<compile_context>
chip_gen: v7x
topology: tpu7x:2x2x1
jax: 0.10.0
libtpu: 0.0.40
codegen_flags: <defaults>
</compile_context>

<pallas_src>
import functools

import jax
import jax.numpy as jnp
from jax.experimental import pallas as pl
from jax.experimental.pallas import tpu as pltpu

_LANE = 128
_SUB = 8
_LEAD = 8                         # zero lead rows so the dx-1 tap offset stays in-bounds
_VMEM_LIMIT = 48 * 1024 * 1024    # under v7x's 64 MiB physical per TC


def _round_up(x, m):
    return (x + m - 1) // m * m


# ------------------------------- fused kernel ------------------------------- #

def _bottleneck_kernel(x_ref, w1_ref, w2_ref, w3_ref,
                       s1_ref, b1_ref, s2_ref, b2_ref, s3_ref, b3_ref,
                       o_ref, h1p_ref, acc_ref, *, H, W, Wpp):
    """One image per grid step.

    x_ref : (H*W, Cin) bf16      w1: (Cin, Cp)   w2: (9, Cp, Cp)   w3: (Cp, Cout)
    s*/b* : (1, C) f32 folded BN scale/shift
    o_ref : (H*W, Cout)
    h1p_ref: (LEAD + (H+2)*Wpp + 8, Cp) bf16 zero-halo padded h1 (flattened, pitch Wpp)
    acc_ref: (H*Wpp, Cp) f32 conv2 accumulator (padded pitch)
    """
    cd = o_ref.dtype
    A = H * Wpp

    # ---- conv1 (1x1) + bn1 + relu: one dense matmul over the image ---------
    h1 = jnp.dot(x_ref[...], w1_ref[...], preferred_element_type=jnp.float32)
    h1 = jnp.maximum(h1 * s1_ref[...] + b1_ref[...], 0.0).astype(cd)     # (H*W, Cp)

    # ---- scatter h1 into the zero-halo padded scratch (aligned pitch) ------
    h1p_ref[...] = jnp.zeros_like(h1p_ref)     # halos / pad cols / lead+tail rows
    for h in range(H):
        dst = _LEAD + (1 + h) * Wpp            # multiple of 8 -> aligned store
        h1p_ref[dst:dst + W, :] = h1[h * W:(h + 1) * W, :]

    # ---- conv2 (3x3, pad 1) + bn2 + relu ------------------------------------
    # 9 shifted matmuls over the flattened padded image, grouped by dy so the
    # f32 accumulator takes 3 RMW passes instead of 9.
    # TODO(synk): the dx=0/2 slices are misaligned by +-1 sublane (re-layout
    # copy); a roll-based shift on the XLU could remove them.
    for dy in range(3):
        part = None
        for dx in range(3):
            off = _LEAD - 1 + dy * Wpp + dx                    # static offset
            lhs = h1p_ref[off:off + A, :]                      # (A, Cp)
            c = jnp.dot(lhs, w2_ref[dy * 3 + dx],
                        preferred_element_type=jnp.float32)
            part = c if part is None else part + c
        if dy == 0:
            acc_ref[...] = part
        else:
            acc_ref[...] += part

    h2 = jnp.maximum(acc_ref[...] * s2_ref[...] + b2_ref[...], 0.0).astype(cd)

    # ---- conv3 (1x1): one dense matmul over the padded image ---------------
    y = jnp.dot(h2, w3_ref[...], preferred_element_type=jnp.float32)      # (A, Cout)

    # ---- bn3 + residual add + relu epilogue (per output row, aligned) ------
    s3 = s3_ref[...]
    b3 = b3_ref[...]
    for h in range(H):
        row = y[h * Wpp:h * Wpp + W, :] * s3 + b3
        row = row + x_ref[h * W:(h + 1) * W, :].astype(jnp.float32)
        o_ref[h * W:(h + 1) * W, :] = jnp.maximum(row, 0.0).astype(cd)


# ------------------------------ pallas_call glue ---------------------------- #

def _bottleneck_fused(x2d, w1, w2, w3, s1, b1, s2, b2, s3, b3, *, n, H, W, out_dtype):
    m, cin = x2d.shape
    cp = w1.shape[1]
    cout = w3.shape[1]
    hw = H * W
    wpp = _round_up(W + 2, _SUB)
    hp = H + 2
    A = H * wpp

    itemsize = jnp.dtype(out_dtype).itemsize
    flops = (2 * m * cin * cp                      # conv1
             + n * 9 * 2 * A * cp * cp             # conv2
             + n * 2 * A * cp * cout)              # conv3
    bytes_accessed = (x2d.size * x2d.dtype.itemsize
                      + m * cout * itemsize
                      + (w1.size + w2.size + w3.size) * itemsize
                      + (s1.size + b1.size + s2.size + b2.size + s3.size + b3.size) * 4)

    kern = functools.partial(_bottleneck_kernel, H=H, W=W, Wpp=wpp)

    # TODO(synk): for batch < 2 on v7x, tile the grid over (image, row-block)
    # with a 1-row halo so both TensorCores get work and DMA stays hidden.
    return pl.pallas_call(
        kern,
        grid=(n,),
        out_shape=jax.ShapeDtypeStruct((m, cout), out_dtype),
        in_specs=[
            pl.BlockSpec((hw, cin), lambda i: (i, 0)),        # x (also residual)
            pl.BlockSpec((cin, cp), lambda i: (0, 0)),        # w1
            pl.BlockSpec((9, cp, cp), lambda i: (0, 0, 0)),   # w2
            pl.BlockSpec((cp, cout), lambda i: (0, 0)),       # w3
            pl.BlockSpec((1, cp), lambda i: (0, 0)),          # s1
            pl.BlockSpec((1, cp), lambda i: (0, 0)),          # b1
            pl.BlockSpec((1, cp), lambda i: (0, 0)),          # s2
            pl.BlockSpec((1, cp), lambda i: (0, 0)),          # b2
            pl.BlockSpec((1, cout), lambda i: (0, 0)),        # s3
            pl.BlockSpec((1, cout), lambda i: (0, 0)),        # b3
        ],
        out_specs=pl.BlockSpec((hw, cout), lambda i: (i, 0)),
        scratch_shapes=[
            pltpu.VMEM((_LEAD + hp * wpp + _SUB, cp), jnp.bfloat16),   # padded h1
            pltpu.VMEM((A, cp), jnp.float32),                          # conv2 acc
        ],
        # Residual/input slab is dead after this op -> reuse its HBM buffer.
        input_output_aliases={0: 0},
        compiler_params=pltpu.CompilerParams(
            dimension_semantics=("parallel",),
            vmem_limit_bytes=_VMEM_LIMIT),
        cost_estimate=pl.CostEstimate(flops=flops, transcendentals=0,
                                      bytes_accessed=bytes_accessed),
    )(x2d, w1, w2, w3, s1, b1, s2, b2, s3, b3)


# ------------------------------ module wrapper ------------------------------ #

def _bn_fold(gamma, beta, mean, var, eps=1e-5):
    scale = gamma / jnp.sqrt(var + eps)
    shift = beta - mean * scale
    return (scale.reshape(1, -1).astype(jnp.float32),
            shift.reshape(1, -1).astype(jnp.float32))


def _pad_last(x, target):
    pad = target - x.shape[-1]
    if pad == 0:
        return x
    return jnp.pad(x, [(0, 0)] * (x.ndim - 1) + [(0, pad)])


@functools.partial(jax.jit, static_argnames=("stride", "compute_dtype"))
def bottleneck_forward(x_nchw, params, stride=1, compute_dtype=jnp.bfloat16):
    """Bottleneck.forward (eval-mode BN), stride=1, downsample=None, q_cfg=None."""
    # TODO(synk): stride=2 on conv2, the external `downsample` nn.Sequential on
    # the residual path, and the QConv2d quantized path are not implemented
    # (they are 1 / None / None in this config).
    assert stride == 1

    cd = compute_dtype
    n, cin, h, w = x_nchw.shape
    planes = params["w1"].shape[0]
    cout = params["w3"].shape[0]
    assert cin == cout, "downsample=None requires inplanes == 4*planes"
    cp = _round_up(planes, _LANE)          # lane-dense intermediate channel width
    m = n * h * w

    # One-time weight/BN packing into channels-last matmul form (precomputed
    # once per model in a real network), intermediate channels zero-padded to a
    # multiple of 128 lanes.
    w1k = _pad_last(jnp.transpose(params["w1"][:, :, 0, 0], (1, 0)), cp).astype(cd)
    w2k = jnp.transpose(params["w2"], (2, 3, 1, 0)).reshape(9, planes, planes)
    w2k = _pad_last(w2k, cp)
    w2k = jnp.pad(w2k, ((0, 0), (0, cp - planes), (0, 0))).astype(cd)
    w3k = jnp.pad(jnp.transpose(params["w3"][:, :, 0, 0], (1, 0)),
                  ((0, cp - planes), (0, 0))).astype(cd)
    s1, b1 = _bn_fold(*params["bn1"])
    s1, b1 = _pad_last(s1, cp), _pad_last(b1, cp)
    s2, b2 = _bn_fold(*params["bn2"])
    s2, b2 = _pad_last(s2, cp), _pad_last(b2, cp)
    s3, b3 = _bn_fold(*params["bn3"])

    # NCHW -> NHWC so channels map onto TPU lanes.
    # TODO(synk): in a full network keep activations NHWC bf16 end-to-end and
    # drop these per-block transposes (extra HBM passes outside the kernel).
    x_nhwc = jnp.transpose(x_nchw, (0, 2, 3, 1)).astype(cd)
    x2d = x_nhwc.reshape(m, cin)

    out2d = _bottleneck_fused(x2d, w1k, w2k, w3k, s1, b1, s2, b2, s3, b3,
                              n=n, H=h, W=w, out_dtype=cd)

    out = out2d.reshape(n, h, w, cout)
    return jnp.transpose(out, (0, 3, 1, 2)).astype(x_nchw.dtype)


# ------------------------------- reference ---------------------------------- #

def _ref_forward(x_nchw, p, compute_dtype):
    """Pure-XLA reference with the same per-stage dtype rounding as the kernel."""
    cd = compute_dtype

    def conv(x, wgt, stride=1, pad=0):
        return jax.lax.conv_general_dilated(
            x.astype(cd), wgt.astype(cd), (stride, stride), [(pad, pad), (pad, pad)],
            dimension_numbers=("NCHW", "OIHW", "NCHW"),
            preferred_element_type=jnp.float32)

    def bn(x, bnp):
        gamma, beta, mean, var = bnp
        s = gamma / jnp.sqrt(var + 1e-5)
        b = beta - mean * s
        return x * s[None, :, None, None] + b[None, :, None, None]

    x_c = x_nchw.astype(cd)
    h1 = jax.nn.relu(bn(conv(x_c, p["w1"]), p["bn1"])).astype(cd)
    h2 = jax.nn.relu(bn(conv(h1, p["w2"], 1, 1), p["bn2"])).astype(cd)
    out = bn(conv(h2, p["w3"]), p["bn3"]) + x_c.astype(jnp.float32)
    return jax.nn.relu(out).astype(cd).astype(jnp.float32)


# --------------------------------- main -------------------------------------- #

def _init_params(key, inplanes, planes):
    ks = jax.random.split(key, 6)
    cout = 4 * planes

    def kaiming(k, shape):
        fan_in = shape[1] * shape[2] * shape[3]
        bound = 1.0 / jnp.sqrt(fan_in)
        return jax.random.uniform(k, shape, jnp.float32, -bound, bound)

    def bn_params(k, c):
        k1, k2, k3, k4 = jax.random.split(k, 4)
        return (1.0 + 0.1 * jax.random.normal(k1, (c,), jnp.float32),
                0.1 * jax.random.normal(k2, (c,), jnp.float32),
                0.1 * jax.random.normal(k3, (c,), jnp.float32),
                1.0 + 0.1 * jax.random.uniform(k4, (c,), jnp.float32))

    return {
        "w1": kaiming(ks[0], (planes, inplanes, 1, 1)),     # OIHW, like nn.Conv2d
        "w2": kaiming(ks[1], (planes, planes, 3, 3)),
        "w3": kaiming(ks[2], (cout, planes, 1, 1)),
        "bn1": bn_params(ks[3], planes),
        "bn2": bn_params(ks[4], planes),
        "bn3": bn_params(ks[5], cout),
    }


if __name__ == "__main__":
    key = jax.random.PRNGKey(0)
    k_x, k_p = jax.random.split(key)

    n, planes, h, w = 2, 8, 16, 16
    inplanes = planes * 4   # downsample=None, stride=1 => residual add is shape-valid

    x = jax.random.normal(k_x, (n, inplanes, h, w), jnp.float32)   # NCHW like PyTorch
    params = _init_params(k_p, inplanes, planes)

    out = jax.block_until_ready(bottleneck_forward(x, params))            # bf16 compute
    ref = jax.block_until_ready(_ref_forward(x, params, jnp.bfloat16))    # mirrored rounding

    assert out.shape == (n, inplanes, h, w)
    max_err = float(jnp.max(jnp.abs(out - ref)))
    assert jnp.allclose(out, ref, rtol=2e-2, atol=2e-2), max_err

    print("KERNEL_OK")
</pallas_src>

<mosaic_0001>
module attributes {stable_mosaic.version = 11 : i64} {
  func.func @_bottleneck_kernel(%arg0: i32, %arg1: memref<256x32xbf16, #tpu.memory_space<vmem>>, %arg2: memref<32x128xbf16, #tpu.memory_space<vmem>>, %arg3: memref<9x128x128xbf16, #tpu.memory_space<vmem>>, %arg4: memref<128x32xbf16, #tpu.memory_space<vmem>>, %arg5: memref<1x128xf32, #tpu.memory_space<vmem>>, %arg6: memref<1x128xf32, #tpu.memory_space<vmem>>, %arg7: memref<1x128xf32, #tpu.memory_space<vmem>>, %arg8: memref<1x128xf32, #tpu.memory_space<vmem>>, %arg9: memref<1x32xf32, #tpu.memory_space<vmem>>, %arg10: memref<1x32xf32, #tpu.memory_space<vmem>>, %arg11: memref<256x32xbf16, #tpu.memory_space<vmem>>, %arg12: memref<448x128xbf16, #tpu.memory_space<vmem>>, %arg13: memref<384x128xf32, #tpu.memory_space<vmem>>) attributes {dimension_semantics = [#tpu.dimension_semantics<parallel>], iteration_bounds = array<i64: 2>, scalar_prefetch = 0 : i64, scratch_operands = 2 : i64, tpu.core_type = #tpu.core_type<tc>, window_params = [{transform_indices = @transform_0, window_bounds = array<i64: 256, 32>}, {pipeline_mode = #tpu.pipeline_mode<synchronous>, transform_indices = @transform_1, window_bounds = array<i64: 32, 128>}, {pipeline_mode = #tpu.pipeline_mode<synchronous>, transform_indices = @transform_2, window_bounds = array<i64: 9, 128, 128>}, {pipeline_mode = #tpu.pipeline_mode<synchronous>, transform_indices = @transform_3, window_bounds = array<i64: 128, 32>}, {pipeline_mode = #tpu.pipeline_mode<synchronous>, transform_indices = @transform_4, window_bounds = array<i64: 1, 128>}, {pipeline_mode = #tpu.pipeline_mode<synchronous>, transform_indices = @transform_5, window_bounds = array<i64: 1, 128>}, {pipeline_mode = #tpu.pipeline_mode<synchronous>, transform_indices = @transform_6, window_bounds = array<i64: 1, 128>}, {pipeline_mode = #tpu.pipeline_mode<synchronous>, transform_indices = @transform_7, window_bounds = array<i64: 1, 128>}, {pipeline_mode = #tpu.pipeline_mode<synchronous>, transform_indices = @transform_8, window_bounds = array<i64: 1, 32>}, {pipeline_mode = #tpu.pipeline_mode<synchronous>, transform_indices = @transform_9, window_bounds = array<i64: 1, 32>}, {transform_indices = @transform_10, window_bounds = array<i64: 256, 32>}]} {
    %c0 = arith.constant 0 : index
    %c0_0 = arith.constant 0 : index
    %0 = vector.load %arg1[%c0, %c0_0] : memref<256x32xbf16, #tpu.memory_space<vmem>>, vector<256x32xbf16>
    %c0_1 = arith.constant 0 : index
    %c0_2 = arith.constant 0 : index
    %1 = vector.load %arg2[%c0_1, %c0_2] : memref<32x128xbf16, #tpu.memory_space<vmem>>, vector<32x128xbf16>
    %cst = arith.constant dense<0.000000e+00> : vector<256x128xf32>
    %2 = tpu.matmul %0, %1, %cst {dimension_numbers = #tpu.dot_dimension_numbers<[1], [0], [0], [1], [0, 0, 1, 1], [], []>} : vector<256x32xbf16>, vector<32x128xbf16>, vector<256x128xf32> -> vector<256x128xf32>
    %c0_3 = arith.constant 0 : index
    %c0_4 = arith.constant 0 : index
    %3 = vector.load %arg5[%c0_3, %c0_4] : memref<1x128xf32, #tpu.memory_space<vmem>>, vector<1x128xf32>
    %4 = vector.broadcast %3 : vector<1x128xf32> to vector<256x128xf32>
    %5 = arith.mulf %2, %4 : vector<256x128xf32>
    %c0_5 = arith.constant 0 : index
    %c0_6 = arith.constant 0 : index
    %6 = vector.load %arg6[%c0_5, %c0_6] : memref<1x128xf32, #tpu.memory_space<vmem>>, vector<1x128xf32>
    %7 = vector.broadcast %6 : vector<1x128xf32> to vector<256x128xf32>
    %8 = arith.addf %5, %7 : vector<256x128xf32>
    %cst_7 = arith.constant 0.000000e+00 : f32
    %9 = vector.broadcast %cst_7 : f32 to vector<256x128xf32>
    %10 = arith.maximumf %8, %9 : vector<256x128xf32>
    %11 = arith.truncf %10 : vector<256x128xf32> to vector<256x128xbf16>
    %cst_8 = arith.constant 0.000000e+00 : bf16
    %12 = vector.broadcast %cst_8 : bf16 to vector<448x128xbf16>
    %c0_9 = arith.constant 0 : index
    %c0_10 = arith.constant 0 : index
    %13 = vector.load %arg12[%c0_9, %c0_10] : memref<448x128xbf16, #tpu.memory_space<vmem>>, vector<448x128xbf16>
    tpu.vector_store %arg12[%c0_9, %c0_10], %12 {strides = array<i32>} : memref<448x128xbf16, #tpu.memory_space<vmem>>, vector<448x128xbf16>,
    %14 = vector.extract_strided_slice %11 {offsets = [0, 0], sizes = [16, 128], strides = [1, 1]} : vector<256x128xbf16> to vector<16x128xbf16>
    %c32 = arith.constant 32 : index
    %c0_11 = arith.constant 0 : index
    %15 = vector.load %arg12[%c32, %c0_11] : memref<448x128xbf16, #tpu.memory_space<vmem>>, vector<16x128xbf16>
    tpu.vector_store %arg12[%c32, %c0_11], %14 {strides = array<i32>} : memref<448x128xbf16, #tpu.memory_space<vmem>>, vector<16x128xbf16>,
    %16 = vector.extract_strided_slice %11 {offsets = [16, 0], sizes = [16, 128], strides = [1, 1]} : vector<256x128xbf16> to vector<16x128xbf16>
    %c56 = arith.constant 56 : index
    %c0_12 = arith.constant 0 : index
    %17 = vector.load %arg12[%c56, %c0_12] : memref<448x128xbf16, #tpu.memory_space<vmem>>, vector<16x128xbf16>
    tpu.vector_store %arg12[%c56, %c0_12], %16 {strides = array<i32>} : memref<448x128xbf16, #tpu.memory_space<vmem>>, vector<16x128xbf16>,
    %18 = vector.extract_strided_slice %11 {offsets = [32, 0], sizes = [16, 128], strides = [1, 1]} : vector<256x128xbf16> to vector<16x128xbf16>
    %c80 = arith.constant 80 : index
    %c0_13 = arith.constant 0 : index
    %19 = vector.load %arg12[%c80, %c0_13] : memref<448x128xbf16, #tpu.memory_space<vmem>>, vector<16x128xbf16>
    tpu.vector_store %arg12[%c80, %c0_13], %18 {strides = array<i32>} : memref<448x128xbf16, #tpu.memory_space<vmem>>, vector<16x128xbf16>,
    %20 = vector.extract_strided_slice %11 {offsets = [48, 0], sizes = [16, 128], strides = [1, 1]} : vector<256x128xbf16> to vector<16x128xbf16>
    %c104 = arith.constant 104 : index
    %c0_14 = arith.constant 0 : index
    %21 = vector.load %arg12[%c104, %c0_14] : memref<448x128xbf16, #tpu.memory_space<vmem>>, vector<16x128xbf16>
    tpu.vector_store %arg12[%c104, %c0_14], %20 {strides = array<i32>} : memref<448x128xbf16, #tpu.memory_space<vmem>>, vector<16x128xbf16>,
    %22 = vector.extract_strided_slice %11 {offsets = [64, 0], sizes = [16, 128], strides = [1, 1]} : vector<256x128xbf16> to vector<16x128xbf16>
    %c128 = arith.constant 128 : index
    %c0_15 = arith.constant 0 : index
    %23 = vector.load %arg12[%c128, %c0_15] : memref<448x128xbf16, #tpu.memory_space<vmem>>, vector<16x128xbf16>
    tpu.vector_store %arg12[%c128, %c0_15], %22 {strides = array<i32>} : memref<448x128xbf16, #tpu.memory_space<vmem>>, vector<16x128xbf16>,
    %24 = vector.extract_strided_slice %11 {offsets = [80, 0], sizes = [16, 128], strides = [1, 1]} : vector<256x128xbf16> to vector<16x128xbf16>
    %c152 = arith.constant 152 : index
    %c0_16 = arith.constant 0 : index
    %25 = vector.load %arg12[%c152, %c0_16] : memref<448x128xbf16, #tpu.memory_space<vmem>>, vector<16x128xbf16>
    tpu.vector_store %arg12[%c152, %c0_16], %24 {strides = array<i32>} : memref<448x128xbf16, #tpu.memory_space<vmem>>, vector<16x128xbf16>,
    %26 = vector.extract_strided_slice %11 {offsets = [96, 0], sizes = [16, 128], strides = [1, 1]} : vector<256x128xbf16> to vector<16x128xbf16>
    %c176 = arith.constant 176 : index
    %c0_17 = arith.constant 0 : index
    %27 = vector.load %arg12[%c176, %c0_17] : memref<448x128xbf16, #tpu.memory_space<vmem>>, vector<16x128xbf16>
    tpu.vector_store %arg12[%c176, %c0_17], %26 {strides = array<i32>} : memref<448x128xbf16, #tpu.memory_space<vmem>>, vector<16x128xbf16>,
    %28 = vector.extract_strided_slice %11 {offsets = [112, 0], sizes = [16, 128], strides = [1, 1]} : vector<256x128xbf16> to vector<16x128xbf16>
    %c200 = arith.constant 200 : index
    %c0_18 = arith.constant 0 : index
    %29 = vector.load %arg12[%c200, %c0_18] : memref<448x128xbf16, #tpu.memory_space<vmem>>, vector<16x128xbf16>
    tpu.vector_store %arg12[%c200, %c0_18], %28 {strides = array<i32>} : memref<448x128xbf16, #tpu.memory_space<vmem>>, vector<16x128xbf16>,
    %30 = vector.extract_strided_slice %11 {offsets = [128, 0], sizes = [16, 128], strides = [1, 1]} : vector<256x128xbf16> to vector<16x128xbf16>
    %c224 = arith.constant 224 : index
    %c0_19 = arith.constant 0 : index
    %31 = vector.load %arg12[%c224, %c0_19] : memref<448x128xbf16, #tpu.memory_space<vmem>>, vector<16x128xbf16>
    tpu.vector_store %arg12[%c224, %c0_19], %30 {strides = array<i32>} : memref<448x128xbf16, #tpu.memory_space<vmem>>, vector<16x128xbf16>,
    %32 = vector.extract_strided_slice %11 {offsets = [144, 0], sizes = [16, 128], strides = [1, 1]} : vector<256x128xbf16> to vector<16x128xbf16>
    %c248 = arith.constant 248 : index
    %c0_20 = arith.constant 0 : index
    %33 = vector.load %arg12[%c248, %c0_20] : memref<448x128xbf16, #tpu.memory_space<vmem>>, vector<16x128xbf16>
    tpu.vector_store %arg12[%c248, %c0_20], %32 {strides = array<i32>} : memref<448x128xbf16, #tpu.memory_space<vmem>>, vector<16x128xbf16>,
    %34 = vector.extract_strided_slice %11 {offsets = [160, 0], sizes = [16, 128], strides = [1, 1]} : vector<256x128xbf16> to vector<16x128xbf16>
    %c272 = arith.constant 272 : index
    %c0_21 = arith.constant 0 : index
    %35 = vector.load %arg12[%c272, %c0_21] : memref<448x128xbf16, #tpu.memory_space<vmem>>, vector<16x128xbf16>
    tpu.vector_store %arg12[%c272, %c0_21], %34 {strides = array<i32>} : memref<448x128xbf16, #tpu.memory_space<vmem>>, vector<16x128xbf16>,
    %36 = vector.extract_strided_slice %11 {offsets = [176, 0], sizes = [16, 128], strides = [1, 1]} : vector<256x128xbf16> to vector<16x128xbf16>
    %c296 = arith.constant 296 : index
    %c0_22 = arith.constant 0 : index
    %37 = vector.load %arg12[%c296, %c0_22] : memref<448x128xbf16, #tpu.memory_space<vmem>>, vector<16x128xbf16>
    tpu.vector_store %arg12[%c296, %c0_22], %36 {strides = array<i32>} : memref<448x128xbf16, #tpu.memory_space<vmem>>, vector<16x128xbf16>,
    %38 = vector.extract_strided_slice %11 {offsets = [192, 0], sizes = [16, 128], strides = [1, 1]} : vector<256x128xbf16> to vector<16x128xbf16>
    %c320 = arith.constant 320 : index
    %c0_23 = arith.constant 0 : index
    %39 = vector.load %arg12[%c320, %c0_23] : memref<448x128xbf16, #tpu.memory_space<vmem>>, vector<16x128xbf16>
    tpu.vector_store %arg12[%c320, %c0_23], %38 {strides = array<i32>} : memref<448x128xbf16, #tpu.memory_space<vmem>>, vector<16x128xbf16>,
    %40 = vector.extract_strided_slice %11 {offsets = [208, 0], sizes = [16, 128], strides = [1, 1]} : vector<256x128xbf16> to vector<16x128xbf16>
    %c344 = arith.constant 344 : index
    %c0_24 = arith.constant 0 : index
    %41 = vector.load %arg12[%c344, %c0_24] : memref<448x128xbf16, #tpu.memory_space<vmem>>, vector<16x128xbf16>
    tpu.vector_store %arg12[%c344, %c0_24], %40 {strides = array<i32>} : memref<448x128xbf16, #tpu.memory_space<vmem>>, vector<16x128xbf16>,
    %42 = vector.extract_strided_slice %11 {offsets = [224, 0], sizes = [16, 128], strides = [1, 1]} : vector<256x128xbf16> to vector<16x128xbf16>
    %c368 = arith.constant 368 : index
    %c0_25 = arith.constant 0 : index
    %43 = vector.load %arg12[%c368, %c0_25] : memref<448x128xbf16, #tpu.memory_space<vmem>>, vector<16x128xbf16>
    tpu.vector_store %arg12[%c368, %c0_25], %42 {strides = array<i32>} : memref<448x128xbf16, #tpu.memory_space<vmem>>, vector<16x128xbf16>,
    %44 = vector.extract_strided_slice %11 {offsets = [240, 0], sizes = [16, 128], strides = [1, 1]} : vector<256x128xbf16> to vector<16x128xbf16>
    %c392 = arith.constant 392 : index
    %c0_26 = arith.constant 0 : index
    %45 = vector.load %arg12[%c392, %c0_26] : memref<448x128xbf16, #tpu.memory_space<vmem>>, vector<16x128xbf16>
    tpu.vector_store %arg12[%c392, %c0_26], %44 {strides = array<i32>} : memref<448x128xbf16, #tpu.memory_space<vmem>>, vector<16x128xbf16>,
    %c7 = arith.constant 7 : index
    %c0_27 = arith.constant 0 : index
    %46 = vector.load %arg12[%c7, %c0_27] : memref<448x128xbf16, #tpu.memory_space<vmem>>, vector<384x128xbf16>
    %c0_28 = arith.constant 0 : index
    %c0_29 = arith.constant 0 : index
    %c0_30 = arith.constant 0 : index
    %47 = vector.load %arg3[%c0_28, %c0_29, %c0_30] : memref<9x128x128xbf16, #tpu.memory_space<vmem>>, vector<1x128x128xbf16>
    %48 = vector.shape_cast %47 : vector<1x128x128xbf16> to vector<128x128xbf16>
    %cst_31 = arith.constant dense<0.000000e+00> : vector<384x128xf32>
    %49 = tpu.matmul %46, %48, %cst_31 {dimension_numbers = #tpu.dot_dimension_numbers<[1], [0], [0], [1], [0, 0, 1, 1], [], []>} : vector<384x128xbf16>, vector<128x128xbf16>, vector<384x128xf32> -> vector<384x128xf32>
    %c8 = arith.constant 8 : index
    %c0_32 = arith.constant 0 : index
    %50 = vector.load %arg12[%c8, %c0_32] : memref<448x128xbf16, #tpu.memory_space<vmem>>, vector<384x128xbf16>
    %c1 = arith.constant 1 : index
    %c0_33 = arith.constant 0 : index
    %c0_34 = arith.constant 0 : index
    %51 = vector.load %arg3[%c1, %c0_33, %c0_34] : memref<9x128x128xbf16, #tpu.memory_space<vmem>>, vector<1x128x128xbf16>
    %52 = vector.shape_cast %51 : vector<1x128x128xbf16> to vector<128x128xbf16>
    %cst_35 = arith.constant dense<0.000000e+00> : vector<384x128xf32>
    %53 = tpu.matmul %50, %52, %cst_35 {dimension_numbers = #tpu.dot_dimension_numbers<[1], [0], [0], [1], [0, 0, 1, 1], [], []>} : vector<384x128xbf16>, vector<128x128xbf16>, vector<384x128xf32> -> vector<384x128xf32>
    %54 = arith.addf %49, %53 : vector<384x128xf32>
    %c9 = arith.constant 9 : index
    %c0_36 = arith.constant 0 : index
    %55 = vector.load %arg12[%c9, %c0_36] : memref<448x128xbf16, #tpu.memory_space<vmem>>, vector<384x128xbf16>
    %c2 = arith.constant 2 : index
    %c0_37 = arith.constant 0 : index
    %c0_38 = arith.constant 0 : index
    %56 = vector.load %arg3[%c2, %c0_37, %c0_38] : memref<9x128x128xbf16, #tpu.memory_space<vmem>>, vector<1x128x128xbf16>
    %57 = vector.shape_cast %56 : vector<1x128x128xbf16> to vector<128x128xbf16>
    %cst_39 = arith.constant dense<0.000000e+00> : vector<384x128xf32>
    %58 = tpu.matmul %55, %57, %cst_39 {dimension_numbers = #tpu.dot_dimension_numbers<[1], [0], [0], [1], [0, 0, 1, 1], [], []>} : vector<384x128xbf16>, vector<128x128xbf16>, vector<384x128xf32> -> vector<384x128xf32>
    %59 = arith.addf %54, %58 : vector<384x128xf32>
    %c0_40 = arith.constant 0 : index
    %c0_41 = arith.constant 0 : index
    %60 = vector.load %arg13[%c0_40, %c0_41] : memref<384x128xf32, #tpu.memory_space<vmem>>, vector<384x128xf32>
    tpu.vector_store %arg13[%c0_40, %c0_41], %59 {strides = array<i32>} : memref<384x128xf32, #tpu.memory_space<vmem>>, vector<384x128xf32>,
    %c31 = arith.constant 31 : index
    %c0_42 = arith.constant 0 : index
    %61 = vector.load %arg12[%c31, %c0_42] : memref<448x128xbf16, #tpu.memory_space<vmem>>, vector<384x128xbf16>
    %c3 = arith.constant 3 : index
    %c0_43 = arith.constant 0 : index
    %c0_44 = arith.constant 0 : index
    %62 = vector.load %arg3[%c3, %c0_43, %c0_44] : memref<9x128x128xbf16, #tpu.memory_space<vmem>>, vector<1x128x128xbf16>
    %63 = vector.shape_cast %62 : vector<1x128x128xbf16> to vector<128x128xbf16>
    %cst_45 = arith.constant dense<0.000000e+00> : vector<384x128xf32>
    %64 = tpu.matmul %61, %63, %cst_45 {dimension_numbers = #tpu.dot_dimension_numbers<[1], [0], [0], [1], [0, 0, 1, 1], [], []>} : vector<384x128xbf16>, vector<128x128xbf16>, vector<384x128xf32> -> vector<384x128xf32>
    %c32_46 = arith.constant 32 : index
    %c0_47 = arith.constant 0 : index
    %65 = vector.load %arg12[%c32_46, %c0_47] : memref<448x128xbf16, #tpu.memory_space<vmem>>, vector<384x128xbf16>
    %c4 = arith.constant 4 : index
    %c0_48 = arith.constant 0 : index
    %c0_49 = arith.constant 0 : index
    %66 = vector.load %arg3[%c4, %c0_48, %c0_49] : memref<9x128x128xbf16, #tpu.memory_space<vmem>>, vector<1x128x128xbf16>
    %67 = vector.shape_cast %66 : vector<1x128x128xbf16> to vector<128x128xbf16>
    %cst_50 = arith.constant dense<0.000000e+00> : vector<384x128xf32>
    %68 = tpu.matmul %65, %67, %cst_50 {dimension_numbers = #tpu.dot_dimension_numbers<[1], [0], [0], [1], [0, 0, 1, 1], [], []>} : vector<384x128xbf16>, vector<128x128xbf16>, vector<384x128xf32> -> vector<384x128xf32>
    %69 = arith.addf %64, %68 : vector<384x128xf32>
    %c33 = arith.constant 33 : index
    %c0_51 = arith.constant 0 : index
    %70 = vector.load %arg12[%c33, %c0_51] : memref<448x128xbf16, #tpu.memory_space<vmem>>, vector<384x128xbf16>
    %c5 = arith.constant 5 : index
    %c0_52 = arith.constant 0 : index
    %c0_53 = arith.constant 0 : index
    %71 = vector.load %arg3[%c5, %c0_52, %c0_53] : memref<9x128x128xbf16, #tpu.memory_space<vmem>>, vector<1x128x128xbf16>
    %72 = vector.shape_cast %71 : vector<1x128x128xbf16> to vector<128x128xbf16>
    %cst_54 = arith.constant dense<0.000000e+00> : vector<384x128xf32>
    %73 = tpu.matmul %70, %72, %cst_54 {dimension_numbers = #tpu.dot_dimension_numbers<[1], [0], [0], [1], [0, 0, 1, 1], [], []>} : vector<384x128xbf16>, vector<128x128xbf16>, vector<384x128xf32> -> vector<384x128xf32>
    %74 = arith.addf %69, %73 : vector<384x128xf32>
    %c0_55 = arith.constant 0 : index
    %c0_56 = arith.constant 0 : index
    %75 = vector.load %arg13[%c0_55, %c0_56] : memref<384x128xf32, #tpu.memory_space<vmem>>, vector<384x128xf32>
    %76 = arith.addf %75, %74 : vector<384x128xf32>
    %c0_57 = arith.constant 0 : index
    %c0_58 = arith.constant 0 : index
    %77 = vector.load %arg13[%c0_57, %c0_58] : memref<384x128xf32, #tpu.memory_space<vmem>>, vector<384x128xf32>
    tpu.vector_store %arg13[%c0_57, %c0_58], %76 {strides = array<i32>} : memref<384x128xf32, #tpu.memory_space<vmem>>, vector<384x128xf32>,
    %c55 = arith.constant 55 : index
    %c0_59 = arith.constant 0 : index
    %78 = vector.load %arg12[%c55, %c0_59] : memref<448x128xbf16, #tpu.memory_space<vmem>>, vector<384x128xbf16>
    %c6 = arith.constant 6 : index
    %c0_60 = arith.constant 0 : index
    %c0_61 = arith.constant 0 : index
    %79 = vector.load %arg3[%c6, %c0_60, %c0_61] : memref<9x128x128xbf16, #tpu.memory_space<vmem>>, vector<1x128x128xbf16>
    %80 = vector.shape_cast %79 : vector<1x128x128xbf16> to vector<128x128xbf16>
    %cst_62 = arith.constant dense<0.000000e+00> : vector<384x128xf32>
    %81 = tpu.matmul %78, %80, %cst_62 {dimension_numbers = #tpu.dot_dimension_numbers<[1], [0], [0], [1], [0, 0, 1, 1], [], []>} : vector<384x128xbf16>, vector<128x128xbf16>, vector<384x128xf32> -> vector<384x128xf32>
    %c56_63 = arith.constant 56 : index
    %c0_64 = arith.constant 0 : index
    %82 = vector.load %arg12[%c56_63, %c0_64] : memref<448x128xbf16, #tpu.memory_space<vmem>>, vector<384x128xbf16>
    %c7_65 = arith.constant 7 : index
    %c0_66 = arith.constant 0 : index
    %c0_67 = arith.constant 0 : index
    %83 = vector.load %arg3[%c7_65, %c0_66, %c0_67] : memref<9x128x128xbf16, #tpu.memory_space<vmem>>, vector<1x128x128xbf16>
    %84 = vector.shape_cast %83 : vector<1x128x128xbf16> to vector<128x128xbf16>
    %cst_68 = arith.constant dense<0.000000e+00> : vector<384x128xf32>
    %85 = tpu.matmul %82, %84, %cst_68 {dimension_numbers = #tpu.dot_dimension_numbers<[1], [0], [0], [1], [0, 0, 1, 1], [], []>} : vector<384x128xbf16>, vector<128x128xbf16>, vector<384x128xf32> -> vector<384x128xf32>
    %86 = arith.addf %81, %85 : vector<384x128xf32>
    %c57 = arith.constant 57 : index
    %c0_69 = arith.constant 0 : index
    %87 = vector.load %arg12[%c57, %c0_69] : memref<448x128xbf16, #tpu.memory_space<vmem>>, vector<384x128xbf16>
    %c8_70 = arith.constant 8 : index
    %c0_71 = arith.constant 0 : index
    %c0_72 = arith.constant 0 : index
    %88 = vector.load %arg3[%c8_70, %c0_71, %c0_72] : memref<9x128x128xbf16, #tpu.memory_space<vmem>>, vector<1x128x128xbf16>
    %89 = vector.shape_cast %88 : vector<1x128x128xbf16> to vector<128x128xbf16>
    %cst_73 = arith.constant dense<0.000000e+00> : vector<384x128xf32>
    %90 = tpu.matmul %87, %89, %cst_73 {dimension_numbers = #tpu.dot_dimension_numbers<[1], [0], [0], [1], [0, 0, 1, 1], [], []>} : vector<384x128xbf16>, vector<128x128xbf16>, vector<384x128xf32> -> vector<384x128xf32>
    %91 = arith.addf %86, %90 : vector<384x128xf32>
    %c0_74 = arith.constant 0 : index
    %c0_75 = arith.constant 0 : index
    %92 = vector.load %arg13[%c0_74, %c0_75] : memref<384x128xf32, #tpu.memory_space<vmem>>, vector<384x128xf32>
    %93 = arith.addf %92, %91 : vector<384x128xf32>
    %c0_76 = arith.constant 0 : index
    %c0_77 = arith.constant 0 : index
    %94 = vector.load %arg13[%c0_76, %c0_77] : memref<384x128xf32, #tpu.memory_space<vmem>>, vector<384x128xf32>
    tpu.vector_store %arg13[%c0_76, %c0_77], %93 {strides = array<i32>} : memref<384x128xf32, #tpu.memory_space<vmem>>, vector<384x128xf32>,
    %c0_78 = arith.constant 0 : index
    %c0_79 = arith.constant 0 : index
    %95 = vector.load %arg13[%c0_78, %c0_79] : memref<384x128xf32, #tpu.memory_space<vmem>>, vector<384x128xf32>
    %c0_80 = arith.constant 0 : index
    %c0_81 = arith.constant 0 : index
    %96 = vector.load %arg7[%c0_80, %c0_81] : memref<1x128xf32, #tpu.memory_space<vmem>>, vector<1x128xf32>
    %97 = vector.broadcast %96 : vector<1x128xf32> to vector<384x128xf32>
    %98 = arith.mulf %95, %97 : vector<384x128xf32>
    %c0_82 = arith.constant 0 : index
    %c0_83 = arith.constant 0 : index
    %99 = vector.load %arg8[%c0_82, %c0_83] : memref<1x128xf32, #tpu.memory_space<vmem>>, vector<1x128xf32>
    %100 = vector.broadcast %99 : vector<1x128xf32> to vector<384x128xf32>
    %101 = arith.addf %98, %100 : vector<384x128xf32>
    %cst_84 = arith.constant 0.000000e+00 : f32
    %102 = vector.broadcast %cst_84 : f32 to vector<384x128xf32>
    %103 = arith.maximumf %101, %102 : vector<384x128xf32>
    %104 = arith.truncf %103 : vector<384x128xf32> to vector<384x128xbf16>
    %c0_85 = arith.constant 0 : index
    %c0_86 = arith.constant 0 : index
    %105 = vector.load %arg4[%c0_85, %c0_86] : memref<128x32xbf16, #tpu.memory_space<vmem>>, vector<128x32xbf16>
    %cst_87 = arith.constant dense<0.000000e+00> : vector<384x32xf32>
    %106 = tpu.matmul %104, %105, %cst_87 {dimension_numbers = #tpu.dot_dimension_numbers<[1], [0], [0], [1], [0, 0, 1, 1], [], []>} : vector<384x128xbf16>, vector<128x32xbf16>, vector<384x32xf32> -> vector<384x32xf32>
    %c0_88 = arith.constant 0 : index
    %c0_89 = arith.constant 0 : index
    %107 = vector.load %arg9[%c0_88, %c0_89] : memref<1x32xf32, #tpu.memory_space<vmem>>, vector<1x32xf32>
    %c0_90 = arith.constant 0 : index
    %c0_91 = arith.constant 0 : index
    %108 = vector.load %arg10[%c0_90, %c0_91] : memref<1x32xf32, #tpu.memory_space<vmem>>, vector<1x32xf32>
    %109 = vector.extract_strided_slice %106 {offsets = [0, 0], sizes = [16, 32], strides = [1, 1]} : vector<384x32xf32> to vector<16x32xf32>
    %110 = vector.broadcast %107 : vector<1x32xf32> to vector<16x32xf32>
    %111 = arith.mulf %109, %110 : vector<16x32xf32>
    %112 = vector.broadcast %108 : vector<1x32xf32> to vector<16x32xf32>
    %113 = arith.addf %111, %112 : vector<16x32xf32>
    %c0_92 = arith.constant 0 : index
    %c0_93 = arith.constant 0 : index
    %114 = vector.load %arg1[%c0_92, %c0_93] : memref<256x32xbf16, #tpu.memory_space<vmem>>, vector<16x32xbf16>
    %115 = arith.extf %114 : vector<16x32xbf16> to vector<16x32xf32>
    %116 = arith.addf %113, %115 : vector<16x32xf32>
    %cst_94 = arith.constant 0.000000e+00 : f32
    %117 = vector.broadcast %cst_94 : f32 to vector<16x32xf32>
    %118 = arith.maximumf %116, %117 : vector<16x32xf32>
    %119 = arith.truncf %118 : vector<16x32xf32> to vector<16x32xbf16>
    %c0_95 = arith.constant 0 : index
    %c0_96 = arith.constant 0 : index
    %120 = vector.load %arg11[%c0_95, %c0_96] : memref<256x32xbf16, #tpu.memory_space<vmem>>, vector<16x32xbf16>
    tpu.vector_store %arg11[%c0_95, %c0_96], %119 {strides = array<i32>} : memref<256x32xbf16, #tpu.memory_space<vmem>>, vector<16x32xbf16>,
    %121 = vector.extract_strided_slice %106 {offsets = [24, 0], sizes = [16, 32], strides = [1, 1]} : vector<384x32xf32> to vector<16x32xf32>
    %122 = vector.broadcast %107 : vector<1x32xf32> to vector<16x32xf32>
    %123 = arith.mulf %121, %122 : vector<16x32xf32>
    %124 = vector.broadcast %108 : vector<1x32xf32> to vector<16x32xf32>
    %125 = arith.addf %123, %124 : vector<16x32xf32>
    %c16 = arith.constant 16 : index
    %c0_97 = arith.constant 0 : index
    %126 = vector.load %arg1[%c16, %c0_97] : memref<256x32xbf16, #tpu.memory_space<vmem>>, vector<16x32xbf16>
    %127 = arith.extf %126 : vector<16x32xbf16> to vector<16x32xf32>
    %128 = arith.addf %125, %127 : vector<16x32xf32>
    %cst_98 = arith.constant 0.000000e+00 : f32
    %129 = vector.broadcast %cst_98 : f32 to vector<16x32xf32>
    %130 = arith.maximumf %128, %129 : vector<16x32xf32>
    %131 = arith.truncf %130 : vector<16x32xf32> to vector<16x32xbf16>
    %c16_99 = arith.constant 16 : index
    %c0_100 = arith.constant 0 : index
    %132 = vector.load %arg11[%c16_99, %c0_100] : memref<256x32xbf16, #tpu.memory_space<vmem>>, vector<16x32xbf16>
    tpu.vector_store %arg11[%c16_99, %c0_100], %131 {strides = array<i32>} : memref<256x32xbf16, #tpu.memory_space<vmem>>, vector<16x32xbf16>,
    %133 = vector.extract_strided_slice %106 {offsets = [48, 0], sizes = [16, 32], strides = [1, 1]} : vector<384x32xf32> to vector<16x32xf32>
    %134 = vector.broadcast %107 : vector<1x32xf32> to vector<16x32xf32>
    %135 = arith.mulf %133, %134 : vector<16x32xf32>
    %136 = vector.broadcast %108 : vector<1x32xf32> to vector<16x32xf32>
    %137 = arith.addf %135, %136 : vector<16x32xf32>
    %c32_101 = arith.constant 32 : index
    %c0_102 = arith.constant 0 : index
    %138 = vector.load %arg1[%c32_101, %c0_102] : memref<256x32xbf16, #tpu.memory_space<vmem>>, vector<16x32xbf16>
    %139 = arith.extf %138 : vector<16x32xbf16> to vector<16x32xf32>
    %140 = arith.addf %137, %139 : vector<16x32xf32>
    %cst_103 = arith.constant 0.000000e+00 : f32
    %141 = vector.broadcast %cst_103 : f32 to vector<16x32xf32>
    %142 = arith.maximumf %140, %141 : vector<16x32xf32>
    %143 = arith.truncf %142 : vector<16x32xf32> to vector<16x32xbf16>
    %c32_104 = arith.constant 32 : index
    %c0_105 = arith.constant 0 : index
    %144 = vector.load %arg11[%c32_104, %c0_105] : memref<256x32xbf16, #tpu.memory_space<vmem>>, vector<16x32xbf16>
    tpu.vector_store %arg11[%c32_104, %c0_105], %143 {strides = array<i32>} : memref<256x32xbf16, #tpu.memory_space<vmem>>, vector<16x32xbf16>,
    %145 = vector.extract_strided_slice %106 {offsets = [72, 0], sizes = [16, 32], strides = [1, 1]} : vector<384x32xf32> to vector<16x32xf32>
    %146 = vector.broadcast %107 : vector<1x32xf32> to vector<16x32xf32>
    %147 = arith.mulf %145, %146 : vector<16x32xf32>
    %148 = vector.broadcast %108 : vector<1x32xf32> to vector<16x32xf32>
    %149 = arith.addf %147, %148 : vector<16x32xf32>
    %c48 = arith.constant 48 : index
    %c0_106 = arith.constant 0 : index
    %150 = vector.load %arg1[%c48, %c0_106] : memref<256x32xbf16, #tpu.memory_space<vmem>>, vector<16x32xbf16>
    %151 = arith.extf %150 : vector<16x32xbf16> to vector<16x32xf32>
    %152 = arith.addf %149, %151 : vector<16x32xf32>
    %cst_107 = arith.constant 0.000000e+00 : f32
    %153 = vector.broadcast %cst_107 : f32 to vector<16x32xf32>
    %154 = arith.maximumf %152, %153 : vector<16x32xf32>
    %155 = arith.truncf %154 : vector<16x32xf32> to vector<16x32xbf16>
    %c48_108 = arith.constant 48 : index
    %c0_109 = arith.constant 0 : index
    %156 = vector.load %arg11[%c48_108, %c0_109] : memref<256x32xbf16, #tpu.memory_space<vmem>>, vector<16x32xbf16>
    tpu.vector_store %arg11[%c48_108, %c0_109], %155 {strides = array<i32>} : memref<256x32xbf16, #tpu.memory_space<vmem>>, vector<16x32xbf16>,
    %157 = vector.extract_strided_slice %106 {offsets = [96, 0], sizes = [16, 32], strides = [1, 1]} : vector<384x32xf32> to vector<16x32xf32>
    %158 = vector.broadcast %107 : vector<1x32xf32> to vector<16x32xf32>
    %159 = arith.mulf %157, %158 : vector<16x32xf32>
    %160 = vector.broadcast %108 : vector<1x32xf32> to vector<16x32xf32>
    %161 = arith.addf %159, %160 : vector<16x32xf32>
    %c64 = arith.constant 64 : index
    %c0_110 = arith.constant 0 : index
    %162 = vector.load %arg1[%c64, %c0_110] : memref<256x32xbf16, #tpu.memory_space<vmem>>, vector<16x32xbf16>
    %163 = arith.extf %162 : vector<16x32xbf16> to vector<16x32xf32>
    %164 = arith.addf %161, %163 : vector<16x32xf32>
    %cst_111 = arith.constant 0.000000e+00 : f32
    %165 = vector.broadcast %cst_111 : f32 to vector<16x32xf32>
    %166 = arith.maximumf %164, %165 : vector<16x32xf32>
    %167 = arith.truncf %166 : vector<16x32xf32> to vector<16x32xbf16>
    %c64_112 = arith.constant 64 : index
    %c0_113 = arith.constant 0 : index
    %168 = vector.load %arg11[%c64_112, %c0_113] : memref<256x32xbf16, #tpu.memory_space<vmem>>, vector<16x32xbf16>
    tpu.vector_store %arg11[%c64_112, %c0_113], %167 {strides = array<i32>} : memref<256x32xbf16, #tpu.memory_space<vmem>>, vector<16x32xbf16>,
    %169 = vector.extract_strided_slice %106 {offsets = [120, 0], sizes = [16, 32], strides = [1, 1]} : vector<384x32xf32> to vector<16x32xf32>
    %170 = vector.broadcast %107 : vector<1x32xf32> to vector<16x32xf32>
    %171 = arith.mulf %169, %170 : vector<16x32xf32>
    %172 = vector.broadcast %108 : vector<1x32xf32> to vector<16x32xf32>
    %173 = arith.addf %171, %172 : vector<16x32xf32>
    %c80_114 = arith.constant 80 : index
    %c0_115 = arith.constant 0 : index
    %174 = vector.load %arg1[%c80_114, %c0_115] : memref<256x32xbf16, #tpu.memory_space<vmem>>, vector<16x32xbf16>
    %175 = arith.extf %174 : vector<16x32xbf16> to vector<16x32xf32>
    %176 = arith.addf %173, %175 : vector<16x32xf32>
    %cst_116 = arith.constant 0.000000e+00 : f32
    %177 = vector.broadcast %cst_116 : f32 to vector<16x32xf32>
    %178 = arith.maximumf %176, %177 : vector<16x32xf32>
    %179 = arith.truncf %178 : vector<16x32xf32> to vector<16x32xbf16>
    %c80_117 = arith.constant 80 : index
    %c0_118 = arith.constant 0 : index
    %180 = vector.load %arg11[%c80_117, %c0_118] : memref<256x32xbf16, #tpu.memory_space<vmem>>, vector<16x32xbf16>
    tpu.vector_store %arg11[%c80_117, %c0_118], %179 {strides = array<i32>} : memref<256x32xbf16, #tpu.memory_space<vmem>>, vector<16x32xbf16>,
    %181 = vector.extract_strided_slice %106 {offsets = [144, 0], sizes = [16, 32], strides = [1, 1]} : vector<384x32xf32> to vector<16x32xf32>
    %182 = vector.broadcast %107 : vector<1x32xf32> to vector<16x32xf32>
    %183 = arith.mulf %181, %182 : vector<16x32xf32>
    %184 = vector.broadcast %108 : vector<1x32xf32> to vector<16x32xf32>
    %185 = arith.addf %183, %184 : vector<16x32xf32>
    %c96 = arith.constant 96 : index
    %c0_119 = arith.constant 0 : index
    %186 = vector.load %arg1[%c96, %c0_119] : memref<256x32xbf16, #tpu.memory_space<vmem>>, vector<16x32xbf16>
    %187 = arith.extf %186 : vector<16x32xbf16> to vector<16x32xf32>
    %188 = arith.addf %185, %187 : vector<16x32xf32>
    %cst_120 = arith.constant 0.000000e+00 : f32
    %189 = vector.broadcast %cst_120 : f32 to vector<16x32xf32>
    %190 = arith.maximumf %188, %189 : vector<16x32xf32>
    %191 = arith.truncf %190 : vector<16x32xf32> to vector<16x32xbf16>
    %c96_121 = arith.constant 96 : index
    %c0_122 = arith.constant 0 : index
    %192 = vector.load %arg11[%c96_121, %c0_122] : memref<256x32xbf16, #tpu.memory_space<vmem>>, vector<16x32xbf16>
    tpu.vector_store %arg11[%c96_121, %c0_122], %191 {strides = array<i32>} : memref<256x32xbf16, #tpu.memory_space<vmem>>, vector<16x32xbf16>,
    %193 = vector.extract_strided_slice %106 {offsets = [168, 0], sizes = [16, 32], strides = [1, 1]} : vector<384x32xf32> to vector<16x32xf32>
    %194 = vector.broadcast %107 : vector<1x32xf32> to vector<16x32xf32>
    %195 = arith.mulf %193, %194 : vector<16x32xf32>
    %196 = vector.broadcast %108 : vector<1x32xf32> to vector<16x32xf32>
    %197 = arith.addf %195, %196 : vector<16x32xf32>
    %c112 = arith.constant 112 : index
    %c0_123 = arith.constant 0 : index
    %198 = vector.load %arg1[%c112, %c0_123] : memref<256x32xbf16, #tpu.memory_space<vmem>>, vector<16x32xbf16>
    %199 = arith.extf %198 : vector<16x32xbf16> to vector<16x32xf32>
    %200 = arith.addf %197, %199 : vector<16x32xf32>
    %cst_124 = arith.constant 0.000000e+00 : f32
    %201 = vector.broadcast %cst_124 : f32 to vector<16x32xf32>
    %202 = arith.maximumf %200, %201 : vector<16x32xf32>
    %203 = arith.truncf %202 : vector<16x32xf32> to vector<16x32xbf16>
    %c112_125 = arith.constant 112 : index
    %c0_126 = arith.constant 0 : index
    %204 = vector.load %arg11[%c112_125, %c0_126] : memref<256x32xbf16, #tpu.memory_space<vmem>>, vector<16x32xbf16>
    tpu.vector_store %arg11[%c112_125, %c0_126], %203 {strides = array<i32>} : memref<256x32xbf16, #tpu.memory_space<vmem>>, vector<16x32xbf16>,
    %205 = vector.extract_strided_slice %106 {offsets = [192, 0], sizes = [16, 32], strides = [1, 1]} : vector<384x32xf32> to vector<16x32xf32>
    %206 = vector.broadcast %107 : vector<1x32xf32> to vector<16x32xf32>
    %207 = arith.mulf %205, %206 : vector<16x32xf32>
    %208 = vector.broadcast %108 : vector<1x32xf32> to vector<16x32xf32>
    %209 = arith.addf %207, %208 : vector<16x32xf32>
    %c128_127 = arith.constant 128 : index
    %c0_128 = arith.constant 0 : index
    %210 = vector.load %arg1[%c128_127, %c0_128] : memref<256x32xbf16, #tpu.memory_space<vmem>>, vector<16x32xbf16>
    %211 = arith.extf %210 : vector<16x32xbf16> to vector<16x32xf32>
    %212 = arith.addf %209, %211 : vector<16x32xf32>
    %cst_129 = arith.constant 0.000000e+00 : f32
    %213 = vector.broadcast %cst_129 : f32 to vector<16x32xf32>
    %214 = arith.maximumf %212, %213 : vector<16x32xf32>
    %215 = arith.truncf %214 : vector<16x32xf32> to vector<16x32xbf16>
    %c128_130 = arith.constant 128 : index
    %c0_131 = arith.constant 0 : index
    %216 = vector.load %arg11[%c128_130, %c0_131] : memref<256x32xbf16, #tpu.memory_space<vmem>>, vector<16x32xbf16>
    tpu.vector_store %arg11[%c128_130, %c0_131], %215 {strides = array<i32>} : memref<256x32xbf16, #tpu.memory_space<vmem>>, vector<16x32xbf16>,
    %217 = vector.extract_strided_slice %106 {offsets = [216, 0], sizes = [16, 32], strides = [1, 1]} : vector<384x32xf32> to vector<16x32xf32>
    %218 = vector.broadcast %107 : vector<1x32xf32> to vector<16x32xf32>
    %219 = arith.mulf %217, %218 : vector<16x32xf32>
    %220 = vector.broadcast %108 : vector<1x32xf32> to vector<16x32xf32>
    %221 = arith.addf %219, %220 : vector<16x32xf32>
    %c144 = arith.constant 144 : index
    %c0_132 = arith.constant 0 : index
    %222 = vector.load %arg1[%c144, %c0_132] : memref<256x32xbf16, #tpu.memory_space<vmem>>, vector<16x32xbf16>
    %223 = arith.extf %222 : vector<16x32xbf16> to vector<16x32xf32>
    %224 = arith.addf %221, %223 : vector<16x32xf32>
    %cst_133 = arith.constant 0.000000e+00 : f32
    %225 = vector.broadcast %cst_133 : f32 to vector<16x32xf32>
    %226 = arith.maximumf %224, %225 : vector<16x32xf32>
    %227 = arith.truncf %226 : vector<16x32xf32> to vector<16x32xbf16>
    %c144_134 = arith.constant 144 : index
    %c0_135 = arith.constant 0 : index
    %228 = vector.load %arg11[%c144_134, %c0_135] : memref<256x32xbf16, #tpu.memory_space<vmem>>, vector<16x32xbf16>
    tpu.vector_store %arg11[%c144_134, %c0_135], %227 {strides = array<i32>} : memref<256x32xbf16, #tpu.memory_space<vmem>>, vector<16x32xbf16>,
    %229 = vector.extract_strided_slice %106 {offsets = [240, 0], sizes = [16, 32], strides = [1, 1]} : vector<384x32xf32> to vector<16x32xf32>
    %230 = vector.broadcast %107 : vector<1x32xf32> to vector<16x32xf32>
    %231 = arith.mulf %229, %230 : vector<16x32xf32>
    %232 = vector.broadcast %108 : vector<1x32xf32> to vector<16x32xf32>
    %233 = arith.addf %231, %232 : vector<16x32xf32>
    %c160 = arith.constant 160 : index
    %c0_136 = arith.constant 0 : index
    %234 = vector.load %arg1[%c160, %c0_136] : memref<256x32xbf16, #tpu.memory_space<vmem>>, vector<16x32xbf16>
    %235 = arith.extf %234 : vector<16x32xbf16> to vector<16x32xf32>
    %236 = arith.addf %233, %235 : vector<16x32xf32>
    %cst_137 = arith.constant 0.000000e+00 : f32
    %237 = vector.broadcast %cst_137 : f32 to vector<16x32xf32>
    %238 = arith.maximumf %236, %237 : vector<16x32xf32>
    %239 = arith.truncf %238 : vector<16x32xf32> to vector<16x32xbf16>
    %c160_138 = arith.constant 160 : index
    %c0_139 = arith.constant 0 : index
    %240 = vector.load %arg11[%c160_138, %c0_139] : memref<256x32xbf16, #tpu.memory_space<vmem>>, vector<16x32xbf16>
    tpu.vector_store %arg11[%c160_138, %c0_139], %239 {strides = array<i32>} : memref<256x32xbf16, #tpu.memory_space<vmem>>, vector<16x32xbf16>,
    %241 = vector.extract_strided_slice %106 {offsets = [264, 0], sizes = [16, 32], strides = [1, 1]} : vector<384x32xf32> to vector<16x32xf32>
    %242 = vector.broadcast %107 : vector<1x32xf32> to vector<16x32xf32>
    %243 = arith.mulf %241, %242 : vector<16x32xf32>
    %244 = vector.broadcast %108 : vector<1x32xf32> to vector<16x32xf32>
    %245 = arith.addf %243, %244 : vector<16x32xf32>
    %c176_140 = arith.constant 176 : index
    %c0_141 = arith.constant 0 : index
    %246 = vector.load %arg1[%c176_140, %c0_141] : memref<256x32xbf16, #tpu.memory_space<vmem>>, vector<16x32xbf16>
    %247 = arith.extf %246 : vector<16x32xbf16> to vector<16x32xf32>
    %248 = arith.addf %245, %247 : vector<16x32xf32>
    %cst_142 = arith.constant 0.000000e+00 : f32
    %249 = vector.broadcast %cst_142 : f32 to vector<16x32xf32>
    %250 = arith.maximumf %248, %249 : vector<16x32xf32>
    %251 = arith.truncf %250 : vector<16x32xf32> to vector<16x32xbf16>
    %c176_143 = arith.constant 176 : index
    %c0_144 = arith.constant 0 : index
    %252 = vector.load %arg11[%c176_143, %c0_144] : memref<256x32xbf16, #tpu.memory_space<vmem>>, vector<16x32xbf16>
    tpu.vector_store %arg11[%c176_143, %c0_144], %251 {strides = array<i32>} : memref<256x32xbf16, #tpu.memory_space<vmem>>, vector<16x32xbf16>,
    %253 = vector.extract_strided_slice %106 {offsets = [288, 0], sizes = [16, 32], strides = [1, 1]} : vector<384x32xf32> to vector<16x32xf32>
    %254 = vector.broadcast %107 : vector<1x32xf32> to vector<16x32xf32>
    %255 = arith.mulf %253, %254 : vector<16x32xf32>
    %256 = vector.broadcast %108 : vector<1x32xf32> to vector<16x32xf32>
    %257 = arith.addf %255, %256 : vector<16x32xf32>
    %c192 = arith.constant 192 : index
    %c0_145 = arith.constant 0 : index
    %258 = vector.load %arg1[%c192, %c0_145] : memref<256x32xbf16, #tpu.memory_space<vmem>>, vector<16x32xbf16>
    %259 = arith.extf %258 : vector<16x32xbf16> to vector<16x32xf32>
    %260 = arith.addf %257, %259 : vector<16x32xf32>
    %cst_146 = arith.constant 0.000000e+00 : f32
    %261 = vector.broadcast %cst_146 : f32 to vector<16x32xf32>
    %262 = arith.maximumf %260, %261 : vector<16x32xf32>
    %263 = arith.truncf %262 : vector<16x32xf32> to vector<16x32xbf16>
    %c192_147 = arith.constant 192 : index
    %c0_148 = arith.constant 0 : index
    %264 = vector.load %arg11[%c192_147, %c0_148] : memref<256x32xbf16, #tpu.memory_space<vmem>>, vector<16x32xbf16>
    tpu.vector_store %arg11[%c192_147, %c0_148], %263 {strides = array<i32>} : memref<256x32xbf16, #tpu.memory_space<vmem>>, vector<16x32xbf16>,
    %265 = vector.extract_strided_slice %106 {offsets = [312, 0], sizes = [16, 32], strides = [1, 1]} : vector<384x32xf32> to vector<16x32xf32>
    %266 = vector.broadcast %107 : vector<1x32xf32> to vector<16x32xf32>
    %267 = arith.mulf %265, %266 : vector<16x32xf32>
    %268 = vector.broadcast %108 : vector<1x32xf32> to vector<16x32xf32>
    %269 = arith.addf %267, %268 : vector<16x32xf32>
    %c208 = arith.constant 208 : index
    %c0_149 = arith.constant 0 : index
    %270 = vector.load %arg1[%c208, %c0_149] : memref<256x32xbf16, #tpu.memory_space<vmem>>, vector<16x32xbf16>
    %271 = arith.extf %270 : vector<16x32xbf16> to vector<16x32xf32>
    %272 = arith.addf %269, %271 : vector<16x32xf32>
    %cst_150 = arith.constant 0.000000e+00 : f32
    %273 = vector.broadcast %cst_150 : f32 to vector<16x32xf32>
    %274 = arith.maximumf %272, %273 : vector<16x32xf32>
    %275 = arith.truncf %274 : vector<16x32xf32> to vector<16x32xbf16>
    %c208_151 = arith.constant 208 : index
    %c0_152 = arith.constant 0 : index
    %276 = vector.load %arg11[%c208_151, %c0_152] : memref<256x32xbf16, #tpu.memory_space<vmem>>, vector<16x32xbf16>
    tpu.vector_store %arg11[%c208_151, %c0_152], %275 {strides = array<i32>} : memref<256x32xbf16, #tpu.memory_space<vmem>>, vector<16x32xbf16>,
    %277 = vector.extract_strided_slice %106 {offsets = [336, 0], sizes = [16, 32], strides = [1, 1]} : vector<384x32xf32> to vector<16x32xf32>
    %278 = vector.broadcast %107 : vector<1x32xf32> to vector<16x32xf32>
    %279 = arith.mulf %277, %278 : vector<16x32xf32>
    %280 = vector.broadcast %108 : vector<1x32xf32> to vector<16x32xf32>
    %281 = arith.addf %279, %280 : vector<16x32xf32>
    %c224_153 = arith.constant 224 : index
    %c0_154 = arith.constant 0 : index
    %282 = vector.load %arg1[%c224_153, %c0_154] : memref<256x32xbf16, #tpu.memory_space<vmem>>, vector<16x32xbf16>
    %283 = arith.extf %282 : vector<16x32xbf16> to vector<16x32xf32>
    %284 = arith.addf %281, %283 : vector<16x32xf32>
    %cst_155 = arith.constant 0.000000e+00 : f32
    %285 = vector.broadcast %cst_155 : f32 to vector<16x32xf32>
    %286 = arith.maximumf %284, %285 : vector<16x32xf32>
    %287 = arith.truncf %286 : vector<16x32xf32> to vector<16x32xbf16>
    %c224_156 = arith.constant 224 : index
    %c0_157 = arith.constant 0 : index
    %288 = vector.load %arg11[%c224_156, %c0_157] : memref<256x32xbf16, #tpu.memory_space<vmem>>, vector<16x32xbf16>
    tpu.vector_store %arg11[%c224_156, %c0_157], %287 {strides = array<i32>} : memref<256x32xbf16, #tpu.memory_space<vmem>>, vector<16x32xbf16>,
    %289 = vector.extract_strided_slice %106 {offsets = [360, 0], sizes = [16, 32], strides = [1, 1]} : vector<384x32xf32> to vector<16x32xf32>
    %290 = vector.broadcast %107 : vector<1x32xf32> to vector<16x32xf32>
    %291 = arith.mulf %289, %290 : vector<16x32xf32>
    %292 = vector.broadcast %108 : vector<1x32xf32> to vector<16x32xf32>
    %293 = arith.addf %291, %292 : vector<16x32xf32>
    %c240 = arith.constant 240 : index
    %c0_158 = arith.constant 0 : index
    %294 = vector.load %arg1[%c240, %c0_158] : memref<256x32xbf16, #tpu.memory_space<vmem>>, vector<16x32xbf16>
    %295 = arith.extf %294 : vector<16x32xbf16> to vector<16x32xf32>
    %296 = arith.addf %293, %295 : vector<16x32xf32>
    %cst_159 = arith.constant 0.000000e+00 : f32
    %297 = vector.broadcast %cst_159 : f32 to vector<16x32xf32>
    %298 = arith.maximumf %296, %297 : vector<16x32xf32>
    %299 = arith.truncf %298 : vector<16x32xf32> to vector<16x32xbf16>
    %c240_160 = arith.constant 240 : index
    %c0_161 = arith.constant 0 : index
    %300 = vector.load %arg11[%c240_160, %c0_161] : memref<256x32xbf16, #tpu.memory_space<vmem>>, vector<16x32xbf16>
    tpu.vector_store %arg11[%c240_160, %c0_161], %299 {strides = array<i32>} : memref<256x32xbf16, #tpu.memory_space<vmem>>, vector<16x32xbf16>,
    return
  }
  func.func @transform_0(%arg0: i32) -> (i32, i32) {
    %c0_i32 = arith.constant 0 : i32
    %c0_i32_0 = arith.constant 0 : i32
    return %arg0, %c0_i32 : i32, i32
  }
  func.func @transform_1(%arg0: i32) -> (i32, i32) {
    %c0_i32 = arith.constant 0 : i32
    %c0_i32_0 = arith.constant 0 : i32
    %c0_i32_1 = arith.constant 0 : i32
    return %c0_i32, %c0_i32_0 : i32, i32
  }
  func.func @transform_2(%arg0: i32) -> (i32, i32, i32) {
    %c0_i32 = arith.constant 0 : i32
    %c0_i32_0 = arith.constant 0 : i32
    %c0_i32_1 = arith.constant 0 : i32
    %c0_i32_2 = arith.constant 0 : i32
    return %c0_i32, %c0_i32_0, %c0_i32_1 : i32, i32, i32
  }
  func.func @transform_3(%arg0: i32) -> (i32, i32) {
    %c0_i32 = arith.constant 0 : i32
    %c0_i32_0 = arith.constant 0 : i32
    %c0_i32_1 = arith.constant 0 : i32
    return %c0_i32, %c0_i32_0 : i32, i32
  }
  func.func @transform_4(%arg0: i32) -> (i32, i32) {
    %c0_i32 = arith.constant 0 : i32
    %c0_i32_0 = arith.constant 0 : i32
    %c0_i32_1 = arith.constant 0 : i32
    return %c0_i32, %c0_i32_0 : i32, i32
  }
  func.func @transform_5(%arg0: i32) -> (i32, i32) {
    %c0_i32 = arith.constant 0 : i32
    %c0_i32_0 = arith.constant 0 : i32
    %c0_i32_1 = arith.constant 0 : i32
    return %c0_i32, %c0_i32_0 : i32, i32
  }
  func.func @transform_6(%arg0: i32) -> (i32, i32) {
    %c0_i32 = arith.constant 0 : i32
    %c0_i32_0 = arith.constant 0 : i32
    %c0_i32_1 = arith.constant 0 : i32
    return %c0_i32, %c0_i32_0 : i32, i32
  }
  func.func @transform_7(%arg0: i32) -> (i32, i32) {
    %c0_i32 = arith.constant 0 : i32
    %c0_i32_0 = arith.constant 0 : i32
    %c0_i32_1 = arith.constant 0 : i32
    return %c0_i32, %c0_i32_0 : i32, i32
  }
  func.func @transform_8(%arg0: i32) -> (i32, i32) {
    %c0_i32 = arith.constant 0 : i32
    %c0_i32_0 = arith.constant 0 : i32
    %c0_i32_1 = arith.constant 0 : i32
    return %c0_i32, %c0_i32_0 : i32, i32
  }
  func.func @transform_9(%arg0: i32) -> (i32, i32) {
    %c0_i32 = arith.constant 0 : i32
    %c0_i32_0 = arith.constant 0 : i32
    %c0_i32_1 = arith.constant 0 : i32
    return %c0_i32, %c0_i32_0 : i32, i32
  }
  func.func @transform_10(%arg0: i32) -> (i32, i32) {
    %c0_i32 = arith.constant 0 : i32
    %c0_i32_0 = arith.constant 0 : i32
    return %arg0, %c0_i32 : i32, i32
  }
}

</mosaic_0001>

<llo_original>
// kernel: bottleneck_forward.1
$region0: #{bottleneck_forward.1}
  #allocation0 [shape = 'u32[]', space=smem, size = 0x4, offset = 0x4, fixed_abs, tag = 'smem constant byte address 0x4 - core index']
  #allocation1 [shape = 'u32[144,128]{1,0:T(1,128)}', space=vmem, size = 0x12000, scoped, tag = 'internal scratch']
  #allocation2 [shape = 'bf16[448,128]{1,0:T(16,128)(2,1)}', space=vmem, size = 0x1c000, scoped, tag = 'scratch operand']
  #allocation3 [shape = 'f32[384,128]{1,0:T(8,128)}', space=vmem, size = 0x30000, scoped, tag = 'scratch operand']
  %s0 = inlined_call_operand.vmem [shape: bf16[512,32], index: 0, kind: input, shape index: {}, may-alias: {0,10}]
  %s1 = inlined_call_operand.vmem [shape: bf16[32,128], index: 1, kind: input, shape index: {}]
  %s2 = inlined_call_operand.vmem [shape: bf16[9,128,128], index: 2, kind: input, shape index: {}]
  %s3 = inlined_call_operand.vmem [shape: bf16[128,32], index: 3, kind: input, shape index: {}]
  %s4 = inlined_call_operand.vmem [shape: f32[1,128], index: 4, kind: input, shape index: {}]
  %s5 = inlined_call_operand.vmem [shape: f32[1,128], index: 5, kind: input, shape index: {}]
  %s6 = inlined_call_operand.vmem [shape: f32[1,128], index: 6, kind: input, shape index: {}]
  %s7 = inlined_call_operand.vmem [shape: f32[1,128], index: 7, kind: input, shape index: {}]
  %s8 = inlined_call_operand.vmem [shape: f32[1,32], index: 8, kind: input, shape index: {}]
  %s9 = inlined_call_operand.vmem [shape: f32[1,32], index: 9, kind: input, shape index: {}]
  %s10 = inlined_call_operand.vmem [shape: bf16[512,32], index: 10, kind: output, shape index: {}, may-alias: {0,10}]
  %s11 = sld [smem:[#allocation0]]
  $region73: #{bottleneck_forward.1} parent=0
    _
  %s13 = ssub.s32 1, %s11
  %s14 = scalar_select 0, %s13, %s11
  loop: start=0, step=1, limit=4
  $region2: #{bottleneck_forward.1} parent=0 // loop_pre_header
    _
  $region3: #{bottleneck_forward.1} parent=0 // loop_header
    %s16 = sphi 0, %s20
    %p17 = scmp.ge.s32.totalorder %s16, 4
    %s26 = sphi 0, %s28
    %s29 = sphi 0, %s26
    %s30 = sphi 0, %s29
    %s46 = sphi 0, %s30
    %s50 = sphi 0, %s50
    %s52 = sphi 0, %s50
    %s53 = sphi 0, %s52
    %s67 = sphi 0, %s53
    %s71 = sphi 0, %s71
    %s73 = sphi 0, %s71
    %s74 = sphi 0, %s73
    %s88 = sphi 0, %s74
    %s92 = sphi 0, %s92
    %s94 = sphi 0, %s92
    %s95 = sphi 0, %s94
    %s109 = sphi 0, %s95
    %s113 = sphi 0, %s113
    %s115 = sphi 0, %s113
    %s116 = sphi 0, %s115
    %s130 = sphi 0, %s116
    %s134 = sphi 0, %s134
    %s136 = sphi 0, %s134
    %s137 = sphi 0, %s136
    %s151 = sphi 0, %s137
    %s155 = sphi 0, %s155
    %s157 = sphi 0, %s155
    %s158 = sphi 0, %s157
    %s172 = sphi 0, %s158
    %s176 = sphi 0, %s176
    %s178 = sphi 0, %s176
    %s179 = sphi 0, %s178
    %s193 = sphi 0, %s179
    %s197 = sphi 0, %s197
    %s199 = sphi 0, %s197
    %s200 = sphi 0, %s199
    %s214 = sphi 0, %s200
    %s218 = sphi 0, %s218
    %s220 = sphi 0, %s218
    %s221 = sphi 0, %s220
    %s235 = sphi 0, %s221
    %s241 = sphi 0, %s243
    %s244 = sphi 0, %s241
    %s245 = sphi 0, %s244
    %s261 = sphi 0, %s245
  $region4: #{bottleneck_forward.1} parent=0 // loop_header_branch
    %19 = sbr.rel (%p17) target = $region8
  $region5: #{bottleneck_forward.1} parent=0 // loop_body
    %s21 = ssub.s32 %s16, 1
    %s22 = ssub.s32 %s16, 2
    %s23 = sadd.s32 %s16, 1
    %s24 = ssub.s32 %s16, %s23
    %p25 = scmp.eq.s32.totalorder %s24, 0
    %s27 = sadd.s32 %s26, 1
    %s28 = scalar_select %p25, %s26, %s27
    %p31 = pneg %p25
    %p32 = scmp.eq.s32.totalorder %s16, 1
    %p33 = por %p31, %p32
    %p34 = scmp.ne.s32.totalorder %s26, %s29
    %p35 = scmp.eq.s32.totalorder %s16, 0
    %p36 = por %p34, %p35
    %p37 = scmp.ne.s32.totalorder %s26, %s29
    %p38 = scmp.eq.s32.totalorder %s21, 1
    %p39 = por %p37, %p38
    %p40 = scmp.ne.s32.totalorder %s29, %s30
    %p41 = scmp.eq.s32.totalorder %s21, 0
    %p42 = por %p40, %p41
    %p43 = scmp.ne.s32.totalorder %s29, %s30
    %p44 = scmp.eq.s32.totalorder %s22, 1
    %p45 = por %p43, %p44
    %p47 = scmp.ne.s32.totalorder %s30, %s46
    %p48 = scmp.eq.s32.totalorder %s22, 0
    %p49 = por %p47, %p48
    %s51 = sadd.s32 %s50, 1
    %p54 = scmp.eq.s32.totalorder %s16, 1
    %p55 = scmp.ne.s32.totalorder %s50, %s52
    %p56 = scmp.eq.s32.totalorder %s16, 0
    %p57 = por %p55, %p56
    %p58 = scmp.ne.s32.totalorder %s50, %s52
    %p59 = scmp.eq.s32.totalorder %s21, 1
    %p60 = por %p58, %p59
    %p61 = scmp.ne.s32.totalorder %s52, %s53
    %p62 = scmp.eq.s32.totalorder %s21, 0
    %p63 = por %p61, %p62
    %p64 = scmp.ne.s32.totalorder %s52, %s53
    %p65 = scmp.eq.s32.totalorder %s22, 1
    %p66 = por %p64, %p65
    %p68 = scmp.ne.s32.totalorder %s53, %s67
    %p69 = scmp.eq.s32.totalorder %s22, 0
    %p70 = por %p68, %p69
    %s72 = sadd.s32 %s71, 1
    %p75 = scmp.eq.s32.totalorder %s16, 1
    %p76 = scmp.ne.s32.totalorder %s71, %s73
    %p77 = scmp.eq.s32.totalorder %s16, 0
    %p78 = por %p76, %p77
    %p79 = scmp.ne.s32.totalorder %s71, %s73
    %p80 = scmp.eq.s32.totalorder %s21, 1
    %p81 = por %p79, %p80
    %p82 = scmp.ne.s32.totalorder %s73, %s74
    %p83 = scmp.eq.s32.totalorder %s21, 0
    %p84 = por %p82, %p83
    %p85 = scmp.ne.s32.totalorder %s73, %s74
    %p86 = scmp.eq.s32.totalorder %s22, 1
    %p87 = por %p85, %p86
    %p89 = scmp.ne.s32.totalorder %s74, %s88
    %p90 = scmp.eq.s32.totalorder %s22, 0
    %p91 = por %p89, %p90
    %s93 = sadd.s32 %s92, 1
    %p96 = scmp.eq.s32.totalorder %s16, 1
    %p97 = scmp.ne.s32.totalorder %s92, %s94
    %p98 = scmp.eq.s32.totalorder %s16, 0
    %p99 = por %p97, %p98
    %p100 = scmp.ne.s32.totalorder %s92, %s94
    %p101 = scmp.eq.s32.totalorder %s21, 1
    %p102 = por %p100, %p101
    %p103 = scmp.ne.s32.totalorder %s94, %s95
    %p104 = scmp.eq.s32.totalorder %s21, 0
    %p105 = por %p103, %p104
    %p106 = scmp.ne.s32.totalorder %s94, %s95
    %p107 = scmp.eq.s32.totalorder %s22, 1
    %p108 = por %p106, %p107
    %p110 = scmp.ne.s32.totalorder %s95, %s109
    %p111 = scmp.eq.s32.totalorder %s22, 0
    %p112 = por %p110, %p111
    %s114 = sadd.s32 %s113, 1
    %p117 = scmp.eq.s32.totalorder %s16, 1
    %p118 = scmp.ne.s32.totalorder %s113, %s115
    %p119 = scmp.eq.s32.totalorder %s16, 0
    %p120 = por %p118, %p119
    %p121 = scmp.ne.s32.totalorder %s113, %s115
    %p122 = scmp.eq.s32.totalorder %s21, 1
    %p123 = por %p121, %p122
    %p124 = scmp.ne.s32.totalorder %s115, %s116
    %p125 = scmp.eq.s32.totalorder %s21, 0
    %p126 = por %p124, %p125
    %p127 = scmp.ne.s32.totalorder %s115, %s116
    %p128 = scmp.eq.s32.totalorder %s22, 1
    %p129 = por %p127, %p128
    %p131 = scmp.ne.s32.totalorder %s116, %s130
    %p132 = scmp.eq.s32.totalorder %s22, 0
    %p133 = por %p131, %p132
    %s135 = sadd.s32 %s134, 1
    %p138 = scmp.eq.s32.totalorder %s16, 1
    %p139 = scmp.ne.s32.totalorder %s134, %s136
    %p140 = scmp.eq.s32.totalorder %s16, 0
    %p141 = por %p139, %p140
    %p142 = scmp.ne.s32.totalorder %s134, %s136
    %p143 = scmp.eq.s32.totalorder %s21, 1
    %p144 = por %p142, %p143
    %p145 = scmp.ne.s32.totalorder %s136, %s137
    %p146 = scmp.eq.s32.totalorder %s21, 0
    %p147 = por %p145, %p146
    %p148 = scmp.ne.s32.totalorder %s136, %s137
    %p149 = scmp.eq.s32.totalorder %s22, 1
    %p150 = por %p148, %p149
    %p152 = scmp.ne.s32.totalorder %s137, %s151
    %p153 = scmp.eq.s32.totalorder %s22, 0
    %p154 = por %p152, %p153
    %s156 = sadd.s32 %s155, 1
    %p159 = scmp.eq.s32.totalorder %s16, 1
    %p160 = scmp.ne.s32.totalorder %s155, %s157
    %p161 = scmp.eq.s32.totalorder %s16, 0
    %p162 = por %p160, %p161
    %p163 = scmp.ne.s32.totalorder %s155, %s157
    %p164 = scmp.eq.s32.totalorder %s21, 1
    %p165 = por %p163, %p164
    %p166 = scmp.ne.s32.totalorder %s157, %s158
    %p167 = scmp.eq.s32.totalorder %s21, 0
    %p168 = por %p166, %p167
    %p169 = scmp.ne.s32.totalorder %s157, %s158
    %p170 = scmp.eq.s32.totalorder %s22, 1
    %p171 = por %p169, %p170
    %p173 = scmp.ne.s32.totalorder %s158, %s172
    %p174 = scmp.eq.s32.totalorder %s22, 0
    %p175 = por %p173, %p174
    %s177 = sadd.s32 %s176, 1
    %p180 = scmp.eq.s32.totalorder %s16, 1
    %p181 = scmp.ne.s32.totalorder %s176, %s178
    %p182 = scmp.eq.s32.totalorder %s16, 0
    %p183 = por %p181, %p182
    %p184 = scmp.ne.s32.totalorder %s176, %s178
    %p185 = scmp.eq.s32.totalorder %s21, 1
    %p186 = por %p184, %p185
    %p187 = scmp.ne.s32.totalorder %s178, %s179
    %p188 = scmp.eq.s32.totalorder %s21, 0
    %p189 = por %p187, %p188
    %p190 = scmp.ne.s32.totalorder %s178, %s179
    %p191 = scmp.eq.s32.totalorder %s22, 1
    %p192 = por %p190, %p191
    %p194 = scmp.ne.s32.totalorder %s179, %s193
    %p195 = scmp.eq.s32.totalorder %s22, 0
    %p196 = por %p194, %p195
    %s198 = sadd.s32 %s197, 1
    %p201 = scmp.eq.s32.totalorder %s16, 1
    %p202 = scmp.ne.s32.totalorder %s197, %s199
    %p203 = scmp.eq.s32.totalorder %s16, 0
    %p204 = por %p202, %p203
    %p205 = scmp.ne.s32.totalorder %s197, %s199
    %p206 = scmp.eq.s32.totalorder %s21, 1
    %p207 = por %p205, %p206
    %p208 = scmp.ne.s32.totalorder %s199, %s200
    %p209 = scmp.eq.s32.totalorder %s21, 0
    %p210 = por %p208, %p209
    %p211 = scmp.ne.s32.totalorder %s199, %s200
    %p212 = scmp.eq.s32.totalorder %s22, 1
    %p213 = por %p211, %p212
    %p215 = scmp.ne.s32.totalorder %s200, %s214
    %p216 = scmp.eq.s32.totalorder %s22, 0
    %p217 = por %p215, %p216
    %s219 = sadd.s32 %s218, 1
    %p222 = scmp.eq.s32.totalorder %s16, 1
    %p223 = scmp.ne.s32.totalorder %s218, %s220
    %p224 = scmp.eq.s32.totalorder %s16, 0
    %p225 = por %p223, %p224
    %p226 = scmp.ne.s32.totalorder %s218, %s220
    %p227 = scmp.eq.s32.totalorder %s21, 1
    %p228 = por %p226, %p227
    %p229 = scmp.ne.s32.totalorder %s220, %s221
    %p230 = scmp.eq.s32.totalorder %s21, 0
    %p231 = por %p229, %p230
    %p232 = scmp.ne.s32.totalorder %s220, %s221
    %p233 = scmp.eq.s32.totalorder %s22, 1
    %p234 = por %p232, %p233
    %p236 = scmp.ne.s32.totalorder %s221, %s235
    %p237 = scmp.eq.s32.totalorder %s22, 0
    %p238 = por %p236, %p237
    %s239 = ssub.s32 %s16, %s23
    %p240 = scmp.eq.s32.totalorder %s239, 0
    %s242 = sadd.s32 %s241, 1
    %s243 = scalar_select %p240, %s241, %s242
    %p246 = pneg %p240
    %p247 = scmp.eq.s32.totalorder %s16, 1
    %p248 = por %p246, %p247
    %p249 = scmp.ne.s32.totalorder %s241, %s244
    %p250 = scmp.eq.s32.totalorder %s16, 0
    %p251 = por %p249, %p250
    %p252 = scmp.ne.s32.totalorder %s241, %s244
    %p253 = scmp.eq.s32.totalorder %s21, 1
    %p254 = por %p252, %p253
    %p255 = scmp.ne.s32.totalorder %s244, %s245
    %p256 = scmp.eq.s32.totalorder %s21, 0
    %p257 = por %p255, %p256
    %p258 = scmp.ne.s32.totalorder %s244, %s245
    %p259 = scmp.eq.s32.totalorder %s22, 1
    %p260 = por %p258, %p259
    %p262 = scmp.ne.s32.totalorder %s245, %s261
    %p263 = scmp.eq.s32.totalorder %s22, 0
    %p264 = por %p262, %p263
    %p265 = scmp.le.s32.totalorder 1, %s16
    %p266 = scmp.lt.s32.totalorder %s16, 3
    %p267 = pnand %p265, %p266
    %p268 = pneg %p267
    // Predicated region
    $region9: #{bottleneck_forward.1} parent=5 // pred_check
      _
    $region10: #{bottleneck_forward.1} parent=5 // pred_check_branch
      %270 = sbr.rel (%p267) target = $region12
    $region11: #{bottleneck_forward.1} parent=5 // pred_region
      %s271 = ssub.s32 %s16, 1
      // Predicated region
      $region13: #{bottleneck_forward.1} parent=11 // pred_check
        %p272 = pneg %p63
      $region14: #{bottleneck_forward.1} parent=11 // pred_check_branch
        %274 = sbr.rel (%p272) target = $region16
      $region15: #{bottleneck_forward.1} parent=11 // pred_region
        _
      $region16: #{bottleneck_forward.1} parent=11 // pred_fallthru
        _
      // Predicated region
      $region17: #{bottleneck_forward.1} parent=11 // pred_check
        %p275 = pneg %p84
      $region18: #{bottleneck_forward.1} parent=11 // pred_check_branch
        %277 = sbr.rel (%p275) target = $region20
      $region19: #{bottleneck_forward.1} parent=11 // pred_region
        _
      $region20: #{bottleneck_forward.1} parent=11 // pred_fallthru
        _
      // Predicated region
      $region21: #{bottleneck_forward.1} parent=11 // pred_check
        %p278 = pneg %p105
      $region22: #{bottleneck_forward.1} parent=11 // pred_check_branch
        %280 = sbr.rel (%p278) target = $region24
      $region23: #{bottleneck_forward.1} parent=11 // pred_region
        _
      $region24: #{bottleneck_forward.1} parent=11 // pred_fallthru
        _
      // Predicated region
      $region25: #{bottleneck_forward.1} parent=11 // pred_check
        %p281 = pneg %p126
      $region26: #{bottleneck_forward.1} parent=11 // pred_check_branch
        %283 = sbr.rel (%p281) target = $region28
      $region27: #{bottleneck_forward.1} parent=11 // pred_region
        _
      $region28: #{bottleneck_forward.1} parent=11 // pred_fallthru
        _
      // Predicated region
      $region29: #{bottleneck_forward.1} parent=11 // pred_check
        %p284 = pneg %p147
      $region30: #{bottleneck_forward.1} parent=11 // pred_check_branch
        %286 = sbr.rel (%p284) target = $region32
      $region31: #{bottleneck_forward.1} parent=11 // pred_region
        _
      $region32: #{bottleneck_forward.1} parent=11 // pred_fallthru
        _
      // Predicated region
      $region33: #{bottleneck_forward.1} parent=11 // pred_check
        %p287 = pneg %p168
      $region34: #{bottleneck_forward.1} parent=11 // pred_check_branch
        %289 = sbr.rel (%p287) target = $region36
      $region35: #{bottleneck_forward.1} parent=11 // pred_region
        _
      $region36: #{bottleneck_forward.1} parent=11 // pred_fallthru
        _
      // Predicated region
      $region37: #{bottleneck_forward.1} parent=11 // pred_check
        %p290 = pneg %p189
      $region38: #{bottleneck_forward.1} parent=11 // pred_check_branch
        %292 = sbr.rel (%p290) target = $region40
      $region39: #{bottleneck_forward.1} parent=11 // pred_region
        _
      $region40: #{bottleneck_forward.1} parent=11 // pred_fallthru
        _
      // Predicated region
      $region41: #{bottleneck_forward.1} parent=11 // pred_check
        %p293 = pneg %p210
      $region42: #{bottleneck_forward.1} parent=11 // pred_check_branch
        %295 = sbr.rel (%p293) target = $region44
      $region43: #{bottleneck_forward.1} parent=11 // pred_region
        _
      $region44: #{bottleneck_forward.1} parent=11 // pred_fallthru
        _
      // Predicated region
      $region45: #{bottleneck_forward.1} parent=11 // pred_check
        %p296 = pneg %p231
      $region46: #{bottleneck_forward.1} parent=11 // pred_check_branch
        %298 = sbr.rel (%p296) target = $region48
      $region47: #{bottleneck_forward.1} parent=11 // pred_region
        _
      $region48: #{bottleneck_forward.1} parent=11 // pred_fallthru
        _
    $region12: #{bottleneck_forward.1} parent=5 // pred_fallthru
      _
    %p299 = scmp.lt.s32.totalorder %s16, 2
    // Predicated region
    $region49: #{bottleneck_forward.1} parent=5 // pred_check
      %p300 = pneg %p299
    $region50: #{bottleneck_forward.1} parent=5 // pred_check_branch
      %302 = sbr.rel (%p300) target = $region52
    $region51: #{bottleneck_forward.1} parent=5 // pred_region
      // Predicated region
      $region53: #{bottleneck_forward.1} parent=51 // pred_check
        %p303 = pneg %p36
      $region54: #{bottleneck_forward.1} parent=51 // pred_check_branch
        %305 = sbr.rel (%p303) target = $region56
      $region55: #{bottleneck_forward.1} parent=51 // pred_region
        %s306 = smul.u32 32, %s16
        %p307 = scmp.lt.s32.totalorder %s306, 63
        %s308 = scalar_select %p307, %s306, 63
        %s309 = smul.addr %s308, 4
        %s310 = scalar_lea.vmem %s0, %s309
        %s311 = smul.u32 32, %s16
      $region56: #{bottleneck_forward.1} parent=51 // pred_fallthru
        _
    $region52: #{bottleneck_forward.1} parent=5 // pred_fallthru
      _
    %p312 = scmp.le.s32.totalorder 1, %s16
    %p313 = scmp.lt.s32.totalorder %s16, 3
    %p314 = pnand %p312, %p313
    %p315 = pneg %p314
    // Predicated region
    $region57: #{bottleneck_forward.1} parent=5 // pred_check
      _
    $region58: #{bottleneck_forward.1} parent=5 // pred_check_branch
      %317 = sbr.rel (%p314) target = $region60
    $region59: #{bottleneck_forward.1} parent=5 // pred_region
      %s318 = ssub.s32 %s16, 1
      %s319 = smul.u32 32, %s21
      %p320 = scmp.lt.s32.totalorder %s319, 63
      %s321 = scalar_select %p320, %s319, 63
      %s322 = smul.addr %s321, 4
      %s323 = scalar_lea.vmem %s0, %s322
      %p324 = pneg %p42
      %p325 = pneg %p39
      %p326 = pneg %p63
      %p327 = pneg %p60
      %p328 = pneg %p84
      %p329 = pneg %p81
      %p330 = pneg %p105
      %p331 = pneg %p102
      %p332 = pneg %p126
      %p333 = pneg %p123
      %p334 = pneg %p147
      %p335 = pneg %p144
      %p336 = pneg %p168
      %p337 = pneg %p165
      %p338 = pneg %p189
      %p339 = pneg %p186
      %p340 = pneg %p210
      %p341 = pneg %p207
      %p342 = pneg %p231
      %p343 = pneg %p228
      %p344 = pneg %p257
      %p345 = pneg %p254
      %s346 = smul.u32 32, %s21
      %p347 = scmp.lt.s32.totalorder %s346, 63
      %s348 = scalar_select %p347, %s346, 63
      %s349 = smul.addr %s348, 4
      %s350 = scalar_lea.vmem %s10, %s349
      %s351 = smul.u32 32, %s21
      %p352 = scmp.lt.s32.totalorder %s351, 63
      %s353 = scalar_select %p352, %s351, 63
      %s354 = smul.addr %s353, 4
      %s355 = scalar_lea.vmem %s0, %s354
      %s356 = smul.u32 32, %s21
      %s357 = smul.u32 32, %s21
      %p358 = scmp.lt.s32.totalorder %s357, 63
      %s359 = scalar_select %p358, %s357, 63
      %s360 = smul.addr %s359, 4
      %s361 = scalar_lea.vmem %s10, %s360
      %s362 = smul.u32 32, %s21
      %v364 = vld [vmem:[%s355] sm:$0xf]
      %v365 = vld [vmem:[%s355 + $0x4] sm:$0xf]
      %v366 = vld [vmem:[%s355 + $0x8] sm:$0xf]
      %v367 = vld [vmem:[%s355 + $0xc] sm:$0xf]
      %v368 = vld [vmem:[%s355 + $0x10] sm:$0xf]
      %v369 = vld [vmem:[%s355 + $0x14] sm:$0xf]
      %v370 = vld [vmem:[%s355 + $0x18] sm:$0xf]
      %v371 = vld [vmem:[%s355 + $0x1c] sm:$0xf]
      %v372 = vld [vmem:[%s355 + $0x20] sm:$0xf]
      %v373 = vld [vmem:[%s355 + $0x24] sm:$0xf]
      %v374 = vld [vmem:[%s355 + $0x28] sm:$0xf]
      %v375 = vld [vmem:[%s355 + $0x2c] sm:$0xf]
      %v376 = vld [vmem:[%s355 + $0x30] sm:$0xf]
      %v377 = vld [vmem:[%s355 + $0x34] sm:$0xf]
      %v378 = vld [vmem:[%s355 + $0x38] sm:$0xf]
      %v379 = vld [vmem:[%s355 + $0x3c] sm:$0xf]
      %v380 = vld [vmem:[%s355 + $0x40] sm:$0xf]
      %v381 = vld [vmem:[%s355 + $0x44] sm:$0xf]
      %v382 = vld [vmem:[%s355 + $0x48] sm:$0xf]
      %v383 = vld [vmem:[%s355 + $0x4c] sm:$0xf]
      %v384 = vld [vmem:[%s355 + $0x50] sm:$0xf]
      %v385 = vld [vmem:[%s355 + $0x54] sm:$0xf]
      %v386 = vld [vmem:[%s355 + $0x58] sm:$0xf]
      %v387 = vld [vmem:[%s355 + $0x5c] sm:$0xf]
      %v388 = vld [vmem:[%s355 + $0x60] sm:$0xf]
      %v389 = vld [vmem:[%s355 + $0x64] sm:$0xf]
      %v390 = vld [vmem:[%s355 + $0x68] sm:$0xf]
      %v391 = vld [vmem:[%s355 + $0x6c] sm:$0xf]
      %v392 = vld [vmem:[%s355 + $0x70] sm:$0xf]
      %v393 = vld [vmem:[%s355 + $0x74] sm:$0xf]
      %v394 = vld [vmem:[%s355 + $0x78] sm:$0xf]
      %v395 = vld [vmem:[%s355 + $0x7c] sm:$0xf]
      %v396 = vld [vmem:[%s1] sm:$0xf]
      %v397 = vld [vmem:[%s1 + $0x4] sm:$0xf]
      %v398 = vld [vmem:[%s1 + $0x8] sm:$0xf]
      %v399 = vld [vmem:[%s1 + $0xc] sm:$0xf]
      %v432 = vunpack.c.l.b16 %v364
      %v433 = vunpack.c.l.b16 %v365
      %v434 = vunpack.c.l.b16 %v366
      %v435 = vunpack.c.l.b16 %v367
      %v436 = vunpack.c.l.b16 %v368
      %v437 = vunpack.c.l.b16 %v369
      %v438 = vunpack.c.l.b16 %v370
      %v439 = vunpack.c.l.b16 %v371
      %v440 = vunpack.c.l.b16 %v372
      %v441 = vunpack.c.l.b16 %v373
      %v442 = vunpack.c.l.b16 %v374
      %v443 = vunpack.c.l.b16 %v375
      %v444 = vunpack.c.l.b16 %v376
      %v445 = vunpack.c.l.b16 %v377
      %v446 = vunpack.c.l.b16 %v378
      %v447 = vunpack.c.l.b16 %v379
      %v448 = vunpack.c.l.b16 %v380
      %v449 = vunpack.c.l.b16 %v381
      %v450 = vunpack.c.l.b16 %v382
      %v451 = vunpack.c.l.b16 %v383
      %v452 = vunpack.c.l.b16 %v384
      %v453 = vunpack.c.l.b16 %v385
      %v454 = vunpack.c.l.b16 %v386
      %v455 = vunpack.c.l.b16 %v387
      %v456 = vunpack.c.l.b16 %v388
      %v457 = vunpack.c.l.b16 %v389
      %v458 = vunpack.c.l.b16 %v390
      %v459 = vunpack.c.l.b16 %v391
      %v460 = vunpack.c.l.b16 %v392
      %v461 = vunpack.c.l.b16 %v393
      %v462 = vunpack.c.l.b16 %v394
      %v463 = vunpack.c.l.b16 %v395
      %v464 = vpack.c.b16 %v433, %v432
      %v465 = vpack.c.b16 %v435, %v434
      %v466 = vpack.c.b16 %v437, %v436
      %v467 = vpack.c.b16 %v439, %v438
      %v468 = vpack.c.b16 %v441, %v440
      %v469 = vpack.c.b16 %v443, %v442
      %v470 = vpack.c.b16 %v445, %v444
      %v471 = vpack.c.b16 %v447, %v446
      %v472 = vpack.c.b16 %v449, %v448
      %v473 = vpack.c.b16 %v451, %v450
      %v474 = vpack.c.b16 %v453, %v452
      %v475 = vpack.c.b16 %v455, %v454
      %v476 = vpack.c.b16 %v457, %v456
      %v477 = vpack.c.b16 %v459, %v458
      %v478 = vpack.c.b16 %v461, %v460
      %v479 = vpack.c.b16 %v463, %v462
      %v484 = vunpack.c.l.b16 %v396
      %v485 = vunpack.c.l.b16 %v397
      %v486 = vunpack.c.l.b16 %v398
      %v487 = vunpack.c.l.b16 %v399
      %v488 = vpack.c.b16 %v485, %v484
      %v489 = vpack.c.b16 %v487, %v486
      %vm492 = vcmask 261120
      %v494 = vsel %vm492, %v464, 0
      %v497 = vsel %vm492, %v465, 0
      %v500 = vsel %vm492, %v466, 0
      %v503 = vsel %vm492, %v467, 0
      %v506 = vsel %vm492, %v468, 0
      %v509 = vsel %vm492, %v469, 0
      %v512 = vsel %vm492, %v470, 0
      %v515 = vsel %vm492, %v471, 0
      %v518 = vsel %vm492, %v472, 0
      %v521 = vsel %vm492, %v473, 0
      %v524 = vsel %vm492, %v474, 0
      %v527 = vsel %vm492, %v475, 0
      %v530 = vsel %vm492, %v476, 0
      %v533 = vsel %vm492, %v477, 0
      %v536 = vsel %vm492, %v478, 0
      %v539 = vsel %vm492, %v479, 0
      %541 = vmatprep.subr.bf16.mxu0 0
      %542 = vmatpush1.bf16.msra.mxu0 %v488
      %543 = vmatprep.subr.bf16.mxu0 0
      %544 = vmatpush1.bf16.msra.mxu0 %v489
      %545 = vmatprep.subr.bf16.mxu0 0
      %546 = vmatpush1.bf16.msra.mxu0 0
      %547 = vmatprep.subr.bf16.mxu0 0
      %548 = vmatpush1.bf16.msra.mxu0 0
      %549 = vmatprep.subr.bf16.mxu0 0
      %550 = vmatpush1.bf16.msra.mxu0 0
      %551 = vmatprep.subr.bf16.mxu0 0
      %552 = vmatpush1.bf16.msra.mxu0 0
      %553 = vmatprep.subr.bf16.mxu0 0
      %554 = vmatpush1.bf16.msra.mxu0 0
      %555 = vmatprep.subr.bf16.mxu0 0
      %556 = vmatpush1.bf16.msra.mxu0 0
      %557 = vmatprep.subr.bf16.mxu0 0
      %558 = vmatpush1.bf16.msra.mxu0 0
      %559 = vmatprep.subr.bf16.mxu0 0
      %560 = vmatpush1.bf16.msra.mxu0 0
      %561 = vmatprep.subr.bf16.mxu0 0
      %562 = vmatpush1.bf16.msra.mxu0 0
      %563 = vmatprep.subr.bf16.mxu0 0
      %564 = vmatpush1.bf16.msra.mxu0 0
      %565 = vmatprep.subr.bf16.mxu0 0
      %566 = vmatpush1.bf16.msra.mxu0 0
      %567 = vmatprep.subr.bf16.mxu0 0
      %568 = vmatpush1.bf16.msra.mxu0 0
      %569 = vmatprep.subr.bf16.mxu0 0
      %570 = vmatpush1.bf16.msra.mxu0 0
      %571 = vmatprep.subr.bf16.mxu0 0
      %572 = vmatpush1.bf16.msra.mxu0 0
      %573 = vmatprep.mubr.bf16.mxu0 0
      %574 = vmatmul.mubr.bf16.gmra.mrb[0].mxu0 %v494
      %v575 = vpop.f32.mrb[0].mxu0
      %v576 = vadd.f32 0.0, %v575
      %v577 = vpop.f32.mrb[0].mxu0
      %v578 = vpop.f32.mrb[0].mxu0
      %v579 = vadd.f32 0.0, %v578
      %v580 = vpop.f32.mrb[0].mxu0
      %581 = vmatprep.mubr.bf16.mxu0 0
      %582 = vmatmul.mubr.bf16.gmra.mrb[0].mxu0 %v497
      %v583 = vpop.f32.mrb[0].mxu0
      %v584 = vadd.f32 0.0, %v583
      %v585 = vpop.f32.mrb[0].mxu0
      %v586 = vpop.f32.mrb[0].mxu0
      %v587 = vadd.f32 0.0, %v586
      %v588 = vpop.f32.mrb[0].mxu0
      %589 = vmatprep.mubr.bf16.mxu0 0
      %590 = vmatmul.mubr.bf16.gmra.mrb[0].mxu0 %v500
      %v591 = vpop.f32.mrb[0].mxu0
      %v592 = vadd.f32 0.0, %v591
      %v593 = vpop.f32.mrb[0].mxu0
      %v594 = vpop.f32.mrb[0].mxu0
      %v595 = vadd.f32 0.0, %v594
      %v596 = vpop.f32.mrb[0].mxu0
      %597 = vmatprep.mubr.bf16.mxu0 0
      %598 = vmatmul.mubr.bf16.gmra.mrb[0].mxu0 %v503
      %v599 = vpop.f32.mrb[0].mxu0
      %v600 = vadd.f32 0.0, %v599
      %v601 = vpop.f32.mrb[0].mxu0
      %v602 = vpop.f32.mrb[0].mxu0
      %v603 = vadd.f32 0.0, %v602
      %v604 = vpop.f32.mrb[0].mxu0
      %605 = vmatprep.mubr.bf16.mxu0 0
      %606 = vmatmul.mubr.bf16.gmra.mrb[0].mxu0 %v506
      %v607 = vpop.f32.mrb[0].mxu0
      %v608 = vadd.f32 0.0, %v607
      %v609 = vpop.f32.mrb[0].mxu0
      %v610 = vpop.f32.mrb[0].mxu0
      %v611 = vadd.f32 0.0, %v610
      %v612 = vpop.f32.mrb[0].mxu0
      %613 = vmatprep.mubr.bf16.mxu0 0
      %614 = vmatmul.mubr.bf16.gmra.mrb[0].mxu0 %v509
      %v615 = vpop.f32.mrb[0].mxu0
      %v616 = vadd.f32 0.0, %v615
      %v617 = vpop.f32.mrb[0].mxu0
      %v618 = vpop.f32.mrb[0].mxu0
      %v619 = vadd.f32 0.0, %v618
      %v620 = vpop.f32.mrb[0].mxu0
      %621 = vmatprep.mubr.bf16.mxu0 0
      %622 = vmatmul.mubr.bf16.gmra.mrb[0].mxu0 %v512
      %v623 = vpop.f32.mrb[0].mxu0
      %v624 = vadd.f32 0.0, %v623
      %v625 = vpop.f32.mrb[0].mxu0
      %v626 = vpop.f32.mrb[0].mxu0
      %v627 = vadd.f32 0.0, %v626
      %v628 = vpop.f32.mrb[0].mxu0
      %629 = vmatprep.mubr.bf16.mxu0 0
      %630 = vmatmul.mubr.bf16.gmra.mrb[0].mxu0 %v515
      %v631 = vpop.f32.mrb[0].mxu0
      %v632 = vadd.f32 0.0, %v631
      %v633 = vpop.f32.mrb[0].mxu0
      %v634 = vpop.f32.mrb[0].mxu0
      %v635 = vadd.f32 0.0, %v634
      %v636 = vpop.f32.mrb[0].mxu0
      %637 = vmatprep.mubr.bf16.mxu0 0
      %638 = vmatmul.mubr.bf16.gmra.mrb[0].mxu0 %v518
      %v639 = vpop.f32.mrb[0].mxu0
      %v640 = vadd.f32 0.0, %v639
      %v641 = vpop.f32.mrb[0].mxu0
      %v642 = vpop.f32.mrb[0].mxu0
      %v643 = vadd.f32 0.0, %v642
      %v644 = vpop.f32.mrb[0].mxu0
      %645 = vmatprep.mubr.bf16.mxu0 0
      %646 = vmatmul.mubr.bf16.gmra.mrb[0].mxu0 %v521
      %v647 = vpop.f32.mrb[0].mxu0
      %v648 = vadd.f32 0.0, %v647
      %v649 = vpop.f32.mrb[0].mxu0
      %v650 = vpop.f32.mrb[0].mxu0
      %v651 = vadd.f32 0.0, %v650
      %v652 = vpop.f32.mrb[0].mxu0
      %653 = vmatprep.mubr.bf16.mxu0 0
      %654 = vmatmul.mubr.bf16.gmra.mrb[0].mxu0 %v524
      %v655 = vpop.f32.mrb[0].mxu0
      %v656 = vadd.f32 0.0, %v655
      %v657 = vpop.f32.mrb[0].mxu0
      %v658 = vpop.f32.mrb[0].mxu0
      %v659 = vadd.f32 0.0, %v658
      %v660 = vpop.f32.mrb[0].mxu0
      %661 = vmatprep.mubr.bf16.mxu0 0
      %662 = vmatmul.mubr.bf16.gmra.mrb[0].mxu0 %v527
      %v663 = vpop.f32.mrb[0].mxu0
      %v664 = vadd.f32 0.0, %v663
      %v665 = vpop.f32.mrb[0].mxu0
      %v666 = vpop.f32.mrb[0].mxu0
      %v667 = vadd.f32 0.0, %v666
      %v668 = vpop.f32.mrb[0].mxu0
      %669 = vmatprep.mubr.bf16.mxu0 0
      %670 = vmatmul.mubr.bf16.gmra.mrb[0].mxu0 %v530
      %v671 = vpop.f32.mrb[0].mxu0
      %v672 = vadd.f32 0.0, %v671
      %v673 = vpop.f32.mrb[0].mxu0
      %v674 = vpop.f32.mrb[0].mxu0
      %v675 = vadd.f32 0.0, %v674
      %v676 = vpop.f32.mrb[0].mxu0
      %677 = vmatprep.mubr.bf16.mxu0 0
      %678 = vmatmul.mubr.bf16.gmra.mrb[0].mxu0 %v533
      %v679 = vpop.f32.mrb[0].mxu0
      %v680 = vadd.f32 0.0, %v679
      %v681 = vpop.f32.mrb[0].mxu0
      %v682 = vpop.f32.mrb[0].mxu0
      %v683 = vadd.f32 0.0, %v682
      %v684 = vpop.f32.mrb[0].mxu0
      %685 = vmatprep.mubr.bf16.mxu0 0
      %686 = vmatmul.mubr.bf16.gmra.mrb[0].mxu0 %v536
      %v687 = vpop.f32.mrb[0].mxu0
      %v688 = vadd.f32 0.0, %v687
      %v689 = vpop.f32.mrb[0].mxu0
      %v690 = vpop.f32.mrb[0].mxu0
      %v691 = vadd.f32 0.0, %v690
      %v692 = vpop.f32.mrb[0].mxu0
      %693 = vmatprep.mubr.bf16.mxu0 0
      %694 = vmatmul.mubr.bf16.gmra.mrb[0].mxu0 %v539
      %v695 = vpop.f32.mrb[0].mxu0
      %v696 = vadd.f32 0.0, %v695
      %v697 = vpop.f32.mrb[0].mxu0
      %v698 = vpop.f32.mrb[0].mxu0
      %v699 = vadd.f32 0.0, %v698
      %v700 = vpop.f32.mrb[0].mxu0
      %701 = vdwg.mxu0
      %v702 = vld [vmem:[%s4] sm:$0x1]
      %v704 = vlaneseq
      %v705 = vshrl.u32 %v704, 7
      %v706 = vsub.s32 0, %v705
      %v707 = vrot.slane %v702, %v706
      %v709 = vmul.f32 %v576, %v707
      %v710 = vmul.f32 %v579, %v707
      %v711 = vmul.f32 %v584, %v707
      %v712 = vmul.f32 %v587, %v707
      %v713 = vmul.f32 %v592, %v707
      %v714 = vmul.f32 %v595, %v707
      %v715 = vmul.f32 %v600, %v707
      %v716 = vmul.f32 %v603, %v707
      %v717 = vmul.f32 %v608, %v707
      %v718 = vmul.f32 %v611, %v707
      %v719 = vmul.f32 %v616, %v707
      %v720 = vmul.f32 %v619, %v707
      %v721 = vmul.f32 %v624, %v707
      %v722 = vmul.f32 %v627, %v707
      %v723 = vmul.f32 %v632, %v707
      %v724 = vmul.f32 %v635, %v707
      %v725 = vmul.f32 %v640, %v707
      %v726 = vmul.f32 %v643, %v707
      %v727 = vmul.f32 %v648, %v707
      %v728 = vmul.f32 %v651, %v707
      %v729 = vmul.f32 %v656, %v707
      %v730 = vmul.f32 %v659, %v707
      %v731 = vmul.f32 %v664, %v707
      %v732 = vmul.f32 %v667, %v707
      %v733 = vmul.f32 %v672, %v707
      %v734 = vmul.f32 %v675, %v707
      %v735 = vmul.f32 %v680, %v707
      %v736 = vmul.f32 %v683, %v707
      %v737 = vmul.f32 %v688, %v707
      %v738 = vmul.f32 %v691, %v707
      %v739 = vmul.f32 %v696, %v707
      %v740 = vmul.f32 %v699, %v707
      %v741 = vld [vmem:[%s5] sm:$0x1]
      %v743 = vlaneseq
      %v744 = vshrl.u32 %v743, 7
      %v745 = vsub.s32 0, %v744
      %v746 = vrot.slane %v741, %v745
      %v748 = vadd.f32 %v709, %v746
      %v749 = vadd.f32 %v710, %v746
      %v750 = vadd.f32 %v711, %v746
      %v751 = vadd.f32 %v712, %v746
      %v752 = vadd.f32 %v713, %v746
      %v753 = vadd.f32 %v714, %v746
      %v754 = vadd.f32 %v715, %v746
      %v755 = vadd.f32 %v716, %v746
      %v756 = vadd.f32 %v717, %v746
      %v757 = vadd.f32 %v718, %v746
      %v758 = vadd.f32 %v719, %v746
      %v759 = vadd.f32 %v720, %v746
      %v760 = vadd.f32 %v721, %v746
      %v761 = vadd.f32 %v722, %v746
      %v762 = vadd.f32 %v723, %v746
      %v763 = vadd.f32 %v724, %v746
      %v764 = vadd.f32 %v725, %v746
      %v765 = vadd.f32 %v726, %v746
      %v766 = vadd.f32 %v727, %v746
      %v767 = vadd.f32 %v728, %v746
      %v768 = vadd.f32 %v729, %v746
      %v769 = vadd.f32 %v730, %v746
      %v770 = vadd.f32 %v731, %v746
      %v771 = vadd.f32 %v732, %v746
      %v772 = vadd.f32 %v733, %v746
      %v773 = vadd.f32 %v734, %v746
      %v774 = vadd.f32 %v735, %v746
      %v775 = vadd.f32 %v736, %v746
      %v776 = vadd.f32 %v737, %v746
      %v777 = vadd.f32 %v738, %v746
      %v778 = vadd.f32 %v739, %v746
      %v779 = vadd.f32 %v740, %v746
      %v780 = vmax.f32 %v748, 0.0
      %v781 = vmax.f32 %v749, 0.0
      %v782 = vmax.f32 %v750, 0.0
      %v783 = vmax.f32 %v751, 0.0
      %v784 = vmax.f32 %v752, 0.0
      %v785 = vmax.f32 %v753, 0.0
      %v786 = vmax.f32 %v754, 0.0
      %v787 = vmax.f32 %v755, 0.0
      %v788 = vmax.f32 %v756, 0.0
      %v789 = vmax.f32 %v757, 0.0
      %v790 = vmax.f32 %v758, 0.0
      %v791 = vmax.f32 %v759, 0.0
      %v792 = vmax.f32 %v760, 0.0
      %v793 = vmax.f32 %v761, 0.0
      %v794 = vmax.f32 %v762, 0.0
      %v795 = vmax.f32 %v763, 0.0
      %v796 = vmax.f32 %v764, 0.0
      %v797 = vmax.f32 %v765, 0.0
      %v798 = vmax.f32 %v766, 0.0
      %v799 = vmax.f32 %v767, 0.0
      %v800 = vmax.f32 %v768, 0.0
      %v801 = vmax.f32 %v769, 0.0
      %v802 = vmax.f32 %v770, 0.0
      %v803 = vmax.f32 %v771, 0.0
      %v804 = vmax.f32 %v772, 0.0
      %v805 = vmax.f32 %v773, 0.0
      %v806 = vmax.f32 %v774, 0.0
      %v807 = vmax.f32 %v775, 0.0
      %v808 = vmax.f32 %v776, 0.0
      %v809 = vmax.f32 %v777, 0.0
      %v810 = vmax.f32 %v778, 0.0
      %v811 = vmax.f32 %v779, 0.0
      %v812 = vpack.c.bf16 %v781, %v780
      %v813 = vpack.c.bf16 %v783, %v782
      %v814 = vpack.c.bf16 %v785, %v784
      %v815 = vpack.c.bf16 %v787, %v786
      %v816 = vpack.c.bf16 %v789, %v788
      %v817 = vpack.c.bf16 %v791, %v790
      %v818 = vpack.c.bf16 %v793, %v792
      %v819 = vpack.c.bf16 %v795, %v794
      %v820 = vpack.c.bf16 %v797, %v796
      %v821 = vpack.c.bf16 %v799, %v798
      %v822 = vpack.c.bf16 %v801, %v800
      %v823 = vpack.c.bf16 %v803, %v802
      %v824 = vpack.c.bf16 %v805, %v804
      %v825 = vpack.c.bf16 %v807, %v806
      %v826 = vpack.c.bf16 %v809, %v808
      %v827 = vpack.c.bf16 %v811, %v810
      %828 = vst [vmem:[#allocation2] sm:$0xff] 0
      %829 = vst [vmem:[#allocation2 + $0x8] sm:$0xff] 0
      %830 = vst [vmem:[#allocation2 + $0x10] sm:$0xff] 0
      %831 = vst [vmem:[#allocation2 + $0x18] sm:$0xff] 0
      %832 = vst [vmem:[#allocation2 + $0x20] sm:$0xff] 0
      %833 = vst [vmem:[#allocation2 + $0x28] sm:$0xff] 0
      %834 = vst [vmem:[#allocation2 + $0x30] sm:$0xff] 0
      %835 = vst [vmem:[#allocation2 + $0x38] sm:$0xff] 0
      %836 = vst [vmem:[#allocation2 + $0x40] sm:$0xff] 0
      %837 = vst [vmem:[#allocation2 + $0x48] sm:$0xff] 0
      %838 = vst [vmem:[#allocation2 + $0x50] sm:$0xff] 0
      %839 = vst [vmem:[#allocation2 + $0x58] sm:$0xff] 0
      %840 = vst [vmem:[#allocation2 + $0x60] sm:$0xff] 0
      %841 = vst [vmem:[#allocation2 + $0x68] sm:$0xff] 0
      %842 = vst [vmem:[#allocation2 + $0x70] sm:$0xff] 0
      %843 = vst [vmem:[#allocation2 + $0x78] sm:$0xff] 0
      %844 = vst [vmem:[#allocation2 + $0x80] sm:$0xff] 0
      %845 = vst [vmem:[#allocation2 + $0x88] sm:$0xff] 0
      %846 = vst [vmem:[#allocation2 + $0x90] sm:$0xff] 0
      %847 = vst [vmem:[#allocation2 + $0x98] sm:$0xff] 0
      %848 = vst [vmem:[#allocation2 + $0xa0] sm:$0xff] 0
      %849 = vst [vmem:[#allocation2 + $0xa8] sm:$0xff] 0
      %850 = vst [vmem:[#allocation2 + $0xb0] sm:$0xff] 0
      %851 = vst [vmem:[#allocation2 + $0xb8] sm:$0xff] 0
      %852 = vst [vmem:[#allocation2 + $0xc0] sm:$0xff] 0
      %853 = vst [vmem:[#allocation2 + $0xc8] sm:$0xff] 0
      %854 = vst [vmem:[#allocation2 + $0xd0] sm:$0xff] 0
      %855 = vst [vmem:[#allocation2 + $0xd8] sm:$0xff] 0
      %856 = vst [vmem:[#allocation2 + $0x10] sm:$0xff] %v812
      %v858 = vrot.slane %v813, 4
      %860 = vst [vmem:[#allocation2 + $0x18] sm:$0xf0] %v858
      %861 = vst [vmem:[#allocation2 + $0x20] sm:$0xf] %v858
      %862 = vst [vmem:[#allocation2 + $0x28] sm:$0xff] %v814
      %v864 = vrot.slane %v815, 4
      %866 = vst [vmem:[#allocation2 + $0x30] sm:$0xf0] %v864
      %867 = vst [vmem:[#allocation2 + $0x38] sm:$0xf] %v864
      %868 = vst [vmem:[#allocation2 + $0x40] sm:$0xff] %v816
      %v870 = vrot.slane %v817, 4
      %872 = vst [vmem:[#allocation2 + $0x48] sm:$0xf0] %v870
      %873 = vst [vmem:[#allocation2 + $0x50] sm:$0xf] %v870
      %874 = vst [vmem:[#allocation2 + $0x58] sm:$0xff] %v818
      %v876 = vrot.slane %v819, 4
      %878 = vst [vmem:[#allocation2 + $0x60] sm:$0xf0] %v876
      %879 = vst [vmem:[#allocation2 + $0x68] sm:$0xf] %v876
      %880 = vst [vmem:[#allocation2 + $0x70] sm:$0xff] %v820
      %v882 = vrot.slane %v821, 4
      %884 = vst [vmem:[#allocation2 + $0x78] sm:$0xf0] %v882
      %885 = vst [vmem:[#allocation2 + $0x80] sm:$0xf] %v882
      %886 = vst [vmem:[#allocation2 + $0x88] sm:$0xff] %v822
      %v888 = vrot.slane %v823, 4
      %890 = vst [vmem:[#allocation2 + $0x90] sm:$0xf0] %v888
      %891 = vst [vmem:[#allocation2 + $0x98] sm:$0xf] %v888
      %892 = vst [vmem:[#allocation2 + $0xa0] sm:$0xff] %v824
      %v894 = vrot.slane %v825, 4
      %896 = vst [vmem:[#allocation2 + $0xa8] sm:$0xf0] %v894
      %897 = vst [vmem:[#allocation2 + $0xb0] sm:$0xf] %v894
      %898 = vst [vmem:[#allocation2 + $0xb8] sm:$0xff] %v826
      %v900 = vrot.slane %v827, 4
      %902 = vst [vmem:[#allocation2 + $0xc0] sm:$0xf0] %v900
      %903 = vst [vmem:[#allocation2 + $0xc8] sm:$0xf] %v900
      %v904 = vld [vmem:[#allocation2] sm:$0xf8]
      %v905 = vld [vmem:[#allocation2 + $0x8] sm:$0xff]
      %v906 = vld [vmem:[#allocation2 + $0x10] sm:$0xff]
      %v907 = vld [vmem:[#allocation2 + $0x18] sm:$0xff]
      %v908 = vld [vmem:[#allocation2 + $0x20] sm:$0xff]
      %v909 = vld [vmem:[#allocation2 + $0x28] sm:$0xff]
      %v910 = vld [vmem:[#allocation2 + $0x30] sm:$0xff]
      %v911 = vld [vmem:[#allocation2 + $0x38] sm:$0xff]
      %v912 = vld [vmem:[#allocation2 + $0x40] sm:$0xff]
      %v913 = vld [vmem:[#allocation2 + $0x48] sm:$0xff]
      %v914 = vld [vmem:[#allocation2 + $0x50] sm:$0xff]
      %v915 = vld [vmem:[#allocation2 + $0x58] sm:$0xff]
      %v916 = vld [vmem:[#allocation2 + $0x60] sm:$0xff]
      %v917 = vld [vmem:[#allocation2 + $0x68] sm:$0xff]
      %v918 = vld [vmem:[#allocation2 + $0x70] sm:$0xff]
      %v919 = vld [vmem:[#allocation2 + $0x78] sm:$0xff]
      %v920 = vld [vmem:[#allocation2 + $0x80] sm:$0xff]
      %v921 = vld [vmem:[#allocation2 + $0x88] sm:$0xff]
      %v922 = vld [vmem:[#allocation2 + $0x90] sm:$0xff]
      %v923 = vld [vmem:[#allocation2 + $0x98] sm:$0xff]
      %v924 = vld [vmem:[#allocation2 + $0xa0] sm:$0xff]
      %v925 = vld [vmem:[#allocation2 + $0xa8] sm:$0xff]
      %v926 = vld [vmem:[#allocation2 + $0xb0] sm:$0xff]
      %v927 = vld [vmem:[#allocation2 + $0xb8] sm:$0xff]
      %v928 = vld [vmem:[#allocation2 + $0xc0] sm:$0xf]
      %v929 = vld [vmem:[%s2] sm:$0xf]
      %v930 = vld [vmem:[%s2 + $0x4] sm:$0xf]
      %v931 = vld [vmem:[%s2 + $0x8] sm:$0xf]
      %v932 = vld [vmem:[%s2 + $0xc] sm:$0xf]
      %v933 = vld [vmem:[%s2 + $0x10] sm:$0xf]
      %v934 = vld [vmem:[%s2 + $0x14] sm:$0xf]
      %v935 = vld [vmem:[%s2 + $0x18] sm:$0xf]
      %v936 = vld [vmem:[%s2 + $0x1c] sm:$0xf]
      %v937 = vld [vmem:[%s2 + $0x20] sm:$0xf]
      %v938 = vld [vmem:[%s2 + $0x24] sm:$0xf]
      %v939 = vld [vmem:[%s2 + $0x28] sm:$0xf]
      %v940 = vld [vmem:[%s2 + $0x2c] sm:$0xf]
      %v941 = vld [vmem:[%s2 + $0x30] sm:$0xf]
      %v942 = vld [vmem:[%s2 + $0x34] sm:$0xf]
      %v943 = vld [vmem:[%s2 + $0x38] sm:$0xf]
      %v944 = vld [vmem:[%s2 + $0x3c] sm:$0xf]
      %v945 = vld [vmem:[#allocation2] sm:$0xf0]
      %s946 = scalar_lea.vmem %s2, 64
      %v947 = vld [vmem:[%s946] sm:$0xf]
      %v948 = vld [vmem:[%s946 + $0x4] sm:$0xf]
      %v949 = vld [vmem:[%s946 + $0x8] sm:$0xf]
      %v950 = vld [vmem:[%s946 + $0xc] sm:$0xf]
      %v951 = vld [vmem:[%s946 + $0x10] sm:$0xf]
      %v952 = vld [vmem:[%s946 + $0x14] sm:$0xf]
      %v953 = vld [vmem:[%s946 + $0x18] sm:$0xf]
      %v954 = vld [vmem:[%s946 + $0x1c] sm:$0xf]
      %v955 = vld [vmem:[%s946 + $0x20] sm:$0xf]
      %v956 = vld [vmem:[%s946 + $0x24] sm:$0xf]
      %v957 = vld [vmem:[%s946 + $0x28] sm:$0xf]
      %v958 = vld [vmem:[%s946 + $0x2c] sm:$0xf]
      %v959 = vld [vmem:[%s946 + $0x30] sm:$0xf]
      %v960 = vld [vmem:[%s946 + $0x34] sm:$0xf]
      %v961 = vld [vmem:[%s946 + $0x38] sm:$0xf]
      %v962 = vld [vmem:[%s946 + $0x3c] sm:$0xf]
      %vm988 = vcmask 1043456
      %v989 = vrot.slane %v945, 4
      %v990 = vrot.slane %v905, 4
      %v991 = vsel %vm988, %v989, %v990
      %v992 = vrot.slane %v906, 4
      %v993 = vsel %vm988, %v990, %v992
      %v994 = vrot.slane %v907, 4
      %v995 = vsel %vm988, %v992, %v994
      %v996 = vrot.slane %v908, 4
      %v997 = vsel %vm988, %v994, %v996
      %v998 = vrot.slane %v909, 4
      %v999 = vsel %vm988, %v996, %v998
      %v1000 = vrot.slane %v910, 4
      %v1001 = vsel %vm988, %v998, %v1000
      %v1002 = vrot.slane %v911, 4
      %v1003 = vsel %vm988, %v1000, %v1002
      %v1004 = vrot.slane %v912, 4
      %v1005 = vsel %vm988, %v1002, %v1004
      %v1006 = vrot.slane %v913, 4
      %v1007 = vsel %vm988, %v1004, %v1006
      %v1008 = vrot.slane %v914, 4
      %v1009 = vsel %vm988, %v1006, %v1008
      %v1010 = vrot.slane %v915, 4
      %v1011 = vsel %vm988, %v1008, %v1010
      %v1012 = vrot.slane %v916, 4
      %v1013 = vsel %vm988, %v1010, %v1012
      %v1014 = vrot.slane %v917, 4
      %v1015 = vsel %vm988, %v1012, %v1014
      %v1016 = vrot.slane %v918, 4
      %v1017 = vsel %vm988, %v1014, %v1016
      %v1018 = vrot.slane %v919, 4
      %v1019 = vsel %vm988, %v1016, %v1018
      %v1020 = vrot.slane %v920, 4
      %v1021 = vsel %vm988, %v1018, %v1020
      %v1022 = vrot.slane %v921, 4
      %v1023 = vsel %vm988, %v1020, %v1022
      %v1024 = vrot.slane %v922, 4
      %v1025 = vsel %vm988, %v1022, %v1024
      %v1026 = vrot.slane %v923, 4
      %v1027 = vsel %vm988, %v1024, %v1026
      %v1028 = vrot.slane %v924, 4
      %v1029 = vsel %vm988, %v1026, %v1028
      %v1030 = vrot.slane %v925, 4
      %v1031 = vsel %vm988, %v1028, %v1030
      %v1032 = vrot.slane %v926, 4
      %v1033 = vsel %vm988, %v1030, %v1032
      %v1034 = vrot.slane %v927, 4
      %v1035 = vsel %vm988, %v1032, %v1034
      %v1036 = vrot.slane %v928, 4
      %v1037 = vsel %vm988, %v1034, %v1036
      %v1078 = vunpack.c.l.b16 %v947
      %v1079 = vunpack.c.l.b16 %v948
      %v1080 = vunpack.c.l.b16 %v949
      %v1081 = vunpack.c.l.b16 %v950
      %v1082 = vunpack.c.l.b16 %v951
      %v1083 = vunpack.c.l.b16 %v952
      %v1084 = vunpack.c.l.b16 %v953
      %v1085 = vunpack.c.l.b16 %v954
      %v1086 = vunpack.c.l.b16 %v955
      %v1087 = vunpack.c.l.b16 %v956
      %v1088 = vunpack.c.l.b16 %v957
      %v1089 = vunpack.c.l.b16 %v958
      %v1090 = vunpack.c.l.b16 %v959
      %v1091 = vunpack.c.l.b16 %v960
      %v1092 = vunpack.c.l.b16 %v961
      %v1093 = vunpack.c.l.b16 %v962
      %v1094 = vpack.c.b16 %v1079, %v1078
      %v1095 = vpack.c.b16 %v1081, %v1080
      %v1096 = vpack.c.b16 %v1083, %v1082
      %v1097 = vpack.c.b16 %v1085, %v1084
      %v1098 = vpack.c.b16 %v1087, %v1086
      %v1099 = vpack.c.b16 %v1089, %v1088
      %v1100 = vpack.c.b16 %v1091, %v1090
      %v1101 = vpack.c.b16 %v1093, %v1092
      %1110 = vmatprep.subr.bf16.mxu0 0
      %1111 = vmatpush1.bf16.msra.mxu0 %v1094
      %1112 = vmatprep.subr.bf16.mxu0 0
      %1113 = vmatpush1.bf16.msra.mxu0 %v1095
      %1114 = vmatprep.subr.bf16.mxu0 0
      %1115 = vmatpush1.bf16.msra.mxu0 %v1096
      %1116 = vmatprep.subr.bf16.mxu0 0
      %1117 = vmatpush1.bf16.msra.mxu0 %v1097
      %1118 = vmatprep.subr.bf16.mxu0 0
      %1119 = vmatpush1.bf16.msra.mxu0 %v1098
      %1120 = vmatprep.subr.bf16.mxu0 0
      %1121 = vmatpush1.bf16.msra.mxu0 %v1099
      %1122 = vmatprep.subr.bf16.mxu0 0
      %1123 = vmatpush1.bf16.msra.mxu0 %v1100
      %1124 = vmatprep.subr.bf16.mxu0 0
      %1125 = vmatpush1.bf16.msra.mxu0 %v1101
      %1126 = vmatprep.subr.bf16.mxu0 0
      %1127 = vmatpush1.bf16.msra.mxu0 0
      %1128 = vmatprep.subr.bf16.mxu0 0
      %1129 = vmatpush1.bf16.msra.mxu0 0
      %1130 = vmatprep.subr.bf16.mxu0 0
      %1131 = vmatpush1.bf16.msra.mxu0 0
      %1132 = vmatprep.subr.bf16.mxu0 0
      %1133 = vmatpush1.bf16.msra.mxu0 0
      %1134 = vmatprep.subr.bf16.mxu0 0
      %1135 = vmatpush1.bf16.msra.mxu0 0
      %1136 = vmatprep.subr.bf16.mxu0 0
      %1137 = vmatpush1.bf16.msra.mxu0 0
      %1138 = vmatprep.subr.bf16.mxu0 0
      %1139 = vmatpush1.bf16.msra.mxu0 0
      %1140 = vmatprep.subr.bf16.mxu0 0
      %1141 = vmatpush1.bf16.msra.mxu0 0
      %1142 = vmatprep.mubr.bf16.mxu0 0
      %1143 = vmatmul.mubr.bf16.gmra.mrb[0].mxu0 %v991
      %v1144 = vpop.f32.mrb[0].mxu0
      %v1145 = vadd.f32 0.0, %v1144
      %v1146 = vpop.f32.mrb[0].mxu0
      %v1147 = vpop.f32.mrb[0].mxu0
      %v1148 = vadd.f32 0.0, %v1147
      %v1149 = vpop.f32.mrb[0].mxu0
      %1150 = vmatprep.mubr.bf16.mxu0 0
      %1151 = vmatmul.mubr.bf16.gmra.mrb[0].mxu0 %v993
      %v1152 = vpop.f32.mrb[0].mxu0
      %v1153 = vadd.f32 0.0, %v1152
      %v1154 = vpop.f32.mrb[0].mxu0
      %v1155 = vpop.f32.mrb[0].mxu0
      %v1156 = vadd.f32 0.0, %v1155
      %v1157 = vpop.f32.mrb[0].mxu0
      %1158 = vmatprep.mubr.bf16.mxu0 0
      %1159 = vmatmul.mubr.bf16.gmra.mrb[0].mxu0 %v995
      %v1160 = vpop.f32.mrb[0].mxu0
      %v1161 = vadd.f32 0.0, %v1160
      %v1162 = vpop.f32.mrb[0].mxu0
      %v1163 = vpop.f32.mrb[0].mxu0
      %v1164 = vadd.f32 0.0, %v1163
      %v1165 = vpop.f32.mrb[0].mxu0
      %1166 = vmatprep.mubr.bf16.mxu0 0
      %1167 = vmatmul.mubr.bf16.gmra.mrb[0].mxu0 %v997
      %v1168 = vpop.f32.mrb[0].mxu0
      %v1169 = vadd.f32 0.0, %v1168
      %v1170 = vpop.f32.mrb[0].mxu0
      %v1171 = vpop.f32.mrb[0].mxu0
      %v1172 = vadd.f32 0.0, %v1171
      %v1173 = vpop.f32.mrb[0].mxu0
      %1174 = vmatprep.mubr.bf16.mxu0 0
      %1175 = vmatmul.mubr.bf16.gmra.mrb[0].mxu0 %v999
      %v1176 = vpop.f32.mrb[0].mxu0
      %v1177 = vadd.f32 0.0, %v1176
      %v1178 = vpop.f32.mrb[0].mxu0
      %v1179 = vpop.f32.mrb[0].mxu0
      %v1180 = vadd.f32 0.0, %v1179
      %v1181 = vpop.f32.mrb[0].mxu0
      %1182 = vmatprep.mubr.bf16.mxu0 0
      %1183 = vmatmul.mubr.bf16.gmra.mrb[0].mxu0 %v1001
      %v1184 = vpop.f32.mrb[0].mxu0
      %v1185 = vadd.f32 0.0, %v1184
      %v1186 = vpop.f32.mrb[0].mxu0
      %v1187 = vpop.f32.mrb[0].mxu0
      %v1188 = vadd.f32 0.0, %v1187
      %v1189 = vpop.f32.mrb[0].mxu0
      %1190 = vmatprep.mubr.bf16.mxu0 0
      %1191 = vmatmul.mubr.bf16.gmra.mrb[0].mxu0 %v1003
      %v1192 = vpop.f32.mrb[0].mxu0
      %v1193 = vadd.f32 0.0, %v1192
      %v1194 = vpop.f32.mrb[0].mxu0
      %v1195 = vpop.f32.mrb[0].mxu0
      %v1196 = vadd.f32 0.0, %v1195
      %v1197 = vpop.f32.mrb[0].mxu0
      %1198 = vmatprep.mubr.bf16.mxu0 0
      %1199 = vmatmul.mubr.bf16.gmra.mrb[0].mxu0 %v1005
      %v1200 = vpop.f32.mrb[0].mxu0
      %v1201 = vadd.f32 0.0, %v1200
      %v1202 = vpop.f32.mrb[0].mxu0
      %v1203 = vpop.f32.mrb[0].mxu0
      %v1204 = vadd.f32 0.0, %v1203
      %v1205 = vpop.f32.mrb[0].mxu0
      %1206 = vmatprep.mubr.bf16.mxu0 0
      %1207 = vmatmul.mubr.bf16.gmra.mrb[0].mxu0 %v1007
      %v1208 = vpop.f32.mrb[0].mxu0
      %v1209 = vadd.f32 0.0, %v1208
      %v1210 = vpop.f32.mrb[0].mxu0
      %v1211 = vpop.f32.mrb[0].mxu0
      %v1212 = vadd.f32 0.0, %v1211
      %v1213 = vpop.f32.mrb[0].mxu0
      %1214 = vmatprep.mubr.bf16.mxu0 0
      %1215 = vmatmul.mubr.bf16.gmra.mrb[0].mxu0 %v1009
      %v1216 = vpop.f32.mrb[0].mxu0
      %v1217 = vadd.f32 0.0, %v1216
      %v1218 = vpop.f32.mrb[0].mxu0
      %v1219 = vpop.f32.mrb[0].mxu0
      %v1220 = vadd.f32 0.0, %v1219
      %v1221 = vpop.f32.mrb[0].mxu0
      %1222 = vmatprep.mubr.bf16.mxu0 0
      %1223 = vmatmul.mubr.bf16.gmra.mrb[0].mxu0 %v1011
      %v1224 = vpop.f32.mrb[0].mxu0
      %v1225 = vadd.f32 0.0, %v1224
      %v1226 = vpop.f32.mrb[0].mxu0
      %v1227 = vpop.f32.mrb[0].mxu0
      %v1228 = vadd.f32 0.0, %v1227
      %v1229 = vpop.f32.mrb[0].mxu0
      %1230 = vmatprep.mubr.bf16.mxu0 0
      %1231 = vmatmul.mubr.bf16.gmra.mrb[0].mxu0 %v1013
      %v1232 = vpop.f32.mrb[0].mxu0
      %v1233 = vadd.f32 0.0, %v1232
      %v1234 = vpop.f32.mrb[0].mxu0
      %v1235 = vpop.f32.mrb[0].mxu0
      %v1236 = vadd.f32 0.0, %v1235
      %v1237 = vpop.f32.mrb[0].mxu0
      %1238 = vmatprep.mubr.bf16.mxu0 0
      %1239 = vmatmul.mubr.bf16.gmra.mrb[0].mxu0 %v1015
      %v1240 = vpop.f32.mrb[0].mxu0
      %v1241 = vadd.f32 0.0, %v1240
      %v1242 = vpop.f32.mrb[0].mxu0
      %v1243 = vpop.f32.mrb[0].mxu0
      %v1244 = vadd.f32 0.0, %v1243
      %v1245 = vpop.f32.mrb[0].mxu0
      %1246 = vmatprep.mubr.bf16.mxu0 0
      %1247 = vmatmul.mubr.bf16.gmra.mrb[0].mxu0 %v1017
      %v1248 = vpop.f32.mrb[0].mxu0
      %v1249 = vadd.f32 0.0, %v1248
      %v1250 = vpop.f32.mrb[0].mxu0
      %v1251 = vpop.f32.mrb[0].mxu0
      %v1252 = vadd.f32 0.0, %v1251
      %v1253 = vpop.f32.mrb[0].mxu0
      %1254 = vmatprep.mubr.bf16.mxu0 0
      %1255 = vmatmul.mubr.bf16.gmra.mrb[0].mxu0 %v1019
      %v1256 = vpop.f32.mrb[0].mxu0
      %v1257 = vadd.f32 0.0, %v1256
      %v1258 = vpop.f32.mrb[0].mxu0
      %v1259 = vpop.f32.mrb[0].mxu0
      %v1260 = vadd.f32 0.0, %v1259
      %v1261 = vpop.f32.mrb[0].mxu0
      %1262 = vmatprep.mubr.bf16.mxu0 0
      %1263 = vmatmul.mubr.bf16.gmra.mrb[0].mxu0 %v1021
      %v1264 = vpop.f32.mrb[0].mxu0
      %v1265 = vadd.f32 0.0, %v1264
      %v1266 = vpop.f32.mrb[0].mxu0
      %v1267 = vpop.f32.mrb[0].mxu0
      %v1268 = vadd.f32 0.0, %v1267
      %v1269 = vpop.f32.mrb[0].mxu0
      %1270 = vmatprep.mubr.bf16.mxu0 0
      %1271 = vmatmul.mubr.bf16.gmra.mrb[0].mxu0 %v1023
      %v1272 = vpop.f32.mrb[0].mxu0
      %v1273 = vadd.f32 0.0, %v1272
      %v1274 = vpop.f32.mrb[0].mxu0
      %v1275 = vpop.f32.mrb[0].mxu0
      %v1276 = vadd.f32 0.0, %v1275
      %v1277 = vpop.f32.mrb[0].mxu0
      %1278 = vmatprep.mubr.bf16.mxu0 0
      %1279 = vmatmul.mubr.bf16.gmra.mrb[0].mxu0 %v1025
      %v1280 = vpop.f32.mrb[0].mxu0
      %v1281 = vadd.f32 0.0, %v1280
      %v1282 = vpop.f32.mrb[0].mxu0
      %v1283 = vpop.f32.mrb[0].mxu0
      %v1284 = vadd.f32 0.0, %v1283
      %v1285 = vpop.f32.mrb[0].mxu0
      %1286 = vmatprep.mubr.bf16.mxu0 0
      %1287 = vmatmul.mubr.bf16.gmra.mrb[0].mxu0 %v1027
      %v1288 = vpop.f32.mrb[0].mxu0
      %v1289 = vadd.f32 0.0, %v1288
      %v1290 = vpop.f32.mrb[0].mxu0
      %v1291 = vpop.f32.mrb[0].mxu0
      %v1292 = vadd.f32 0.0, %v1291
      %v1293 = vpop.f32.mrb[0].mxu0
      %1294 = vmatprep.mubr.bf16.mxu0 0
      %1295 = vmatmul.mubr.bf16.gmra.mrb[0].mxu0 %v1029
      %v1296 = vpop.f32.mrb[0].mxu0
      %v1297 = vadd.f32 0.0, %v1296
      %v1298 = vpop.f32.mrb[0].mxu0
      %v1299 = vpop.f32.mrb[0].mxu0
      %v1300 = vadd.f32 0.0, %v1299
      %v1301 = vpop.f32.mrb[0].mxu0
      %1302 = vmatprep.mubr.bf16.mxu0 0
      %1303 = vmatmul.mubr.bf16.gmra.mrb[0].mxu0 %v1031
      %v1304 = vpop.f32.mrb[0].mxu0
      %v1305 = vadd.f32 0.0, %v1304
      %v1306 = vpop.f32.mrb[0].mxu0
      %v1307 = vpop.f32.mrb[0].mxu0
      %v1308 = vadd.f32 0.0, %v1307
      %v1309 = vpop.f32.mrb[0].mxu0
      %1310 = vmatprep.mubr.bf16.mxu0 0
      %1311 = vmatmul.mubr.bf16.gmra.mrb[0].mxu0 %v1033
      %v1312 = vpop.f32.mrb[0].mxu0
      %v1313 = vadd.f32 0.0, %v1312
      %v1314 = vpop.f32.mrb[0].mxu0
      %v1315 = vpop.f32.mrb[0].mxu0
      %v1316 = vadd.f32 0.0, %v1315
      %v1317 = vpop.f32.mrb[0].mxu0
      %1318 = vmatprep.mubr.bf16.mxu0 0
      %1319 = vmatmul.mubr.bf16.gmra.mrb[0].mxu0 %v1035
      %v1320 = vpop.f32.mrb[0].mxu0
      %v1321 = vadd.f32 0.0, %v1320
      %v1322 = vpop.f32.mrb[0].mxu0
      %v1323 = vpop.f32.mrb[0].mxu0
      %v1324 = vadd.f32 0.0, %v1323
      %v1325 = vpop.f32.mrb[0].mxu0
      %1326 = vmatprep.mubr.bf16.mxu0 0
      %1327 = vmatmul.mubr.bf16.gmra.mrb[0].mxu0 %v1037
      %v1328 = vpop.f32.mrb[0].mxu0
      %v1329 = vadd.f32 0.0, %v1328
      %v1330 = vpop.f32.mrb[0].mxu0
      %v1331 = vpop.f32.mrb[0].mxu0
      %v1332 = vadd.f32 0.0, %v1331
      %v1333 = vpop.f32.mrb[0].mxu0
      %1334 = vdwg.mxu0
      %vm1335 = vsmask.f32 4352
      %v1337 = vshrl.u32 %v904, 16
      %v1339 = vrot.slane %v1337, 3
      %v1340 = vshll.u32 %v904, 16
      %v1342 = vrot.slane %v1340, 4
      %v1343 = vor.u32 %v1339, %v1342
      %v1345 = vshrl.u32 %v905, 16
      %v1347 = vrot.slane %v1345, 3
      %v1348 = vshll.u32 %v905, 16
      %v1350 = vrot.slane %v1348, 4
      %v1351 = vor.u32 %v1347, %v1350
      %v1352 = vsel %vm1335, %v1343, %v1351
      %v1354 = vshrl.u32 %v906, 16
      %v1356 = vrot.slane %v1354, 3
      %v1357 = vshll.u32 %v906, 16
      %v1359 = vrot.slane %v1357, 4
      %v1360 = vor.u32 %v1356, %v1359
      %v1361 = vsel %vm1335, %v1351, %v1360
      %v1363 = vshrl.u32 %v907, 16
      %v1365 = vrot.slane %v1363, 3
      %v1366 = vshll.u32 %v907, 16
      %v1368 = vrot.slane %v1366, 4
      %v1369 = vor.u32 %v1365, %v1368
      %v1370 = vsel %vm1335, %v1360, %v1369
      %v1372 = vshrl.u32 %v908, 16
      %v1374 = vrot.slane %v1372, 3
      %v1375 = vshll.u32 %v908, 16
      %v1377 = vrot.slane %v1375, 4
      %v1378 = vor.u32 %v1374, %v1377
      %v1379 = vsel %vm1335, %v1369, %v1378
      %v1381 = vshrl.u32 %v909, 16
      %v1383 = vrot.slane %v1381, 3
      %v1384 = vshll.u32 %v909, 16
      %v1386 = vrot.slane %v1384, 4
      %v1387 = vor.u32 %v1383, %v1386
      %v1388 = vsel %vm1335, %v1378, %v1387
      %v1390 = vshrl.u32 %v910, 16
      %v1392 = vrot.slane %v1390, 3
      %v1393 = vshll.u32 %v910, 16
      %v1395 = vrot.slane %v1393, 4
      %v1396 = vor.u32 %v1392, %v1395
      %v1397 = vsel %vm1335, %v1387, %v1396
      %v1399 = vshrl.u32 %v911, 16
      %v1401 = vrot.slane %v1399, 3
      %v1402 = vshll.u32 %v911, 16
      %v1404 = vrot.slane %v1402, 4
      %v1405 = vor.u32 %v1401, %v1404
      %v1406 = vsel %vm1335, %v1396, %v1405
      %v1408 = vshrl.u32 %v912, 16
      %v1410 = vrot.slane %v1408, 3
      %v1411 = vshll.u32 %v912, 16
      %v1413 = vrot.slane %v1411, 4
      %v1414 = vor.u32 %v1410, %v1413
      %v1415 = vsel %vm1335, %v1405, %v1414
      %v1417 = vshrl.u32 %v913, 16
      %v1419 = vrot.slane %v1417, 3
      %v1420 = vshll.u32 %v913, 16
      %v1422 = vrot.slane %v1420, 4
      %v1423 = vor.u32 %v1419, %v1422
      %v1424 = vsel %vm1335, %v1414, %v1423
      %v1426 = vshrl.u32 %v914, 16
      %v1428 = vrot.slane %v1426, 3
      %v1429 = vshll.u32 %v914, 16
      %v1431 = vrot.slane %v1429, 4
      %v1432 = vor.u32 %v1428, %v1431
      %v1433 = vsel %vm1335, %v1423, %v1432
      %v1435 = vshrl.u32 %v915, 16
      %v1437 = vrot.slane %v1435, 3
      %v1438 = vshll.u32 %v915, 16
      %v1440 = vrot.slane %v1438, 4
      %v1441 = vor.u32 %v1437, %v1440
      %v1442 = vsel %vm1335, %v1432, %v1441
      %v1444 = vshrl.u32 %v916, 16
      %v1446 = vrot.slane %v1444, 3
      %v1447 = vshll.u32 %v916, 16
      %v1449 = vrot.slane %v1447, 4
      %v1450 = vor.u32 %v1446, %v1449
      %v1451 = vsel %vm1335, %v1441, %v1450
      %v1453 = vshrl.u32 %v917, 16
      %v1455 = vrot.slane %v1453, 3
      %v1456 = vshll.u32 %v917, 16
      %v1458 = vrot.slane %v1456, 4
      %v1459 = vor.u32 %v1455, %v1458
      %v1460 = vsel %vm1335, %v1450, %v1459
      %v1462 = vshrl.u32 %v918, 16
      %v1464 = vrot.slane %v1462, 3
      %v1465 = vshll.u32 %v918, 16
      %v1467 = vrot.slane %v1465, 4
      %v1468 = vor.u32 %v1464, %v1467
      %v1469 = vsel %vm1335, %v1459, %v1468
      %v1471 = vshrl.u32 %v919, 16
      %v1473 = vrot.slane %v1471, 3
      %v1474 = vshll.u32 %v919, 16
      %v1476 = vrot.slane %v1474, 4
      %v1477 = vor.u32 %v1473, %v1476
      %v1478 = vsel %vm1335, %v1468, %v1477
      %v1480 = vshrl.u32 %v920, 16
      %v1482 = vrot.slane %v1480, 3
      %v1483 = vshll.u32 %v920, 16
      %v1485 = vrot.slane %v1483, 4
      %v1486 = vor.u32 %v1482, %v1485
      %v1487 = vsel %vm1335, %v1477, %v1486
      %v1489 = vshrl.u32 %v921, 16
      %v1491 = vrot.slane %v1489, 3
      %v1492 = vshll.u32 %v921, 16
      %v1494 = vrot.slane %v1492, 4
      %v1495 = vor.u32 %v1491, %v1494
      %v1496 = vsel %vm1335, %v1486, %v1495
      %v1498 = vshrl.u32 %v922, 16
      %v1500 = vrot.slane %v1498, 3
      %v1501 = vshll.u32 %v922, 16
      %v1503 = vrot.slane %v1501, 4
      %v1504 = vor.u32 %v1500, %v1503
      %v1505 = vsel %vm1335, %v1495, %v1504
      %v1507 = vshrl.u32 %v923, 16
      %v1509 = vrot.slane %v1507, 3
      %v1510 = vshll.u32 %v923, 16
      %v1512 = vrot.slane %v1510, 4
      %v1513 = vor.u32 %v1509, %v1512
      %v1514 = vsel %vm1335, %v1504, %v1513
      %v1516 = vshrl.u32 %v924, 16
      %v1518 = vrot.slane %v1516, 3
      %v1519 = vshll.u32 %v924, 16
      %v1521 = vrot.slane %v1519, 4
      %v1522 = vor.u32 %v1518, %v1521
      %v1523 = vsel %vm1335, %v1513, %v1522
      %v1525 = vshrl.u32 %v925, 16
      %v1527 = vrot.slane %v1525, 3
      %v1528 = vshll.u32 %v925, 16
      %v1530 = vrot.slane %v1528, 4
      %v1531 = vor.u32 %v1527, %v1530
      %v1532 = vsel %vm1335, %v1522, %v1531
      %v1534 = vshrl.u32 %v926, 16
      %v1536 = vrot.slane %v1534, 3
      %v1537 = vshll.u32 %v926, 16
      %v1539 = vrot.slane %v1537, 4
      %v1540 = vor.u32 %v1536, %v1539
      %v1541 = vsel %vm1335, %v1531, %v1540
      %v1543 = vshrl.u32 %v927, 16
      %v1545 = vrot.slane %v1543, 3
      %v1546 = vshll.u32 %v927, 16
      %v1548 = vrot.slane %v1546, 4
      %v1549 = vor.u32 %v1545, %v1548
      %v1550 = vsel %vm1335, %v1540, %v1549
      %v1552 = vshrl.u32 %v928, 16
      %v1554 = vrot.slane %v1552, 3
      %v1555 = vshll.u32 %v928, 16
      %v1557 = vrot.slane %v1555, 4
      %v1558 = vor.u32 %v1554, %v1557
      %v1559 = vsel %vm1335, %v1549, %v1558
      %v1600 = vunpack.c.l.b16 %v929
      %v1601 = vunpack.c.l.b16 %v930
      %v1602 = vunpack.c.l.b16 %v931
      %v1603 = vunpack.c.l.b16 %v932
      %v1604 = vunpack.c.l.b16 %v933
      %v1605 = vunpack.c.l.b16 %v934
      %v1606 = vunpack.c.l.b16 %v935
      %v1607 = vunpack.c.l.b16 %v936
      %v1608 = vunpack.c.l.b16 %v937
      %v1609 = vunpack.c.l.b16 %v938
      %v1610 = vunpack.c.l.b16 %v939
      %v1611 = vunpack.c.l.b16 %v940
      %v1612 = vunpack.c.l.b16 %v941
      %v1613 = vunpack.c.l.b16 %v942
      %v1614 = vunpack.c.l.b16 %v943
      %v1615 = vunpack.c.l.b16 %v944
      %v1616 = vpack.c.b16 %v1601, %v1600
      %v1617 = vpack.c.b16 %v1603, %v1602
      %v1618 = vpack.c.b16 %v1605, %v1604
      %v1619 = vpack.c.b16 %v1607, %v1606
      %v1620 = vpack.c.b16 %v1609, %v1608
      %v1621 = vpack.c.b16 %v1611, %v1610
      %v1622 = vpack.c.b16 %v1613, %v1612
      %v1623 = vpack.c.b16 %v1615, %v1614
      %1632 = vmatprep.subr.bf16.mxu0 0
      %1633 = vmatpush1.bf16.msra.mxu0 %v1616
      %1634 = vmatprep.subr.bf16.mxu0 0
      %1635 = vmatpush1.bf16.msra.mxu0 %v1617
      %1636 = vmatprep.subr.bf16.mxu0 0
      %1637 = vmatpush1.bf16.msra.mxu0 %v1618
      %1638 = vmatprep.subr.bf16.mxu0 0
      %1639 = vmatpush1.bf16.msra.mxu0 %v1619
      %1640 = vmatprep.subr.bf16.mxu0 0
      %1641 = vmatpush1.bf16.msra.mxu0 %v1620
      %1642 = vmatprep.subr.bf16.mxu0 0
      %1643 = vmatpush1.bf16.msra.mxu0 %v1621
      %1644 = vmatprep.subr.bf16.mxu0 0
      %1645 = vmatpush1.bf16.msra.mxu0 %v1622
      %1646 = vmatprep.subr.bf16.mxu0 0
      %1647 = vmatpush1.bf16.msra.mxu0 %v1623
      %1648 = vmatprep.subr.bf16.mxu0 0
      %1649 = vmatpush1.bf16.msra.mxu0 0
      %1650 = vmatprep.subr.bf16.mxu0 0
      %1651 = vmatpush1.bf16.msra.mxu0 0
      %1652 = vmatprep.subr.bf16.mxu0 0
      %1653 = vmatpush1.bf16.msra.mxu0 0
      %1654 = vmatprep.subr.bf16.mxu0 0
      %1655 = vmatpush1.bf16.msra.mxu0 0
      %1656 = vmatprep.subr.bf16.mxu0 0
      %1657 = vmatpush1.bf16.msra.mxu0 0
      %1658 = vmatprep.subr.bf16.mxu0 0
      %1659 = vmatpush1.bf16.msra.mxu0 0
      %1660 = vmatprep.subr.bf16.mxu0 0
      %1661 = vmatpush1.bf16.msra.mxu0 0
      %1662 = vmatprep.subr.bf16.mxu0 0
      %1663 = vmatpush1.bf16.msra.mxu0 0
      %1664 = vmatprep.mubr.bf16.mxu0 0
      %1665 = vmatmul.mubr.bf16.gmra.mrb[0].mxu0 %v1352
      %v1666 = vpop.f32.mrb[0].mxu0
      %v1667 = vadd.f32 %v1145, %v1666
      %v1668 = vpop.f32.mrb[0].mxu0
      %v1669 = vpop.f32.mrb[0].mxu0
      %v1670 = vadd.f32 %v1148, %v1669
      %v1671 = vpop.f32.mrb[0].mxu0
      %1672 = vmatprep.mubr.bf16.mxu0 0
      %1673 = vmatmul.mubr.bf16.gmra.mrb[0].mxu0 %v1361
      %v1674 = vpop.f32.mrb[0].mxu0
      %v1675 = vadd.f32 %v1153, %v1674
      %v1676 = vpop.f32.mrb[0].mxu0
      %v1677 = vpop.f32.mrb[0].mxu0
      %v1678 = vadd.f32 %v1156, %v1677
      %v1679 = vpop.f32.mrb[0].mxu0
      %1680 = vmatprep.mubr.bf16.mxu0 0
      %1681 = vmatmul.mubr.bf16.gmra.mrb[0].mxu0 %v1370
      %v1682 = vpop.f32.mrb[0].mxu0
      %v1683 = vadd.f32 %v1161, %v1682
      %v1684 = vpop.f32.mrb[0].mxu0
      %v1685 = vpop.f32.mrb[0].mxu0
      %v1686 = vadd.f32 %v1164, %v1685
      %v1687 = vpop.f32.mrb[0].mxu0
      %1688 = vmatprep.mubr.bf16.mxu0 0
      %1689 = vmatmul.mubr.bf16.gmra.mrb[0].mxu0 %v1379
      %v1690 = vpop.f32.mrb[0].mxu0
      %v1691 = vadd.f32 %v1169, %v1690
      %v1692 = vpop.f32.mrb[0].mxu0
      %v1693 = vpop.f32.mrb[0].mxu0
      %v1694 = vadd.f32 %v1172, %v1693
      %v1695 = vpop.f32.mrb[0].mxu0
      %1696 = vmatprep.mubr.bf16.mxu0 0
      %1697 = vmatmul.mubr.bf16.gmra.mrb[0].mxu0 %v1388
      %v1698 = vpop.f32.mrb[0].mxu0
      %v1699 = vadd.f32 %v1177, %v1698
      %v1700 = vpop.f32.mrb[0].mxu0
      %v1701 = vpop.f32.mrb[0].mxu0
      %v1702 = vadd.f32 %v1180, %v1701
      %v1703 = vpop.f32.mrb[0].mxu0
      %1704 = vmatprep.mubr.bf16.mxu0 0
      %1705 = vmatmul.mubr.bf16.gmra.mrb[0].mxu0 %v1397
      %v1706 = vpop.f32.mrb[0].mxu0
      %v1707 = vadd.f32 %v1185, %v1706
      %v1708 = vpop.f32.mrb[0].mxu0
      %v1709 = vpop.f32.mrb[0].mxu0
      %v1710 = vadd.f32 %v1188, %v1709
      %v1711 = vpop.f32.mrb[0].mxu0
      %1712 = vmatprep.mubr.bf16.mxu0 0
      %1713 = vmatmul.mubr.bf16.gmra.mrb[0].mxu0 %v1406
      %v1714 = vpop.f32.mrb[0].mxu0
      %v1715 = vadd.f32 %v1193, %v1714
      %v1716 = vpop.f32.mrb[0].mxu0
      %v1717 = vpop.f32.mrb[0].mxu0
      %v1718 = vadd.f32 %v1196, %v1717
      %v1719 = vpop.f32.mrb[0].mxu0
      %1720 = vmatprep.mubr.bf16.mxu0 0
      %1721 = vmatmul.mubr.bf16.gmra.mrb[0].mxu0 %v1415
      %v1722 = vpop.f32.mrb[0].mxu0
      %v1723 = vadd.f32 %v1201, %v1722
      %v1724 = vpop.f32.mrb[0].mxu0
      %v1725 = vpop.f32.mrb[0].mxu0
      %v1726 = vadd.f32 %v1204, %v1725
      %v1727 = vpop.f32.mrb[0].mxu0
      %1728 = vmatprep.mubr.bf16.mxu0 0
      %1729 = vmatmul.mubr.bf16.gmra.mrb[0].mxu0 %v1424
      %v1730 = vpop.f32.mrb[0].mxu0
      %v1731 = vadd.f32 %v1209, %v1730
      %v1732 = vpop.f32.mrb[0].mxu0
      %v1733 = vpop.f32.mrb[0].mxu0
      %v1734 = vadd.f32 %v1212, %v1733
      %v1735 = vpop.f32.mrb[0].mxu0
      %1736 = vmatprep.mubr.bf16.mxu0 0
      %1737 = vmatmul.mubr.bf16.gmra.mrb[0].mxu0 %v1433
      %v1738 = vpop.f32.mrb[0].mxu0
      %v1739 = vadd.f32 %v1217, %v1738
      %v1740 = vpop.f32.mrb[0].mxu0
      %v1741 = vpop.f32.mrb[0].mxu0
      %v1742 = vadd.f32 %v1220, %v1741
      %v1743 = vpop.f32.mrb[0].mxu0
      %1744 = vmatprep.mubr.bf16.mxu0 0
      %1745 = vmatmul.mubr.bf16.gmra.mrb[0].mxu0 %v1442
      %v1746 = vpop.f32.mrb[0].mxu0
      %v1747 = vadd.f32 %v1225, %v1746
      %v1748 = vpop.f32.mrb[0].mxu0
      %v1749 = vpop.f32.mrb[0].mxu0
      %v1750 = vadd.f32 %v1228, %v1749
      %v1751 = vpop.f32.mrb[0].mxu0
      %1752 = vmatprep.mubr.bf16.mxu0 0
      %1753 = vmatmul.mubr.bf16.gmra.mrb[0].mxu0 %v1451
      %v1754 = vpop.f32.mrb[0].mxu0
      %v1755 = vadd.f32 %v1233, %v1754
      %v1756 = vpop.f32.mrb[0].mxu0
      %v1757 = vpop.f32.mrb[0].mxu0
      %v1758 = vadd.f32 %v1236, %v1757
      %v1759 = vpop.f32.mrb[0].mxu0
      %1760 = vmatprep.mubr.bf16.mxu0 0
      %1761 = vmatmul.mubr.bf16.gmra.mrb[0].mxu0 %v1460
      %v1762 = vpop.f32.mrb[0].mxu0
      %v1763 = vadd.f32 %v1241, %v1762
      %v1764 = vpop.f32.mrb[0].mxu0
      %v1765 = vpop.f32.mrb[0].mxu0
      %v1766 = vadd.f32 %v1244, %v1765
      %v1767 = vpop.f32.mrb[0].mxu0
      %1768 = vmatprep.mubr.bf16.mxu0 0
      %1769 = vmatmul.mubr.bf16.gmra.mrb[0].mxu0 %v1469
      %v1770 = vpop.f32.mrb[0].mxu0
      %v1771 = vadd.f32 %v1249, %v1770
      %v1772 = vpop.f32.mrb[0].mxu0
      %v1773 = vpop.f32.mrb[0].mxu0
      %v1774 = vadd.f32 %v1252, %v1773
      %v1775 = vpop.f32.mrb[0].mxu0
      %1776 = vmatprep.mubr.bf16.mxu0 0
      %1777 = vmatmul.mubr.bf16.gmra.mrb[0].mxu0 %v1478
      %v1778 = vpop.f32.mrb[0].mxu0
      %v1779 = vadd.f32 %v1257, %v1778
      %v1780 = vpop.f32.mrb[0].mxu0
      %v1781 = vpop.f32.mrb[0].mxu0
      %v1782 = vadd.f32 %v1260, %v1781
      %v1783 = vpop.f32.mrb[0].mxu0
      %1784 = vmatprep.mubr.bf16.mxu0 0
      %1785 = vmatmul.mubr.bf16.gmra.mrb[0].mxu0 %v1487
      %v1786 = vpop.f32.mrb[0].mxu0
      %v1787 = vadd.f32 %v1265, %v1786
      %v1788 = vpop.f32.mrb[0].mxu0
      %v1789 = vpop.f32.mrb[0].mxu0
      %v1790 = vadd.f32 %v1268, %v1789
      %v1791 = vpop.f32.mrb[0].mxu0
      %1792 = vmatprep.mubr.bf16.mxu0 0
      %1793 = vmatmul.mubr.bf16.gmra.mrb[0].mxu0 %v1496
      %v1794 = vpop.f32.mrb[0].mxu0
      %v1795 = vadd.f32 %v1273, %v1794
      %v1796 = vpop.f32.mrb[0].mxu0
      %v1797 = vpop.f32.mrb[0].mxu0
      %v1798 = vadd.f32 %v1276, %v1797
      %v1799 = vpop.f32.mrb[0].mxu0
      %1800 = vmatprep.mubr.bf16.mxu0 0
      %1801 = vmatmul.mubr.bf16.gmra.mrb[0].mxu0 %v1505
      %v1802 = vpop.f32.mrb[0].mxu0
      %v1803 = vadd.f32 %v1281, %v1802
      %v1804 = vpop.f32.mrb[0].mxu0
      %v1805 = vpop.f32.mrb[0].mxu0
      %v1806 = vadd.f32 %v1284, %v1805
      %v1807 = vpop.f32.mrb[0].mxu0
      %1808 = vmatprep.mubr.bf16.mxu0 0
      %1809 = vmatmul.mubr.bf16.gmra.mrb[0].mxu0 %v1514
      %v1810 = vpop.f32.mrb[0].mxu0
      %v1811 = vadd.f32 %v1289, %v1810
      %v1812 = vpop.f32.mrb[0].mxu0
      %v1813 = vpop.f32.mrb[0].mxu0
      %v1814 = vadd.f32 %v1292, %v1813
      %v1815 = vpop.f32.mrb[0].mxu0
      %1816 = vmatprep.mubr.bf16.mxu0 0
      %1817 = vmatmul.mubr.bf16.gmra.mrb[0].mxu0 %v1523
      %v1818 = vpop.f32.mrb[0].mxu0
      %v1819 = vadd.f32 %v1297, %v1818
      %v1820 = vpop.f32.mrb[0].mxu0
      %v1821 = vpop.f32.mrb[0].mxu0
      %v1822 = vadd.f32 %v1300, %v1821
      %v1823 = vpop.f32.mrb[0].mxu0
      %1824 = vmatprep.mubr.bf16.mxu0 0
      %1825 = vmatmul.mubr.bf16.gmra.mrb[0].mxu0 %v1532
      %v1826 = vpop.f32.mrb[0].mxu0
      %v1827 = vadd.f32 %v1305, %v1826
      %v1828 = vpop.f32.mrb[0].mxu0
      %v1829 = vpop.f32.mrb[0].mxu0
      %v1830 = vadd.f32 %v1308, %v1829
      %v1831 = vpop.f32.mrb[0].mxu0
      %1832 = vmatprep.mubr.bf16.mxu0 0
      %1833 = vmatmul.mubr.bf16.gmra.mrb[0].mxu0 %v1541
      %v1834 = vpop.f32.mrb[0].mxu0
      %v1835 = vadd.f32 %v1313, %v1834
      %v1836 = vpop.f32.mrb[0].mxu0
      %v1837 = vpop.f32.mrb[0].mxu0
      %v1838 = vadd.f32 %v1316, %v1837
      %v1839 = vpop.f32.mrb[0].mxu0
      %1840 = vmatprep.mubr.bf16.mxu0 0
      %1841 = vmatmul.mubr.bf16.gmra.mrb[0].mxu0 %v1550
      %v1842 = vpop.f32.mrb[0].mxu0
      %v1843 = vadd.f32 %v1321, %v1842
      %v1844 = vpop.f32.mrb[0].mxu0
      %v1845 = vpop.f32.mrb[0].mxu0
      %v1846 = vadd.f32 %v1324, %v1845
      %v1847 = vpop.f32.mrb[0].mxu0
      %1848 = vmatprep.mubr.bf16.mxu0 0
      %1849 = vmatmul.mubr.bf16.gmra.mrb[0].mxu0 %v1559
      %v1850 = vpop.f32.mrb[0].mxu0
      %v1851 = vadd.f32 %v1329, %v1850
      %v1852 = vpop.f32.mrb[0].mxu0
      %v1853 = vpop.f32.mrb[0].mxu0
      %v1854 = vadd.f32 %v1332, %v1853
      %v1855 = vpop.f32.mrb[0].mxu0
      %1856 = vdwg.mxu0
      %v1857 = vld [vmem:[#allocation2 + $0xc0] sm:$0x1f]
      %s1858 = scalar_lea.vmem %s2, 128
      %v1859 = vld [vmem:[%s1858] sm:$0xf]
      %v1860 = vld [vmem:[%s1858 + $0x4] sm:$0xf]
      %v1861 = vld [vmem:[%s1858 + $0x8] sm:$0xf]
      %v1862 = vld [vmem:[%s1858 + $0xc] sm:$0xf]
      %v1863 = vld [vmem:[%s1858 + $0x10] sm:$0xf]
      %v1864 = vld [vmem:[%s1858 + $0x14] sm:$0xf]
      %v1865 = vld [vmem:[%s1858 + $0x18] sm:$0xf]
      %v1866 = vld [vmem:[%s1858 + $0x1c] sm:$0xf]
      %v1867 = vld [vmem:[%s1858 + $0x20] sm:$0xf]
      %v1868 = vld [vmem:[%s1858 + $0x24] sm:$0xf]
      %v1869 = vld [vmem:[%s1858 + $0x28] sm:$0xf]
      %v1870 = vld [vmem:[%s1858 + $0x2c] sm:$0xf]
      %v1871 = vld [vmem:[%s1858 + $0x30] sm:$0xf]
      %v1872 = vld [vmem:[%s1858 + $0x34] sm:$0xf]
      %v1873 = vld [vmem:[%s1858 + $0x38] sm:$0xf]
      %v1874 = vld [vmem:[%s1858 + $0x3c] sm:$0xf]
      %vm1875 = vsmask.f32 3328
      %v1877 = vshrl.u32 %v945, 16
      %v1879 = vrot.slane %v1877, 4
      %v1880 = vshll.u32 %v945, 16
      %v1882 = vrot.slane %v1880, 5
      %v1883 = vor.u32 %v1879, %v1882
      %v1884 = vrot.slane %v1345, 4
      %v1885 = vrot.slane %v1348, 5
      %v1886 = vor.u32 %v1884, %v1885
      %v1887 = vsel %vm1875, %v1883, %v1886
      %v1888 = vrot.slane %v1354, 4
      %v1889 = vrot.slane %v1357, 5
      %v1890 = vor.u32 %v1888, %v1889
      %v1891 = vsel %vm1875, %v1886, %v1890
      %v1892 = vrot.slane %v1363, 4
      %v1893 = vrot.slane %v1366, 5
      %v1894 = vor.u32 %v1892, %v1893
      %v1895 = vsel %vm1875, %v1890, %v1894
      %v1896 = vrot.slane %v1372, 4
      %v1897 = vrot.slane %v1375, 5
      %v1898 = vor.u32 %v1896, %v1897
      %v1899 = vsel %vm1875, %v1894, %v1898
      %v1900 = vrot.slane %v1381, 4
      %v1901 = vrot.slane %v1384, 5
      %v1902 = vor.u32 %v1900, %v1901
      %v1903 = vsel %vm1875, %v1898, %v1902
      %v1904 = vrot.slane %v1390, 4
      %v1905 = vrot.slane %v1393, 5
      %v1906 = vor.u32 %v1904, %v1905
      %v1907 = vsel %vm1875, %v1902, %v1906
      %v1908 = vrot.slane %v1399, 4
      %v1909 = vrot.slane %v1402, 5
      %v1910 = vor.u32 %v1908, %v1909
      %v1911 = vsel %vm1875, %v1906, %v1910
      %v1912 = vrot.slane %v1408, 4
      %v1913 = vrot.slane %v1411, 5
      %v1914 = vor.u32 %v1912, %v1913
      %v1915 = vsel %vm1875, %v1910, %v1914
      %v1916 = vrot.slane %v1417, 4
      %v1917 = vrot.slane %v1420, 5
      %v1918 = vor.u32 %v1916, %v1917
      %v1919 = vsel %vm1875, %v1914, %v1918
      %v1920 = vrot.slane %v1426, 4
      %v1921 = vrot.slane %v1429, 5
      %v1922 = vor.u32 %v1920, %v1921
      %v1923 = vsel %vm1875, %v1918, %v1922
      %v1924 = vrot.slane %v1435, 4
      %v1925 = vrot.slane %v1438, 5
      %v1926 = vor.u32 %v1924, %v1925
      %v1927 = vsel %vm1875, %v1922, %v1926
      %v1928 = vrot.slane %v1444, 4
      %v1929 = vrot.slane %v1447, 5
      %v1930 = vor.u32 %v1928, %v1929
      %v1931 = vsel %vm1875, %v1926, %v1930
      %v1932 = vrot.slane %v1453, 4
      %v1933 = vrot.slane %v1456, 5
      %v1934 = vor.u32 %v1932, %v1933
      %v1935 = vsel %vm1875, %v1930, %v1934
      %v1936 = vrot.slane %v1462, 4
      %v1937 = vrot.slane %v1465, 5
      %v1938 = vor.u32 %v1936, %v1937
      %v1939 = vsel %vm1875, %v1934, %v1938
      %v1940 = vrot.slane %v1471, 4
      %v1941 = vrot.slane %v1474, 5
      %v1942 = vor.u32 %v1940, %v1941
      %v1943 = vsel %vm1875, %v1938, %v1942
      %v1944 = vrot.slane %v1480, 4
      %v1945 = vrot.slane %v1483, 5
      %v1946 = vor.u32 %v1944, %v1945
      %v1947 = vsel %vm1875, %v1942, %v1946
      %v1948 = vrot.slane %v1489, 4
      %v1949 = vrot.slane %v1492, 5
      %v1950 = vor.u32 %v1948, %v1949
      %v1951 = vsel %vm1875, %v1946, %v1950
      %v1952 = vrot.slane %v1498, 4
      %v1953 = vrot.slane %v1501, 5
      %v1954 = vor.u32 %v1952, %v1953
      %v1955 = vsel %vm1875, %v1950, %v1954
      %v1956 = vrot.slane %v1507, 4
      %v1957 = vrot.slane %v1510, 5
      %v1958 = vor.u32 %v1956, %v1957
      %v1959 = vsel %vm1875, %v1954, %v1958
      %v1960 = vrot.slane %v1516, 4
      %v1961 = vrot.slane %v1519, 5
      %v1962 = vor.u32 %v1960, %v1961
      %v1963 = vsel %vm1875, %v1958, %v1962
      %v1964 = vrot.slane %v1525, 4
      %v1965 = vrot.slane %v1528, 5
      %v1966 = vor.u32 %v1964, %v1965
      %v1967 = vsel %vm1875, %v1962, %v1966
      %v1968 = vrot.slane %v1534, 4
      %v1969 = vrot.slane %v1537, 5
      %v1970 = vor.u32 %v1968, %v1969
      %v1971 = vsel %vm1875, %v1966, %v1970
      %v1972 = vrot.slane %v1543, 4
      %v1973 = vrot.slane %v1546, 5
      %v1974 = vor.u32 %v1972, %v1973
      %v1975 = vsel %vm1875, %v1970, %v1974
      %v1977 = vshrl.u32 %v1857, 16
      %v1979 = vrot.slane %v1977, 4
      %v1980 = vshll.u32 %v1857, 16
      %v1982 = vrot.slane %v1980, 5
      %v1983 = vor.u32 %v1979, %v1982
      %v1984 = vsel %vm1875, %v1974, %v1983
      %v2025 = vunpack.c.l.b16 %v1859
      %v2026 = vunpack.c.l.b16 %v1860
      %v2027 = vunpack.c.l.b16 %v1861
      %v2028 = vunpack.c.l.b16 %v1862
      %v2029 = vunpack.c.l.b16 %v1863
      %v2030 = vunpack.c.l.b16 %v1864
      %v2031 = vunpack.c.l.b16 %v1865
      %v2032 = vunpack.c.l.b16 %v1866
      %v2033 = vunpack.c.l.b16 %v1867
      %v2034 = vunpack.c.l.b16 %v1868
      %v2035 = vunpack.c.l.b16 %v1869
      %v2036 = vunpack.c.l.b16 %v1870
      %v2037 = vunpack.c.l.b16 %v1871
      %v2038 = vunpack.c.l.b16 %v1872
      %v2039 = vunpack.c.l.b16 %v1873
      %v2040 = vunpack.c.l.b16 %v1874
      %v2041 = vpack.c.b16 %v2026, %v2025
      %v2042 = vpack.c.b16 %v2028, %v2027
      %v2043 = vpack.c.b16 %v2030, %v2029
      %v2044 = vpack.c.b16 %v2032, %v2031
      %v2045 = vpack.c.b16 %v2034, %v2033
      %v2046 = vpack.c.b16 %v2036, %v2035
      %v2047 = vpack.c.b16 %v2038, %v2037
      %v2048 = vpack.c.b16 %v2040, %v2039
      %2057 = vmatprep.subr.bf16.mxu0 0
      %2058 = vmatpush1.bf16.msra.mxu0 %v2041
      %2059 = vmatprep.subr.bf16.mxu0 0
      %2060 = vmatpush1.bf16.msra.mxu0 %v2042
      %2061 = vmatprep.subr.bf16.mxu0 0
      %2062 = vmatpush1.bf16.msra.mxu0 %v2043
      %2063 = vmatprep.subr.bf16.mxu0 0
      %2064 = vmatpush1.bf16.msra.mxu0 %v2044
      %2065 = vmatprep.subr.bf16.mxu0 0
      %2066 = vmatpush1.bf16.msra.mxu0 %v2045
      %2067 = vmatprep.subr.bf16.mxu0 0
      %2068 = vmatpush1.bf16.msra.mxu0 %v2046
      %2069 = vmatprep.subr.bf16.mxu0 0
      %2070 = vmatpush1.bf16.msra.mxu0 %v2047
      %2071 = vmatprep.subr.bf16.mxu0 0
      %2072 = vmatpush1.bf16.msra.mxu0 %v2048
      %2073 = vmatprep.subr.bf16.mxu0 0
      %2074 = vmatpush1.bf16.msra.mxu0 0
      %2075 = vmatprep.subr.bf16.mxu0 0
      %2076 = vmatpush1.bf16.msra.mxu0 0
      %2077 = vmatprep.subr.bf16.mxu0 0
      %2078 = vmatpush1.bf16.msra.mxu0 0
      %2079 = vmatprep.subr.bf16.mxu0 0
      %2080 = vmatpush1.bf16.msra.mxu0 0
      %2081 = vmatprep.subr.bf16.mxu0 0
      %2082 = vmatpush1.bf16.msra.mxu0 0
      %2083 = vmatprep.subr.bf16.mxu0 0
      %2084 = vmatpush1.bf16.msra.mxu0 0
      %2085 = vmatprep.subr.bf16.mxu0 0
      %2086 = vmatpush1.bf16.msra.mxu0 0
      %2087 = vmatprep.subr.bf16.mxu0 0
      %2088 = vmatpush1.bf16.msra.mxu0 0
      %2089 = vmatprep.mubr.bf16.mxu0 0
      %2090 = vmatmul.mubr.bf16.gmra.mrb[0].mxu0 %v1887
      %v2091 = vpop.f32.mrb[0].mxu0
      %v2092 = vadd.f32 0.0, %v2091
      %v2093 = vpop.f32.mrb[0].mxu0
      %v2094 = vpop.f32.mrb[0].mxu0
      %v2095 = vadd.f32 0.0, %v2094
      %v2096 = vpop.f32.mrb[0].mxu0
      %2097 = vmatprep.mubr.bf16.mxu0 0
      %2098 = vmatmul.mubr.bf16.gmra.mrb[0].mxu0 %v1891
      %v2099 = vpop.f32.mrb[0].mxu0
      %v2100 = vadd.f32 0.0, %v2099
      %v2101 = vpop.f32.mrb[0].mxu0
      %v2102 = vpop.f32.mrb[0].mxu0
      %v2103 = vadd.f32 0.0, %v2102
      %v2104 = vpop.f32.mrb[0].mxu0
      %2105 = vmatprep.mubr.bf16.mxu0 0
      %2106 = vmatmul.mubr.bf16.gmra.mrb[0].mxu0 %v1895
      %v2107 = vpop.f32.mrb[0].mxu0
      %v2108 = vadd.f32 0.0, %v2107
      %v2109 = vpop.f32.mrb[0].mxu0
      %v2110 = vpop.f32.mrb[0].mxu0
      %v2111 = vadd.f32 0.0, %v2110
      %v2112 = vpop.f32.mrb[0].mxu0
      %2113 = vmatprep.mubr.bf16.mxu0 0
      %2114 = vmatmul.mubr.bf16.gmra.mrb[0].mxu0 %v1899
      %v2115 = vpop.f32.mrb[0].mxu0
      %v2116 = vadd.f32 0.0, %v2115
      %v2117 = vpop.f32.mrb[0].mxu0
      %v2118 = vpop.f32.mrb[0].mxu0
      %v2119 = vadd.f32 0.0, %v2118
      %v2120 = vpop.f32.mrb[0].mxu0
      %2121 = vmatprep.mubr.bf16.mxu0 0
      %2122 = vmatmul.mubr.bf16.gmra.mrb[0].mxu0 %v1903
      %v2123 = vpop.f32.mrb[0].mxu0
      %v2124 = vadd.f32 0.0, %v2123
      %v2125 = vpop.f32.mrb[0].mxu0
      %v2126 = vpop.f32.mrb[0].mxu0
      %v2127 = vadd.f32 0.0, %v2126
      %v2128 = vpop.f32.mrb[0].mxu0
      %2129 = vmatprep.mubr.bf16.mxu0 0
      %2130 = vmatmul.mubr.bf16.gmra.mrb[0].mxu0 %v1907
      %v2131 = vpop.f32.mrb[0].mxu0
      %v2132 = vadd.f32 0.0, %v2131
      %v2133 = vpop.f32.mrb[0].mxu0
      %v2134 = vpop.f32.mrb[0].mxu0
      %v2135 = vadd.f32 0.0, %v2134
      %v2136 = vpop.f32.mrb[0].mxu0
      %2137 = vmatprep.mubr.bf16.mxu0 0
      %2138 = vmatmul.mubr.bf16.gmra.mrb[0].mxu0 %v1911
      %v2139 = vpop.f32.mrb[0].mxu0
      %v2140 = vadd.f32 0.0, %v2139
      %v2141 = vpop.f32.mrb[0].mxu0
      %v2142 = vpop.f32.mrb[0].mxu0
      %v2143 = vadd.f32 0.0, %v2142
      %v2144 = vpop.f32.mrb[0].mxu0
      %2145 = vmatprep.mubr.bf16.mxu0 0
      %2146 = vmatmul.mubr.bf16.gmra.mrb[0].mxu0 %v1915
      %v2147 = vpop.f32.mrb[0].mxu0
      %v2148 = vadd.f32 0.0, %v2147
      %v2149 = vpop.f32.mrb[0].mxu0
      %v2150 = vpop.f32.mrb[0].mxu0
      %v2151 = vadd.f32 0.0, %v2150
      %v2152 = vpop.f32.mrb[0].mxu0
      %2153 = vmatprep.mubr.bf16.mxu0 0
      %2154 = vmatmul.mubr.bf16.gmra.mrb[0].mxu0 %v1919
      %v2155 = vpop.f32.mrb[0].mxu0
      %v2156 = vadd.f32 0.0, %v2155
      %v2157 = vpop.f32.mrb[0].mxu0
      %v2158 = vpop.f32.mrb[0].mxu0
      %v2159 = vadd.f32 0.0, %v2158
      %v2160 = vpop.f32.mrb[0].mxu0
      %2161 = vmatprep.mubr.bf16.mxu0 0
      %2162 = vmatmul.mubr.bf16.gmra.mrb[0].mxu0 %v1923
      %v2163 = vpop.f32.mrb[0].mxu0
      %v2164 = vadd.f32 0.0, %v2163
      %v2165 = vpop.f32.mrb[0].mxu0
      %v2166 = vpop.f32.mrb[0].mxu0
      %v2167 = vadd.f32 0.0, %v2166
      %v2168 = vpop.f32.mrb[0].mxu0
      %2169 = vmatprep.mubr.bf16.mxu0 0
      %2170 = vmatmul.mubr.bf16.gmra.mrb[0].mxu0 %v1927
      %v2171 = vpop.f32.mrb[0].mxu0
      %v2172 = vadd.f32 0.0, %v2171
      %v2173 = vpop.f32.mrb[0].mxu0
      %v2174 = vpop.f32.mrb[0].mxu0
      %v2175 = vadd.f32 0.0, %v2174
      %v2176 = vpop.f32.mrb[0].mxu0
      %2177 = vmatprep.mubr.bf16.mxu0 0
      %2178 = vmatmul.mubr.bf16.gmra.mrb[0].mxu0 %v1931
      %v2179 = vpop.f32.mrb[0].mxu0
      %v2180 = vadd.f32 0.0, %v2179
      %v2181 = vpop.f32.mrb[0].mxu0
      %v2182 = vpop.f32.mrb[0].mxu0
      %v2183 = vadd.f32 0.0, %v2182
      %v2184 = vpop.f32.mrb[0].mxu0
      %2185 = vmatprep.mubr.bf16.mxu0 0
      %2186 = vmatmul.mubr.bf16.gmra.mrb[0].mxu0 %v1935
      %v2187 = vpop.f32.mrb[0].mxu0
      %v2188 = vadd.f32 0.0, %v2187
      %v2189 = vpop.f32.mrb[0].mxu0
      %v2190 = vpop.f32.mrb[0].mxu0
      %v2191 = vadd.f32 0.0, %v2190
      %v2192 = vpop.f32.mrb[0].mxu0
      %2193 = vmatprep.mubr.bf16.mxu0 0
      %2194 = vmatmul.mubr.bf16.gmra.mrb[0].mxu0 %v1939
      %v2195 = vpop.f32.mrb[0].mxu0
      %v2196 = vadd.f32 0.0, %v2195
      %v2197 = vpop.f32.mrb[0].mxu0
      %v2198 = vpop.f32.mrb[0].mxu0
      %v2199 = vadd.f32 0.0, %v2198
      %v2200 = vpop.f32.mrb[0].mxu0
      %2201 = vmatprep.mubr.bf16.mxu0 0
      %2202 = vmatmul.mubr.bf16.gmra.mrb[0].mxu0 %v1943
      %v2203 = vpop.f32.mrb[0].mxu0
      %v2204 = vadd.f32 0.0, %v2203
      %v2205 = vpop.f32.mrb[0].mxu0
      %v2206 = vpop.f32.mrb[0].mxu0
      %v2207 = vadd.f32 0.0, %v2206
      %v2208 = vpop.f32.mrb[0].mxu0
      %2209 = vmatprep.mubr.bf16.mxu0 0
      %2210 = vmatmul.mubr.bf16.gmra.mrb[0].mxu0 %v1947
      %v2211 = vpop.f32.mrb[0].mxu0
      %v2212 = vadd.f32 0.0, %v2211
      %v2213 = vpop.f32.mrb[0].mxu0
      %v2214 = vpop.f32.mrb[0].mxu0
      %v2215 = vadd.f32 0.0, %v2214
      %v2216 = vpop.f32.mrb[0].mxu0
      %2217 = vmatprep.mubr.bf16.mxu0 0
      %2218 = vmatmul.mubr.bf16.gmra.mrb[0].mxu0 %v1951
      %v2219 = vpop.f32.mrb[0].mxu0
      %v2220 = vadd.f32 0.0, %v2219
      %v2221 = vpop.f32.mrb[0].mxu0
      %v2222 = vpop.f32.mrb[0].mxu0
      %v2223 = vadd.f32 0.0, %v2222
      %v2224 = vpop.f32.mrb[0].mxu0
      %2225 = vmatprep.mubr.bf16.mxu0 0
      %2226 = vmatmul.mubr.bf16.gmra.mrb[0].mxu0 %v1955
      %v2227 = vpop.f32.mrb[0].mxu0
      %v2228 = vadd.f32 0.0, %v2227
      %v2229 = vpop.f32.mrb[0].mxu0
      %v2230 = vpop.f32.mrb[0].mxu0
      %v2231 = vadd.f32 0.0, %v2230
      %v2232 = vpop.f32.mrb[0].mxu0
      %2233 = vmatprep.mubr.bf16.mxu0 0
      %2234 = vmatmul.mubr.bf16.gmra.mrb[0].mxu0 %v1959
      %v2235 = vpop.f32.mrb[0].mxu0
      %v2236 = vadd.f32 0.0, %v2235
      %v2237 = vpop.f32.mrb[0].mxu0
      %v2238 = vpop.f32.mrb[0].mxu0
      %v2239 = vadd.f32 0.0, %v2238
      %v2240 = vpop.f32.mrb[0].mxu0
      %2241 = vmatprep.mubr.bf16.mxu0 0
      %2242 = vmatmul.mubr.bf16.gmra.mrb[0].mxu0 %v1963
      %v2243 = vpop.f32.mrb[0].mxu0
      %v2244 = vadd.f32 0.0, %v2243
      %v2245 = vpop.f32.mrb[0].mxu0
      %v2246 = vpop.f32.mrb[0].mxu0
      %v2247 = vadd.f32 0.0, %v2246
      %v2248 = vpop.f32.mrb[0].mxu0
      %2249 = vmatprep.mubr.bf16.mxu0 0
      %2250 = vmatmul.mubr.bf16.gmra.mrb[0].mxu0 %v1967
      %v2251 = vpop.f32.mrb[0].mxu0
      %v2252 = vadd.f32 0.0, %v2251
      %v2253 = vpop.f32.mrb[0].mxu0
      %v2254 = vpop.f32.mrb[0].mxu0
      %v2255 = vadd.f32 0.0, %v2254
      %v2256 = vpop.f32.mrb[0].mxu0
      %2257 = vmatprep.mubr.bf16.mxu0 0
      %2258 = vmatmul.mubr.bf16.gmra.mrb[0].mxu0 %v1971
      %v2259 = vpop.f32.mrb[0].mxu0
      %v2260 = vadd.f32 0.0, %v2259
      %v2261 = vpop.f32.mrb[0].mxu0
      %v2262 = vpop.f32.mrb[0].mxu0
      %v2263 = vadd.f32 0.0, %v2262
      %v2264 = vpop.f32.mrb[0].mxu0
      %2265 = vmatprep.mubr.bf16.mxu0 0
      %2266 = vmatmul.mubr.bf16.gmra.mrb[0].mxu0 %v1975
      %v2267 = vpop.f32.mrb[0].mxu0
      %v2268 = vadd.f32 0.0, %v2267
      %v2269 = vpop.f32.mrb[0].mxu0
      %v2270 = vpop.f32.mrb[0].mxu0
      %v2271 = vadd.f32 0.0, %v2270
      %v2272 = vpop.f32.mrb[0].mxu0
      %2273 = vmatprep.mubr.bf16.mxu0 0
      %2274 = vmatmul.mubr.bf16.gmra.mrb[0].mxu0 %v1984
      %v2275 = vpop.f32.mrb[0].mxu0
      %v2276 = vadd.f32 0.0, %v2275
      %v2277 = vpop.f32.mrb[0].mxu0
      %v2278 = vpop.f32.mrb[0].mxu0
      %v2279 = vadd.f32 0.0, %v2278
      %v2280 = vpop.f32.mrb[0].mxu0
      %2281 = vdwg.mxu0
      %v2282 = vadd.f32 %v1667, %v2092
      %v2283 = vadd.f32 %v1670, %v2095
      %v2284 = vadd.f32 %v1675, %v2100
      %v2285 = vadd.f32 %v1678, %v2103
      %v2286 = vadd.f32 %v1683, %v2108
      %v2287 = vadd.f32 %v1686, %v2111
      %v2288 = vadd.f32 %v1691, %v2116
      %v2289 = vadd.f32 %v1694, %v2119
      %v2290 = vadd.f32 %v1699, %v2124
      %v2291 = vadd.f32 %v1702, %v2127
      %v2292 = vadd.f32 %v1707, %v2132
      %v2293 = vadd.f32 %v1710, %v2135
      %v2294 = vadd.f32 %v1715, %v2140
      %v2295 = vadd.f32 %v1718, %v2143
      %v2296 = vadd.f32 %v1723, %v2148
      %v2297 = vadd.f32 %v1726, %v2151
      %v2298 = vadd.f32 %v1731, %v2156
      %v2299 = vadd.f32 %v1734, %v2159
      %v2300 = vadd.f32 %v1739, %v2164
      %v2301 = vadd.f32 %v1742, %v2167
      %v2302 = vadd.f32 %v1747, %v2172
      %v2303 = vadd.f32 %v1750, %v2175
      %v2304 = vadd.f32 %v1755, %v2180
      %v2305 = vadd.f32 %v1758, %v2183
      %v2306 = vadd.f32 %v1763, %v2188
      %v2307 = vadd.f32 %v1766, %v2191
      %v2308 = vadd.f32 %v1771, %v2196
      %v2309 = vadd.f32 %v1774, %v2199
      %v2310 = vadd.f32 %v1779, %v2204
      %v2311 = vadd.f32 %v1782, %v2207
      %v2312 = vadd.f32 %v1787, %v2212
      %v2313 = vadd.f32 %v1790, %v2215
      %v2314 = vadd.f32 %v1795, %v2220
      %v2315 = vadd.f32 %v1798, %v2223
      %v2316 = vadd.f32 %v1803, %v2228
      %v2317 = vadd.f32 %v1806, %v2231
      %v2318 = vadd.f32 %v1811, %v2236
      %v2319 = vadd.f32 %v1814, %v2239
      %v2320 = vadd.f32 %v1819, %v2244
      %v2321 = vadd.f32 %v1822, %v2247
      %v2322 = vadd.f32 %v1827, %v2252
      %v2323 = vadd.f32 %v1830, %v2255
      %v2324 = vadd.f32 %v1835, %v2260
      %v2325 = vadd.f32 %v1838, %v2263
      %v2326 = vadd.f32 %v1843, %v2268
      %v2327 = vadd.f32 %v1846, %v2271
      %v2328 = vadd.f32 %v1851, %v2276
      %v2329 = vadd.f32 %v1854, %v2279
      %2330 = vst [vmem:[#allocation3] sm:$0xff] %v2282
      %2331 = vst [vmem:[#allocation3 + $0x8] sm:$0xff] %v2283
      %2332 = vst [vmem:[#allocation3 + $0x10] sm:$0xff] %v2284
      %2333 = vst [vmem:[#allocation3 + $0x18] sm:$0xff] %v2285
      %2334 = vst [vmem:[#allocation3 + $0x20] sm:$0xff] %v2286
      %2335 = vst [vmem:[#allocation3 + $0x28] sm:$0xff] %v2287
      %2336 = vst [vmem:[#allocation3 + $0x30] sm:$0xff] %v2288
      %2337 = vst [vmem:[#allocation3 + $0x38] sm:$0xff] %v2289
      %2338 = vst [vmem:[#allocation3 + $0x40] sm:$0xff] %v2290
      %2339 = vst [vmem:[#allocation3 + $0x48] sm:$0xff] %v2291
      %2340 = vst [vmem:[#allocation3 + $0x50] sm:$0xff] %v2292
      %2341 = vst [vmem:[#allocation3 + $0x58] sm:$0xff] %v2293
      %2342 = vst [vmem:[#allocation3 + $0x60] sm:$0xff] %v2294
      %2343 = vst [vmem:[#allocation3 + $0x68] sm:$0xff] %v2295
      %2344 = vst [vmem:[#allocation3 + $0x70] sm:$0xff] %v2296
      %2345 = vst [vmem:[#allocation3 + $0x78] sm:$0xff] %v2297
      %2346 = vst [vmem:[#allocation3 + $0x80] sm:$0xff] %v2298
      %2347 = vst [vmem:[#allocation3 + $0x88] sm:$0xff] %v2299
      %2348 = vst [vmem:[#allocation3 + $0x90] sm:$0xff] %v2300
      %2349 = vst [vmem:[#allocation3 + $0x98] sm:$0xff] %v2301
      %2350 = vst [vmem:[#allocation3 + $0xa0] sm:$0xff] %v2302
      %2351 = vst [vmem:[#allocation3 + $0xa8] sm:$0xff] %v2303
      %2352 = vst [vmem:[#allocation3 + $0xb0] sm:$0xff] %v2304
      %2353 = vst [vmem:[#allocation3 + $0xb8] sm:$0xff] %v2305
      %2354 = vst [vmem:[#allocation3 + $0xc0] sm:$0xff] %v2306
      %2355 = vst [vmem:[#allocation3 + $0xc8] sm:$0xff] %v2307
      %2356 = vst [vmem:[#allocation3 + $0xd0] sm:$0xff] %v2308
      %2357 = vst [vmem:[#allocation3 + $0xd8] sm:$0xff] %v2309
      %2358 = vst [vmem:[#allocation3 + $0xe0] sm:$0xff] %v2310
      %2359 = vst [vmem:[#allocation3 + $0xe8] sm:$0xff] %v2311
      %2360 = vst [vmem:[#allocation3 + $0xf0] sm:$0xff] %v2312
      %2361 = vst [vmem:[#allocation3 + $0xf8] sm:$0xff] %v2313
      %2362 = vst [vmem:[#allocation3 + $0x100] sm:$0xff] %v2314
      %2363 = vst [vmem:[#allocation3 + $0x108] sm:$0xff] %v2315
      %2364 = vst [vmem:[#allocation3 + $0x110] sm:$0xff] %v2316
      %2365 = vst [vmem:[#allocation3 + $0x118] sm:$0xff] %v2317
      %2366 = vst [vmem:[#allocation3 + $0x120] sm:$0xff] %v2318
      %2367 = vst [vmem:[#allocation3 + $0x128] sm:$0xff] %v2319
      %2368 = vst [vmem:[#allocation3 + $0x130] sm:$0xff] %v2320
      %2369 = vst [vmem:[#allocation3 + $0x138] sm:$0xff] %v2321
      %2370 = vst [vmem:[#allocation3 + $0x140] sm:$0xff] %v2322
      %2371 = vst [vmem:[#allocation3 + $0x148] sm:$0xff] %v2323
      %2372 = vst [vmem:[#allocation3 + $0x150] sm:$0xff] %v2324
      %2373 = vst [vmem:[#allocation3 + $0x158] sm:$0xff] %v2325
      %2374 = vst [vmem:[#allocation3 + $0x160] sm:$0xff] %v2326
      %2375 = vst [vmem:[#allocation3 + $0x168] sm:$0xff] %v2327
      %2376 = vst [vmem:[#allocation3 + $0x170] sm:$0xff] %v2328
      %2377 = vst [vmem:[#allocation3 + $0x178] sm:$0xff] %v2329
      %v2378 = vld [vmem:[#allocation2 + $0x8] sm:$0x80]
      %v2379 = vld [vmem:[#allocation2 + $0x10] sm:$0xff]
      %v2380 = vld [vmem:[#allocation2 + $0x18] sm:$0xff]
      %v2381 = vld [vmem:[#allocation2 + $0x20] sm:$0xff]
      %v2382 = vld [vmem:[#allocation2 + $0x28] sm:$0xff]
      %v2383 = vld [vmem:[#allocation2 + $0x30] sm:$0xff]
      %v2384 = vld [vmem:[#allocation2 + $0x38] sm:$0xff]
      %v2385 = vld [vmem:[#allocation2 + $0x40] sm:$0xff]
      %v2386 = vld [vmem:[#allocation2 + $0x48] sm:$0xff]
      %v2387 = vld [vmem:[#allocation2 + $0x50] sm:$0xff]
      %v2388 = vld [vmem:[#allocation2 + $0x58] sm:$0xff]
      %v2389 = vld [vmem:[#allocation2 + $0x60] sm:$0xff]
      %v2390 = vld [vmem:[#allocation2 + $0x68] sm:$0xff]
      %v2391 = vld [vmem:[#allocation2 + $0x70] sm:$0xff]
      %v2392 = vld [vmem:[#allocation2 + $0x78] sm:$0xff]
      %v2393 = vld [vmem:[#allocation2 + $0x80] sm:$0xff]
      %v2394 = vld [vmem:[#allocation2 + $0x88] sm:$0xff]
      %v2395 = vld [vmem:[#allocation2 + $0x90] sm:$0xff]
      %v2396 = vld [vmem:[#allocation2 + $0x98] sm:$0xff]
      %v2397 = vld [vmem:[#allocation2 + $0xa0] sm:$0xff]
      %v2398 = vld [vmem:[#allocation2 + $0xa8] sm:$0xff]
      %v2399 = vld [vmem:[#allocation2 + $0xb0] sm:$0xff]
      %v2400 = vld [vmem:[#allocation2 + $0xb8] sm:$0xff]
      %v2401 = vld [vmem:[#allocation2 + $0xc0] sm:$0xff]
      %v2402 = vld [vmem:[#allocation2 + $0xc8] sm:$0xff]
      %s2403 = scalar_lea.vmem %s2, 192
      %v2404 = vld [vmem:[%s2403] sm:$0xf]
      %v2405 = vld [vmem:[%s2403 + $0x4] sm:$0xf]
      %v2406 = vld [vmem:[%s2403 + $0x8] sm:$0xf]
      %v2407 = vld [vmem:[%s2403 + $0xc] sm:$0xf]
      %v2408 = vld [vmem:[%s2403 + $0x10] sm:$0xf]
      %v2409 = vld [vmem:[%s2403 + $0x14] sm:$0xf]
      %v2410 = vld [vmem:[%s2403 + $0x18] sm:$0xf]
      %v2411 = vld [vmem:[%s2403 + $0x1c] sm:$0xf]
      %v2412 = vld [vmem:[%s2403 + $0x20] sm:$0xf]
      %v2413 = vld [vmem:[%s2403 + $0x24] sm:$0xf]
      %v2414 = vld [vmem:[%s2403 + $0x28] sm:$0xf]
      %v2415 = vld [vmem:[%s2403 + $0x2c] sm:$0xf]
      %v2416 = vld [vmem:[%s2403 + $0x30] sm:$0xf]
      %v2417 = vld [vmem:[%s2403 + $0x34] sm:$0xf]
      %v2418 = vld [vmem:[%s2403 + $0x38] sm:$0xf]
      %v2419 = vld [vmem:[%s2403 + $0x3c] sm:$0xf]
      %s2420 = scalar_lea.vmem %s2, 256
      %v2421 = vld [vmem:[%s2420] sm:$0xf]
      %v2422 = vld [vmem:[%s2420 + $0x4] sm:$0xf]
      %v2423 = vld [vmem:[%s2420 + $0x8] sm:$0xf]
      %v2424 = vld [vmem:[%s2420 + $0xc] sm:$0xf]
      %v2425 = vld [vmem:[%s2420 + $0x10] sm:$0xf]
      %v2426 = vld [vmem:[%s2420 + $0x14] sm:$0xf]
      %v2427 = vld [vmem:[%s2420 + $0x18] sm:$0xf]
      %v2428 = vld [vmem:[%s2420 + $0x1c] sm:$0xf]
      %v2429 = vld [vmem:[%s2420 + $0x20] sm:$0xf]
      %v2430 = vld [vmem:[%s2420 + $0x24] sm:$0xf]
      %v2431 = vld [vmem:[%s2420 + $0x28] sm:$0xf]
      %v2432 = vld [vmem:[%s2420 + $0x2c] sm:$0xf]
      %v2433 = vld [vmem:[%s2420 + $0x30] sm:$0xf]
      %v2434 = vld [vmem:[%s2420 + $0x34] sm:$0xf]
      %v2435 = vld [vmem:[%s2420 + $0x38] sm:$0xf]
      %v2436 = vld [vmem:[%s2420 + $0x3c] sm:$0xf]
      %v2453 = vunpack.c.l.b16 %v2421
      %v2454 = vunpack.c.l.b16 %v2422
      %v2455 = vunpack.c.l.b16 %v2423
      %v2456 = vunpack.c.l.b16 %v2424
      %v2457 = vunpack.c.l.b16 %v2425
      %v2458 = vunpack.c.l.b16 %v2426
      %v2459 = vunpack.c.l.b16 %v2427
      %v2460 = vunpack.c.l.b16 %v2428
      %v2461 = vunpack.c.l.b16 %v2429
      %v2462 = vunpack.c.l.b16 %v2430
      %v2463 = vunpack.c.l.b16 %v2431
      %v2464 = vunpack.c.l.b16 %v2432
      %v2465 = vunpack.c.l.b16 %v2433
      %v2466 = vunpack.c.l.b16 %v2434
      %v2467 = vunpack.c.l.b16 %v2435
      %v2468 = vunpack.c.l.b16 %v2436
      %v2469 = vpack.c.b16 %v2454, %v2453
      %v2470 = vpack.c.b16 %v2456, %v2455
      %v2471 = vpack.c.b16 %v2458, %v2457
      %v2472 = vpack.c.b16 %v2460, %v2459
      %v2473 = vpack.c.b16 %v2462, %v2461
      %v2474 = vpack.c.b16 %v2464, %v2463
      %v2475 = vpack.c.b16 %v2466, %v2465
      %v2476 = vpack.c.b16 %v2468, %v2467
      %2485 = vmatprep.subr.bf16.mxu0 0
      %2486 = vmatpush1.bf16.msra.mxu0 %v2469
      %2487 = vmatprep.subr.bf16.mxu0 0
      %2488 = vmatpush1.bf16.msra.mxu0 %v2470
      %2489 = vmatprep.subr.bf16.mxu0 0
      %2490 = vmatpush1.bf16.msra.mxu0 %v2471
      %2491 = vmatprep.subr.bf16.mxu0 0
      %2492 = vmatpush1.bf16.msra.mxu0 %v2472
      %2493 = vmatprep.subr.bf16.mxu0 0
      %2494 = vmatpush1.bf16.msra.mxu0 %v2473
      %2495 = vmatprep.subr.bf16.mxu0 0
      %2496 = vmatpush1.bf16.msra.mxu0 %v2474
      %2497 = vmatprep.subr.bf16.mxu0 0
      %2498 = vmatpush1.bf16.msra.mxu0 %v2475
      %2499 = vmatprep.subr.bf16.mxu0 0
      %2500 = vmatpush1.bf16.msra.mxu0 %v2476
      %2501 = vmatprep.subr.bf16.mxu0 0
      %2502 = vmatpush1.bf16.msra.mxu0 0
      %2503 = vmatprep.subr.bf16.mxu0 0
      %2504 = vmatpush1.bf16.msra.mxu0 0
      %2505 = vmatprep.subr.bf16.mxu0 0
      %2506 = vmatpush1.bf16.msra.mxu0 0
      %2507 = vmatprep.subr.bf16.mxu0 0
      %2508 = vmatpush1.bf16.msra.mxu0 0
      %2509 = vmatprep.subr.bf16.mxu0 0
      %2510 = vmatpush1.bf16.msra.mxu0 0
      %2511 = vmatprep.subr.bf16.mxu0 0
      %2512 = vmatpush1.bf16.msra.mxu0 0
      %2513 = vmatprep.subr.bf16.mxu0 0
      %2514 = vmatpush1.bf16.msra.mxu0 0
      %2515 = vmatprep.subr.bf16.mxu0 0
      %2516 = vmatpush1.bf16.msra.mxu0 0
      %2517 = vmatprep.mubr.bf16.mxu0 0
      %2518 = vmatmul.mubr.bf16.gmra.mrb[0].mxu0 %v2379
      %v2519 = vpop.f32.mrb[0].mxu0
      %v2520 = vadd.f32 0.0, %v2519
      %v2521 = vpop.f32.mrb[0].mxu0
      %v2522 = vpop.f32.mrb[0].mxu0
      %v2523 = vadd.f32 0.0, %v2522
      %v2524 = vpop.f32.mrb[0].mxu0
      %2525 = vmatprep.mubr.bf16.mxu0 0
      %2526 = vmatmul.mubr.bf16.gmra.mrb[0].mxu0 %v2380
      %v2527 = vpop.f32.mrb[0].mxu0
      %v2528 = vadd.f32 0.0, %v2527
      %v2529 = vpop.f32.mrb[0].mxu0
      %v2530 = vpop.f32.mrb[0].mxu0
      %v2531 = vadd.f32 0.0, %v2530
      %v2532 = vpop.f32.mrb[0].mxu0
      %2533 = vmatprep.mubr.bf16.mxu0 0
      %2534 = vmatmul.mubr.bf16.gmra.mrb[0].mxu0 %v2381
      %v2535 = vpop.f32.mrb[0].mxu0
      %v2536 = vadd.f32 0.0, %v2535
      %v2537 = vpop.f32.mrb[0].mxu0
      %v2538 = vpop.f32.mrb[0].mxu0
      %v2539 = vadd.f32 0.0, %v2538
      %v2540 = vpop.f32.mrb[0].mxu0
      %2541 = vmatprep.mubr.bf16.mxu0 0
      %2542 = vmatmul.mubr.bf16.gmra.mrb[0].mxu0 %v2382
      %v2543 = vpop.f32.mrb[0].mxu0
      %v2544 = vadd.f32 0.0, %v2543
      %v2545 = vpop.f32.mrb[0].mxu0
      %v2546 = vpop.f32.mrb[0].mxu0
      %v2547 = vadd.f32 0.0, %v2546
      %v2548 = vpop.f32.mrb[0].mxu0
      %2549 = vmatprep.mubr.bf16.mxu0 0
      %2550 = vmatmul.mubr.bf16.gmra.mrb[0].mxu0 %v2383
      %v2551 = vpop.f32.mrb[0].mxu0
      %v2552 = vadd.f32 0.0, %v2551
      %v2553 = vpop.f32.mrb[0].mxu0
      %v2554 = vpop.f32.mrb[0].mxu0
      %v2555 = vadd.f32 0.0, %v2554
      %v2556 = vpop.f32.mrb[0].mxu0
      %2557 = vmatprep.mubr.bf16.mxu0 0
      %2558 = vmatmul.mubr.bf16.gmra.mrb[0].mxu0 %v2384
      %v2559 = vpop.f32.mrb[0].mxu0
      %v2560 = vadd.f32 0.0, %v2559
      %v2561 = vpop.f32.mrb[0].mxu0
      %v2562 = vpop.f32.mrb[0].mxu0
      %v2563 = vadd.f32 0.0, %v2562
      %v2564 = vpop.f32.mrb[0].mxu0
      %2565 = vmatprep.mubr.bf16.mxu0 0
      %2566 = vmatmul.mubr.bf16.gmra.mrb[0].mxu0 %v2385
      %v2567 = vpop.f32.mrb[0].mxu0
      %v2568 = vadd.f32 0.0, %v2567
      %v2569 = vpop.f32.mrb[0].mxu0
      %v2570 = vpop.f32.mrb[0].mxu0
      %v2571 = vadd.f32 0.0, %v2570
      %v2572 = vpop.f32.mrb[0].mxu0
      %2573 = vmatprep.mubr.bf16.mxu0 0
      %2574 = vmatmul.mubr.bf16.gmra.mrb[0].mxu0 %v2386
      %v2575 = vpop.f32.mrb[0].mxu0
      %v2576 = vadd.f32 0.0, %v2575
      %v2577 = vpop.f32.mrb[0].mxu0
      %v2578 = vpop.f32.mrb[0].mxu0
      %v2579 = vadd.f32 0.0, %v2578
      %v2580 = vpop.f32.mrb[0].mxu0
      %2581 = vmatprep.mubr.bf16.mxu0 0
      %2582 = vmatmul.mubr.bf16.gmra.mrb[0].mxu0 %v2387
      %v2583 = vpop.f32.mrb[0].mxu0
      %v2584 = vadd.f32 0.0, %v2583
      %v2585 = vpop.f32.mrb[0].mxu0
      %v2586 = vpop.f32.mrb[0].mxu0
      %v2587 = vadd.f32 0.0, %v2586
      %v2588 = vpop.f32.mrb[0].mxu0
      %2589 = vmatprep.mubr.bf16.mxu0 0
      %2590 = vmatmul.mubr.bf16.gmra.mrb[0].mxu0 %v2388
      %v2591 = vpop.f32.mrb[0].mxu0
      %v2592 = vadd.f32 0.0, %v2591
      %v2593 = vpop.f32.mrb[0].mxu0
      %v2594 = vpop.f32.mrb[0].mxu0
      %v2595 = vadd.f32 0.0, %v2594
      %v2596 = vpop.f32.mrb[0].mxu0
      %2597 = vmatprep.mubr.bf16.mxu0 0
      %2598 = vmatmul.mubr.bf16.gmra.mrb[0].mxu0 %v2389
      %v2599 = vpop.f32.mrb[0].mxu0
      %v2600 = vadd.f32 0.0, %v2599
      %v2601 = vpop.f32.mrb[0].mxu0
      %v2602 = vpop.f32.mrb[0].mxu0
      %v2603 = vadd.f32 0.0, %v2602
      %v2604 = vpop.f32.mrb[0].mxu0
      %2605 = vmatprep.mubr.bf16.mxu0 0
      %2606 = vmatmul.mubr.bf16.gmra.mrb[0].mxu0 %v2390
      %v2607 = vpop.f32.mrb[0].mxu0
      %v2608 = vadd.f32 0.0, %v2607
      %v2609 = vpop.f32.mrb[0].mxu0
      %v2610 = vpop.f32.mrb[0].mxu0
      %v2611 = vadd.f32 0.0, %v2610
      %v2612 = vpop.f32.mrb[0].mxu0
      %2613 = vmatprep.mubr.bf16.mxu0 0
      %2614 = vmatmul.mubr.bf16.gmra.mrb[0].mxu0 %v2391
      %v2615 = vpop.f32.mrb[0].mxu0
      %v2616 = vadd.f32 0.0, %v2615
      %v2617 = vpop.f32.mrb[0].mxu0
      %v2618 = vpop.f32.mrb[0].mxu0
      %v2619 = vadd.f32 0.0, %v2618
      %v2620 = vpop.f32.mrb[0].mxu0
      %2621 = vmatprep.mubr.bf16.mxu0 0
      %2622 = vmatmul.mubr.bf16.gmra.mrb[0].mxu0 %v2392
      %v2623 = vpop.f32.mrb[0].mxu0
      %v2624 = vadd.f32 0.0, %v2623
      %v2625 = vpop.f32.mrb[0].mxu0
      %v2626 = vpop.f32.mrb[0].mxu0
      %v2627 = vadd.f32 0.0, %v2626
      %v2628 = vpop.f32.mrb[0].mxu0
      %2629 = vmatprep.mubr.bf16.mxu0 0
      %2630 = vmatmul.mubr.bf16.gmra.mrb[0].mxu0 %v2393
      %v2631 = vpop.f32.mrb[0].mxu0
      %v2632 = vadd.f32 0.0, %v2631
      %v2633 = vpop.f32.mrb[0].mxu0
      %v2634 = vpop.f32.mrb[0].mxu0
      %v2635 = vadd.f32 0.0, %v2634
      %v2636 = vpop.f32.mrb[0].mxu0
      %2637 = vmatprep.mubr.bf16.mxu0 0
      %2638 = vmatmul.mubr.bf16.gmra.mrb[0].mxu0 %v2394
      %v2639 = vpop.f32.mrb[0].mxu0
      %v2640 = vadd.f32 0.0, %v2639
      %v2641 = vpop.f32.mrb[0].mxu0
      %v2642 = vpop.f32.mrb[0].mxu0
      %v2643 = vadd.f32 0.0, %v2642
      %v2644 = vpop.f32.mrb[0].mxu0
      %2645 = vmatprep.mubr.bf16.mxu0 0
      %2646 = vmatmul.mubr.bf16.gmra.mrb[0].mxu0 %v2395
      %v2647 = vpop.f32.mrb[0].mxu0
      %v2648 = vadd.f32 0.0, %v2647
      %v2649 = vpop.f32.mrb[0].mxu0
      %v2650 = vpop.f32.mrb[0].mxu0
      %v2651 = vadd.f32 0.0, %v2650
      %v2652 = vpop.f32.mrb[0].mxu0
      %2653 = vmatprep.mubr.bf16.mxu0 0
      %2654 = vmatmul.mubr.bf16.gmra.mrb[0].mxu0 %v2396
      %v2655 = vpop.f32.mrb[0].mxu0
      %v2656 = vadd.f32 0.0, %v2655
      %v2657 = vpop.f32.mrb[0].mxu0
      %v2658 = vpop.f32.mrb[0].mxu0
      %v2659 = vadd.f32 0.0, %v2658
      %v2660 = vpop.f32.mrb[0].mxu0
      %2661 = vmatprep.mubr.bf16.mxu0 0
      %2662 = vmatmul.mubr.bf16.gmra.mrb[0].mxu0 %v2397
      %v2663 = vpop.f32.mrb[0].mxu0
      %v2664 = vadd.f32 0.0, %v2663
      %v2665 = vpop.f32.mrb[0].mxu0
      %v2666 = vpop.f32.mrb[0].mxu0
      %v2667 = vadd.f32 0.0, %v2666
      %v2668 = vpop.f32.mrb[0].mxu0
      %2669 = vmatprep.mubr.bf16.mxu0 0
      %2670 = vmatmul.mubr.bf16.gmra.mrb[0].mxu0 %v2398
      %v2671 = vpop.f32.mrb[0].mxu0
      %v2672 = vadd.f32 0.0, %v2671
      %v2673 = vpop.f32.mrb[0].mxu0
      %v2674 = vpop.f32.mrb[0].mxu0
      %v2675 = vadd.f32 0.0, %v2674
      %v2676 = vpop.f32.mrb[0].mxu0
      %2677 = vmatprep.mubr.bf16.mxu0 0
      %2678 = vmatmul.mubr.bf16.gmra.mrb[0].mxu0 %v2399
      %v2679 = vpop.f32.mrb[0].mxu0
      %v2680 = vadd.f32 0.0, %v2679
      %v2681 = vpop.f32.mrb[0].mxu0
      %v2682 = vpop.f32.mrb[0].mxu0
      %v2683 = vadd.f32 0.0, %v2682
      %v2684 = vpop.f32.mrb[0].mxu0
      %2685 = vmatprep.mubr.bf16.mxu0 0
      %2686 = vmatmul.mubr.bf16.gmra.mrb[0].mxu0 %v2400
      %v2687 = vpop.f32.mrb[0].mxu0
      %v2688 = vadd.f32 0.0, %v2687
      %v2689 = vpop.f32.mrb[0].mxu0
      %v2690 = vpop.f32.mrb[0].mxu0
      %v2691 = vadd.f32 0.0, %v2690
      %v2692 = vpop.f32.mrb[0].mxu0
      %2693 = vmatprep.mubr.bf16.mxu0 0
      %2694 = vmatmul.mubr.bf16.gmra.mrb[0].mxu0 %v2401
      %v2695 = vpop.f32.mrb[0].mxu0
      %v2696 = vadd.f32 0.0, %v2695
      %v2697 = vpop.f32.mrb[0].mxu0
      %v2698 = vpop.f32.mrb[0].mxu0
      %v2699 = vadd.f32 0.0, %v2698
      %v2700 = vpop.f32.mrb[0].mxu0
      %2701 = vmatprep.mubr.bf16.mxu0 0
      %2702 = vmatmul.mubr.bf16.gmra.mrb[0].mxu0 %v2402
      %v2703 = vpop.f32.mrb[0].mxu0
      %v2704 = vadd.f32 0.0, %v2703
      %v2705 = vpop.f32.mrb[0].mxu0
      %v2706 = vpop.f32.mrb[0].mxu0
      %v2707 = vadd.f32 0.0, %v2706
      %v2708 = vpop.f32.mrb[0].mxu0
      %2709 = vdwg.mxu0
      %vm2710 = vsmask.f32 256
      %v2712 = vshrl.u32 %v2378, 16
      %v2714 = vrot.slane %v2712, 7
      %v2716 = vshrl.u32 %v2379, 16
      %v2718 = vrot.slane %v2716, 7
      %v2719 = vshll.u32 %v2379, 16
      %v2721 = vor.u32 %v2718, %v2719
      %v2722 = vsel %vm2710, %v2714, %v2721
      %v2724 = vshrl.u32 %v2380, 16
      %v2726 = vrot.slane %v2724, 7
      %v2727 = vshll.u32 %v2380, 16
      %v2729 = vor.u32 %v2726, %v2727
      %v2730 = vsel %vm2710, %v2718, %v2729
      %v2732 = vshrl.u32 %v2381, 16
      %v2734 = vrot.slane %v2732, 7
      %v2735 = vshll.u32 %v2381, 16
      %v2737 = vor.u32 %v2734, %v2735
      %v2738 = vsel %vm2710, %v2726, %v2737
      %v2740 = vshrl.u32 %v2382, 16
      %v2742 = vrot.slane %v2740, 7
      %v2743 = vshll.u32 %v2382, 16
      %v2745 = vor.u32 %v2742, %v2743
      %v2746 = vsel %vm2710, %v2734, %v2745
      %v2748 = vshrl.u32 %v2383, 16
      %v2750 = vrot.slane %v2748, 7
      %v2751 = vshll.u32 %v2383, 16
      %v2753 = vor.u32 %v2750, %v2751
      %v2754 = vsel %vm2710, %v2742, %v2753
      %v2756 = vshrl.u32 %v2384, 16
      %v2758 = vrot.slane %v2756, 7
      %v2759 = vshll.u32 %v2384, 16
      %v2761 = vor.u32 %v2758, %v2759
      %v2762 = vsel %vm2710, %v2750, %v2761
      %v2764 = vshrl.u32 %v2385, 16
      %v2766 = vrot.slane %v2764, 7
      %v2767 = vshll.u32 %v2385, 16
      %v2769 = vor.u32 %v2766, %v2767
      %v2770 = vsel %vm2710, %v2758, %v2769
      %v2772 = vshrl.u32 %v2386, 16
      %v2774 = vrot.slane %v2772, 7
      %v2775 = vshll.u32 %v2386, 16
      %v2777 = vor.u32 %v2774, %v2775
      %v2778 = vsel %vm2710, %v2766, %v2777
      %v2780 = vshrl.u32 %v2387, 16
      %v2782 = vrot.slane %v2780, 7
      %v2783 = vshll.u32 %v2387, 16
      %v2785 = vor.u32 %v2782, %v2783
      %v2786 = vsel %vm2710, %v2774, %v2785
      %v2788 = vshrl.u32 %v2388, 16
      %v2790 = vrot.slane %v2788, 7
      %v2791 = vshll.u32 %v2388, 16
      %v2793 = vor.u32 %v2790, %v2791
      %v2794 = vsel %vm2710, %v2782, %v2793
      %v2796 = vshrl.u32 %v2389, 16
      %v2798 = vrot.slane %v2796, 7
      %v2799 = vshll.u32 %v2389, 16
      %v2801 = vor.u32 %v2798, %v2799
      %v2802 = vsel %vm2710, %v2790, %v2801
      %v2804 = vshrl.u32 %v2390, 16
      %v2806 = vrot.slane %v2804, 7
      %v2807 = vshll.u32 %v2390, 16
      %v2809 = vor.u32 %v2806, %v2807
      %v2810 = vsel %vm2710, %v2798, %v2809
      %v2812 = vshrl.u32 %v2391, 16
      %v2814 = vrot.slane %v2812, 7
      %v2815 = vshll.u32 %v2391, 16
      %v2817 = vor.u32 %v2814, %v2815
      %v2818 = vsel %vm2710, %v2806, %v2817
      %v2820 = vshrl.u32 %v2392, 16
      %v2822 = vrot.slane %v2820, 7
      %v2823 = vshll.u32 %v2392, 16
      %v2825 = vor.u32 %v2822, %v2823
      %v2826 = vsel %vm2710, %v2814, %v2825
      %v2828 = vshrl.u32 %v2393, 16
      %v2830 = vrot.slane %v2828, 7
      %v2831 = vshll.u32 %v2393, 16
      %v2833 = vor.u32 %v2830, %v2831
      %v2834 = vsel %vm2710, %v2822, %v2833
      %v2836 = vshrl.u32 %v2394, 16
      %v2838 = vrot.slane %v2836, 7
      %v2839 = vshll.u32 %v2394, 16
      %v2841 = vor.u32 %v2838, %v2839
      %v2842 = vsel %vm2710, %v2830, %v2841
      %v2844 = vshrl.u32 %v2395, 16
      %v2846 = vrot.slane %v2844, 7
      %v2847 = vshll.u32 %v2395, 16
      %v2849 = vor.u32 %v2846, %v2847
      %v2850 = vsel %vm2710, %v2838, %v2849
      %v2852 = vshrl.u32 %v2396, 16
      %v2854 = vrot.slane %v2852, 7
      %v2855 = vshll.u32 %v2396, 16
      %v2857 = vor.u32 %v2854, %v2855
      %v2858 = vsel %vm2710, %v2846, %v2857
      %v2860 = vshrl.u32 %v2397, 16
      %v2862 = vrot.slane %v2860, 7
      %v2863 = vshll.u32 %v2397, 16
      %v2865 = vor.u32 %v2862, %v2863
      %v2866 = vsel %vm2710, %v2854, %v2865
      %v2868 = vshrl.u32 %v2398, 16
      %v2870 = vrot.slane %v2868, 7
      %v2871 = vshll.u32 %v2398, 16
      %v2873 = vor.u32 %v2870, %v2871
      %v2874 = vsel %vm2710, %v2862, %v2873
      %v2876 = vshrl.u32 %v2399, 16
      %v2878 = vrot.slane %v2876, 7
      %v2879 = vshll.u32 %v2399, 16
      %v2881 = vor.u32 %v2878, %v2879
      %v2882 = vsel %vm2710, %v2870, %v2881
      %v2884 = vshrl.u32 %v2400, 16
      %v2886 = vrot.slane %v2884, 7
      %v2887 = vshll.u32 %v2400, 16
      %v2889 = vor.u32 %v2886, %v2887
      %v2890 = vsel %vm2710, %v2878, %v2889
      %v2892 = vshrl.u32 %v2401, 16
      %v2894 = vrot.slane %v2892, 7
      %v2895 = vshll.u32 %v2401, 16
      %v2897 = vor.u32 %v2894, %v2895
      %v2898 = vsel %vm2710, %v2886, %v2897
      %v2900 = vshrl.u32 %v2402, 16
      %v2902 = vrot.slane %v2900, 7
      %v2903 = vshll.u32 %v2402, 16
      %v2905 = vor.u32 %v2902, %v2903
      %v2906 = vsel %vm2710, %v2894, %v2905
      %v2947 = vunpack.c.l.b16 %v2404
      %v2948 = vunpack.c.l.b16 %v2405
      %v2949 = vunpack.c.l.b16 %v2406
      %v2950 = vunpack.c.l.b16 %v2407
      %v2951 = vunpack.c.l.b16 %v2408
      %v2952 = vunpack.c.l.b16 %v2409
      %v2953 = vunpack.c.l.b16 %v2410
      %v2954 = vunpack.c.l.b16 %v2411
      %v2955 = vunpack.c.l.b16 %v2412
      %v2956 = vunpack.c.l.b16 %v2413
      %v2957 = vunpack.c.l.b16 %v2414
      %v2958 = vunpack.c.l.b16 %v2415
      %v2959 = vunpack.c.l.b16 %v2416
      %v2960 = vunpack.c.l.b16 %v2417
      %v2961 = vunpack.c.l.b16 %v2418
      %v2962 = vunpack.c.l.b16 %v2419
      %v2963 = vpack.c.b16 %v2948, %v2947
      %v2964 = vpack.c.b16 %v2950, %v2949
      %v2965 = vpack.c.b16 %v2952, %v2951
      %v2966 = vpack.c.b16 %v2954, %v2953
      %v2967 = vpack.c.b16 %v2956, %v2955
      %v2968 = vpack.c.b16 %v2958, %v2957
      %v2969 = vpack.c.b16 %v2960, %v2959
      %v2970 = vpack.c.b16 %v2962, %v2961
      %2979 = vmatprep.subr.bf16.mxu0 0
      %2980 = vmatpush1.bf16.msra.mxu0 %v2963
      %2981 = vmatprep.subr.bf16.mxu0 0
      %2982 = vmatpush1.bf16.msra.mxu0 %v2964
      %2983 = vmatprep.subr.bf16.mxu0 0
      %2984 = vmatpush1.bf16.msra.mxu0 %v2965
      %2985 = vmatprep.subr.bf16.mxu0 0
      %2986 = vmatpush1.bf16.msra.mxu0 %v2966
      %2987 = vmatprep.subr.bf16.mxu0 0
      %2988 = vmatpush1.bf16.msra.mxu0 %v2967
      %2989 = vmatprep.subr.bf16.mxu0 0
      %2990 = vmatpush1.bf16.msra.mxu0 %v2968
      %2991 = vmatprep.subr.bf16.mxu0 0
      %2992 = vmatpush1.bf16.msra.mxu0 %v2969
      %2993 = vmatprep.subr.bf16.mxu0 0
      %2994 = vmatpush1.bf16.msra.mxu0 %v2970
      %2995 = vmatprep.subr.bf16.mxu0 0
      %2996 = vmatpush1.bf16.msra.mxu0 0
      %2997 = vmatprep.subr.bf16.mxu0 0
      %2998 = vmatpush1.bf16.msra.mxu0 0
      %2999 = vmatprep.subr.bf16.mxu0 0
      %3000 = vmatpush1.bf16.msra.mxu0 0
      %3001 = vmatprep.subr.bf16.mxu0 0
      %3002 = vmatpush1.bf16.msra.mxu0 0
      %3003 = vmatprep.subr.bf16.mxu0 0
      %3004 = vmatpush1.bf16.msra.mxu0 0
      %3005 = vmatprep.subr.bf16.mxu0 0
      %3006 = vmatpush1.bf16.msra.mxu0 0
      %3007 = vmatprep.subr.bf16.mxu0 0
      %3008 = vmatpush1.bf16.msra.mxu0 0
      %3009 = vmatprep.subr.bf16.mxu0 0
      %3010 = vmatpush1.bf16.msra.mxu0 0
      %3011 = vmatprep.mubr.bf16.mxu0 0
      %3012 = vmatmul.mubr.bf16.gmra.mrb[0].mxu0 %v2722
      %v3013 = vpop.f32.mrb[0].mxu0
      %v3014 = vadd.f32 %v2520, %v3013
      %v3015 = vpop.f32.mrb[0].mxu0
      %v3016 = vpop.f32.mrb[0].mxu0
      %v3017 = vadd.f32 %v2523, %v3016
      %v3018 = vpop.f32.mrb[0].mxu0
      %3019 = vmatprep.mubr.bf16.mxu0 0
      %3020 = vmatmul.mubr.bf16.gmra.mrb[0].mxu0 %v2730
      %v3021 = vpop.f32.mrb[0].mxu0
      %v3022 = vadd.f32 %v2528, %v3021
      %v3023 = vpop.f32.mrb[0].mxu0
      %v3024 = vpop.f32.mrb[0].mxu0
      %v3025 = vadd.f32 %v2531, %v3024
      %v3026 = vpop.f32.mrb[0].mxu0
      %3027 = vmatprep.mubr.bf16.mxu0 0
      %3028 = vmatmul.mubr.bf16.gmra.mrb[0].mxu0 %v2738
      %v3029 = vpop.f32.mrb[0].mxu0
      %v3030 = vadd.f32 %v2536, %v3029
      %v3031 = vpop.f32.mrb[0].mxu0
      %v3032 = vpop.f32.mrb[0].mxu0
      %v3033 = vadd.f32 %v2539, %v3032
      %v3034 = vpop.f32.mrb[0].mxu0
      %3035 = vmatprep.mubr.bf16.mxu0 0
      %3036 = vmatmul.mubr.bf16.gmra.mrb[0].mxu0 %v2746
      %v3037 = vpop.f32.mrb[0].mxu0
      %v3038 = vadd.f32 %v2544, %v3037
      %v3039 = vpop.f32.mrb[0].mxu0
      %v3040 = vpop.f32.mrb[0].mxu0
      %v3041 = vadd.f32 %v2547, %v3040
      %v3042 = vpop.f32.mrb[0].mxu0
      %3043 = vmatprep.mubr.bf16.mxu0 0
      %3044 = vmatmul.mubr.bf16.gmra.mrb[0].mxu0 %v2754
      %v3045 = vpop.f32.mrb[0].mxu0
      %v3046 = vadd.f32 %v2552, %v3045
      %v3047 = vpop.f32.mrb[0].mxu0
      %v3048 = vpop.f32.mrb[0].mxu0
      %v3049 = vadd.f32 %v2555, %v3048
      %v3050 = vpop.f32.mrb[0].mxu0
      %3051 = vmatprep.mubr.bf16.mxu0 0
      %3052 = vmatmul.mubr.bf16.gmra.mrb[0].mxu0 %v2762
      %v3053 = vpop.f32.mrb[0].mxu0
      %v3054 = vadd.f32 %v2560, %v3053
      %v3055 = vpop.f32.mrb[0].mxu0
      %v3056 = vpop.f32.mrb[0].mxu0
      %v3057 = vadd.f32 %v2563, %v3056
      %v3058 = vpop.f32.mrb[0].mxu0
      %3059 = vmatprep.mubr.bf16.mxu0 0
      %3060 = vmatmul.mubr.bf16.gmra.mrb[0].mxu0 %v2770
      %v3061 = vpop.f32.mrb[0].mxu0
      %v3062 = vadd.f32 %v2568, %v3061
      %v3063 = vpop.f32.mrb[0].mxu0
      %v3064 = vpop.f32.mrb[0].mxu0
      %v3065 = vadd.f32 %v2571, %v3064
      %v3066 = vpop.f32.mrb[0].mxu0
      %3067 = vmatprep.mubr.bf16.mxu0 0
      %3068 = vmatmul.mubr.bf16.gmra.mrb[0].mxu0 %v2778
      %v3069 = vpop.f32.mrb[0].mxu0
      %v3070 = vadd.f32 %v2576, %v3069
      %v3071 = vpop.f32.mrb[0].mxu0
      %v3072 = vpop.f32.mrb[0].mxu0
      %v3073 = vadd.f32 %v2579, %v3072
      %v3074 = vpop.f32.mrb[0].mxu0
      %3075 = vmatprep.mubr.bf16.mxu0 0
      %3076 = vmatmul.mubr.bf16.gmra.mrb[0].mxu0 %v2786
      %v3077 = vpop.f32.mrb[0].mxu0
      %v3078 = vadd.f32 %v2584, %v3077
      %v3079 = vpop.f32.mrb[0].mxu0
      %v3080 = vpop.f32.mrb[0].mxu0
      %v3081 = vadd.f32 %v2587, %v3080
      %v3082 = vpop.f32.mrb[0].mxu0
      %3083 = vmatprep.mubr.bf16.mxu0 0
      %3084 = vmatmul.mubr.bf16.gmra.mrb[0].mxu0 %v2794
      %v3085 = vpop.f32.mrb[0].mxu0
      %v3086 = vadd.f32 %v2592, %v3085
      %v3087 = vpop.f32.mrb[0].mxu0
      %v3088 = vpop.f32.mrb[0].mxu0
      %v3089 = vadd.f32 %v2595, %v3088
      %v3090 = vpop.f32.mrb[0].mxu0
      %3091 = vmatprep.mubr.bf16.mxu0 0
      %3092 = vmatmul.mubr.bf16.gmra.mrb[0].mxu0 %v2802
      %v3093 = vpop.f32.mrb[0].mxu0
      %v3094 = vadd.f32 %v2600, %v3093
      %v3095 = vpop.f32.mrb[0].mxu0
      %v3096 = vpop.f32.mrb[0].mxu0
      %v3097 = vadd.f32 %v2603, %v3096
      %v3098 = vpop.f32.mrb[0].mxu0
      %3099 = vmatprep.mubr.bf16.mxu0 0
      %3100 = vmatmul.mubr.bf16.gmra.mrb[0].mxu0 %v2810
      %v3101 = vpop.f32.mrb[0].mxu0
      %v3102 = vadd.f32 %v2608, %v3101
      %v3103 = vpop.f32.mrb[0].mxu0
      %v3104 = vpop.f32.mrb[0].mxu0
      %v3105 = vadd.f32 %v2611, %v3104
      %v3106 = vpop.f32.mrb[0].mxu0
      %3107 = vmatprep.mubr.bf16.mxu0 0
      %3108 = vmatmul.mubr.bf16.gmra.mrb[0].mxu0 %v2818
      %v3109 = vpop.f32.mrb[0].mxu0
      %v3110 = vadd.f32 %v2616, %v3109
      %v3111 = vpop.f32.mrb[0].mxu0
      %v3112 = vpop.f32.mrb[0].mxu0
      %v3113 = vadd.f32 %v2619, %v3112
      %v3114 = vpop.f32.mrb[0].mxu0
      %3115 = vmatprep.mubr.bf16.mxu0 0
      %3116 = vmatmul.mubr.bf16.gmra.mrb[0].mxu0 %v2826
      %v3117 = vpop.f32.mrb[0].mxu0
      %v3118 = vadd.f32 %v2624, %v3117
      %v3119 = vpop.f32.mrb[0].mxu0
      %v3120 = vpop.f32.mrb[0].mxu0
      %v3121 = vadd.f32 %v2627, %v3120
      %v3122 = vpop.f32.mrb[0].mxu0
      %3123 = vmatprep.mubr.bf16.mxu0 0
      %3124 = vmatmul.mubr.bf16.gmra.mrb[0].mxu0 %v2834
      %v3125 = vpop.f32.mrb[0].mxu0
      %v3126 = vadd.f32 %v2632, %v3125
      %v3127 = vpop.f32.mrb[0].mxu0
      %v3128 = vpop.f32.mrb[0].mxu0
      %v3129 = vadd.f32 %v2635, %v3128
      %v3130 = vpop.f32.mrb[0].mxu0
      %3131 = vmatprep.mubr.bf16.mxu0 0
      %3132 = vmatmul.mubr.bf16.gmra.mrb[0].mxu0 %v2842
      %v3133 = vpop.f32.mrb[0].mxu0
      %v3134 = vadd.f32 %v2640, %v3133
      %v3135 = vpop.f32.mrb[0].mxu0
      %v3136 = vpop.f32.mrb[0].mxu0
      %v3137 = vadd.f32 %v2643, %v3136
      %v3138 = vpop.f32.mrb[0].mxu0
      %3139 = vmatprep.mubr.bf16.mxu0 0
      %3140 = vmatmul.mubr.bf16.gmra.mrb[0].mxu0 %v2850
      %v3141 = vpop.f32.mrb[0].mxu0
      %v3142 = vadd.f32 %v2648, %v3141
      %v3143 = vpop.f32.mrb[0].mxu0
      %v3144 = vpop.f32.mrb[0].mxu0
      %v3145 = vadd.f32 %v2651, %v3144
      %v3146 = vpop.f32.mrb[0].mxu0
      %3147 = vmatprep.mubr.bf16.mxu0 0
      %3148 = vmatmul.mubr.bf16.gmra.mrb[0].mxu0 %v2858
      %v3149 = vpop.f32.mrb[0].mxu0
      %v3150 = vadd.f32 %v2656, %v3149
      %v3151 = vpop.f32.mrb[0].mxu0
      %v3152 = vpop.f32.mrb[0].mxu0
      %v3153 = vadd.f32 %v2659, %v3152
      %v3154 = vpop.f32.mrb[0].mxu0
      %3155 = vmatprep.mubr.bf16.mxu0 0
      %3156 = vmatmul.mubr.bf16.gmra.mrb[0].mxu0 %v2866
      %v3157 = vpop.f32.mrb[0].mxu0
      %v3158 = vadd.f32 %v2664, %v3157
      %v3159 = vpop.f32.mrb[0].mxu0
      %v3160 = vpop.f32.mrb[0].mxu0
      %v3161 = vadd.f32 %v2667, %v3160
      %v3162 = vpop.f32.mrb[0].mxu0
      %3163 = vmatprep.mubr.bf16.mxu0 0
      %3164 = vmatmul.mubr.bf16.gmra.mrb[0].mxu0 %v2874
      %v3165 = vpop.f32.mrb[0].mxu0
      %v3166 = vadd.f32 %v2672, %v3165
      %v3167 = vpop.f32.mrb[0].mxu0
      %v3168 = vpop.f32.mrb[0].mxu0
      %v3169 = vadd.f32 %v2675, %v3168
      %v3170 = vpop.f32.mrb[0].mxu0
      %3171 = vmatprep.mubr.bf16.mxu0 0
      %3172 = vmatmul.mubr.bf16.gmra.mrb[0].mxu0 %v2882
      %v3173 = vpop.f32.mrb[0].mxu0
      %v3174 = vadd.f32 %v2680, %v3173
      %v3175 = vpop.f32.mrb[0].mxu0
      %v3176 = vpop.f32.mrb[0].mxu0
      %v3177 = vadd.f32 %v2683, %v3176
      %v3178 = vpop.f32.mrb[0].mxu0
      %3179 = vmatprep.mubr.bf16.mxu0 0
      %3180 = vmatmul.mubr.bf16.gmra.mrb[0].mxu0 %v2890
      %v3181 = vpop.f32.mrb[0].mxu0
      %v3182 = vadd.f32 %v2688, %v3181
      %v3183 = vpop.f32.mrb[0].mxu0
      %v3184 = vpop.f32.mrb[0].mxu0
      %v3185 = vadd.f32 %v2691, %v3184
      %v3186 = vpop.f32.mrb[0].mxu0
      %3187 = vmatprep.mubr.bf16.mxu0 0
      %3188 = vmatmul.mubr.bf16.gmra.mrb[0].mxu0 %v2898
      %v3189 = vpop.f32.mrb[0].mxu0
      %v3190 = vadd.f32 %v2696, %v3189
      %v3191 = vpop.f32.mrb[0].mxu0
      %v3192 = vpop.f32.mrb[0].mxu0
      %v3193 = vadd.f32 %v2699, %v3192
      %v3194 = vpop.f32.mrb[0].mxu0
      %3195 = vmatprep.mubr.bf16.mxu0 0
      %3196 = vmatmul.mubr.bf16.gmra.mrb[0].mxu0 %v2906
      %v3197 = vpop.f32.mrb[0].mxu0
      %v3198 = vadd.f32 %v2704, %v3197
      %v3199 = vpop.f32.mrb[0].mxu0
      %v3200 = vpop.f32.mrb[0].mxu0
      %v3201 = vadd.f32 %v2707, %v3200
      %v3202 = vpop.f32.mrb[0].mxu0
      %3203 = vdwg.mxu0
      %v3204 = vld [vmem:[#allocation2 + $0x10] sm:$0xff]
      %v3205 = vld [vmem:[#allocation2 + $0x18] sm:$0xff]
      %v3206 = vld [vmem:[#allocation2 + $0x20] sm:$0xff]
      %v3207 = vld [vmem:[#allocation2 + $0x28] sm:$0xff]
      %v3208 = vld [vmem:[#allocation2 + $0x30] sm:$0xff]
      %v3209 = vld [vmem:[#allocation2 + $0x38] sm:$0xff]
      %v3210 = vld [vmem:[#allocation2 + $0x40] sm:$0xff]
      %v3211 = vld [vmem:[#allocation2 + $0x48] sm:$0xff]
      %v3212 = vld [vmem:[#allocation2 + $0x50] sm:$0xff]
      %v3213 = vld [vmem:[#allocation2 + $0x58] sm:$0xff]
      %v3214 = vld [vmem:[#allocation2 + $0x60] sm:$0xff]
      %v3215 = vld [vmem:[#allocation2 + $0x68] sm:$0xff]
      %v3216 = vld [vmem:[#allocation2 + $0x70] sm:$0xff]
      %v3217 = vld [vmem:[#allocation2 + $0x78] sm:$0xff]
      %v3218 = vld [vmem:[#allocation2 + $0x80] sm:$0xff]
      %v3219 = vld [vmem:[#allocation2 + $0x88] sm:$0xff]
      %v3220 = vld [vmem:[#allocation2 + $0x90] sm:$0xff]
      %v3221 = vld [vmem:[#allocation2 + $0x98] sm:$0xff]
      %v3222 = vld [vmem:[#allocation2 + $0xa0] sm:$0xff]
      %v3223 = vld [vmem:[#allocation2 + $0xa8] sm:$0xff]
      %v3224 = vld [vmem:[#allocation2 + $0xb0] sm:$0xff]
      %v3225 = vld [vmem:[#allocation2 + $0xb8] sm:$0xff]
      %v3226 = vld [vmem:[#allocation2 + $0xc0] sm:$0xff]
      %v3227 = vld [vmem:[#allocation2 + $0xc8] sm:$0xff]
      %v3228 = vld [vmem:[#allocation2 + $0xd0] sm:$0x1]
      %s3229 = scalar_lea.vmem %s2, 320
      %v3230 = vld [vmem:[%s3229] sm:$0xf]
      %v3231 = vld [vmem:[%s3229 + $0x4] sm:$0xf]
      %v3232 = vld [vmem:[%s3229 + $0x8] sm:$0xf]
      %v3233 = vld [vmem:[%s3229 + $0xc] sm:$0xf]
      %v3234 = vld [vmem:[%s3229 + $0x10] sm:$0xf]
      %v3235 = vld [vmem:[%s3229 + $0x14] sm:$0xf]
      %v3236 = vld [vmem:[%s3229 + $0x18] sm:$0xf]
      %v3237 = vld [vmem:[%s3229 + $0x1c] sm:$0xf]
      %v3238 = vld [vmem:[%s3229 + $0x20] sm:$0xf]
      %v3239 = vld [vmem:[%s3229 + $0x24] sm:$0xf]
      %v3240 = vld [vmem:[%s3229 + $0x28] sm:$0xf]
      %v3241 = vld [vmem:[%s3229 + $0x2c] sm:$0xf]
      %v3242 = vld [vmem:[%s3229 + $0x30] sm:$0xf]
      %v3243 = vld [vmem:[%s3229 + $0x34] sm:$0xf]
      %v3244 = vld [vmem:[%s3229 + $0x38] sm:$0xf]
      %v3245 = vld [vmem:[%s3229 + $0x3c] sm:$0xf]
      %vm3246 = vsmask.f32 7424
      %v3248 = vshrl.u32 %v3204, 16
      %v3250 = vshll.u32 %v3204, 16
      %v3252 = vrot.slane %v3250, 1
      %v3253 = vor.u32 %v3248, %v3252
      %v3255 = vshll.u32 %v3205, 16
      %v3257 = vrot.slane %v3255, 1
      %v3258 = vsel %vm3246, %v3253, %v3257
      %v3259 = vshrl.u32 %v3205, 16
      %v3261 = vor.u32 %v3259, %v3257
      %v3263 = vshll.u32 %v3206, 16
      %v3265 = vrot.slane %v3263, 1
      %v3266 = vsel %vm3246, %v3261, %v3265
      %v3267 = vshrl.u32 %v3206, 16
      %v3269 = vor.u32 %v3267, %v3265
      %v3271 = vshll.u32 %v3207, 16
      %v3273 = vrot.slane %v3271, 1
      %v3274 = vsel %vm3246, %v3269, %v3273
      %v3275 = vshrl.u32 %v3207, 16
      %v3277 = vor.u32 %v3275, %v3273
      %v3279 = vshll.u32 %v3208, 16
      %v3281 = vrot.slane %v3279, 1
      %v3282 = vsel %vm3246, %v3277, %v3281
      %v3283 = vshrl.u32 %v3208, 16
      %v3285 = vor.u32 %v3283, %v3281
      %v3287 = vshll.u32 %v3209, 16
      %v3289 = vrot.slane %v3287, 1
      %v3290 = vsel %vm3246, %v3285, %v3289
      %v3291 = vshrl.u32 %v3209, 16
      %v3293 = vor.u32 %v3291, %v3289
      %v3295 = vshll.u32 %v3210, 16
      %v3297 = vrot.slane %v3295, 1
      %v3298 = vsel %vm3246, %v3293, %v3297
      %v3299 = vshrl.u32 %v3210, 16
      %v3301 = vor.u32 %v3299, %v3297
      %v3303 = vshll.u32 %v3211, 16
      %v3305 = vrot.slane %v3303, 1
      %v3306 = vsel %vm3246, %v3301, %v3305
      %v3307 = vshrl.u32 %v3211, 16
      %v3309 = vor.u32 %v3307, %v3305
      %v3311 = vshll.u32 %v3212, 16
      %v3313 = vrot.slane %v3311, 1
      %v3314 = vsel %vm3246, %v3309, %v3313
      %v3315 = vshrl.u32 %v3212, 16
      %v3317 = vor.u32 %v3315, %v3313
      %v3319 = vshll.u32 %v3213, 16
      %v3321 = vrot.slane %v3319, 1
      %v3322 = vsel %vm3246, %v3317, %v3321
      %v3323 = vshrl.u32 %v3213, 16
      %v3325 = vor.u32 %v3323, %v3321
      %v3327 = vshll.u32 %v3214, 16
      %v3329 = vrot.slane %v3327, 1
      %v3330 = vsel %vm3246, %v3325, %v3329
      %v3331 = vshrl.u32 %v3214, 16
      %v3333 = vor.u32 %v3331, %v3329
      %v3335 = vshll.u32 %v3215, 16
      %v3337 = vrot.slane %v3335, 1
      %v3338 = vsel %vm3246, %v3333, %v3337
      %v3339 = vshrl.u32 %v3215, 16
      %v3341 = vor.u32 %v3339, %v3337
      %v3343 = vshll.u32 %v3216, 16
      %v3345 = vrot.slane %v3343, 1
      %v3346 = vsel %vm3246, %v3341, %v3345
      %v3347 = vshrl.u32 %v3216, 16
      %v3349 = vor.u32 %v3347, %v3345
      %v3351 = vshll.u32 %v3217, 16
      %v3353 = vrot.slane %v3351, 1
      %v3354 = vsel %vm3246, %v3349, %v3353
      %v3355 = vshrl.u32 %v3217, 16
      %v3357 = vor.u32 %v3355, %v3353
      %v3359 = vshll.u32 %v3218, 16
      %v3361 = vrot.slane %v3359, 1
      %v3362 = vsel %vm3246, %v3357, %v3361
      %v3363 = vshrl.u32 %v3218, 16
      %v3365 = vor.u32 %v3363, %v3361
      %v3367 = vshll.u32 %v3219, 16
      %v3369 = vrot.slane %v3367, 1
      %v3370 = vsel %vm3246, %v3365, %v3369
      %v3371 = vshrl.u32 %v3219, 16
      %v3373 = vor.u32 %v3371, %v3369
      %v3375 = vshll.u32 %v3220, 16
      %v3377 = vrot.slane %v3375, 1
      %v3378 = vsel %vm3246, %v3373, %v3377
      %v3379 = vshrl.u32 %v3220, 16
      %v3381 = vor.u32 %v3379, %v3377
      %v3383 = vshll.u32 %v3221, 16
      %v3385 = vrot.slane %v3383, 1
      %v3386 = vsel %vm3246, %v3381, %v3385
      %v3387 = vshrl.u32 %v3221, 16
      %v3389 = vor.u32 %v3387, %v3385
      %v3391 = vshll.u32 %v3222, 16
      %v3393 = vrot.slane %v3391, 1
      %v3394 = vsel %vm3246, %v3389, %v3393
      %v3395 = vshrl.u32 %v3222, 16
      %v3397 = vor.u32 %v3395, %v3393
      %v3399 = vshll.u32 %v3223, 16
      %v3401 = vrot.slane %v3399, 1
      %v3402 = vsel %vm3246, %v3397, %v3401
      %v3403 = vshrl.u32 %v3223, 16
      %v3405 = vor.u32 %v3403, %v3401
      %v3407 = vshll.u32 %v3224, 16
      %v3409 = vrot.slane %v3407, 1
      %v3410 = vsel %vm3246, %v3405, %v3409
      %v3411 = vshrl.u32 %v3224, 16
      %v3413 = vor.u32 %v3411, %v3409
      %v3415 = vshll.u32 %v3225, 16
      %v3417 = vrot.slane %v3415, 1
      %v3418 = vsel %vm3246, %v3413, %v3417
      %v3419 = vshrl.u32 %v3225, 16
      %v3421 = vor.u32 %v3419, %v3417
      %v3423 = vshll.u32 %v3226, 16
      %v3425 = vrot.slane %v3423, 1
      %v3426 = vsel %vm3246, %v3421, %v3425
      %v3427 = vshrl.u32 %v3226, 16
      %v3429 = vor.u32 %v3427, %v3425
      %v3431 = vshll.u32 %v3227, 16
      %v3433 = vrot.slane %v3431, 1
      %v3434 = vsel %vm3246, %v3429, %v3433
      %v3435 = vshrl.u32 %v3227, 16
      %v3437 = vor.u32 %v3435, %v3433
      %v3439 = vshll.u32 %v3228, 16
      %v3441 = vrot.slane %v3439, 1
      %v3442 = vsel %vm3246, %v3437, %v3441
      %v3483 = vunpack.c.l.b16 %v3230
      %v3484 = vunpack.c.l.b16 %v3231
      %v3485 = vunpack.c.l.b16 %v3232
      %v3486 = vunpack.c.l.b16 %v3233
      %v3487 = vunpack.c.l.b16 %v3234
      %v3488 = vunpack.c.l.b16 %v3235
      %v3489 = vunpack.c.l.b16 %v3236
      %v3490 = vunpack.c.l.b16 %v3237
      %v3491 = vunpack.c.l.b16 %v3238
      %v3492 = vunpack.c.l.b16 %v3239
      %v3493 = vunpack.c.l.b16 %v3240
      %v3494 = vunpack.c.l.b16 %v3241
      %v3495 = vunpack.c.l.b16 %v3242
      %v3496 = vunpack.c.l.b16 %v3243
      %v3497 = vunpack.c.l.b16 %v3244
      %v3498 = vunpack.c.l.b16 %v3245
      %v3499 = vpack.c.b16 %v3484, %v3483
      %v3500 = vpack.c.b16 %v3486, %v3485
      %v3501 = vpack.c.b16 %v3488, %v3487
      %v3502 = vpack.c.b16 %v3490, %v3489
      %v3503 = vpack.c.b16 %v3492, %v3491
      %v3504 = vpack.c.b16 %v3494, %v3493
      %v3505 = vpack.c.b16 %v3496, %v3495
      %v3506 = vpack.c.b16 %v3498, %v3497
      %3515 = vmatprep.subr.bf16.mxu0 0
      %3516 = vmatpush1.bf16.msra.mxu0 %v3499
      %3517 = vmatprep.subr.bf16.mxu0 0
      %3518 = vmatpush1.bf16.msra.mxu0 %v3500
      %3519 = vmatprep.subr.bf16.mxu0 0
      %3520 = vmatpush1.bf16.msra.mxu0 %v3501
      %3521 = vmatprep.subr.bf16.mxu0 0
      %3522 = vmatpush1.bf16.msra.mxu0 %v3502
      %3523 = vmatprep.subr.bf16.mxu0 0
      %3524 = vmatpush1.bf16.msra.mxu0 %v3503
      %3525 = vmatprep.subr.bf16.mxu0 0
      %3526 = vmatpush1.bf16.msra.mxu0 %v3504
      %3527 = vmatprep.subr.bf16.mxu0 0
      %3528 = vmatpush1.bf16.msra.mxu0 %v3505
      %3529 = vmatprep.subr.bf16.mxu0 0
      %3530 = vmatpush1.bf16.msra.mxu0 %v3506
      %3531 = vmatprep.subr.bf16.mxu0 0
      %3532 = vmatpush1.bf16.msra.mxu0 0
      %3533 = vmatprep.subr.bf16.mxu0 0
      %3534 = vmatpush1.bf16.msra.mxu0 0
      %3535 = vmatprep.subr.bf16.mxu0 0
      %3536 = vmatpush1.bf16.msra.mxu0 0
      %3537 = vmatprep.subr.bf16.mxu0 0
      %3538 = vmatpush1.bf16.msra.mxu0 0
      %3539 = vmatprep.subr.bf16.mxu0 0
      %3540 = vmatpush1.bf16.msra.mxu0 0
      %3541 = vmatprep.subr.bf16.mxu0 0
      %3542 = vmatpush1.bf16.msra.mxu0 0
      %3543 = vmatprep.subr.bf16.mxu0 0
      %3544 = vmatpush1.bf16.msra.mxu0 0
      %3545 = vmatprep.subr.bf16.mxu0 0
      %3546 = vmatpush1.bf16.msra.mxu0 0
      %3547 = vmatprep.mubr.bf16.mxu0 0
      %3548 = vmatmul.mubr.bf16.gmra.mrb[0].mxu0 %v3258
      %v3549 = vpop.f32.mrb[0].mxu0
      %v3550 = vadd.f32 0.0, %v3549
      %v3551 = vpop.f32.mrb[0].mxu0
      %v3552 = vpop.f32.mrb[0].mxu0
      %v3553 = vadd.f32 0.0, %v3552
      %v3554 = vpop.f32.mrb[0].mxu0
      %3555 = vmatprep.mubr.bf16.mxu0 0
      %3556 = vmatmul.mubr.bf16.gmra.mrb[0].mxu0 %v3266
      %v3557 = vpop.f32.mrb[0].mxu0
      %v3558 = vadd.f32 0.0, %v3557
      %v3559 = vpop.f32.mrb[0].mxu0
      %v3560 = vpop.f32.mrb[0].mxu0
      %v3561 = vadd.f32 0.0, %v3560
      %v3562 = vpop.f32.mrb[0].mxu0
      %3563 = vmatprep.mubr.bf16.mxu0 0
      %3564 = vmatmul.mubr.bf16.gmra.mrb[0].mxu0 %v3274
      %v3565 = vpop.f32.mrb[0].mxu0
      %v3566 = vadd.f32 0.0, %v3565
      %v3567 = vpop.f32.mrb[0].mxu0
      %v3568 = vpop.f32.mrb[0].mxu0
      %v3569 = vadd.f32 0.0, %v3568
      %v3570 = vpop.f32.mrb[0].mxu0
      %3571 = vmatprep.mubr.bf16.mxu0 0
      %3572 = vmatmul.mubr.bf16.gmra.mrb[0].mxu0 %v3282
      %v3573 = vpop.f32.mrb[0].mxu0
      %v3574 = vadd.f32 0.0, %v3573
      %v3575 = vpop.f32.mrb[0].mxu0
      %v3576 = vpop.f32.mrb[0].mxu0
      %v3577 = vadd.f32 0.0, %v3576
      %v3578 = vpop.f32.mrb[0].mxu0
      %3579 = vmatprep.mubr.bf16.mxu0 0
      %3580 = vmatmul.mubr.bf16.gmra.mrb[0].mxu0 %v3290
      %v3581 = vpop.f32.mrb[0].mxu0
      %v3582 = vadd.f32 0.0, %v3581
      %v3583 = vpop.f32.mrb[0].mxu0
      %v3584 = vpop.f32.mrb[0].mxu0
      %v3585 = vadd.f32 0.0, %v3584
      %v3586 = vpop.f32.mrb[0].mxu0
      %3587 = vmatprep.mubr.bf16.mxu0 0
      %3588 = vmatmul.mubr.bf16.gmra.mrb[0].mxu0 %v3298
      %v3589 = vpop.f32.mrb[0].mxu0
      %v3590 = vadd.f32 0.0, %v3589
      %v3591 = vpop.f32.mrb[0].mxu0
      %v3592 = vpop.f32.mrb[0].mxu0
      %v3593 = vadd.f32 0.0, %v3592
      %v3594 = vpop.f32.mrb[0].mxu0
      %3595 = vmatprep.mubr.bf16.mxu0 0
      %3596 = vmatmul.mubr.bf16.gmra.mrb[0].mxu0 %v3306
      %v3597 = vpop.f32.mrb[0].mxu0
      %v3598 = vadd.f32 0.0, %v3597
      %v3599 = vpop.f32.mrb[0].mxu0
      %v3600 = vpop.f32.mrb[0].mxu0
      %v3601 = vadd.f32 0.0, %v3600
      %v3602 = vpop.f32.mrb[0].mxu0
      %3603 = vmatprep.mubr.bf16.mxu0 0
      %3604 = vmatmul.mubr.bf16.gmra.mrb[0].mxu0 %v3314
      %v3605 = vpop.f32.mrb[0].mxu0
      %v3606 = vadd.f32 0.0, %v3605
      %v3607 = vpop.f32.mrb[0].mxu0
      %v3608 = vpop.f32.mrb[0].mxu0
      %v3609 = vadd.f32 0.0, %v3608
      %v3610 = vpop.f32.mrb[0].mxu0
      %3611 = vmatprep.mubr.bf16.mxu0 0
      %3612 = vmatmul.mubr.bf16.gmra.mrb[0].mxu0 %v3322
      %v3613 = vpop.f32.mrb[0].mxu0
      %v3614 = vadd.f32 0.0, %v3613
      %v3615 = vpop.f32.mrb[0].mxu0
      %v3616 = vpop.f32.mrb[0].mxu0
      %v3617 = vadd.f32 0.0, %v3616
      %v3618 = vpop.f32.mrb[0].mxu0
      %3619 = vmatprep.mubr.bf16.mxu0 0
      %3620 = vmatmul.mubr.bf16.gmra.mrb[0].mxu0 %v3330
      %v3621 = vpop.f32.mrb[0].mxu0
      %v3622 = vadd.f32 0.0, %v3621
      %v3623 = vpop.f32.mrb[0].mxu0
      %v3624 = vpop.f32.mrb[0].mxu0
      %v3625 = vadd.f32 0.0, %v3624
      %v3626 = vpop.f32.mrb[0].mxu0
      %3627 = vmatprep.mubr.bf16.mxu0 0
      %3628 = vmatmul.mubr.bf16.gmra.mrb[0].mxu0 %v3338
      %v3629 = vpop.f32.mrb[0].mxu0
      %v3630 = vadd.f32 0.0, %v3629
      %v3631 = vpop.f32.mrb[0].mxu0
      %v3632 = vpop.f32.mrb[0].mxu0
      %v3633 = vadd.f32 0.0, %v3632
      %v3634 = vpop.f32.mrb[0].mxu0
      %3635 = vmatprep.mubr.bf16.mxu0 0
      %3636 = vmatmul.mubr.bf16.gmra.mrb[0].mxu0 %v3346
      %v3637 = vpop.f32.mrb[0].mxu0
      %v3638 = vadd.f32 0.0, %v3637
      %v3639 = vpop.f32.mrb[0].mxu0
      %v3640 = vpop.f32.mrb[0].mxu0
      %v3641 = vadd.f32 0.0, %v3640
      %v3642 = vpop.f32.mrb[0].mxu0
      %3643 = vmatprep.mubr.bf16.mxu0 0
      %3644 = vmatmul.mubr.bf16.gmra.mrb[0].mxu0 %v3354
      %v3645 = vpop.f32.mrb[0].mxu0
      %v3646 = vadd.f32 0.0, %v3645
      %v3647 = vpop.f32.mrb[0].mxu0
      %v3648 = vpop.f32.mrb[0].mxu0
      %v3649 = vadd.f32 0.0, %v3648
      %v3650 = vpop.f32.mrb[0].mxu0
      %3651 = vmatprep.mubr.bf16.mxu0 0
      %3652 = vmatmul.mubr.bf16.gmra.mrb[0].mxu0 %v3362
      %v3653 = vpop.f32.mrb[0].mxu0
      %v3654 = vadd.f32 0.0, %v3653
      %v3655 = vpop.f32.mrb[0].mxu0
      %v3656 = vpop.f32.mrb[0].mxu0
      %v3657 = vadd.f32 0.0, %v3656
      %v3658 = vpop.f32.mrb[0].mxu0
      %3659 = vmatprep.mubr.bf16.mxu0 0
      %3660 = vmatmul.mubr.bf16.gmra.mrb[0].mxu0 %v3370
      %v3661 = vpop.f32.mrb[0].mxu0
      %v3662 = vadd.f32 0.0, %v3661
      %v3663 = vpop.f32.mrb[0].mxu0
      %v3664 = vpop.f32.mrb[0].mxu0
      %v3665 = vadd.f32 0.0, %v3664
      %v3666 = vpop.f32.mrb[0].mxu0
      %3667 = vmatprep.mubr.bf16.mxu0 0
      %3668 = vmatmul.mubr.bf16.gmra.mrb[0].mxu0 %v3378
      %v3669 = vpop.f32.mrb[0].mxu0
      %v3670 = vadd.f32 0.0, %v3669
      %v3671 = vpop.f32.mrb[0].mxu0
      %v3672 = vpop.f32.mrb[0].mxu0
      %v3673 = vadd.f32 0.0, %v3672
      %v3674 = vpop.f32.mrb[0].mxu0
      %3675 = vmatprep.mubr.bf16.mxu0 0
      %3676 = vmatmul.mubr.bf16.gmra.mrb[0].mxu0 %v3386
      %v3677 = vpop.f32.mrb[0].mxu0
      %v3678 = vadd.f32 0.0, %v3677
      %v3679 = vpop.f32.mrb[0].mxu0
      %v3680 = vpop.f32.mrb[0].mxu0
      %v3681 = vadd.f32 0.0, %v3680
      %v3682 = vpop.f32.mrb[0].mxu0
      %3683 = vmatprep.mubr.bf16.mxu0 0
      %3684 = vmatmul.mubr.bf16.gmra.mrb[0].mxu0 %v3394
      %v3685 = vpop.f32.mrb[0].mxu0
      %v3686 = vadd.f32 0.0, %v3685
      %v3687 = vpop.f32.mrb[0].mxu0
      %v3688 = vpop.f32.mrb[0].mxu0
      %v3689 = vadd.f32 0.0, %v3688
      %v3690 = vpop.f32.mrb[0].mxu0
      %3691 = vmatprep.mubr.bf16.mxu0 0
      %3692 = vmatmul.mubr.bf16.gmra.mrb[0].mxu0 %v3402
      %v3693 = vpop.f32.mrb[0].mxu0
      %v3694 = vadd.f32 0.0, %v3693
      %v3695 = vpop.f32.mrb[0].mxu0
      %v3696 = vpop.f32.mrb[0].mxu0
      %v3697 = vadd.f32 0.0, %v3696
      %v3698 = vpop.f32.mrb[0].mxu0
      %3699 = vmatprep.mubr.bf16.mxu0 0
      %3700 = vmatmul.mubr.bf16.gmra.mrb[0].mxu0 %v3410
      %v3701 = vpop.f32.mrb[0].mxu0
      %v3702 = vadd.f32 0.0, %v3701
      %v3703 = vpop.f32.mrb[0].mxu0
      %v3704 = vpop.f32.mrb[0].mxu0
      %v3705 = vadd.f32 0.0, %v3704
      %v3706 = vpop.f32.mrb[0].mxu0
      %3707 = vmatprep.mubr.bf16.mxu0 0
      %3708 = vmatmul.mubr.bf16.gmra.mrb[0].mxu0 %v3418
      %v3709 = vpop.f32.mrb[0].mxu0
      %v3710 = vadd.f32 0.0, %v3709
      %v3711 = vpop.f32.mrb[0].mxu0
      %v3712 = vpop.f32.mrb[0].mxu0
      %v3713 = vadd.f32 0.0, %v3712
      %v3714 = vpop.f32.mrb[0].mxu0
      %3715 = vmatprep.mubr.bf16.mxu0 0
      %3716 = vmatmul.mubr.bf16.gmra.mrb[0].mxu0 %v3426
      %v3717 = vpop.f32.mrb[0].mxu0
      %v3718 = vadd.f32 0.0, %v3717
      %v3719 = vpop.f32.mrb[0].mxu0
      %v3720 = vpop.f32.mrb[0].mxu0
      %v3721 = vadd.f32 0.0, %v3720
      %v3722 = vpop.f32.mrb[0].mxu0
      %3723 = vmatprep.mubr.bf16.mxu0 0
      %3724 = vmatmul.mubr.bf16.gmra.mrb[0].mxu0 %v3434
      %v3725 = vpop.f32.mrb[0].mxu0
      %v3726 = vadd.f32 0.0, %v3725
      %v3727 = vpop.f32.mrb[0].mxu0
      %v3728 = vpop.f32.mrb[0].mxu0
      %v3729 = vadd.f32 0.0, %v3728
      %v3730 = vpop.f32.mrb[0].mxu0
      %3731 = vmatprep.mubr.bf16.mxu0 0
      %3732 = vmatmul.mubr.bf16.gmra.mrb[0].mxu0 %v3442
      %v3733 = vpop.f32.mrb[0].mxu0
      %v3734 = vadd.f32 0.0, %v3733
      %v3735 = vpop.f32.mrb[0].mxu0
      %v3736 = vpop.f32.mrb[0].mxu0
      %v3737 = vadd.f32 0.0, %v3736
      %v3738 = vpop.f32.mrb[0].mxu0
      %3739 = vdwg.mxu0
      %v3740 = vadd.f32 %v3014, %v3550
      %v3741 = vadd.f32 %v3017, %v3553
      %v3742 = vadd.f32 %v3022, %v3558
      %v3743 = vadd.f32 %v3025, %v3561
      %v3744 = vadd.f32 %v3030, %v3566
      %v3745 = vadd.f32 %v3033, %v3569
      %v3746 = vadd.f32 %v3038, %v3574
      %v3747 = vadd.f32 %v3041, %v3577
      %v3748 = vadd.f32 %v3046, %v3582
      %v3749 = vadd.f32 %v3049, %v3585
      %v3750 = vadd.f32 %v3054, %v3590
      %v3751 = vadd.f32 %v3057, %v3593
      %v3752 = vadd.f32 %v3062, %v3598
      %v3753 = vadd.f32 %v3065, %v3601
      %v3754 = vadd.f32 %v3070, %v3606
      %v3755 = vadd.f32 %v3073, %v3609
      %v3756 = vadd.f32 %v3078, %v3614
      %v3757 = vadd.f32 %v3081, %v3617
      %v3758 = vadd.f32 %v3086, %v3622
      %v3759 = vadd.f32 %v3089, %v3625
      %v3760 = vadd.f32 %v3094, %v3630
      %v3761 = vadd.f32 %v3097, %v3633
      %v3762 = vadd.f32 %v3102, %v3638
      %v3763 = vadd.f32 %v3105, %v3641
      %v3764 = vadd.f32 %v3110, %v3646
      %v3765 = vadd.f32 %v3113, %v3649
      %v3766 = vadd.f32 %v3118, %v3654
      %v3767 = vadd.f32 %v3121, %v3657
      %v3768 = vadd.f32 %v3126, %v3662
      %v3769 = vadd.f32 %v3129, %v3665
      %v3770 = vadd.f32 %v3134, %v3670
      %v3771 = vadd.f32 %v3137, %v3673
      %v3772 = vadd.f32 %v3142, %v3678
      %v3773 = vadd.f32 %v3145, %v3681
      %v3774 = vadd.f32 %v3150, %v3686
      %v3775 = vadd.f32 %v3153, %v3689
      %v3776 = vadd.f32 %v3158, %v3694
      %v3777 = vadd.f32 %v3161, %v3697
      %v3778 = vadd.f32 %v3166, %v3702
      %v3779 = vadd.f32 %v3169, %v3705
      %v3780 = vadd.f32 %v3174, %v3710
      %v3781 = vadd.f32 %v3177, %v3713
      %v3782 = vadd.f32 %v3182, %v3718
      %v3783 = vadd.f32 %v3185, %v3721
      %v3784 = vadd.f32 %v3190, %v3726
      %v3785 = vadd.f32 %v3193, %v3729
      %v3786 = vadd.f32 %v3198, %v3734
      %v3787 = vadd.f32 %v3201, %v3737
      %v3788 = vld [vmem:[#allocation3] sm:$0xff]
      %v3789 = vld [vmem:[#allocation3 + $0x8] sm:$0xff]
      %v3790 = vld [vmem:[#allocation3 + $0x10] sm:$0xff]
      %v3791 = vld [vmem:[#allocation3 + $0x18] sm:$0xff]
      %v3792 = vld [vmem:[#allocation3 + $0x20] sm:$0xff]
      %v3793 = vld [vmem:[#allocation3 + $0x28] sm:$0xff]
      %v3794 = vld [vmem:[#allocation3 + $0x30] sm:$0xff]
      %v3795 = vld [vmem:[#allocation3 + $0x38] sm:$0xff]
      %v3796 = vld [vmem:[#allocation3 + $0x40] sm:$0xff]
      %v3797 = vld [vmem:[#allocation3 + $0x48] sm:$0xff]
      %v3798 = vld [vmem:[#allocation3 + $0x50] sm:$0xff]
      %v3799 = vld [vmem:[#allocation3 + $0x58] sm:$0xff]
      %v3800 = vld [vmem:[#allocation3 + $0x60] sm:$0xff]
      %v3801 = vld [vmem:[#allocation3 + $0x68] sm:$0xff]
      %v3802 = vld [vmem:[#allocation3 + $0x70] sm:$0xff]
      %v3803 = vld [vmem:[#allocation3 + $0x78] sm:$0xff]
      %v3804 = vld [vmem:[#allocation3 + $0x80] sm:$0xff]
      %v3805 = vld [vmem:[#allocation3 + $0x88] sm:$0xff]
      %v3806 = vld [vmem:[#allocation3 + $0x90] sm:$0xff]
      %v3807 = vld [vmem:[#allocation3 + $0x98] sm:$0xff]
      %v3808 = vld [vmem:[#allocation3 + $0xa0] sm:$0xff]
      %v3809 = vld [vmem:[#allocation3 + $0xa8] sm:$0xff]
      %v3810 = vld [vmem:[#allocation3 + $0xb0] sm:$0xff]
      %v3811 = vld [vmem:[#allocation3 + $0xb8] sm:$0xff]
      %v3812 = vld [vmem:[#allocation3 + $0xc0] sm:$0xff]
      %v3813 = vld [vmem:[#allocation3 + $0xc8] sm:$0xff]
      %v3814 = vld [vmem:[#allocation3 + $0xd0] sm:$0xff]
      %v3815 = vld [vmem:[#allocation3 + $0xd8] sm:$0xff]
      %v3816 = vld [vmem:[#allocation3 + $0xe0] sm:$0xff]
      %v3817 = vld [vmem:[#allocation3 + $0xe8] sm:$0xff]
      %v3818 = vld [vmem:[#allocation3 + $0xf0] sm:$0xff]
      %v3819 = vld [vmem:[#allocation3 + $0xf8] sm:$0xff]
      %v3820 = vld [vmem:[#allocation3 + $0x100] sm:$0xff]
      %v3821 = vld [vmem:[#allocation3 + $0x108] sm:$0xff]
      %v3822 = vld [vmem:[#allocation3 + $0x110] sm:$0xff]
      %v3823 = vld [vmem:[#allocation3 + $0x118] sm:$0xff]
      %v3824 = vld [vmem:[#allocation3 + $0x120] sm:$0xff]
      %v3825 = vld [vmem:[#allocation3 + $0x128] sm:$0xff]
      %v3826 = vld [vmem:[#allocation3 + $0x130] sm:$0xff]
      %v3827 = vld [vmem:[#allocation3 + $0x138] sm:$0xff]
      %v3828 = vld [vmem:[#allocation3 + $0x140] sm:$0xff]
      %v3829 = vld [vmem:[#allocation3 + $0x148] sm:$0xff]
      %v3830 = vld [vmem:[#allocation3 + $0x150] sm:$0xff]
      %v3831 = vld [vmem:[#allocation3 + $0x158] sm:$0xff]
      %v3832 = vld [vmem:[#allocation3 + $0x160] sm:$0xff]
      %v3833 = vld [vmem:[#allocation3 + $0x168] sm:$0xff]
      %v3834 = vld [vmem:[#allocation3 + $0x170] sm:$0xff]
      %v3835 = vld [vmem:[#allocation3 + $0x178] sm:$0xff]
      %v3836 = vadd.f32 %v3788, %v3740
      %v3837 = vadd.f32 %v3789, %v3741
      %v3838 = vadd.f32 %v3790, %v3742
      %v3839 = vadd.f32 %v3791, %v3743
      %v3840 = vadd.f32 %v3792, %v3744
      %v3841 = vadd.f32 %v3793, %v3745
      %v3842 = vadd.f32 %v3794, %v3746
      %v3843 = vadd.f32 %v3795, %v3747
      %v3844 = vadd.f32 %v3796, %v3748
      %v3845 = vadd.f32 %v3797, %v3749
      %v3846 = vadd.f32 %v3798, %v3750
      %v3847 = vadd.f32 %v3799, %v3751
      %v3848 = vadd.f32 %v3800, %v3752
      %v3849 = vadd.f32 %v3801, %v3753
      %v3850 = vadd.f32 %v3802, %v3754
      %v3851 = vadd.f32 %v3803, %v3755
      %v3852 = vadd.f32 %v3804, %v3756
      %v3853 = vadd.f32 %v3805, %v3757
      %v3854 = vadd.f32 %v3806, %v3758
      %v3855 = vadd.f32 %v3807, %v3759
      %v3856 = vadd.f32 %v3808, %v3760
      %v3857 = vadd.f32 %v3809, %v3761
      %v3858 = vadd.f32 %v3810, %v3762
      %v3859 = vadd.f32 %v3811, %v3763
      %v3860 = vadd.f32 %v3812, %v3764
      %v3861 = vadd.f32 %v3813, %v3765
      %v3862 = vadd.f32 %v3814, %v3766
      %v3863 = vadd.f32 %v3815, %v3767
      %v3864 = vadd.f32 %v3816, %v3768
      %v3865 = vadd.f32 %v3817, %v3769
      %v3866 = vadd.f32 %v3818, %v3770
      %v3867 = vadd.f32 %v3819, %v3771
      %v3868 = vadd.f32 %v3820, %v3772
      %v3869 = vadd.f32 %v3821, %v3773
      %v3870 = vadd.f32 %v3822, %v3774
      %v3871 = vadd.f32 %v3823, %v3775
      %v3872 = vadd.f32 %v3824, %v3776
      %v3873 = vadd.f32 %v3825, %v3777
      %v3874 = vadd.f32 %v3826, %v3778
      %v3875 = vadd.f32 %v3827, %v3779
      %v3876 = vadd.f32 %v3828, %v3780
      %v3877 = vadd.f32 %v3829, %v3781
      %v3878 = vadd.f32 %v3830, %v3782
      %v3879 = vadd.f32 %v3831, %v3783
      %v3880 = vadd.f32 %v3832, %v3784
      %v3881 = vadd.f32 %v3833, %v3785
      %v3882 = vadd.f32 %v3834, %v3786
      %v3883 = vadd.f32 %v3835, %v3787
      %3884 = vst [vmem:[#allocation3] sm:$0xff] %v3836
      %3885 = vst [vmem:[#allocation3 + $0x8] sm:$0xff] %v3837
      %3886 = vst [vmem:[#allocation3 + $0x10] sm:$0xff] %v3838
      %3887 = vst [vmem:[#allocation3 + $0x18] sm:$0xff] %v3839
      %3888 = vst [vmem:[#allocation3 + $0x20] sm:$0xff] %v3840
      %3889 = vst [vmem:[#allocation3 + $0x28] sm:$0xff] %v3841
      %3890 = vst [vmem:[#allocation3 + $0x30] sm:$0xff] %v3842
      %3891 = vst [vmem:[#allocation3 + $0x38] sm:$0xff] %v3843
      %3892 = vst [vmem:[#allocation3 + $0x40] sm:$0xff] %v3844
      %3893 = vst [vmem:[#allocation3 + $0x48] sm:$0xff] %v3845
      %3894 = vst [vmem:[#allocation3 + $0x50] sm:$0xff] %v3846
      %3895 = vst [vmem:[#allocation3 + $0x58] sm:$0xff] %v3847
      %3896 = vst [vmem:[#allocation3 + $0x60] sm:$0xff] %v3848
      %3897 = vst [vmem:[#allocation3 + $0x68] sm:$0xff] %v3849
      %3898 = vst [vmem:[#allocation3 + $0x70] sm:$0xff] %v3850
      %3899 = vst [vmem:[#allocation3 + $0x78] sm:$0xff] %v3851
      %3900 = vst [vmem:[#allocation3 + $0x80] sm:$0xff] %v3852
      %3901 = vst [vmem:[#allocation3 + $0x88] sm:$0xff] %v3853
      %3902 = vst [vmem:[#allocation3 + $0x90] sm:$0xff] %v3854
      %3903 = vst [vmem:[#allocation3 + $0x98] sm:$0xff] %v3855
      %3904 = vst [vmem:[#allocation3 + $0xa0] sm:$0xff] %v3856
      %3905 = vst [vmem:[#allocation3 + $0xa8] sm:$0xff] %v3857
      %3906 = vst [vmem:[#allocation3 + $0xb0] sm:$0xff] %v3858
      %3907 = vst [vmem:[#allocation3 + $0xb8] sm:$0xff] %v3859
      %3908 = vst [vmem:[#allocation3 + $0xc0] sm:$0xff] %v3860
      %3909 = vst [vmem:[#allocation3 + $0xc8] sm:$0xff] %v3861
      %3910 = vst [vmem:[#allocation3 + $0xd0] sm:$0xff] %v3862
      %3911 = vst [vmem:[#allocation3 + $0xd8] sm:$0xff] %v3863
      %3912 = vst [vmem:[#allocation3 + $0xe0] sm:$0xff] %v3864
      %3913 = vst [vmem:[#allocation3 + $0xe8] sm:$0xff] %v3865
      %3914 = vst [vmem:[#allocation3 + $0xf0] sm:$0xff] %v3866
      %3915 = vst [vmem:[#allocation3 + $0xf8] sm:$0xff] %v3867
      %3916 = vst [vmem:[#allocation3 + $0x100] sm:$0xff] %v3868
      %3917 = vst [vmem:[#allocation3 + $0x108] sm:$0xff] %v3869
      %3918 = vst [vmem:[#allocation3 + $0x110] sm:$0xff] %v3870
      %3919 = vst [vmem:[#allocation3 + $0x118] sm:$0xff] %v3871
      %3920 = vst [vmem:[#allocation3 + $0x120] sm:$0xff] %v3872
      %3921 = vst [vmem:[#allocation3 + $0x128] sm:$0xff] %v3873
      %3922 = vst [vmem:[#allocation3 + $0x130] sm:$0xff] %v3874
      %3923 = vst [vmem:[#allocation3 + $0x138] sm:$0xff] %v3875
      %3924 = vst [vmem:[#allocation3 + $0x140] sm:$0xff] %v3876
      %3925 = vst [vmem:[#allocation3 + $0x148] sm:$0xff] %v3877
      %3926 = vst [vmem:[#allocation3 + $0x150] sm:$0xff] %v3878
      %3927 = vst [vmem:[#allocation3 + $0x158] sm:$0xff] %v3879
      %3928 = vst [vmem:[#allocation3 + $0x160] sm:$0xff] %v3880
      %3929 = vst [vmem:[#allocation3 + $0x168] sm:$0xff] %v3881
      %3930 = vst [vmem:[#allocation3 + $0x170] sm:$0xff] %v3882
      %3931 = vst [vmem:[#allocation3 + $0x178] sm:$0xff] %v3883
      %v3932 = vld [vmem:[#allocation2 + $0x18] sm:$0xf8]
      %v3933 = vld [vmem:[#allocation2 + $0x20] sm:$0xff]
      %v3934 = vld [vmem:[#allocation2 + $0x28] sm:$0xff]
      %v3935 = vld [vmem:[#allocation2 + $0x30] sm:$0xff]
      %v3936 = vld [vmem:[#allocation2 + $0x38] sm:$0xff]
      %v3937 = vld [vmem:[#allocation2 + $0x40] sm:$0xff]
      %v3938 = vld [vmem:[#allocation2 + $0x48] sm:$0xff]
      %v3939 = vld [vmem:[#allocation2 + $0x50] sm:$0xff]
      %v3940 = vld [vmem:[#allocation2 + $0x58] sm:$0xff]
      %v3941 = vld [vmem:[#allocation2 + $0x60] sm:$0xff]
      %v3942 = vld [vmem:[#allocation2 + $0x68] sm:$0xff]
      %v3943 = vld [vmem:[#allocation2 + $0x70] sm:$0xff]
      %v3944 = vld [vmem:[#allocation2 + $0x78] sm:$0xff]
      %v3945 = vld [vmem:[#allocation2 + $0x80] sm:$0xff]
      %v3946 = vld [vmem:[#allocation2 + $0x88] sm:$0xff]
      %v3947 = vld [vmem:[#allocation2 + $0x90] sm:$0xff]
      %v3948 = vld [vmem:[#allocation2 + $0x98] sm:$0xff]
      %v3949 = vld [vmem:[#allocation2 + $0xa0] sm:$0xff]
      %v3950 = vld [vmem:[#allocation2 + $0xa8] sm:$0xff]
      %v3951 = vld [vmem:[#allocation2 + $0xb0] sm:$0xff]
      %v3952 = vld [vmem:[#allocation2 + $0xb8] sm:$0xff]
      %v3953 = vld [vmem:[#allocation2 + $0xc0] sm:$0xff]
      %v3954 = vld [vmem:[#allocation2 + $0xc8] sm:$0xff]
      %v3955 = vld [vmem:[#allocation2 + $0xd0] sm:$0xff]
      %v3956 = vld [vmem:[#allocation2 + $0xd8] sm:$0xf]
      %s3957 = scalar_lea.vmem %s2, 384
      %v3958 = vld [vmem:[%s3957] sm:$0xf]
      %v3959 = vld [vmem:[%s3957 + $0x4] sm:$0xf]
      %v3960 = vld [vmem:[%s3957 + $0x8] sm:$0xf]
      %v3961 = vld [vmem:[%s3957 + $0xc] sm:$0xf]
      %v3962 = vld [vmem:[%s3957 + $0x10] sm:$0xf]
      %v3963 = vld [vmem:[%s3957 + $0x14] sm:$0xf]
      %v3964 = vld [vmem:[%s3957 + $0x18] sm:$0xf]
      %v3965 = vld [vmem:[%s3957 + $0x1c] sm:$0xf]
      %v3966 = vld [vmem:[%s3957 + $0x20] sm:$0xf]
      %v3967 = vld [vmem:[%s3957 + $0x24] sm:$0xf]
      %v3968 = vld [vmem:[%s3957 + $0x28] sm:$0xf]
      %v3969 = vld [vmem:[%s3957 + $0x2c] sm:$0xf]
      %v3970 = vld [vmem:[%s3957 + $0x30] sm:$0xf]
      %v3971 = vld [vmem:[%s3957 + $0x34] sm:$0xf]
      %v3972 = vld [vmem:[%s3957 + $0x38] sm:$0xf]
      %v3973 = vld [vmem:[%s3957 + $0x3c] sm:$0xf]
      %v3974 = vld [vmem:[#allocation2 + $0x18] sm:$0xf0]
      %s3975 = scalar_lea.vmem %s2, 448
      %v3976 = vld [vmem:[%s3975] sm:$0xf]
      %v3977 = vld [vmem:[%s3975 + $0x4] sm:$0xf]
      %v3978 = vld [vmem:[%s3975 + $0x8] sm:$0xf]
      %v3979 = vld [vmem:[%s3975 + $0xc] sm:$0xf]
      %v3980 = vld [vmem:[%s3975 + $0x10] sm:$0xf]
      %v3981 = vld [vmem:[%s3975 + $0x14] sm:$0xf]
      %v3982 = vld [vmem:[%s3975 + $0x18] sm:$0xf]
      %v3983 = vld [vmem:[%s3975 + $0x1c] sm:$0xf]
      %v3984 = vld [vmem:[%s3975 + $0x20] sm:$0xf]
      %v3985 = vld [vmem:[%s3975 + $0x24] sm:$0xf]
      %v3986 = vld [vmem:[%s3975 + $0x28] sm:$0xf]
      %v3987 = vld [vmem:[%s3975 + $0x2c] sm:$0xf]
      %v3988 = vld [vmem:[%s3975 + $0x30] sm:$0xf]
      %v3989 = vld [vmem:[%s3975 + $0x34] sm:$0xf]
      %v3990 = vld [vmem:[%s3975 + $0x38] sm:$0xf]
      %v3991 = vld [vmem:[%s3975 + $0x3c] sm:$0xf]
      %v4017 = vrot.slane %v3974, 4
      %v4018 = vrot.slane %v3933, 4
      %v4019 = vsel %vm988, %v4017, %v4018
      %v4020 = vrot.slane %v3934, 4
      %v4021 = vsel %vm988, %v4018, %v4020
      %v4022 = vrot.slane %v3935, 4
      %v4023 = vsel %vm988, %v4020, %v4022
      %v4024 = vrot.slane %v3936, 4
      %v4025 = vsel %vm988, %v4022, %v4024
      %v4026 = vrot.slane %v3937, 4
      %v4027 = vsel %vm988, %v4024, %v4026
      %v4028 = vrot.slane %v3938, 4
      %v4029 = vsel %vm988, %v4026, %v4028
      %v4030 = vrot.slane %v3939, 4
      %v4031 = vsel %vm988, %v4028, %v4030
      %v4032 = vrot.slane %v3940, 4
      %v4033 = vsel %vm988, %v4030, %v4032
      %v4034 = vrot.slane %v3941, 4
      %v4035 = vsel %vm988, %v4032, %v4034
      %v4036 = vrot.slane %v3942, 4
      %v4037 = vsel %vm988, %v4034, %v4036
      %v4038 = vrot.slane %v3943, 4
      %v4039 = vsel %vm988, %v4036, %v4038
      %v4040 = vrot.slane %v3944, 4
      %v4041 = vsel %vm988, %v4038, %v4040
      %v4042 = vrot.slane %v3945, 4
      %v4043 = vsel %vm988, %v4040, %v4042
      %v4044 = vrot.slane %v3946, 4
      %v4045 = vsel %vm988, %v4042, %v4044
      %v4046 = vrot.slane %v3947, 4
      %v4047 = vsel %vm988, %v4044, %v4046
      %v4048 = vrot.slane %v3948, 4
      %v4049 = vsel %vm988, %v4046, %v4048
      %v4050 = vrot.slane %v3949, 4
      %v4051 = vsel %vm988, %v4048, %v4050
      %v4052 = vrot.slane %v3950, 4
      %v4053 = vsel %vm988, %v4050, %v4052
      %v4054 = vrot.slane %v3951, 4
      %v4055 = vsel %vm988, %v4052, %v4054
      %v4056 = vrot.slane %v3952, 4
      %v4057 = vsel %vm988, %v4054, %v4056
      %v4058 = vrot.slane %v3953, 4
      %v4059 = vsel %vm988, %v4056, %v4058
      %v4060 = vrot.slane %v3954, 4
      %v4061 = vsel %vm988, %v4058, %v4060
      %v4062 = vrot.slane %v3955, 4
      %v4063 = vsel %vm988, %v4060, %v4062
      %v4064 = vrot.slane %v3956, 4
      %v4065 = vsel %vm988, %v4062, %v4064
      %v4106 = vunpack.c.l.b16 %v3976
      %v4107 = vunpack.c.l.b16 %v3977
      %v4108 = vunpack.c.l.b16 %v3978
      %v4109 = vunpack.c.l.b16 %v3979
      %v4110 = vunpack.c.l.b16 %v3980
      %v4111 = vunpack.c.l.b16 %v3981
      %v4112 = vunpack.c.l.b16 %v3982
      %v4113 = vunpack.c.l.b16 %v3983
      %v4114 = vunpack.c.l.b16 %v3984
      %v4115 = vunpack.c.l.b16 %v3985
      %v4116 = vunpack.c.l.b16 %v3986
      %v4117 = vunpack.c.l.b16 %v3987
      %v4118 = vunpack.c.l.b16 %v3988
      %v4119 = vunpack.c.l.b16 %v3989
      %v4120 = vunpack.c.l.b16 %v3990
      %v4121 = vunpack.c.l.b16 %v3991
      %v4122 = vpack.c.b16 %v4107, %v4106
      %v4123 = vpack.c.b16 %v4109, %v4108
      %v4124 = vpack.c.b16 %v4111, %v4110
      %v4125 = vpack.c.b16 %v4113, %v4112
      %v4126 = vpack.c.b16 %v4115, %v4114
      %v4127 = vpack.c.b16 %v4117, %v4116
      %v4128 = vpack.c.b16 %v4119, %v4118
      %v4129 = vpack.c.b16 %v4121, %v4120
      %4138 = vmatprep.subr.bf16.mxu0 0
      %4139 = vmatpush1.bf16.msra.mxu0 %v4122
      %4140 = vmatprep.subr.bf16.mxu0 0
      %4141 = vmatpush1.bf16.msra.mxu0 %v4123
      %4142 = vmatprep.subr.bf16.mxu0 0
      %4143 = vmatpush1.bf16.msra.mxu0 %v4124
      %4144 = vmatprep.subr.bf16.mxu0 0
      %4145 = vmatpush1.bf16.msra.mxu0 %v4125
      %4146 = vmatprep.subr.bf16.mxu0 0
      %4147 = vmatpush1.bf16.msra.mxu0 %v4126
      %4148 = vmatprep.subr.bf16.mxu0 0
      %4149 = vmatpush1.bf16.msra.mxu0 %v4127
      %4150 = vmatprep.subr.bf16.mxu0 0
      %4151 = vmatpush1.bf16.msra.mxu0 %v4128
      %4152 = vmatprep.subr.bf16.mxu0 0
      %4153 = vmatpush1.bf16.msra.mxu0 %v4129
      %4154 = vmatprep.subr.bf16.mxu0 0
      %4155 = vmatpush1.bf16.msra.mxu0 0
      %4156 = vmatprep.subr.bf16.mxu0 0
      %4157 = vmatpush1.bf16.msra.mxu0 0
      %4158 = vmatprep.subr.bf16.mxu0 0
      %4159 = vmatpush1.bf16.msra.mxu0 0
      %4160 = vmatprep.subr.bf16.mxu0 0
      %4161 = vmatpush1.bf16.msra.mxu0 0
      %4162 = vmatprep.subr.bf16.mxu0 0
      %4163 = vmatpush1.bf16.msra.mxu0 0
      %4164 = vmatprep.subr.bf16.mxu0 0
      %4165 = vmatpush1.bf16.msra.mxu0 0
      %4166 = vmatprep.subr.bf16.mxu0 0
      %4167 = vmatpush1.bf16.msra.mxu0 0
      %4168 = vmatprep.subr.bf16.mxu0 0
      %4169 = vmatpush1.bf16.msra.mxu0 0
      %4170 = vmatprep.mubr.bf16.mxu0 0
      %4171 = vmatmul.mubr.bf16.gmra.mrb[0].mxu0 %v4019
      %v4172 = vpop.f32.mrb[0].mxu0
      %v4173 = vadd.f32 0.0, %v4172
      %v4174 = vpop.f32.mrb[0].mxu0
      %v4175 = vpop.f32.mrb[0].mxu0
      %v4176 = vadd.f32 0.0, %v4175
      %v4177 = vpop.f32.mrb[0].mxu0
      %4178 = vmatprep.mubr.bf16.mxu0 0
      %4179 = vmatmul.mubr.bf16.gmra.mrb[0].mxu0 %v4021
      %v4180 = vpop.f32.mrb[0].mxu0
      %v4181 = vadd.f32 0.0, %v4180
      %v4182 = vpop.f32.mrb[0].mxu0
      %v4183 = vpop.f32.mrb[0].mxu0
      %v4184 = vadd.f32 0.0, %v4183
      %v4185 = vpop.f32.mrb[0].mxu0
      %4186 = vmatprep.mubr.bf16.mxu0 0
      %4187 = vmatmul.mubr.bf16.gmra.mrb[0].mxu0 %v4023
      %v4188 = vpop.f32.mrb[0].mxu0
      %v4189 = vadd.f32 0.0, %v4188
      %v4190 = vpop.f32.mrb[0].mxu0
      %v4191 = vpop.f32.mrb[0].mxu0
      %v4192 = vadd.f32 0.0, %v4191
      %v4193 = vpop.f32.mrb[0].mxu0
      %4194 = vmatprep.mubr.bf16.mxu0 0
      %4195 = vmatmul.mubr.bf16.gmra.mrb[0].mxu0 %v4025
      %v4196 = vpop.f32.mrb[0].mxu0
      %v4197 = vadd.f32 0.0, %v4196
      %v4198 = vpop.f32.mrb[0].mxu0
      %v4199 = vpop.f32.mrb[0].mxu0
      %v4200 = vadd.f32 0.0, %v4199
      %v4201 = vpop.f32.mrb[0].mxu0
      %4202 = vmatprep.mubr.bf16.mxu0 0
      %4203 = vmatmul.mubr.bf16.gmra.mrb[0].mxu0 %v4027
      %v4204 = vpop.f32.mrb[0].mxu0
      %v4205 = vadd.f32 0.0, %v4204
      %v4206 = vpop.f32.mrb[0].mxu0
      %v4207 = vpop.f32.mrb[0].mxu0
      %v4208 = vadd.f32 0.0, %v4207
      %v4209 = vpop.f32.mrb[0].mxu0
      %4210 = vmatprep.mubr.bf16.mxu0 0
      %4211 = vmatmul.mubr.bf16.gmra.mrb[0].mxu0 %v4029
      %v4212 = vpop.f32.mrb[0].mxu0
      %v4213 = vadd.f32 0.0, %v4212
      %v4214 = vpop.f32.mrb[0].mxu0
      %v4215 = vpop.f32.mrb[0].mxu0
      %v4216 = vadd.f32 0.0, %v4215
      %v4217 = vpop.f32.mrb[0].mxu0
      %4218 = vmatprep.mubr.bf16.mxu0 0
      %4219 = vmatmul.mubr.bf16.gmra.mrb[0].mxu0 %v4031
      %v4220 = vpop.f32.mrb[0].mxu0
      %v4221 = vadd.f32 0.0, %v4220
      %v4222 = vpop.f32.mrb[0].mxu0
      %v4223 = vpop.f32.mrb[0].mxu0
      %v4224 = vadd.f32 0.0, %v4223
      %v4225 = vpop.f32.mrb[0].mxu0
      %4226 = vmatprep.mubr.bf16.mxu0 0
      %4227 = vmatmul.mubr.bf16.gmra.mrb[0].mxu0 %v4033
      %v4228 = vpop.f32.mrb[0].mxu0
      %v4229 = vadd.f32 0.0, %v4228
      %v4230 = vpop.f32.mrb[0].mxu0
      %v4231 = vpop.f32.mrb[0].mxu0
      %v4232 = vadd.f32 0.0, %v4231
      %v4233 = vpop.f32.mrb[0].mxu0
      %4234 = vmatprep.mubr.bf16.mxu0 0
      %4235 = vmatmul.mubr.bf16.gmra.mrb[0].mxu0 %v4035
      %v4236 = vpop.f32.mrb[0].mxu0
      %v4237 = vadd.f32 0.0, %v4236
      %v4238 = vpop.f32.mrb[0].mxu0
      %v4239 = vpop.f32.mrb[0].mxu0
      %v4240 = vadd.f32 0.0, %v4239
      %v4241 = vpop.f32.mrb[0].mxu0
      %4242 = vmatprep.mubr.bf16.mxu0 0
      %4243 = vmatmul.mubr.bf16.gmra.mrb[0].mxu0 %v4037
      %v4244 = vpop.f32.mrb[0].mxu0
      %v4245 = vadd.f32 0.0, %v4244
      %v4246 = vpop.f32.mrb[0].mxu0
      %v4247 = vpop.f32.mrb[0].mxu0
      %v4248 = vadd.f32 0.0, %v4247
      %v4249 = vpop.f32.mrb[0].mxu0
      %4250 = vmatprep.mubr.bf16.mxu0 0
      %4251 = vmatmul.mubr.bf16.gmra.mrb[0].mxu0 %v4039
      %v4252 = vpop.f32.mrb[0].mxu0
      %v4253 = vadd.f32 0.0, %v4252
      %v4254 = vpop.f32.mrb[0].mxu0
      %v4255 = vpop.f32.mrb[0].mxu0
      %v4256 = vadd.f32 0.0, %v4255
      %v4257 = vpop.f32.mrb[0].mxu0
      %4258 = vmatprep.mubr.bf16.mxu0 0
      %4259 = vmatmul.mubr.bf16.gmra.mrb[0].mxu0 %v4041
      %v4260 = vpop.f32.mrb[0].mxu0
      %v4261 = vadd.f32 0.0, %v4260
      %v4262 = vpop.f32.mrb[0].mxu0
      %v4263 = vpop.f32.mrb[0].mxu0
      %v4264 = vadd.f32 0.0, %v4263
      %v4265 = vpop.f32.mrb[0].mxu0
      %4266 = vmatprep.mubr.bf16.mxu0 0
      %4267 = vmatmul.mubr.bf16.gmra.mrb[0].mxu0 %v4043
      %v4268 = vpop.f32.mrb[0].mxu0
      %v4269 = vadd.f32 0.0, %v4268
      %v4270 = vpop.f32.mrb[0].mxu0
      %v4271 = vpop.f32.mrb[0].mxu0
      %v4272 = vadd.f32 0.0, %v4271
      %v4273 = vpop.f32.mrb[0].mxu0
      %4274 = vmatprep.mubr.bf16.mxu0 0
      %4275 = vmatmul.mubr.bf16.gmra.mrb[0].mxu0 %v4045
      %v4276 = vpop.f32.mrb[0].mxu0
      %v4277 = vadd.f32 0.0, %v4276
      %v4278 = vpop.f32.mrb[0].mxu0
      %v4279 = vpop.f32.mrb[0].mxu0
      %v4280 = vadd.f32 0.0, %v4279
      %v4281 = vpop.f32.mrb[0].mxu0
      %4282 = vmatprep.mubr.bf16.mxu0 0
      %4283 = vmatmul.mubr.bf16.gmra.mrb[0].mxu0 %v4047
      %v4284 = vpop.f32.mrb[0].mxu0
      %v4285 = vadd.f32 0.0, %v4284
      %v4286 = vpop.f32.mrb[0].mxu0
      %v4287 = vpop.f32.mrb[0].mxu0
      %v4288 = vadd.f32 0.0, %v4287
      %v4289 = vpop.f32.mrb[0].mxu0
      %4290 = vmatprep.mubr.bf16.mxu0 0
      %4291 = vmatmul.mubr.bf16.gmra.mrb[0].mxu0 %v4049
      %v4292 = vpop.f32.mrb[0].mxu0
      %v4293 = vadd.f32 0.0, %v4292
      %v4294 = vpop.f32.mrb[0].mxu0
      %v4295 = vpop.f32.mrb[0].mxu0
      %v4296 = vadd.f32 0.0, %v4295
      %v4297 = vpop.f32.mrb[0].mxu0
      %4298 = vmatprep.mubr.bf16.mxu0 0
      %4299 = vmatmul.mubr.bf16.gmra.mrb[0].mxu0 %v4051
      %v4300 = vpop.f32.mrb[0].mxu0
      %v4301 = vadd.f32 0.0, %v4300
      %v4302 = vpop.f32.mrb[0].mxu0
      %v4303 = vpop.f32.mrb[0].mxu0
      %v4304 = vadd.f32 0.0, %v4303
      %v4305 = vpop.f32.mrb[0].mxu0
      %4306 = vmatprep.mubr.bf16.mxu0 0
      %4307 = vmatmul.mubr.bf16.gmra.mrb[0].mxu0 %v4053
      %v4308 = vpop.f32.mrb[0].mxu0
      %v4309 = vadd.f32 0.0, %v4308
      %v4310 = vpop.f32.mrb[0].mxu0
      %v4311 = vpop.f32.mrb[0].mxu0
      %v4312 = vadd.f32 0.0, %v4311
      %v4313 = vpop.f32.mrb[0].mxu0
      %4314 = vmatprep.mubr.bf16.mxu0 0
      %4315 = vmatmul.mubr.bf16.gmra.mrb[0].mxu0 %v4055
      %v4316 = vpop.f32.mrb[0].mxu0
      %v4317 = vadd.f32 0.0, %v4316
      %v4318 = vpop.f32.mrb[0].mxu0
      %v4319 = vpop.f32.mrb[0].mxu0
      %v4320 = vadd.f32 0.0, %v4319
      %v4321 = vpop.f32.mrb[0].mxu0
      %4322 = vmatprep.mubr.bf16.mxu0 0
      %4323 = vmatmul.mubr.bf16.gmra.mrb[0].mxu0 %v4057
      %v4324 = vpop.f32.mrb[0].mxu0
      %v4325 = vadd.f32 0.0, %v4324
      %v4326 = vpop.f32.mrb[0].mxu0
      %v4327 = vpop.f32.mrb[0].mxu0
      %v4328 = vadd.f32 0.0, %v4327
      %v4329 = vpop.f32.mrb[0].mxu0
      %4330 = vmatprep.mubr.bf16.mxu0 0
      %4331 = vmatmul.mubr.bf16.gmra.mrb[0].mxu0 %v4059
      %v4332 = vpop.f32.mrb[0].mxu0
      %v4333 = vadd.f32 0.0, %v4332
      %v4334 = vpop.f32.mrb[0].mxu0
      %v4335 = vpop.f32.mrb[0].mxu0
      %v4336 = vadd.f32 0.0, %v4335
      %v4337 = vpop.f32.mrb[0].mxu0
      %4338 = vmatprep.mubr.bf16.mxu0 0
      %4339 = vmatmul.mubr.bf16.gmra.mrb[0].mxu0 %v4061
      %v4340 = vpop.f32.mrb[0].mxu0
      %v4341 = vadd.f32 0.0, %v4340
      %v4342 = vpop.f32.mrb[0].mxu0
      %v4343 = vpop.f32.mrb[0].mxu0
      %v4344 = vadd.f32 0.0, %v4343
      %v4345 = vpop.f32.mrb[0].mxu0
      %4346 = vmatprep.mubr.bf16.mxu0 0
      %4347 = vmatmul.mubr.bf16.gmra.mrb[0].mxu0 %v4063
      %v4348 = vpop.f32.mrb[0].mxu0
      %v4349 = vadd.f32 0.0, %v4348
      %v4350 = vpop.f32.mrb[0].mxu0
      %v4351 = vpop.f32.mrb[0].mxu0
      %v4352 = vadd.f32 0.0, %v4351
      %v4353 = vpop.f32.mrb[0].mxu0
      %4354 = vmatprep.mubr.bf16.mxu0 0
      %4355 = vmatmul.mubr.bf16.gmra.mrb[0].mxu0 %v4065
      %v4356 = vpop.f32.mrb[0].mxu0
      %v4357 = vadd.f32 0.0, %v4356
      %v4358 = vpop.f32.mrb[0].mxu0
      %v4359 = vpop.f32.mrb[0].mxu0
      %v4360 = vadd.f32 0.0, %v4359
      %v4361 = vpop.f32.mrb[0].mxu0
      %4362 = vdwg.mxu0
      %v4364 = vshrl.u32 %v3932, 16
      %v4366 = vrot.slane %v4364, 3
      %v4367 = vshll.u32 %v3932, 16
      %v4369 = vrot.slane %v4367, 4
      %v4370 = vor.u32 %v4366, %v4369
      %v4372 = vshrl.u32 %v3933, 16
      %v4374 = vrot.slane %v4372, 3
      %v4375 = vshll.u32 %v3933, 16
      %v4377 = vrot.slane %v4375, 4
      %v4378 = vor.u32 %v4374, %v4377
      %v4379 = vsel %vm1335, %v4370, %v4378
      %v4381 = vshrl.u32 %v3934, 16
      %v4383 = vrot.slane %v4381, 3
      %v4384 = vshll.u32 %v3934, 16
      %v4386 = vrot.slane %v4384, 4
      %v4387 = vor.u32 %v4383, %v4386
      %v4388 = vsel %vm1335, %v4378, %v4387
      %v4390 = vshrl.u32 %v3935, 16
      %v4392 = vrot.slane %v4390, 3
      %v4393 = vshll.u32 %v3935, 16
      %v4395 = vrot.slane %v4393, 4
      %v4396 = vor.u32 %v4392, %v4395
      %v4397 = vsel %vm1335, %v4387, %v4396
      %v4399 = vshrl.u32 %v3936, 16
      %v4401 = vrot.slane %v4399, 3
      %v4402 = vshll.u32 %v3936, 16
      %v4404 = vrot.slane %v4402, 4
      %v4405 = vor.u32 %v4401, %v4404
      %v4406 = vsel %vm1335, %v4396, %v4405
      %v4408 = vshrl.u32 %v3937, 16
      %v4410 = vrot.slane %v4408, 3
      %v4411 = vshll.u32 %v3937, 16
      %v4413 = vrot.slane %v4411, 4
      %v4414 = vor.u32 %v4410, %v4413
      %v4415 = vsel %vm1335, %v4405, %v4414
      %v4417 = vshrl.u32 %v3938, 16
      %v4419 = vrot.slane %v4417, 3
      %v4420 = vshll.u32 %v3938, 16
      %v4422 = vrot.slane %v4420, 4
      %v4423 = vor.u32 %v4419, %v4422
      %v4424 = vsel %vm1335, %v4414, %v4423
      %v4426 = vshrl.u32 %v3939, 16
      %v4428 = vrot.slane %v4426, 3
      %v4429 = vshll.u32 %v3939, 16
      %v4431 = vrot.slane %v4429, 4
      %v4432 = vor.u32 %v4428, %v4431
      %v4433 = vsel %vm1335, %v4423, %v4432
      %v4435 = vshrl.u32 %v3940, 16
      %v4437 = vrot.slane %v4435, 3
      %v4438 = vshll.u32 %v3940, 16
      %v4440 = vrot.slane %v4438, 4
      %v4441 = vor.u32 %v4437, %v4440
      %v4442 = vsel %vm1335, %v4432, %v4441
      %v4444 = vshrl.u32 %v3941, 16
      %v4446 = vrot.slane %v4444, 3
      %v4447 = vshll.u32 %v3941, 16
      %v4449 = vrot.slane %v4447, 4
      %v4450 = vor.u32 %v4446, %v4449
      %v4451 = vsel %vm1335, %v4441, %v4450
      %v4453 = vshrl.u32 %v3942, 16
      %v4455 = vrot.slane %v4453, 3
      %v4456 = vshll.u32 %v3942, 16
      %v4458 = vrot.slane %v4456, 4
      %v4459 = vor.u32 %v4455, %v4458
      %v4460 = vsel %vm1335, %v4450, %v4459
      %v4462 = vshrl.u32 %v3943, 16
      %v4464 = vrot.slane %v4462, 3
      %v4465 = vshll.u32 %v3943, 16
      %v4467 = vrot.slane %v4465, 4
      %v4468 = vor.u32 %v4464, %v4467
      %v4469 = vsel %vm1335, %v4459, %v4468
      %v4471 = vshrl.u32 %v3944, 16
      %v4473 = vrot.slane %v4471, 3
      %v4474 = vshll.u32 %v3944, 16
      %v4476 = vrot.slane %v4474, 4
      %v4477 = vor.u32 %v4473, %v4476
      %v4478 = vsel %vm1335, %v4468, %v4477
      %v4480 = vshrl.u32 %v3945, 16
      %v4482 = vrot.slane %v4480, 3
      %v4483 = vshll.u32 %v3945, 16
      %v4485 = vrot.slane %v4483, 4
      %v4486 = vor.u32 %v4482, %v4485
      %v4487 = vsel %vm1335, %v4477, %v4486
      %v4489 = vshrl.u32 %v3946, 16
      %v4491 = vrot.slane %v4489, 3
      %v4492 = vshll.u32 %v3946, 16
      %v4494 = vrot.slane %v4492, 4
      %v4495 = vor.u32 %v4491, %v4494
      %v4496 = vsel %vm1335, %v4486, %v4495
      %v4498 = vshrl.u32 %v3947, 16
      %v4500 = vrot.slane %v4498, 3
      %v4501 = vshll.u32 %v3947, 16
      %v4503 = vrot.slane %v4501, 4
      %v4504 = vor.u32 %v4500, %v4503
      %v4505 = vsel %vm1335, %v4495, %v4504
      %v4507 = vshrl.u32 %v3948, 16
      %v4509 = vrot.slane %v4507, 3
      %v4510 = vshll.u32 %v3948, 16
      %v4512 = vrot.slane %v4510, 4
      %v4513 = vor.u32 %v4509, %v4512
      %v4514 = vsel %vm1335, %v4504, %v4513
      %v4516 = vshrl.u32 %v3949, 16
      %v4518 = vrot.slane %v4516, 3
      %v4519 = vshll.u32 %v3949, 16
      %v4521 = vrot.slane %v4519, 4
      %v4522 = vor.u32 %v4518, %v4521
      %v4523 = vsel %vm1335, %v4513, %v4522
      %v4525 = vshrl.u32 %v3950, 16
      %v4527 = vrot.slane %v4525, 3
      %v4528 = vshll.u32 %v3950, 16
      %v4530 = vrot.slane %v4528, 4
      %v4531 = vor.u32 %v4527, %v4530
      %v4532 = vsel %vm1335, %v4522, %v4531
      %v4534 = vshrl.u32 %v3951, 16
      %v4536 = vrot.slane %v4534, 3
      %v4537 = vshll.u32 %v3951, 16
      %v4539 = vrot.slane %v4537, 4
      %v4540 = vor.u32 %v4536, %v4539
      %v4541 = vsel %vm1335, %v4531, %v4540
      %v4543 = vshrl.u32 %v3952, 16
      %v4545 = vrot.slane %v4543, 3
      %v4546 = vshll.u32 %v3952, 16
      %v4548 = vrot.slane %v4546, 4
      %v4549 = vor.u32 %v4545, %v4548
      %v4550 = vsel %vm1335, %v4540, %v4549
      %v4552 = vshrl.u32 %v3953, 16
      %v4554 = vrot.slane %v4552, 3
      %v4555 = vshll.u32 %v3953, 16
      %v4557 = vrot.slane %v4555, 4
      %v4558 = vor.u32 %v4554, %v4557
      %v4559 = vsel %vm1335, %v4549, %v4558
      %v4561 = vshrl.u32 %v3954, 16
      %v4563 = vrot.slane %v4561, 3
      %v4564 = vshll.u32 %v3954, 16
      %v4566 = vrot.slane %v4564, 4
      %v4567 = vor.u32 %v4563, %v4566
      %v4568 = vsel %vm1335, %v4558, %v4567
      %v4570 = vshrl.u32 %v3955, 16
      %v4572 = vrot.slane %v4570, 3
      %v4573 = vshll.u32 %v3955, 16
      %v4575 = vrot.slane %v4573, 4
      %v4576 = vor.u32 %v4572, %v4575
      %v4577 = vsel %vm1335, %v4567, %v4576
      %v4579 = vshrl.u32 %v3956, 16
      %v4581 = vrot.slane %v4579, 3
      %v4582 = vshll.u32 %v3956, 16
      %v4584 = vrot.slane %v4582, 4
      %v4585 = vor.u32 %v4581, %v4584
      %v4586 = vsel %vm1335, %v4576, %v4585
      %v4627 = vunpack.c.l.b16 %v3958
      %v4628 = vunpack.c.l.b16 %v3959
      %v4629 = vunpack.c.l.b16 %v3960
      %v4630 = vunpack.c.l.b16 %v3961
      %v4631 = vunpack.c.l.b16 %v3962
      %v4632 = vunpack.c.l.b16 %v3963
      %v4633 = vunpack.c.l.b16 %v3964
      %v4634 = vunpack.c.l.b16 %v3965
      %v4635 = vunpack.c.l.b16 %v3966
      %v4636 = vunpack.c.l.b16 %v3967
      %v4637 = vunpack.c.l.b16 %v3968
      %v4638 = vunpack.c.l.b16 %v3969
      %v4639 = vunpack.c.l.b16 %v3970
      %v4640 = vunpack.c.l.b16 %v3971
      %v4641 = vunpack.c.l.b16 %v3972
      %v4642 = vunpack.c.l.b16 %v3973
      %v4643 = vpack.c.b16 %v4628, %v4627
      %v4644 = vpack.c.b16 %v4630, %v4629
      %v4645 = vpack.c.b16 %v4632, %v4631
      %v4646 = vpack.c.b16 %v4634, %v4633
      %v4647 = vpack.c.b16 %v4636, %v4635
      %v4648 = vpack.c.b16 %v4638, %v4637
      %v4649 = vpack.c.b16 %v4640, %v4639
      %v4650 = vpack.c.b16 %v4642, %v4641
      %4659 = vmatprep.subr.bf16.mxu0 0
      %4660 = vmatpush1.bf16.msra.mxu0 %v4643
      %4661 = vmatprep.subr.bf16.mxu0 0
      %4662 = vmatpush1.bf16.msra.mxu0 %v4644
      %4663 = vmatprep.subr.bf16.mxu0 0
      %4664 = vmatpush1.bf16.msra.mxu0 %v4645
      %4665 = vmatprep.subr.bf16.mxu0 0
      %4666 = vmatpush1.bf16.msra.mxu0 %v4646
      %4667 = vmatprep.subr.bf16.mxu0 0
      %4668 = vmatpush1.bf16.msra.mxu0 %v4647
      %4669 = vmatprep.subr.bf16.mxu0 0
      %4670 = vmatpush1.bf16.msra.mxu0 %v4648
      %4671 = vmatprep.subr.bf16.mxu0 0
      %4672 = vmatpush1.bf16.msra.mxu0 %v4649
      %4673 = vmatprep.subr.bf16.mxu0 0
      %4674 = vmatpush1.bf16.msra.mxu0 %v4650
      %4675 = vmatprep.subr.bf16.mxu0 0
      %4676 = vmatpush1.bf16.msra.mxu0 0
      %4677 = vmatprep.subr.bf16.mxu0 0
      %4678 = vmatpush1.bf16.msra.mxu0 0
      %4679 = vmatprep.subr.bf16.mxu0 0
      %4680 = vmatpush1.bf16.msra.mxu0 0
      %4681 = vmatprep.subr.bf16.mxu0 0
      %4682 = vmatpush1.bf16.msra.mxu0 0
      %4683 = vmatprep.subr.bf16.mxu0 0
      %4684 = vmatpush1.bf16.msra.mxu0 0
      %4685 = vmatprep.subr.bf16.mxu0 0
      %4686 = vmatpush1.bf16.msra.mxu0 0
      %4687 = vmatprep.subr.bf16.mxu0 0
      %4688 = vmatpush1.bf16.msra.mxu0 0
      %4689 = vmatprep.subr.bf16.mxu0 0
      %4690 = vmatpush1.bf16.msra.mxu0 0
      %4691 = vmatprep.mubr.bf16.mxu0 0
      %4692 = vmatmul.mubr.bf16.gmra.mrb[0].mxu0 %v4379
      %v4693 = vpop.f32.mrb[0].mxu0
      %v4694 = vadd.f32 %v4173, %v4693
      %v4695 = vpop.f32.mrb[0].mxu0
      %v4696 = vpop.f32.mrb[0].mxu0
      %v4697 = vadd.f32 %v4176, %v4696
      %v4698 = vpop.f32.mrb[0].mxu0
      %4699 = vmatprep.mubr.bf16.mxu0 0
      %4700 = vmatmul.mubr.bf16.gmra.mrb[0].mxu0 %v4388
      %v4701 = vpop.f32.mrb[0].mxu0
      %v4702 = vadd.f32 %v4181, %v4701
      %v4703 = vpop.f32.mrb[0].mxu0
      %v4704 = vpop.f32.mrb[0].mxu0
      %v4705 = vadd.f32 %v4184, %v4704
      %v4706 = vpop.f32.mrb[0].mxu0
      %4707 = vmatprep.mubr.bf16.mxu0 0
      %4708 = vmatmul.mubr.bf16.gmra.mrb[0].mxu0 %v4397
      %v4709 = vpop.f32.mrb[0].mxu0
      %v4710 = vadd.f32 %v4189, %v4709
      %v4711 = vpop.f32.mrb[0].mxu0
      %v4712 = vpop.f32.mrb[0].mxu0
      %v4713 = vadd.f32 %v4192, %v4712
      %v4714 = vpop.f32.mrb[0].mxu0
      %4715 = vmatprep.mubr.bf16.mxu0 0
      %4716 = vmatmul.mubr.bf16.gmra.mrb[0].mxu0 %v4406
      %v4717 = vpop.f32.mrb[0].mxu0
      %v4718 = vadd.f32 %v4197, %v4717
      %v4719 = vpop.f32.mrb[0].mxu0
      %v4720 = vpop.f32.mrb[0].mxu0
      %v4721 = vadd.f32 %v4200, %v4720
      %v4722 = vpop.f32.mrb[0].mxu0
      %4723 = vmatprep.mubr.bf16.mxu0 0
      %4724 = vmatmul.mubr.bf16.gmra.mrb[0].mxu0 %v4415
      %v4725 = vpop.f32.mrb[0].mxu0
      %v4726 = vadd.f32 %v4205, %v4725
      %v4727 = vpop.f32.mrb[0].mxu0
      %v4728 = vpop.f32.mrb[0].mxu0
      %v4729 = vadd.f32 %v4208, %v4728
      %v4730 = vpop.f32.mrb[0].mxu0
      %4731 = vmatprep.mubr.bf16.mxu0 0
      %4732 = vmatmul.mubr.bf16.gmra.mrb[0].mxu0 %v4424
      %v4733 = vpop.f32.mrb[0].mxu0
      %v4734 = vadd.f32 %v4213, %v4733
      %v4735 = vpop.f32.mrb[0].mxu0
      %v4736 = vpop.f32.mrb[0].mxu0
      %v4737 = vadd.f32 %v4216, %v4736
      %v4738 = vpop.f32.mrb[0].mxu0
      %4739 = vmatprep.mubr.bf16.mxu0 0
      %4740 = vmatmul.mubr.bf16.gmra.mrb[0].mxu0 %v4433
      %v4741 = vpop.f32.mrb[0].mxu0
      %v4742 = vadd.f32 %v4221, %v4741
      %v4743 = vpop.f32.mrb[0].mxu0
      %v4744 = vpop.f32.mrb[0].mxu0
      %v4745 = vadd.f32 %v4224, %v4744
      %v4746 = vpop.f32.mrb[0].mxu0
      %4747 = vmatprep.mubr.bf16.mxu0 0
      %4748 = vmatmul.mubr.bf16.gmra.mrb[0].mxu0 %v4442
      %v4749 = vpop.f32.mrb[0].mxu0
      %v4750 = vadd.f32 %v4229, %v4749
      %v4751 = vpop.f32.mrb[0].mxu0
      %v4752 = vpop.f32.mrb[0].mxu0
      %v4753 = vadd.f32 %v4232, %v4752
      %v4754 = vpop.f32.mrb[0].mxu0
      %4755 = vmatprep.mubr.bf16.mxu0 0
      %4756 = vmatmul.mubr.bf16.gmra.mrb[0].mxu0 %v4451
      %v4757 = vpop.f32.mrb[0].mxu0
      %v4758 = vadd.f32 %v4237, %v4757
      %v4759 = vpop.f32.mrb[0].mxu0
      %v4760 = vpop.f32.mrb[0].mxu0
      %v4761 = vadd.f32 %v4240, %v4760
      %v4762 = vpop.f32.mrb[0].mxu0
      %4763 = vmatprep.mubr.bf16.mxu0 0
      %4764 = vmatmul.mubr.bf16.gmra.mrb[0].mxu0 %v4460
      %v4765 = vpop.f32.mrb[0].mxu0
      %v4766 = vadd.f32 %v4245, %v4765
      %v4767 = vpop.f32.mrb[0].mxu0
      %v4768 = vpop.f32.mrb[0].mxu0
      %v4769 = vadd.f32 %v4248, %v4768
      %v4770 = vpop.f32.mrb[0].mxu0
      %4771 = vmatprep.mubr.bf16.mxu0 0
      %4772 = vmatmul.mubr.bf16.gmra.mrb[0].mxu0 %v4469
      %v4773 = vpop.f32.mrb[0].mxu0
      %v4774 = vadd.f32 %v4253, %v4773
      %v4775 = vpop.f32.mrb[0].mxu0
      %v4776 = vpop.f32.mrb[0].mxu0
      %v4777 = vadd.f32 %v4256, %v4776
      %v4778 = vpop.f32.mrb[0].mxu0
      %4779 = vmatprep.mubr.bf16.mxu0 0
      %4780 = vmatmul.mubr.bf16.gmra.mrb[0].mxu0 %v4478
      %v4781 = vpop.f32.mrb[0].mxu0
      %v4782 = vadd.f32 %v4261, %v4781
      %v4783 = vpop.f32.mrb[0].mxu0
      %v4784 = vpop.f32.mrb[0].mxu0
      %v4785 = vadd.f32 %v4264, %v4784
      %v4786 = vpop.f32.mrb[0].mxu0
      %4787 = vmatprep.mubr.bf16.mxu0 0
      %4788 = vmatmul.mubr.bf16.gmra.mrb[0].mxu0 %v4487
      %v4789 = vpop.f32.mrb[0].mxu0
      %v4790 = vadd.f32 %v4269, %v4789
      %v4791 = vpop.f32.mrb[0].mxu0
      %v4792 = vpop.f32.mrb[0].mxu0
      %v4793 = vadd.f32 %v4272, %v4792
      %v4794 = vpop.f32.mrb[0].mxu0
      %4795 = vmatprep.mubr.bf16.mxu0 0
      %4796 = vmatmul.mubr.bf16.gmra.mrb[0].mxu0 %v4496
      %v4797 = vpop.f32.mrb[0].mxu0
      %v4798 = vadd.f32 %v4277, %v4797
      %v4799 = vpop.f32.mrb[0].mxu0
      %v4800 = vpop.f32.mrb[0].mxu0
      %v4801 = vadd.f32 %v4280, %v4800
      %v4802 = vpop.f32.mrb[0].mxu0
      %4803 = vmatprep.mubr.bf16.mxu0 0
      %4804 = vmatmul.mubr.bf16.gmra.mrb[0].mxu0 %v4505
      %v4805 = vpop.f32.mrb[0].mxu0
      %v4806 = vadd.f32 %v4285, %v4805
      %v4807 = vpop.f32.mrb[0].mxu0
      %v4808 = vpop.f32.mrb[0].mxu0
      %v4809 = vadd.f32 %v4288, %v4808
      %v4810 = vpop.f32.mrb[0].mxu0
      %4811 = vmatprep.mubr.bf16.mxu0 0
      %4812 = vmatmul.mubr.bf16.gmra.mrb[0].mxu0 %v4514
      %v4813 = vpop.f32.mrb[0].mxu0
      %v4814 = vadd.f32 %v4293, %v4813
      %v4815 = vpop.f32.mrb[0].mxu0
      %v4816 = vpop.f32.mrb[0].mxu0
      %v4817 = vadd.f32 %v4296, %v4816
      %v4818 = vpop.f32.mrb[0].mxu0
      %4819 = vmatprep.mubr.bf16.mxu0 0
      %4820 = vmatmul.mubr.bf16.gmra.mrb[0].mxu0 %v4523
      %v4821 = vpop.f32.mrb[0].mxu0
      %v4822 = vadd.f32 %v4301, %v4821
      %v4823 = vpop.f32.mrb[0].mxu0
      %v4824 = vpop.f32.mrb[0].mxu0
      %v4825 = vadd.f32 %v4304, %v4824
      %v4826 = vpop.f32.mrb[0].mxu0
      %4827 = vmatprep.mubr.bf16.mxu0 0
      %4828 = vmatmul.mubr.bf16.gmra.mrb[0].mxu0 %v4532
      %v4829 = vpop.f32.mrb[0].mxu0
      %v4830 = vadd.f32 %v4309, %v4829
      %v4831 = vpop.f32.mrb[0].mxu0
      %v4832 = vpop.f32.mrb[0].mxu0
      %v4833 = vadd.f32 %v4312, %v4832
      %v4834 = vpop.f32.mrb[0].mxu0
      %4835 = vmatprep.mubr.bf16.mxu0 0
      %4836 = vmatmul.mubr.bf16.gmra.mrb[0].mxu0 %v4541
      %v4837 = vpop.f32.mrb[0].mxu0
      %v4838 = vadd.f32 %v4317, %v4837
      %v4839 = vpop.f32.mrb[0].mxu0
      %v4840 = vpop.f32.mrb[0].mxu0
      %v4841 = vadd.f32 %v4320, %v4840
      %v4842 = vpop.f32.mrb[0].mxu0
      %4843 = vmatprep.mubr.bf16.mxu0 0
      %4844 = vmatmul.mubr.bf16.gmra.mrb[0].mxu0 %v4550
      %v4845 = vpop.f32.mrb[0].mxu0
      %v4846 = vadd.f32 %v4325, %v4845
      %v4847 = vpop.f32.mrb[0].mxu0
      %v4848 = vpop.f32.mrb[0].mxu0
      %v4849 = vadd.f32 %v4328, %v4848
      %v4850 = vpop.f32.mrb[0].mxu0
      %4851 = vmatprep.mubr.bf16.mxu0 0
      %4852 = vmatmul.mubr.bf16.gmra.mrb[0].mxu0 %v4559
      %v4853 = vpop.f32.mrb[0].mxu0
      %v4854 = vadd.f32 %v4333, %v4853
      %v4855 = vpop.f32.mrb[0].mxu0
      %v4856 = vpop.f32.mrb[0].mxu0
      %v4857 = vadd.f32 %v4336, %v4856
      %v4858 = vpop.f32.mrb[0].mxu0
      %4859 = vmatprep.mubr.bf16.mxu0 0
      %4860 = vmatmul.mubr.bf16.gmra.mrb[0].mxu0 %v4568
      %v4861 = vpop.f32.mrb[0].mxu0
      %v4862 = vadd.f32 %v4341, %v4861
      %v4863 = vpop.f32.mrb[0].mxu0
      %v4864 = vpop.f32.mrb[0].mxu0
      %v4865 = vadd.f32 %v4344, %v4864
      %v4866 = vpop.f32.mrb[0].mxu0
      %4867 = vmatprep.mubr.bf16.mxu0 0
      %4868 = vmatmul.mubr.bf16.gmra.mrb[0].mxu0 %v4577
      %v4869 = vpop.f32.mrb[0].mxu0
      %v4870 = vadd.f32 %v4349, %v4869
      %v4871 = vpop.f32.mrb[0].mxu0
      %v4872 = vpop.f32.mrb[0].mxu0
      %v4873 = vadd.f32 %v4352, %v4872
      %v4874 = vpop.f32.mrb[0].mxu0
      %4875 = vmatprep.mubr.bf16.mxu0 0
      %4876 = vmatmul.mubr.bf16.gmra.mrb[0].mxu0 %v4586
      %v4877 = vpop.f32.mrb[0].mxu0
      %v4878 = vadd.f32 %v4357, %v4877
      %v4879 = vpop.f32.mrb[0].mxu0
      %v4880 = vpop.f32.mrb[0].mxu0
      %v4881 = vadd.f32 %v4360, %v4880
      %v4882 = vpop.f32.mrb[0].mxu0
      %4883 = vdwg.mxu0
      %v4884 = vld [vmem:[#allocation2 + $0xd8] sm:$0x1f]
      %s4885 = scalar_lea.vmem %s2, 512
      %v4886 = vld [vmem:[%s4885] sm:$0xf]
      %v4887 = vld [vmem:[%s4885 + $0x4] sm:$0xf]
      %v4888 = vld [vmem:[%s4885 + $0x8] sm:$0xf]
      %v4889 = vld [vmem:[%s4885 + $0xc] sm:$0xf]
      %v4890 = vld [vmem:[%s4885 + $0x10] sm:$0xf]
      %v4891 = vld [vmem:[%s4885 + $0x14] sm:$0xf]
      %v4892 = vld [vmem:[%s4885 + $0x18] sm:$0xf]
      %v4893 = vld [vmem:[%s4885 + $0x1c] sm:$0xf]
      %v4894 = vld [vmem:[%s4885 + $0x20] sm:$0xf]
      %v4895 = vld [vmem:[%s4885 + $0x24] sm:$0xf]
      %v4896 = vld [vmem:[%s4885 + $0x28] sm:$0xf]
      %v4897 = vld [vmem:[%s4885 + $0x2c] sm:$0xf]
      %v4898 = vld [vmem:[%s4885 + $0x30] sm:$0xf]
      %v4899 = vld [vmem:[%s4885 + $0x34] sm:$0xf]
      %v4900 = vld [vmem:[%s4885 + $0x38] sm:$0xf]
      %v4901 = vld [vmem:[%s4885 + $0x3c] sm:$0xf]
      %v4903 = vshrl.u32 %v3974, 16
      %v4905 = vrot.slane %v4903, 4
      %v4906 = vshll.u32 %v3974, 16
      %v4908 = vrot.slane %v4906, 5
      %v4909 = vor.u32 %v4905, %v4908
      %v4910 = vrot.slane %v4372, 4
      %v4911 = vrot.slane %v4375, 5
      %v4912 = vor.u32 %v4910, %v4911
      %v4913 = vsel %vm1875, %v4909, %v4912
      %v4914 = vrot.slane %v4381, 4
      %v4915 = vrot.slane %v4384, 5
      %v4916 = vor.u32 %v4914, %v4915
      %v4917 = vsel %vm1875, %v4912, %v4916
      %v4918 = vrot.slane %v4390, 4
      %v4919 = vrot.slane %v4393, 5
      %v4920 = vor.u32 %v4918, %v4919
      %v4921 = vsel %vm1875, %v4916, %v4920
      %v4922 = vrot.slane %v4399, 4
      %v4923 = vrot.slane %v4402, 5
      %v4924 = vor.u32 %v4922, %v4923
      %v4925 = vsel %vm1875, %v4920, %v4924
      %v4926 = vrot.slane %v4408, 4
      %v4927 = vrot.slane %v4411, 5
      %v4928 = vor.u32 %v4926, %v4927
      %v4929 = vsel %vm1875, %v4924, %v4928
      %v4930 = vrot.slane %v4417, 4
      %v4931 = vrot.slane %v4420, 5
      %v4932 = vor.u32 %v4930, %v4931
      %v4933 = vsel %vm1875, %v4928, %v4932
      %v4934 = vrot.slane %v4426, 4
      %v4935 = vrot.slane %v4429, 5
      %v4936 = vor.u32 %v4934, %v4935
      %v4937 = vsel %vm1875, %v4932, %v4936
      %v4938 = vrot.slane %v4435, 4
      %v4939 = vrot.slane %v4438, 5
      %v4940 = vor.u32 %v4938, %v4939
      %v4941 = vsel %vm1875, %v4936, %v4940
      %v4942 = vrot.slane %v4444, 4
      %v4943 = vrot.slane %v4447, 5
      %v4944 = vor.u32 %v4942, %v4943
      %v4945 = vsel %vm1875, %v4940, %v4944
      %v4946 = vrot.slane %v4453, 4
      %v4947 = vrot.slane %v4456, 5
      %v4948 = vor.u32 %v4946, %v4947
      %v4949 = vsel %vm1875, %v4944, %v4948
      %v4950 = vrot.slane %v4462, 4
      %v4951 = vrot.slane %v4465, 5
      %v4952 = vor.u32 %v4950, %v4951
      %v4953 = vsel %vm1875, %v4948, %v4952
      %v4954 = vrot.slane %v4471, 4
      %v4955 = vrot.slane %v4474, 5
      %v4956 = vor.u32 %v4954, %v4955
      %v4957 = vsel %vm1875, %v4952, %v4956
      %v4958 = vrot.slane %v4480, 4
      %v4959 = vrot.slane %v4483, 5
      %v4960 = vor.u32 %v4958, %v4959
      %v4961 = vsel %vm1875, %v4956, %v4960
      %v4962 = vrot.slane %v4489, 4
      %v4963 = vrot.slane %v4492, 5
      %v4964 = vor.u32 %v4962, %v4963
      %v4965 = vsel %vm1875, %v4960, %v4964
      %v4966 = vrot.slane %v4498, 4
      %v4967 = vrot.slane %v4501, 5
      %v4968 = vor.u32 %v4966, %v4967
      %v4969 = vsel %vm1875, %v4964, %v4968
      %v4970 = vrot.slane %v4507, 4
      %v4971 = vrot.slane %v4510, 5
      %v4972 = vor.u32 %v4970, %v4971
      %v4973 = vsel %vm1875, %v4968, %v4972
      %v4974 = vrot.slane %v4516, 4
      %v4975 = vrot.slane %v4519, 5
      %v4976 = vor.u32 %v4974, %v4975
      %v4977 = vsel %vm1875, %v4972, %v4976
      %v4978 = vrot.slane %v4525, 4
      %v4979 = vrot.slane %v4528, 5
      %v4980 = vor.u32 %v4978, %v4979
      %v4981 = vsel %vm1875, %v4976, %v4980
      %v4982 = vrot.slane %v4534, 4
      %v4983 = vrot.slane %v4537, 5
      %v4984 = vor.u32 %v4982, %v4983
      %v4985 = vsel %vm1875, %v4980, %v4984
      %v4986 = vrot.slane %v4543, 4
      %v4987 = vrot.slane %v4546, 5
      %v4988 = vor.u32 %v4986, %v4987
      %v4989 = vsel %vm1875, %v4984, %v4988
      %v4990 = vrot.slane %v4552, 4
      %v4991 = vrot.slane %v4555, 5
      %v4992 = vor.u32 %v4990, %v4991
      %v4993 = vsel %vm1875, %v4988, %v4992
      %v4994 = vrot.slane %v4561, 4
      %v4995 = vrot.slane %v4564, 5
      %v4996 = vor.u32 %v4994, %v4995
      %v4997 = vsel %vm1875, %v4992, %v4996
      %v4998 = vrot.slane %v4570, 4
      %v4999 = vrot.slane %v4573, 5
      %v5000 = vor.u32 %v4998, %v4999
      %v5001 = vsel %vm1875, %v4996, %v5000
      %v5003 = vshrl.u32 %v4884, 16
      %v5005 = vrot.slane %v5003, 4
      %v5006 = vshll.u32 %v4884, 16
      %v5008 = vrot.slane %v5006, 5
      %v5009 = vor.u32 %v5005, %v5008
      %v5010 = vsel %vm1875, %v5000, %v5009
      %v5051 = vunpack.c.l.b16 %v4886
      %v5052 = vunpack.c.l.b16 %v4887
      %v5053 = vunpack.c.l.b16 %v4888
      %v5054 = vunpack.c.l.b16 %v4889
      %v5055 = vunpack.c.l.b16 %v4890
      %v5056 = vunpack.c.l.b16 %v4891
      %v5057 = vunpack.c.l.b16 %v4892
      %v5058 = vunpack.c.l.b16 %v4893
      %v5059 = vunpack.c.l.b16 %v4894
      %v5060 = vunpack.c.l.b16 %v4895
      %v5061 = vunpack.c.l.b16 %v4896
      %v5062 = vunpack.c.l.b16 %v4897
      %v5063 = vunpack.c.l.b16 %v4898
      %v5064 = vunpack.c.l.b16 %v4899
      %v5065 = vunpack.c.l.b16 %v4900
      %v5066 = vunpack.c.l.b16 %v4901
      %v5067 = vpack.c.b16 %v5052, %v5051
      %v5068 = vpack.c.b16 %v5054, %v5053
      %v5069 = vpack.c.b16 %v5056, %v5055
      %v5070 = vpack.c.b16 %v5058, %v5057
      %v5071 = vpack.c.b16 %v5060, %v5059
      %v5072 = vpack.c.b16 %v5062, %v5061
      %v5073 = vpack.c.b16 %v5064, %v5063
      %v5074 = vpack.c.b16 %v5066, %v5065
      %5083 = vmatprep.subr.bf16.mxu0 0
      %5084 = vmatpush1.bf16.msra.mxu0 %v5067
      %5085 = vmatprep.subr.bf16.mxu0 0
      %5086 = vmatpush1.bf16.msra.mxu0 %v5068
      %5087 = vmatprep.subr.bf16.mxu0 0
      %5088 = vmatpush1.bf16.msra.mxu0 %v5069
      %5089 = vmatprep.subr.bf16.mxu0 0
      %5090 = vmatpush1.bf16.msra.mxu0 %v5070
      %5091 = vmatprep.subr.bf16.mxu0 0
      %5092 = vmatpush1.bf16.msra.mxu0 %v5071
      %5093 = vmatprep.subr.bf16.mxu0 0
      %5094 = vmatpush1.bf16.msra.mxu0 %v5072
      %5095 = vmatprep.subr.bf16.mxu0 0
      %5096 = vmatpush1.bf16.msra.mxu0 %v5073
      %5097 = vmatprep.subr.bf16.mxu0 0
      %5098 = vmatpush1.bf16.msra.mxu0 %v5074
      %5099 = vmatprep.subr.bf16.mxu0 0
      %5100 = vmatpush1.bf16.msra.mxu0 0
      %5101 = vmatprep.subr.bf16.mxu0 0
      %5102 = vmatpush1.bf16.msra.mxu0 0
      %5103 = vmatprep.subr.bf16.mxu0 0
      %5104 = vmatpush1.bf16.msra.mxu0 0
      %5105 = vmatprep.subr.bf16.mxu0 0
      %5106 = vmatpush1.bf16.msra.mxu0 0
      %5107 = vmatprep.subr.bf16.mxu0 0
      %5108 = vmatpush1.bf16.msra.mxu0 0
      %5109 = vmatprep.subr.bf16.mxu0 0
      %5110 = vmatpush1.bf16.msra.mxu0 0
      %5111 = vmatprep.subr.bf16.mxu0 0
      %5112 = vmatpush1.bf16.msra.mxu0 0
      %5113 = vmatprep.subr.bf16.mxu0 0
      %5114 = vmatpush1.bf16.msra.mxu0 0
      %5115 = vmatprep.mubr.bf16.mxu0 0
      %5116 = vmatmul.mubr.bf16.gmra.mrb[0].mxu0 %v4913
      %v5117 = vpop.f32.mrb[0].mxu0
      %v5118 = vadd.f32 0.0, %v5117
      %v5119 = vpop.f32.mrb[0].mxu0
      %v5120 = vpop.f32.mrb[0].mxu0
      %v5121 = vadd.f32 0.0, %v5120
      %v5122 = vpop.f32.mrb[0].mxu0
      %5123 = vmatprep.mubr.bf16.mxu0 0
      %5124 = vmatmul.mubr.bf16.gmra.mrb[0].mxu0 %v4917
      %v5125 = vpop.f32.mrb[0].mxu0
      %v5126 = vadd.f32 0.0, %v5125
      %v5127 = vpop.f32.mrb[0].mxu0
      %v5128 = vpop.f32.mrb[0].mxu0
      %v5129 = vadd.f32 0.0, %v5128
      %v5130 = vpop.f32.mrb[0].mxu0
      %5131 = vmatprep.mubr.bf16.mxu0 0
      %5132 = vmatmul.mubr.bf16.gmra.mrb[0].mxu0 %v4921
      %v5133 = vpop.f32.mrb[0].mxu0
      %v5134 = vadd.f32 0.0, %v5133
      %v5135 = vpop.f32.mrb[0].mxu0
      %v5136 = vpop.f32.mrb[0].mxu0
      %v5137 = vadd.f32 0.0, %v5136
      %v5138 = vpop.f32.mrb[0].mxu0
      %5139 = vmatprep.mubr.bf16.mxu0 0
      %5140 = vmatmul.mubr.bf16.gmra.mrb[0].mxu0 %v4925
      %v5141 = vpop.f32.mrb[0].mxu0
      %v5142 = vadd.f32 0.0, %v5141
      %v5143 = vpop.f32.mrb[0].mxu0
      %v5144 = vpop.f32.mrb[0].mxu0
      %v5145 = vadd.f32 0.0, %v5144
      %v5146 = vpop.f32.mrb[0].mxu0
      %5147 = vmatprep.mubr.bf16.mxu0 0
      %5148 = vmatmul.mubr.bf16.gmra.mrb[0].mxu0 %v4929
      %v5149 = vpop.f32.mrb[0].mxu0
      %v5150 = vadd.f32 0.0, %v5149
      %v5151 = vpop.f32.mrb[0].mxu0
      %v5152 = vpop.f32.mrb[0].mxu0
      %v5153 = vadd.f32 0.0, %v5152
      %v5154 = vpop.f32.mrb[0].mxu0
      %5155 = vmatprep.mubr.bf16.mxu0 0
      %5156 = vmatmul.mubr.bf16.gmra.mrb[0].mxu0 %v4933
      %v5157 = vpop.f32.mrb[0].mxu0
      %v5158 = vadd.f32 0.0, %v5157
      %v5159 = vpop.f32.mrb[0].mxu0
      %v5160 = vpop.f32.mrb[0].mxu0
      %v5161 = vadd.f32 0.0, %v5160
      %v5162 = vpop.f32.mrb[0].mxu0
      %5163 = vmatprep.mubr.bf16.mxu0 0
      %5164 = vmatmul.mubr.bf16.gmra.mrb[0].mxu0 %v4937
      %v5165 = vpop.f32.mrb[0].mxu0
      %v5166 = vadd.f32 0.0, %v5165
      %v5167 = vpop.f32.mrb[0].mxu0
      %v5168 = vpop.f32.mrb[0].mxu0
      %v5169 = vadd.f32 0.0, %v5168
      %v5170 = vpop.f32.mrb[0].mxu0
      %5171 = vmatprep.mubr.bf16.mxu0 0
      %5172 = vmatmul.mubr.bf16.gmra.mrb[0].mxu0 %v4941
      %v5173 = vpop.f32.mrb[0].mxu0
      %v5174 = vadd.f32 0.0, %v5173
      %v5175 = vpop.f32.mrb[0].mxu0
      %v5176 = vpop.f32.mrb[0].mxu0
      %v5177 = vadd.f32 0.0, %v5176
      %v5178 = vpop.f32.mrb[0].mxu0
      %5179 = vmatprep.mubr.bf16.mxu0 0
      %5180 = vmatmul.mubr.bf16.gmra.mrb[0].mxu0 %v4945
      %v5181 = vpop.f32.mrb[0].mxu0
      %v5182 = vadd.f32 0.0, %v5181
      %v5183 = vpop.f32.mrb[0].mxu0
      %v5184 = vpop.f32.mrb[0].mxu0
      %v5185 = vadd.f32 0.0, %v5184
      %v5186 = vpop.f32.mrb[0].mxu0
      %5187 = vmatprep.mubr.bf16.mxu0 0
      %5188 = vmatmul.mubr.bf16.gmra.mrb[0].mxu0 %v4949
      %v5189 = vpop.f32.mrb[0].mxu0
      %v5190 = vadd.f32 0.0, %v5189
      %v5191 = vpop.f32.mrb[0].mxu0
      %v5192 = vpop.f32.mrb[0].mxu0
      %v5193 = vadd.f32 0.0, %v5192
      %v5194 = vpop.f32.mrb[0].mxu0
      %5195 = vmatprep.mubr.bf16.mxu0 0
      %5196 = vmatmul.mubr.bf16.gmra.mrb[0].mxu0 %v4953
      %v5197 = vpop.f32.mrb[0].mxu0
      %v5198 = vadd.f32 0.0, %v5197
      %v5199 = vpop.f32.mrb[0].mxu0
      %v5200 = vpop.f32.mrb[0].mxu0
      %v5201 = vadd.f32 0.0, %v5200
      %v5202 = vpop.f32.mrb[0].mxu0
      %5203 = vmatprep.mubr.bf16.mxu0 0
      %5204 = vmatmul.mubr.bf16.gmra.mrb[0].mxu0 %v4957
      %v5205 = vpop.f32.mrb[0].mxu0
      %v5206 = vadd.f32 0.0, %v5205
      %v5207 = vpop.f32.mrb[0].mxu0
      %v5208 = vpop.f32.mrb[0].mxu0
      %v5209 = vadd.f32 0.0, %v5208
      %v5210 = vpop.f32.mrb[0].mxu0
      %5211 = vmatprep.mubr.bf16.mxu0 0
      %5212 = vmatmul.mubr.bf16.gmra.mrb[0].mxu0 %v4961
      %v5213 = vpop.f32.mrb[0].mxu0
      %v5214 = vadd.f32 0.0, %v5213
      %v5215 = vpop.f32.mrb[0].mxu0
      %v5216 = vpop.f32.mrb[0].mxu0
      %v5217 = vadd.f32 0.0, %v5216
      %v5218 = vpop.f32.mrb[0].mxu0
      %5219 = vmatprep.mubr.bf16.mxu0 0
      %5220 = vmatmul.mubr.bf16.gmra.mrb[0].mxu0 %v4965
      %v5221 = vpop.f32.mrb[0].mxu0
      %v5222 = vadd.f32 0.0, %v5221
      %v5223 = vpop.f32.mrb[0].mxu0
      %v5224 = vpop.f32.mrb[0].mxu0
      %v5225 = vadd.f32 0.0, %v5224
      %v5226 = vpop.f32.mrb[0].mxu0
      %5227 = vmatprep.mubr.bf16.mxu0 0
      %5228 = vmatmul.mubr.bf16.gmra.mrb[0].mxu0 %v4969
      %v5229 = vpop.f32.mrb[0].mxu0
      %v5230 = vadd.f32 0.0, %v5229
      %v5231 = vpop.f32.mrb[0].mxu0
      %v5232 = vpop.f32.mrb[0].mxu0
      %v5233 = vadd.f32 0.0, %v5232
      %v5234 = vpop.f32.mrb[0].mxu0
      %5235 = vmatprep.mubr.bf16.mxu0 0
      %5236 = vmatmul.mubr.bf16.gmra.mrb[0].mxu0 %v4973
      %v5237 = vpop.f32.mrb[0].mxu0
      %v5238 = vadd.f32 0.0, %v5237
      %v5239 = vpop.f32.mrb[0].mxu0
      %v5240 = vpop.f32.mrb[0].mxu0
      %v5241 = vadd.f32 0.0, %v5240
      %v5242 = vpop.f32.mrb[0].mxu0
      %5243 = vmatprep.mubr.bf16.mxu0 0
      %5244 = vmatmul.mubr.bf16.gmra.mrb[0].mxu0 %v4977
      %v5245 = vpop.f32.mrb[0].mxu0
      %v5246 = vadd.f32 0.0, %v5245
      %v5247 = vpop.f32.mrb[0].mxu0
      %v5248 = vpop.f32.mrb[0].mxu0
      %v5249 = vadd.f32 0.0, %v5248
      %v5250 = vpop.f32.mrb[0].mxu0
      %5251 = vmatprep.mubr.bf16.mxu0 0
      %5252 = vmatmul.mubr.bf16.gmra.mrb[0].mxu0 %v4981
      %v5253 = vpop.f32.mrb[0].mxu0
      %v5254 = vadd.f32 0.0, %v5253
      %v5255 = vpop.f32.mrb[0].mxu0
      %v5256 = vpop.f32.mrb[0].mxu0
      %v5257 = vadd.f32 0.0, %v5256
      %v5258 = vpop.f32.mrb[0].mxu0
      %5259 = vmatprep.mubr.bf16.mxu0 0
      %5260 = vmatmul.mubr.bf16.gmra.mrb[0].mxu0 %v4985
      %v5261 = vpop.f32.mrb[0].mxu0
      %v5262 = vadd.f32 0.0, %v5261
      %v5263 = vpop.f32.mrb[0].mxu0
      %v5264 = vpop.f32.mrb[0].mxu0
      %v5265 = vadd.f32 0.0, %v5264
      %v5266 = vpop.f32.mrb[0].mxu0
      %5267 = vmatprep.mubr.bf16.mxu0 0
      %5268 = vmatmul.mubr.bf16.gmra.mrb[0].mxu0 %v4989
      %v5269 = vpop.f32.mrb[0].mxu0
      %v5270 = vadd.f32 0.0, %v5269
      %v5271 = vpop.f32.mrb[0].mxu0
      %v5272 = vpop.f32.mrb[0].mxu0
      %v5273 = vadd.f32 0.0, %v5272
      %v5274 = vpop.f32.mrb[0].mxu0
      %5275 = vmatprep.mubr.bf16.mxu0 0
      %5276 = vmatmul.mubr.bf16.gmra.mrb[0].mxu0 %v4993
      %v5277 = vpop.f32.mrb[0].mxu0
      %v5278 = vadd.f32 0.0, %v5277
      %v5279 = vpop.f32.mrb[0].mxu0
      %v5280 = vpop.f32.mrb[0].mxu0
      %v5281 = vadd.f32 0.0, %v5280
      %v5282 = vpop.f32.mrb[0].mxu0
      %5283 = vmatprep.mubr.bf16.mxu0 0
      %5284 = vmatmul.mubr.bf16.gmra.mrb[0].mxu0 %v4997
      %v5285 = vpop.f32.mrb[0].mxu0
      %v5286 = vadd.f32 0.0, %v5285
      %v5287 = vpop.f32.mrb[0].mxu0
      %v5288 = vpop.f32.mrb[0].mxu0
      %v5289 = vadd.f32 0.0, %v5288
      %v5290 = vpop.f32.mrb[0].mxu0
      %5291 = vmatprep.mubr.bf16.mxu0 0
      %5292 = vmatmul.mubr.bf16.gmra.mrb[0].mxu0 %v5001
      %v5293 = vpop.f32.mrb[0].mxu0
      %v5294 = vadd.f32 0.0, %v5293
      %v5295 = vpop.f32.mrb[0].mxu0
      %v5296 = vpop.f32.mrb[0].mxu0
      %v5297 = vadd.f32 0.0, %v5296
      %v5298 = vpop.f32.mrb[0].mxu0
      %5299 = vmatprep.mubr.bf16.mxu0 0
      %5300 = vmatmul.mubr.bf16.gmra.mrb[0].mxu0 %v5010
      %v5301 = vpop.f32.mrb[0].mxu0
      %v5302 = vadd.f32 0.0, %v5301
      %v5303 = vpop.f32.mrb[0].mxu0
      %v5304 = vpop.f32.mrb[0].mxu0
      %v5305 = vadd.f32 0.0, %v5304
      %v5306 = vpop.f32.mrb[0].mxu0
      %5307 = vdwg.mxu0
      %v5308 = vadd.f32 %v4694, %v5118
      %v5309 = vadd.f32 %v4697, %v5121
      %v5310 = vadd.f32 %v4702, %v5126
      %v5311 = vadd.f32 %v4705, %v5129
      %v5312 = vadd.f32 %v4710, %v5134
      %v5313 = vadd.f32 %v4713, %v5137
      %v5314 = vadd.f32 %v4718, %v5142
      %v5315 = vadd.f32 %v4721, %v5145
      %v5316 = vadd.f32 %v4726, %v5150
      %v5317 = vadd.f32 %v4729, %v5153
      %v5318 = vadd.f32 %v4734, %v5158
      %v5319 = vadd.f32 %v4737, %v5161
      %v5320 = vadd.f32 %v4742, %v5166
      %v5321 = vadd.f32 %v4745, %v5169
      %v5322 = vadd.f32 %v4750, %v5174
      %v5323 = vadd.f32 %v4753, %v5177
      %v5324 = vadd.f32 %v4758, %v5182
      %v5325 = vadd.f32 %v4761, %v5185
      %v5326 = vadd.f32 %v4766, %v5190
      %v5327 = vadd.f32 %v4769, %v5193
      %v5328 = vadd.f32 %v4774, %v5198
      %v5329 = vadd.f32 %v4777, %v5201
      %v5330 = vadd.f32 %v4782, %v5206
      %v5331 = vadd.f32 %v4785, %v5209
      %v5332 = vadd.f32 %v4790, %v5214
      %v5333 = vadd.f32 %v4793, %v5217
      %v5334 = vadd.f32 %v4798, %v5222
      %v5335 = vadd.f32 %v4801, %v5225
      %v5336 = vadd.f32 %v4806, %v5230
      %v5337 = vadd.f32 %v4809, %v5233
      %v5338 = vadd.f32 %v4814, %v5238
      %v5339 = vadd.f32 %v4817, %v5241
      %v5340 = vadd.f32 %v4822, %v5246
      %v5341 = vadd.f32 %v4825, %v5249
      %v5342 = vadd.f32 %v4830, %v5254
      %v5343 = vadd.f32 %v4833, %v5257
      %v5344 = vadd.f32 %v4838, %v5262
      %v5345 = vadd.f32 %v4841, %v5265
      %v5346 = vadd.f32 %v4846, %v5270
      %v5347 = vadd.f32 %v4849, %v5273
      %v5348 = vadd.f32 %v4854, %v5278
      %v5349 = vadd.f32 %v4857, %v5281
      %v5350 = vadd.f32 %v4862, %v5286
      %v5351 = vadd.f32 %v4865, %v5289
      %v5352 = vadd.f32 %v4870, %v5294
      %v5353 = vadd.f32 %v4873, %v5297
      %v5354 = vadd.f32 %v4878, %v5302
      %v5355 = vadd.f32 %v4881, %v5305
      %v5356 = vld [vmem:[#allocation3] sm:$0xff]
      %v5357 = vld [vmem:[#allocation3 + $0x8] sm:$0xff]
      %v5358 = vld [vmem:[#allocation3 + $0x10] sm:$0xff]
      %v5359 = vld [vmem:[#allocation3 + $0x18] sm:$0xff]
      %v5360 = vld [vmem:[#allocation3 + $0x20] sm:$0xff]
      %v5361 = vld [vmem:[#allocation3 + $0x28] sm:$0xff]
      %v5362 = vld [vmem:[#allocation3 + $0x30] sm:$0xff]
      %v5363 = vld [vmem:[#allocation3 + $0x38] sm:$0xff]
      %v5364 = vld [vmem:[#allocation3 + $0x40] sm:$0xff]
      %v5365 = vld [vmem:[#allocation3 + $0x48] sm:$0xff]
      %v5366 = vld [vmem:[#allocation3 + $0x50] sm:$0xff]
      %v5367 = vld [vmem:[#allocation3 + $0x58] sm:$0xff]
      %v5368 = vld [vmem:[#allocation3 + $0x60] sm:$0xff]
      %v5369 = vld [vmem:[#allocation3 + $0x68] sm:$0xff]
      %v5370 = vld [vmem:[#allocation3 + $0x70] sm:$0xff]
      %v5371 = vld [vmem:[#allocation3 + $0x78] sm:$0xff]
      %v5372 = vld [vmem:[#allocation3 + $0x80] sm:$0xff]
      %v5373 = vld [vmem:[#allocation3 + $0x88] sm:$0xff]
      %v5374 = vld [vmem:[#allocation3 + $0x90] sm:$0xff]
      %v5375 = vld [vmem:[#allocation3 + $0x98] sm:$0xff]
      %v5376 = vld [vmem:[#allocation3 + $0xa0] sm:$0xff]
      %v5377 = vld [vmem:[#allocation3 + $0xa8] sm:$0xff]
      %v5378 = vld [vmem:[#allocation3 + $0xb0] sm:$0xff]
      %v5379 = vld [vmem:[#allocation3 + $0xb8] sm:$0xff]
      %v5380 = vld [vmem:[#allocation3 + $0xc0] sm:$0xff]
      %v5381 = vld [vmem:[#allocation3 + $0xc8] sm:$0xff]
      %v5382 = vld [vmem:[#allocation3 + $0xd0] sm:$0xff]
      %v5383 = vld [vmem:[#allocation3 + $0xd8] sm:$0xff]
      %v5384 = vld [vmem:[#allocation3 + $0xe0] sm:$0xff]
      %v5385 = vld [vmem:[#allocation3 + $0xe8] sm:$0xff]
      %v5386 = vld [vmem:[#allocation3 + $0xf0] sm:$0xff]
      %v5387 = vld [vmem:[#allocation3 + $0xf8] sm:$0xff]
      %v5388 = vld [vmem:[#allocation3 + $0x100] sm:$0xff]
      %v5389 = vld [vmem:[#allocation3 + $0x108] sm:$0xff]
      %v5390 = vld [vmem:[#allocation3 + $0x110] sm:$0xff]
      %v5391 = vld [vmem:[#allocation3 + $0x118] sm:$0xff]
      %v5392 = vld [vmem:[#allocation3 + $0x120] sm:$0xff]
      %v5393 = vld [vmem:[#allocation3 + $0x128] sm:$0xff]
      %v5394 = vld [vmem:[#allocation3 + $0x130] sm:$0xff]
      %v5395 = vld [vmem:[#allocation3 + $0x138] sm:$0xff]
      %v5396 = vld [vmem:[#allocation3 + $0x140] sm:$0xff]
      %v5397 = vld [vmem:[#allocation3 + $0x148] sm:$0xff]
      %v5398 = vld [vmem:[#allocation3 + $0x150] sm:$0xff]
      %v5399 = vld [vmem:[#allocation3 + $0x158] sm:$0xff]
      %v5400 = vld [vmem:[#allocation3 + $0x160] sm:$0xff]
      %v5401 = vld [vmem:[#allocation3 + $0x168] sm:$0xff]
      %v5402 = vld [vmem:[#allocation3 + $0x170] sm:$0xff]
      %v5403 = vld [vmem:[#allocation3 + $0x178] sm:$0xff]
      %v5404 = vadd.f32 %v5356, %v5308
      %v5405 = vadd.f32 %v5357, %v5309
      %v5406 = vadd.f32 %v5358, %v5310
      %v5407 = vadd.f32 %v5359, %v5311
      %v5408 = vadd.f32 %v5360, %v5312
      %v5409 = vadd.f32 %v5361, %v5313
      %v5410 = vadd.f32 %v5362, %v5314
      %v5411 = vadd.f32 %v5363, %v5315
      %v5412 = vadd.f32 %v5364, %v5316
      %v5413 = vadd.f32 %v5365, %v5317
      %v5414 = vadd.f32 %v5366, %v5318
      %v5415 = vadd.f32 %v5367, %v5319
      %v5416 = vadd.f32 %v5368, %v5320
      %v5417 = vadd.f32 %v5369, %v5321
      %v5418 = vadd.f32 %v5370, %v5322
      %v5419 = vadd.f32 %v5371, %v5323
      %v5420 = vadd.f32 %v5372, %v5324
      %v5421 = vadd.f32 %v5373, %v5325
      %v5422 = vadd.f32 %v5374, %v5326
      %v5423 = vadd.f32 %v5375, %v5327
      %v5424 = vadd.f32 %v5376, %v5328
      %v5425 = vadd.f32 %v5377, %v5329
      %v5426 = vadd.f32 %v5378, %v5330
      %v5427 = vadd.f32 %v5379, %v5331
      %v5428 = vadd.f32 %v5380, %v5332
      %v5429 = vadd.f32 %v5381, %v5333
      %v5430 = vadd.f32 %v5382, %v5334
      %v5431 = vadd.f32 %v5383, %v5335
      %v5432 = vadd.f32 %v5384, %v5336
      %v5433 = vadd.f32 %v5385, %v5337
      %v5434 = vadd.f32 %v5386, %v5338
      %v5435 = vadd.f32 %v5387, %v5339
      %v5436 = vadd.f32 %v5388, %v5340
      %v5437 = vadd.f32 %v5389, %v5341
      %v5438 = vadd.f32 %v5390, %v5342
      %v5439 = vadd.f32 %v5391, %v5343
      %v5440 = vadd.f32 %v5392, %v5344
      %v5441 = vadd.f32 %v5393, %v5345
      %v5442 = vadd.f32 %v5394, %v5346
      %v5443 = vadd.f32 %v5395, %v5347
      %v5444 = vadd.f32 %v5396, %v5348
      %v5445 = vadd.f32 %v5397, %v5349
      %v5446 = vadd.f32 %v5398, %v5350
      %v5447 = vadd.f32 %v5399, %v5351
      %v5448 = vadd.f32 %v5400, %v5352
      %v5449 = vadd.f32 %v5401, %v5353
      %v5450 = vadd.f32 %v5402, %v5354
      %v5451 = vadd.f32 %v5403, %v5355
      %5452 = vst [vmem:[#allocation3] sm:$0xff] %v5404
      %5453 = vst [vmem:[#allocation3 + $0x8] sm:$0xff] %v5405
      %5454 = vst [vmem:[#allocation3 + $0x10] sm:$0xff] %v5406
      %5455 = vst [vmem:[#allocation3 + $0x18] sm:$0xff] %v5407
      %5456 = vst [vmem:[#allocation3 + $0x20] sm:$0xff] %v5408
      %5457 = vst [vmem:[#allocation3 + $0x28] sm:$0xff] %v5409
      %5458 = vst [vmem:[#allocation3 + $0x30] sm:$0xff] %v5410
      %5459 = vst [vmem:[#allocation3 + $0x38] sm:$0xff] %v5411
      %5460 = vst [vmem:[#allocation3 + $0x40] sm:$0xff] %v5412
      %5461 = vst [vmem:[#allocation3 + $0x48] sm:$0xff] %v5413
      %5462 = vst [vmem:[#allocation3 + $0x50] sm:$0xff] %v5414
      %5463 = vst [vmem:[#allocation3 + $0x58] sm:$0xff] %v5415
      %5464 = vst [vmem:[#allocation3 + $0x60] sm:$0xff] %v5416
      %5465 = vst [vmem:[#allocation3 + $0x68] sm:$0xff] %v5417
      %5466 = vst [vmem:[#allocation3 + $0x70] sm:$0xff] %v5418
      %5467 = vst [vmem:[#allocation3 + $0x78] sm:$0xff] %v5419
      %5468 = vst [vmem:[#allocation3 + $0x80] sm:$0xff] %v5420
      %5469 = vst [vmem:[#allocation3 + $0x88] sm:$0xff] %v5421
      %5470 = vst [vmem:[#allocation3 + $0x90] sm:$0xff] %v5422
      %5471 = vst [vmem:[#allocation3 + $0x98] sm:$0xff] %v5423
      %5472 = vst [vmem:[#allocation3 + $0xa0] sm:$0xff] %v5424
      %5473 = vst [vmem:[#allocation3 + $0xa8] sm:$0xff] %v5425
      %5474 = vst [vmem:[#allocation3 + $0xb0] sm:$0xff] %v5426
      %5475 = vst [vmem:[#allocation3 + $0xb8] sm:$0xff] %v5427
      %5476 = vst [vmem:[#allocation3 + $0xc0] sm:$0xff] %v5428
      %5477 = vst [vmem:[#allocation3 + $0xc8] sm:$0xff] %v5429
      %5478 = vst [vmem:[#allocation3 + $0xd0] sm:$0xff] %v5430
      %5479 = vst [vmem:[#allocation3 + $0xd8] sm:$0xff] %v5431
      %5480 = vst [vmem:[#allocation3 + $0xe0] sm:$0xff] %v5432
      %5481 = vst [vmem:[#allocation3 + $0xe8] sm:$0xff] %v5433
      %5482 = vst [vmem:[#allocation3 + $0xf0] sm:$0xff] %v5434
      %5483 = vst [vmem:[#allocation3 + $0xf8] sm:$0xff] %v5435
      %5484 = vst [vmem:[#allocation3 + $0x100] sm:$0xff] %v5436
      %5485 = vst [vmem:[#allocation3 + $0x108] sm:$0xff] %v5437
      %5486 = vst [vmem:[#allocation3 + $0x110] sm:$0xff] %v5438
      %5487 = vst [vmem:[#allocation3 + $0x118] sm:$0xff] %v5439
      %5488 = vst [vmem:[#allocation3 + $0x120] sm:$0xff] %v5440
      %5489 = vst [vmem:[#allocation3 + $0x128] sm:$0xff] %v5441
      %5490 = vst [vmem:[#allocation3 + $0x130] sm:$0xff] %v5442
      %5491 = vst [vmem:[#allocation3 + $0x138] sm:$0xff] %v5443
      %5492 = vst [vmem:[#allocation3 + $0x140] sm:$0xff] %v5444
      %5493 = vst [vmem:[#allocation3 + $0x148] sm:$0xff] %v5445
      %5494 = vst [vmem:[#allocation3 + $0x150] sm:$0xff] %v5446
      %5495 = vst [vmem:[#allocation3 + $0x158] sm:$0xff] %v5447
      %5496 = vst [vmem:[#allocation3 + $0x160] sm:$0xff] %v5448
      %5497 = vst [vmem:[#allocation3 + $0x168] sm:$0xff] %v5449
      %5498 = vst [vmem:[#allocation3 + $0x170] sm:$0xff] %v5450
      %5499 = vst [vmem:[#allocation3 + $0x178] sm:$0xff] %v5451
      %v5500 = vld [vmem:[#allocation3] sm:$0xff]
      %v5501 = vld [vmem:[#allocation3 + $0x8] sm:$0xff]
      %v5502 = vld [vmem:[#allocation3 + $0x10] sm:$0xff]
      %v5503 = vld [vmem:[#allocation3 + $0x18] sm:$0xff]
      %v5504 = vld [vmem:[#allocation3 + $0x20] sm:$0xff]
      %v5505 = vld [vmem:[#allocation3 + $0x28] sm:$0xff]
      %v5506 = vld [vmem:[#allocation3 + $0x30] sm:$0xff]
      %v5507 = vld [vmem:[#allocation3 + $0x38] sm:$0xff]
      %v5508 = vld [vmem:[#allocation3 + $0x40] sm:$0xff]
      %v5509 = vld [vmem:[#allocation3 + $0x48] sm:$0xff]
      %v5510 = vld [vmem:[#allocation3 + $0x50] sm:$0xff]
      %v5511 = vld [vmem:[#allocation3 + $0x58] sm:$0xff]
      %v5512 = vld [vmem:[#allocation3 + $0x60] sm:$0xff]
      %v5513 = vld [vmem:[#allocation3 + $0x68] sm:$0xff]
      %v5514 = vld [vmem:[#allocation3 + $0x70] sm:$0xff]
      %v5515 = vld [vmem:[#allocation3 + $0x78] sm:$0xff]
      %v5516 = vld [vmem:[#allocation3 + $0x80] sm:$0xff]
      %v5517 = vld [vmem:[#allocation3 + $0x88] sm:$0xff]
      %v5518 = vld [vmem:[#allocation3 + $0x90] sm:$0xff]
      %v5519 = vld [vmem:[#allocation3 + $0x98] sm:$0xff]
      %v5520 = vld [vmem:[#allocation3 + $0xa0] sm:$0xff]
      %v5521 = vld [vmem:[#allocation3 + $0xa8] sm:$0xff]
      %v5522 = vld [vmem:[#allocation3 + $0xb0] sm:$0xff]
      %v5523 = vld [vmem:[#allocation3 + $0xb8] sm:$0xff]
      %v5524 = vld [vmem:[#allocation3 + $0xc0] sm:$0xff]
      %v5525 = vld [vmem:[#allocation3 + $0xc8] sm:$0xff]
      %v5526 = vld [vmem:[#allocation3 + $0xd0] sm:$0xff]
      %v5527 = vld [vmem:[#allocation3 + $0xd8] sm:$0xff]
      %v5528 = vld [vmem:[#allocation3 + $0xe0] sm:$0xff]
      %v5529 = vld [vmem:[#allocation3 + $0xe8] sm:$0xff]
      %v5530 = vld [vmem:[#allocation3 + $0xf0] sm:$0xff]
      %v5531 = vld [vmem:[#allocation3 + $0xf8] sm:$0xff]
      %v5532 = vld [vmem:[#allocation3 + $0x100] sm:$0xff]
      %v5533 = vld [vmem:[#allocation3 + $0x108] sm:$0xff]
      %v5534 = vld [vmem:[#allocation3 + $0x110] sm:$0xff]
      %v5535 = vld [vmem:[#allocation3 + $0x118] sm:$0xff]
      %v5536 = vld [vmem:[#allocation3 + $0x120] sm:$0xff]
      %v5537 = vld [vmem:[#allocation3 + $0x128] sm:$0xff]
      %v5538 = vld [vmem:[#allocation3 + $0x130] sm:$0xff]
      %v5539 = vld [vmem:[#allocation3 + $0x138] sm:$0xff]
      %v5540 = vld [vmem:[#allocation3 + $0x140] sm:$0xff]
      %v5541 = vld [vmem:[#allocation3 + $0x148] sm:$0xff]
      %v5542 = vld [vmem:[#allocation3 + $0x150] sm:$0xff]
      %v5543 = vld [vmem:[#allocation3 + $0x158] sm:$0xff]
      %v5544 = vld [vmem:[#allocation3 + $0x160] sm:$0xff]
      %v5545 = vld [vmem:[#allocation3 + $0x168] sm:$0xff]
      %v5546 = vld [vmem:[#allocation3 + $0x170] sm:$0xff]
      %v5547 = vld [vmem:[#allocation3 + $0x178] sm:$0xff]
      %v5548 = vld [vmem:[%s6] sm:$0x1]
      %v5550 = vlaneseq
      %v5551 = vshrl.u32 %v5550, 7
      %v5552 = vsub.s32 0, %v5551
      %v5553 = vrot.slane %v5548, %v5552
      %v5555 = vmul.f32 %v5500, %v5553
      %v5556 = vmul.f32 %v5501, %v5553
      %v5557 = vmul.f32 %v5502, %v5553
      %v5558 = vmul.f32 %v5503, %v5553
      %v5559 = vmul.f32 %v5504, %v5553
      %v5560 = vmul.f32 %v5505, %v5553
      %v5561 = vmul.f32 %v5506, %v5553
      %v5562 = vmul.f32 %v5507, %v5553
      %v5563 = vmul.f32 %v5508, %v5553
      %v5564 = vmul.f32 %v5509, %v5553
      %v5565 = vmul.f32 %v5510, %v5553
      %v5566 = vmul.f32 %v5511, %v5553
      %v5567 = vmul.f32 %v5512, %v5553
      %v5568 = vmul.f32 %v5513, %v5553
      %v5569 = vmul.f32 %v5514, %v5553
      %v5570 = vmul.f32 %v5515, %v5553
      %v5571 = vmul.f32 %v5516, %v5553
      %v5572 = vmul.f32 %v5517, %v5553
      %v5573 = vmul.f32 %v5518, %v5553
      %v5574 = vmul.f32 %v5519, %v5553
      %v5575 = vmul.f32 %v5520, %v5553
      %v5576 = vmul.f32 %v5521, %v5553
      %v5577 = vmul.f32 %v5522, %v5553
      %v5578 = vmul.f32 %v5523, %v5553
      %v5579 = vmul.f32 %v5524, %v5553
      %v5580 = vmul.f32 %v5525, %v5553
      %v5581 = vmul.f32 %v5526, %v5553
      %v5582 = vmul.f32 %v5527, %v5553
      %v5583 = vmul.f32 %v5528, %v5553
      %v5584 = vmul.f32 %v5529, %v5553
      %v5585 = vmul.f32 %v5530, %v5553
      %v5586 = vmul.f32 %v5531, %v5553
      %v5587 = vmul.f32 %v5532, %v5553
      %v5588 = vmul.f32 %v5533, %v5553
      %v5589 = vmul.f32 %v5534, %v5553
      %v5590 = vmul.f32 %v5535, %v5553
      %v5591 = vmul.f32 %v5536, %v5553
      %v5592 = vmul.f32 %v5537, %v5553
      %v5593 = vmul.f32 %v5538, %v5553
      %v5594 = vmul.f32 %v5539, %v5553
      %v5595 = vmul.f32 %v5540, %v5553
      %v5596 = vmul.f32 %v5541, %v5553
      %v5597 = vmul.f32 %v5542, %v5553
      %v5598 = vmul.f32 %v5543, %v5553
      %v5599 = vmul.f32 %v5544, %v5553
      %v5600 = vmul.f32 %v5545, %v5553
      %v5601 = vmul.f32 %v5546, %v5553
      %v5602 = vmul.f32 %v5547, %v5553
      %v5603 = vld [vmem:[%s7] sm:$0x1]
      %v5605 = vlaneseq
      %v5606 = vshrl.u32 %v5605, 7
      %v5607 = vsub.s32 0, %v5606
      %v5608 = vrot.slane %v5603, %v5607
      %v5610 = vadd.f32 %v5555, %v5608
      %v5611 = vadd.f32 %v5556, %v5608
      %v5612 = vadd.f32 %v5557, %v5608
      %v5613 = vadd.f32 %v5558, %v5608
      %v5614 = vadd.f32 %v5559, %v5608
      %v5615 = vadd.f32 %v5560, %v5608
      %v5616 = vadd.f32 %v5561, %v5608
      %v5617 = vadd.f32 %v5562, %v5608
      %v5618 = vadd.f32 %v5563, %v5608
      %v5619 = vadd.f32 %v5564, %v5608
      %v5620 = vadd.f32 %v5565, %v5608
      %v5621 = vadd.f32 %v5566, %v5608
      %v5622 = vadd.f32 %v5567, %v5608
      %v5623 = vadd.f32 %v5568, %v5608
      %v5624 = vadd.f32 %v5569, %v5608
      %v5625 = vadd.f32 %v5570, %v5608
      %v5626 = vadd.f32 %v5571, %v5608
      %v5627 = vadd.f32 %v5572, %v5608
      %v5628 = vadd.f32 %v5573, %v5608
      %v5629 = vadd.f32 %v5574, %v5608
      %v5630 = vadd.f32 %v5575, %v5608
      %v5631 = vadd.f32 %v5576, %v5608
      %v5632 = vadd.f32 %v5577, %v5608
      %v5633 = vadd.f32 %v5578, %v5608
      %v5634 = vadd.f32 %v5579, %v5608
      %v5635 = vadd.f32 %v5580, %v5608
      %v5636 = vadd.f32 %v5581, %v5608
      %v5637 = vadd.f32 %v5582, %v5608
      %v5638 = vadd.f32 %v5583, %v5608
      %v5639 = vadd.f32 %v5584, %v5608
      %v5640 = vadd.f32 %v5585, %v5608
      %v5641 = vadd.f32 %v5586, %v5608
      %v5642 = vadd.f32 %v5587, %v5608
      %v5643 = vadd.f32 %v5588, %v5608
      %v5644 = vadd.f32 %v5589, %v5608
      %v5645 = vadd.f32 %v5590, %v5608
      %v5646 = vadd.f32 %v5591, %v5608
      %v5647 = vadd.f32 %v5592, %v5608
      %v5648 = vadd.f32 %v5593, %v5608
      %v5649 = vadd.f32 %v5594, %v5608
      %v5650 = vadd.f32 %v5595, %v5608
      %v5651 = vadd.f32 %v5596, %v5608
      %v5652 = vadd.f32 %v5597, %v5608
      %v5653 = vadd.f32 %v5598, %v5608
      %v5654 = vadd.f32 %v5599, %v5608
      %v5655 = vadd.f32 %v5600, %v5608
      %v5656 = vadd.f32 %v5601, %v5608
      %v5657 = vadd.f32 %v5602, %v5608
      %v5658 = vmax.f32 %v5610, 0.0
      %v5659 = vmax.f32 %v5611, 0.0
      %v5660 = vmax.f32 %v5612, 0.0
      %v5661 = vmax.f32 %v5613, 0.0
      %v5662 = vmax.f32 %v5614, 0.0
      %v5663 = vmax.f32 %v5615, 0.0
      %v5664 = vmax.f32 %v5616, 0.0
      %v5665 = vmax.f32 %v5617, 0.0
      %v5666 = vmax.f32 %v5618, 0.0
      %v5667 = vmax.f32 %v5619, 0.0
      %v5668 = vmax.f32 %v5620, 0.0
      %v5669 = vmax.f32 %v5621, 0.0
      %v5670 = vmax.f32 %v5622, 0.0
      %v5671 = vmax.f32 %v5623, 0.0
      %v5672 = vmax.f32 %v5624, 0.0
      %v5673 = vmax.f32 %v5625, 0.0
      %v5674 = vmax.f32 %v5626, 0.0
      %v5675 = vmax.f32 %v5627, 0.0
      %v5676 = vmax.f32 %v5628, 0.0
      %v5677 = vmax.f32 %v5629, 0.0
      %v5678 = vmax.f32 %v5630, 0.0
      %v5679 = vmax.f32 %v5631, 0.0
      %v5680 = vmax.f32 %v5632, 0.0
      %v5681 = vmax.f32 %v5633, 0.0
      %v5682 = vmax.f32 %v5634, 0.0
      %v5683 = vmax.f32 %v5635, 0.0
      %v5684 = vmax.f32 %v5636, 0.0
      %v5685 = vmax.f32 %v5637, 0.0
      %v5686 = vmax.f32 %v5638, 0.0
      %v5687 = vmax.f32 %v5639, 0.0
      %v5688 = vmax.f32 %v5640, 0.0
      %v5689 = vmax.f32 %v5641, 0.0
      %v5690 = vmax.f32 %v5642, 0.0
      %v5691 = vmax.f32 %v5643, 0.0
      %v5692 = vmax.f32 %v5644, 0.0
      %v5693 = vmax.f32 %v5645, 0.0
      %v5694 = vmax.f32 %v5646, 0.0
      %v5695 = vmax.f32 %v5647, 0.0
      %v5696 = vmax.f32 %v5648, 0.0
      %v5697 = vmax.f32 %v5649, 0.0
      %v5698 = vmax.f32 %v5650, 0.0
      %v5699 = vmax.f32 %v5651, 0.0
      %v5700 = vmax.f32 %v5652, 0.0
      %v5701 = vmax.f32 %v5653, 0.0
      %v5702 = vmax.f32 %v5654, 0.0
      %v5703 = vmax.f32 %v5655, 0.0
      %v5704 = vmax.f32 %v5656, 0.0
      %v5705 = vmax.f32 %v5657, 0.0
      %v5706 = vpack.c.bf16 %v5659, %v5658
      %v5707 = vpack.c.bf16 %v5661, %v5660
      %v5708 = vpack.c.bf16 %v5663, %v5662
      %v5709 = vpack.c.bf16 %v5665, %v5664
      %v5710 = vpack.c.bf16 %v5667, %v5666
      %v5711 = vpack.c.bf16 %v5669, %v5668
      %v5712 = vpack.c.bf16 %v5671, %v5670
      %v5713 = vpack.c.bf16 %v5673, %v5672
      %v5714 = vpack.c.bf16 %v5675, %v5674
      %v5715 = vpack.c.bf16 %v5677, %v5676
      %v5716 = vpack.c.bf16 %v5679, %v5678
      %v5717 = vpack.c.bf16 %v5681, %v5680
      %v5718 = vpack.c.bf16 %v5683, %v5682
      %v5719 = vpack.c.bf16 %v5685, %v5684
      %v5720 = vpack.c.bf16 %v5687, %v5686
      %v5721 = vpack.c.bf16 %v5689, %v5688
      %v5722 = vpack.c.bf16 %v5691, %v5690
      %v5723 = vpack.c.bf16 %v5693, %v5692
      %v5724 = vpack.c.bf16 %v5695, %v5694
      %v5725 = vpack.c.bf16 %v5697, %v5696
      %v5726 = vpack.c.bf16 %v5699, %v5698
      %v5727 = vpack.c.bf16 %v5701, %v5700
      %v5728 = vpack.c.bf16 %v5703, %v5702
      %v5729 = vpack.c.bf16 %v5705, %v5704
      %v5730 = vld [vmem:[%s3] sm:$0xf]
      %v5731 = vld [vmem:[%s3 + $0x4] sm:$0xf]
      %v5732 = vld [vmem:[%s3 + $0x8] sm:$0xf]
      %v5733 = vld [vmem:[%s3 + $0xc] sm:$0xf]
      %v5734 = vld [vmem:[%s3 + $0x10] sm:$0xf]
      %v5735 = vld [vmem:[%s3 + $0x14] sm:$0xf]
      %v5736 = vld [vmem:[%s3 + $0x18] sm:$0xf]
      %v5737 = vld [vmem:[%s3 + $0x1c] sm:$0xf]
      %v5738 = vld [vmem:[%s3 + $0x20] sm:$0xf]
      %v5739 = vld [vmem:[%s3 + $0x24] sm:$0xf]
      %v5740 = vld [vmem:[%s3 + $0x28] sm:$0xf]
      %v5741 = vld [vmem:[%s3 + $0x2c] sm:$0xf]
      %v5742 = vld [vmem:[%s3 + $0x30] sm:$0xf]
      %v5743 = vld [vmem:[%s3 + $0x34] sm:$0xf]
      %v5744 = vld [vmem:[%s3 + $0x38] sm:$0xf]
      %v5745 = vld [vmem:[%s3 + $0x3c] sm:$0xf]
      %v5762 = vunpack.c.l.b16 %v5730
      %v5763 = vunpack.c.l.b16 %v5731
      %v5764 = vunpack.c.l.b16 %v5732
      %v5765 = vunpack.c.l.b16 %v5733
      %v5766 = vunpack.c.l.b16 %v5734
      %v5767 = vunpack.c.l.b16 %v5735
      %v5768 = vunpack.c.l.b16 %v5736
      %v5769 = vunpack.c.l.b16 %v5737
      %v5770 = vunpack.c.l.b16 %v5738
      %v5771 = vunpack.c.l.b16 %v5739
      %v5772 = vunpack.c.l.b16 %v5740
      %v5773 = vunpack.c.l.b16 %v5741
      %v5774 = vunpack.c.l.b16 %v5742
      %v5775 = vunpack.c.l.b16 %v5743
      %v5776 = vunpack.c.l.b16 %v5744
      %v5777 = vunpack.c.l.b16 %v5745
      %v5778 = vpack.c.b16 %v5763, %v5762
      %v5779 = vpack.c.b16 %v5765, %v5764
      %v5780 = vpack.c.b16 %v5767, %v5766
      %v5781 = vpack.c.b16 %v5769, %v5768
      %v5782 = vpack.c.b16 %v5771, %v5770
      %v5783 = vpack.c.b16 %v5773, %v5772
      %v5784 = vpack.c.b16 %v5775, %v5774
      %v5785 = vpack.c.b16 %v5777, %v5776
      %5794 = vmatprep.subr.bf16.mxu0 0
      %5795 = vmatpush1.bf16.msra.mxu0 %v5778
      %5796 = vmatprep.subr.bf16.mxu0 0
      %5797 = vmatpush1.bf16.msra.mxu0 %v5779
      %5798 = vmatprep.subr.bf16.mxu0 0
      %5799 = vmatpush1.bf16.msra.mxu0 %v5780
      %5800 = vmatprep.subr.bf16.mxu0 0
      %5801 = vmatpush1.bf16.msra.mxu0 %v5781
      %5802 = vmatprep.subr.bf16.mxu0 0
      %5803 = vmatpush1.bf16.msra.mxu0 %v5782
      %5804 = vmatprep.subr.bf16.mxu0 0
      %5805 = vmatpush1.bf16.msra.mxu0 %v5783
      %5806 = vmatprep.subr.bf16.mxu0 0
      %5807 = vmatpush1.bf16.msra.mxu0 %v5784
      %5808 = vmatprep.subr.bf16.mxu0 0
      %5809 = vmatpush1.bf16.msra.mxu0 %v5785
      %5810 = vmatprep.subr.bf16.mxu0 0
      %5811 = vmatpush1.bf16.msra.mxu0 0
      %5812 = vmatprep.subr.bf16.mxu0 0
      %5813 = vmatpush1.bf16.msra.mxu0 0
      %5814 = vmatprep.subr.bf16.mxu0 0
      %5815 = vmatpush1.bf16.msra.mxu0 0
      %5816 = vmatprep.subr.bf16.mxu0 0
      %5817 = vmatpush1.bf16.msra.mxu0 0
      %5818 = vmatprep.subr.bf16.mxu0 0
      %5819 = vmatpush1.bf16.msra.mxu0 0
      %5820 = vmatprep.subr.bf16.mxu0 0
      %5821 = vmatpush1.bf16.msra.mxu0 0
      %5822 = vmatprep.subr.bf16.mxu0 0
      %5823 = vmatpush1.bf16.msra.mxu0 0
      %5824 = vmatprep.subr.bf16.mxu0 0
      %5825 = vmatpush1.bf16.msra.mxu0 0
      %5826 = vmatprep.mubr.bf16.mxu0 0
      %5827 = vmatmul.mubr.bf16.gmra.mrb[0].mxu0 %v5706
      %v5828 = vpop.f32.mrb[0].mxu0
      %v5829 = vadd.f32 0.0, %v5828
      %v5830 = vpop.f32.mrb[0].mxu0
      %v5831 = vpop.f32.mrb[0].mxu0
      %v5832 = vadd.f32 0.0, %v5831
      %v5833 = vpop.f32.mrb[0].mxu0
      %5834 = vmatprep.mubr.bf16.mxu0 0
      %5835 = vmatmul.mubr.bf16.gmra.mrb[0].mxu0 %v5707
      %v5836 = vpop.f32.mrb[0].mxu0
      %v5837 = vpop.f32.mrb[0].mxu0
      %v5838 = vpop.f32.mrb[0].mxu0
      %v5839 = vadd.f32 0.0, %v5838
      %v5840 = vpop.f32.mrb[0].mxu0
      %5841 = vmatprep.mubr.bf16.mxu0 0
      %5842 = vmatmul.mubr.bf16.gmra.mrb[0].mxu0 %v5708
      %v5843 = vpop.f32.mrb[0].mxu0
      %v5844 = vadd.f32 0.0, %v5843
      %v5845 = vpop.f32.mrb[0].mxu0
      %v5846 = vpop.f32.mrb[0].mxu0
      %v5847 = vpop.f32.mrb[0].mxu0
      %5848 = vmatprep.mubr.bf16.mxu0 0
      %5849 = vmatmul.mubr.bf16.gmra.mrb[0].mxu0 %v5709
      %v5850 = vpop.f32.mrb[0].mxu0
      %v5851 = vadd.f32 0.0, %v5850
      %v5852 = vpop.f32.mrb[0].mxu0
      %v5853 = vpop.f32.mrb[0].mxu0
      %v5854 = vadd.f32 0.0, %v5853
      %v5855 = vpop.f32.mrb[0].mxu0
      %5856 = vmatprep.mubr.bf16.mxu0 0
      %5857 = vmatmul.mubr.bf16.gmra.mrb[0].mxu0 %v5710
      %v5858 = vpop.f32.mrb[0].mxu0
      %v5859 = vpop.f32.mrb[0].mxu0
      %v5860 = vpop.f32.mrb[0].mxu0
      %v5861 = vadd.f32 0.0, %v5860
      %v5862 = vpop.f32.mrb[0].mxu0
      %5863 = vmatprep.mubr.bf16.mxu0 0
      %5864 = vmatmul.mubr.bf16.gmra.mrb[0].mxu0 %v5711
      %v5865 = vpop.f32.mrb[0].mxu0
      %v5866 = vadd.f32 0.0, %v5865
      %v5867 = vpop.f32.mrb[0].mxu0
      %v5868 = vpop.f32.mrb[0].mxu0
      %v5869 = vpop.f32.mrb[0].mxu0
      %5870 = vmatprep.mubr.bf16.mxu0 0
      %5871 = vmatmul.mubr.bf16.gmra.mrb[0].mxu0 %v5712
      %v5872 = vpop.f32.mrb[0].mxu0
      %v5873 = vadd.f32 0.0, %v5872
      %v5874 = vpop.f32.mrb[0].mxu0
      %v5875 = vpop.f32.mrb[0].mxu0
      %v5876 = vadd.f32 0.0, %v5875
      %v5877 = vpop.f32.mrb[0].mxu0
      %5878 = vmatprep.mubr.bf16.mxu0 0
      %5879 = vmatmul.mubr.bf16.gmra.mrb[0].mxu0 %v5713
      %v5880 = vpop.f32.mrb[0].mxu0
      %v5881 = vpop.f32.mrb[0].mxu0
      %v5882 = vpop.f32.mrb[0].mxu0
      %v5883 = vadd.f32 0.0, %v5882
      %v5884 = vpop.f32.mrb[0].mxu0
      %5885 = vmatprep.mubr.bf16.mxu0 0
      %5886 = vmatmul.mubr.bf16.gmra.mrb[0].mxu0 %v5714
      %v5887 = vpop.f32.mrb[0].mxu0
      %v5888 = vadd.f32 0.0, %v5887
      %v5889 = vpop.f32.mrb[0].mxu0
      %v5890 = vpop.f32.mrb[0].mxu0
      %v5891 = vpop.f32.mrb[0].mxu0
      %5892 = vmatprep.mubr.bf16.mxu0 0
      %5893 = vmatmul.mubr.bf16.gmra.mrb[0].mxu0 %v5715
      %v5894 = vpop.f32.mrb[0].mxu0
      %v5895 = vadd.f32 0.0, %v5894
      %v5896 = vpop.f32.mrb[0].mxu0
      %v5897 = vpop.f32.mrb[0].mxu0
      %v5898 = vadd.f32 0.0, %v5897
      %v5899 = vpop.f32.mrb[0].mxu0
      %5900 = vmatprep.mubr.bf16.mxu0 0
      %5901 = vmatmul.mubr.bf16.gmra.mrb[0].mxu0 %v5716
      %v5902 = vpop.f32.mrb[0].mxu0
      %v5903 = vpop.f32.mrb[0].mxu0
      %v5904 = vpop.f32.mrb[0].mxu0
      %v5905 = vadd.f32 0.0, %v5904
      %v5906 = vpop.f32.mrb[0].mxu0
      %5907 = vmatprep.mubr.bf16.mxu0 0
      %5908 = vmatmul.mubr.bf16.gmra.mrb[0].mxu0 %v5717
      %v5909 = vpop.f32.mrb[0].mxu0
      %v5910 = vadd.f32 0.0, %v5909
      %v5911 = vpop.f32.mrb[0].mxu0
      %v5912 = vpop.f32.mrb[0].mxu0
      %v5913 = vpop.f32.mrb[0].mxu0
      %5914 = vmatprep.mubr.bf16.mxu0 0
      %5915 = vmatmul.mubr.bf16.gmra.mrb[0].mxu0 %v5718
      %v5916 = vpop.f32.mrb[0].mxu0
      %v5917 = vadd.f32 0.0, %v5916
      %v5918 = vpop.f32.mrb[0].mxu0
      %v5919 = vpop.f32.mrb[0].mxu0
      %v5920 = vadd.f32 0.0, %v5919
      %v5921 = vpop.f32.mrb[0].mxu0
      %5922 = vmatprep.mubr.bf16.mxu0 0
      %5923 = vmatmul.mubr.bf16.gmra.mrb[0].mxu0 %v5719
      %v5924 = vpop.f32.mrb[0].mxu0
      %v5925 = vpop.f32.mrb[0].mxu0
      %v5926 = vpop.f32.mrb[0].mxu0
      %v5927 = vadd.f32 0.0, %v5926
      %v5928 = vpop.f32.mrb[0].mxu0
      %5929 = vmatprep.mubr.bf16.mxu0 0
      %5930 = vmatmul.mubr.bf16.gmra.mrb[0].mxu0 %v5720
      %v5931 = vpop.f32.mrb[0].mxu0
      %v5932 = vadd.f32 0.0, %v5931
      %v5933 = vpop.f32.mrb[0].mxu0
      %v5934 = vpop.f32.mrb[0].mxu0
      %v5935 = vpop.f32.mrb[0].mxu0
      %5936 = vmatprep.mubr.bf16.mxu0 0
      %5937 = vmatmul.mubr.bf16.gmra.mrb[0].mxu0 %v5721
      %v5938 = vpop.f32.mrb[0].mxu0
      %v5939 = vadd.f32 0.0, %v5938
      %v5940 = vpop.f32.mrb[0].mxu0
      %v5941 = vpop.f32.mrb[0].mxu0
      %v5942 = vadd.f32 0.0, %v5941
      %v5943 = vpop.f32.mrb[0].mxu0
      %5944 = vmatprep.mubr.bf16.mxu0 0
      %5945 = vmatmul.mubr.bf16.gmra.mrb[0].mxu0 %v5722
      %v5946 = vpop.f32.mrb[0].mxu0
      %v5947 = vpop.f32.mrb[0].mxu0
      %v5948 = vpop.f32.mrb[0].mxu0
      %v5949 = vadd.f32 0.0, %v5948
      %v5950 = vpop.f32.mrb[0].mxu0
      %5951 = vmatprep.mubr.bf16.mxu0 0
      %5952 = vmatmul.mubr.bf16.gmra.mrb[0].mxu0 %v5723
      %v5953 = vpop.f32.mrb[0].mxu0
      %v5954 = vadd.f32 0.0, %v5953
      %v5955 = vpop.f32.mrb[0].mxu0
      %v5956 = vpop.f32.mrb[0].mxu0
      %v5957 = vpop.f32.mrb[0].mxu0
      %5958 = vmatprep.mubr.bf16.mxu0 0
      %5959 = vmatmul.mubr.bf16.gmra.mrb[0].mxu0 %v5724
      %v5960 = vpop.f32.mrb[0].mxu0
      %v5961 = vadd.f32 0.0, %v5960
      %v5962 = vpop.f32.mrb[0].mxu0
      %v5963 = vpop.f32.mrb[0].mxu0
      %v5964 = vadd.f32 0.0, %v5963
      %v5965 = vpop.f32.mrb[0].mxu0
      %5966 = vmatprep.mubr.bf16.mxu0 0
      %5967 = vmatmul.mubr.bf16.gmra.mrb[0].mxu0 %v5725
      %v5968 = vpop.f32.mrb[0].mxu0
      %v5969 = vpop.f32.mrb[0].mxu0
      %v5970 = vpop.f32.mrb[0].mxu0
      %v5971 = vadd.f32 0.0, %v5970
      %v5972 = vpop.f32.mrb[0].mxu0
      %5973 = vmatprep.mubr.bf16.mxu0 0
      %5974 = vmatmul.mubr.bf16.gmra.mrb[0].mxu0 %v5726
      %v5975 = vpop.f32.mrb[0].mxu0
      %v5976 = vadd.f32 0.0, %v5975
      %v5977 = vpop.f32.mrb[0].mxu0
      %v5978 = vpop.f32.mrb[0].mxu0
      %v5979 = vpop.f32.mrb[0].mxu0
      %5980 = vmatprep.mubr.bf16.mxu0 0
      %5981 = vmatmul.mubr.bf16.gmra.mrb[0].mxu0 %v5727
      %v5982 = vpop.f32.mrb[0].mxu0
      %v5983 = vadd.f32 0.0, %v5982
      %v5984 = vpop.f32.mrb[0].mxu0
      %v5985 = vpop.f32.mrb[0].mxu0
      %v5986 = vadd.f32 0.0, %v5985
      %v5987 = vpop.f32.mrb[0].mxu0
      %5988 = vmatprep.mubr.bf16.mxu0 0
      %5989 = vmatmul.mubr.bf16.gmra.mrb[0].mxu0 %v5728
      %v5990 = vpop.f32.mrb[0].mxu0
      %v5991 = vpop.f32.mrb[0].mxu0
      %v5992 = vpop.f32.mrb[0].mxu0
      %v5993 = vadd.f32 0.0, %v5992
      %v5994 = vpop.f32.mrb[0].mxu0
      %5995 = vmatprep.mubr.bf16.mxu0 0
      %5996 = vmatmul.mubr.bf16.gmra.mrb[0].mxu0 %v5729
      %v5997 = vpop.f32.mrb[0].mxu0
      %v5998 = vadd.f32 0.0, %v5997
      %v5999 = vpop.f32.mrb[0].mxu0
      %v6000 = vpop.f32.mrb[0].mxu0
      %v6001 = vpop.f32.mrb[0].mxu0
      %6002 = vdwg.mxu0
      %v6003 = vld [vmem:[%s8] sm:$0x1]
      %v6004 = vld [vmem:[%s9] sm:$0x1]
      %v6006 = vlaneseq
      %v6007 = vshrl.u32 %v6006, 7
      %v6008 = vsub.s32 0, %v6007
      %v6009 = vrot.slane %v6003, %v6008
      %v6011 = vmul.f32 %v5829, %v6009
      %v6012 = vmul.f32 %v5832, %v6009
      %v6014 = vlaneseq
      %v6015 = vshrl.u32 %v6014, 7
      %v6016 = vsub.s32 0, %v6015
      %v6017 = vrot.slane %v6004, %v6016
      %v6019 = vadd.f32 %v6011, %v6017
      %v6020 = vadd.f32 %v6012, %v6017
      %v6021 = vld [vmem:[%s355] sm:$0xf]
      %v6022 = vld [vmem:[%s355 + $0x4] sm:$0xf]
      %v6023 = vunpack.c.l.bf16 %v6021
      %v6024 = vunpack.c.l.bf16 %v6022
      %v6025 = vadd.f32 %v6019, %v6023
      %v6026 = vadd.f32 %v6020, %v6024
      %v6027 = vmax.f32 %v6025, 0.0
      %v6028 = vmax.f32 %v6026, 0.0
      %v6029 = vpack.c.bf16 %v6028, %v6027
      %v6031 = vunpack.c.l.b16 %v6029
      %v6032 = vunpack.c.h.b16 %v6029
      %v6033 = vpack.c.b16 %v6031, %v6031
      %v6034 = vpack.c.b16 %v6032, %v6032
      %vm6037 = vcmask 257024
      %6038 = vst.msk [vmem:[%s361] sm:$0xf] %vm6037, %v6033
      %6039 = vst.msk [vmem:[%s361 + $0x4] sm:$0xf] %vm6037, %v6034
      %v6040 = vmul.f32 %v5839, %v6009
      %v6041 = vmul.f32 %v5844, %v6009
      %v6042 = vadd.f32 %v6040, %v6017
      %v6043 = vadd.f32 %v6041, %v6017
      %v6044 = vld [vmem:[%s355 + $0x8] sm:$0xf]
      %v6045 = vld [vmem:[%s355 + $0xc] sm:$0xf]
      %v6046 = vunpack.c.l.bf16 %v6044
      %v6047 = vunpack.c.l.bf16 %v6045
      %v6048 = vadd.f32 %v6042, %v6046
      %v6049 = vadd.f32 %v6043, %v6047
      %v6050 = vmax.f32 %v6048, 0.0
      %v6051 = vmax.f32 %v6049, 0.0
      %v6052 = vpack.c.bf16 %v6051, %v6050
      %v6054 = vunpack.c.l.b16 %v6052
      %v6055 = vunpack.c.h.b16 %v6052
      %v6056 = vpack.c.b16 %v6054, %v6054
      %v6057 = vpack.c.b16 %v6055, %v6055
      %6060 = vst.msk [vmem:[%s361 + $0x8] sm:$0xf] %vm6037, %v6056
      %6061 = vst.msk [vmem:[%s361 + $0xc] sm:$0xf] %vm6037, %v6057
      %v6062 = vmul.f32 %v5851, %v6009
      %v6063 = vmul.f32 %v5854, %v6009
      %v6064 = vadd.f32 %v6062, %v6017
      %v6065 = vadd.f32 %v6063, %v6017
      %v6066 = vld [vmem:[%s355 + $0x10] sm:$0xf]
      %v6067 = vld [vmem:[%s355 + $0x14] sm:$0xf]
      %v6068 = vunpack.c.l.bf16 %v6066
      %v6069 = vunpack.c.l.bf16 %v6067
      %v6070 = vadd.f32 %v6064, %v6068
      %v6071 = vadd.f32 %v6065, %v6069
      %v6072 = vmax.f32 %v6070, 0.0
      %v6073 = vmax.f32 %v6071, 0.0
      %v6074 = vpack.c.bf16 %v6073, %v6072
      %v6076 = vunpack.c.l.b16 %v6074
      %v6077 = vunpack.c.h.b16 %v6074
      %v6078 = vpack.c.b16 %v6076, %v6076
      %v6079 = vpack.c.b16 %v6077, %v6077
      %6082 = vst.msk [vmem:[%s361 + $0x10] sm:$0xf] %vm6037, %v6078
      %6083 = vst.msk [vmem:[%s361 + $0x14] sm:$0xf] %vm6037, %v6079
      %v6084 = vmul.f32 %v5861, %v6009
      %v6085 = vmul.f32 %v5866, %v6009
      %v6086 = vadd.f32 %v6084, %v6017
      %v6087 = vadd.f32 %v6085, %v6017
      %v6088 = vld [vmem:[%s355 + $0x18] sm:$0xf]
      %v6089 = vld [vmem:[%s355 + $0x1c] sm:$0xf]
      %v6090 = vunpack.c.l.bf16 %v6088
      %v6091 = vunpack.c.l.bf16 %v6089
      %v6092 = vadd.f32 %v6086, %v6090
      %v6093 = vadd.f32 %v6087, %v6091
      %v6094 = vmax.f32 %v6092, 0.0
      %v6095 = vmax.f32 %v6093, 0.0
      %v6096 = vpack.c.bf16 %v6095, %v6094
      %v6098 = vunpack.c.l.b16 %v6096
      %v6099 = vunpack.c.h.b16 %v6096
      %v6100 = vpack.c.b16 %v6098, %v6098
      %v6101 = vpack.c.b16 %v6099, %v6099
      %6104 = vst.msk [vmem:[%s361 + $0x18] sm:$0xf] %vm6037, %v6100
      %6105 = vst.msk [vmem:[%s361 + $0x1c] sm:$0xf] %vm6037, %v6101
      %v6106 = vmul.f32 %v5873, %v6009
      %v6107 = vmul.f32 %v5876, %v6009
      %v6108 = vadd.f32 %v6106, %v6017
      %v6109 = vadd.f32 %v6107, %v6017
      %v6110 = vld [vmem:[%s355 + $0x20] sm:$0xf]
      %v6111 = vld [vmem:[%s355 + $0x24] sm:$0xf]
      %v6112 = vunpack.c.l.bf16 %v6110
      %v6113 = vunpack.c.l.bf16 %v6111
      %v6114 = vadd.f32 %v6108, %v6112
      %v6115 = vadd.f32 %v6109, %v6113
      %v6116 = vmax.f32 %v6114, 0.0
      %v6117 = vmax.f32 %v6115, 0.0
      %v6118 = vpack.c.bf16 %v6117, %v6116
      %v6120 = vunpack.c.l.b16 %v6118
      %v6121 = vunpack.c.h.b16 %v6118
      %v6122 = vpack.c.b16 %v6120, %v6120
      %v6123 = vpack.c.b16 %v6121, %v6121
      %6126 = vst.msk [vmem:[%s361 + $0x20] sm:$0xf] %vm6037, %v6122
      %6127 = vst.msk [vmem:[%s361 + $0x24] sm:$0xf] %vm6037, %v6123
      %v6128 = vmul.f32 %v5883, %v6009
      %v6129 = vmul.f32 %v5888, %v6009
      %v6130 = vadd.f32 %v6128, %v6017
      %v6131 = vadd.f32 %v6129, %v6017
      %v6132 = vld [vmem:[%s355 + $0x28] sm:$0xf]
      %v6133 = vld [vmem:[%s355 + $0x2c] sm:$0xf]
      %v6134 = vunpack.c.l.bf16 %v6132
      %v6135 = vunpack.c.l.bf16 %v6133
      %v6136 = vadd.f32 %v6130, %v6134
      %v6137 = vadd.f32 %v6131, %v6135
      %v6138 = vmax.f32 %v6136, 0.0
      %v6139 = vmax.f32 %v6137, 0.0
      %v6140 = vpack.c.bf16 %v6139, %v6138
      %v6142 = vunpack.c.l.b16 %v6140
      %v6143 = vunpack.c.h.b16 %v6140
      %v6144 = vpack.c.b16 %v6142, %v6142
      %v6145 = vpack.c.b16 %v6143, %v6143
      %6148 = vst.msk [vmem:[%s361 + $0x28] sm:$0xf] %vm6037, %v6144
      %6149 = vst.msk [vmem:[%s361 + $0x2c] sm:$0xf] %vm6037, %v6145
      %v6150 = vmul.f32 %v5895, %v6009
      %v6151 = vmul.f32 %v5898, %v6009
      %v6152 = vadd.f32 %v6150, %v6017
      %v6153 = vadd.f32 %v6151, %v6017
      %v6154 = vld [vmem:[%s355 + $0x30] sm:$0xf]
      %v6155 = vld [vmem:[%s355 + $0x34] sm:$0xf]
      %v6156 = vunpack.c.l.bf16 %v6154
      %v6157 = vunpack.c.l.bf16 %v6155
      %v6158 = vadd.f32 %v6152, %v6156
      %v6159 = vadd.f32 %v6153, %v6157
      %v6160 = vmax.f32 %v6158, 0.0
      %v6161 = vmax.f32 %v6159, 0.0
      %v6162 = vpack.c.bf16 %v6161, %v6160
      %v6164 = vunpack.c.l.b16 %v6162
      %v6165 = vunpack.c.h.b16 %v6162
      %v6166 = vpack.c.b16 %v6164, %v6164
      %v6167 = vpack.c.b16 %v6165, %v6165
      %6170 = vst.msk [vmem:[%s361 + $0x30] sm:$0xf] %vm6037, %v6166
      %6171 = vst.msk [vmem:[%s361 + $0x34] sm:$0xf] %vm6037, %v6167
      %v6172 = vmul.f32 %v5905, %v6009
      %v6173 = vmul.f32 %v5910, %v6009
      %v6174 = vadd.f32 %v6172, %v6017
      %v6175 = vadd.f32 %v6173, %v6017
      %v6176 = vld [vmem:[%s355 + $0x38] sm:$0xf]
      %v6177 = vld [vmem:[%s355 + $0x3c] sm:$0xf]
      %v6178 = vunpack.c.l.bf16 %v6176
      %v6179 = vunpack.c.l.bf16 %v6177
      %v6180 = vadd.f32 %v6174, %v6178
      %v6181 = vadd.f32 %v6175, %v6179
      %v6182 = vmax.f32 %v6180, 0.0
      %v6183 = vmax.f32 %v6181, 0.0
      %v6184 = vpack.c.bf16 %v6183, %v6182
      %v6186 = vunpack.c.l.b16 %v6184
      %v6187 = vunpack.c.h.b16 %v6184
      %v6188 = vpack.c.b16 %v6186, %v6186
      %v6189 = vpack.c.b16 %v6187, %v6187
      %6192 = vst.msk [vmem:[%s361 + $0x38] sm:$0xf] %vm6037, %v6188
      %6193 = vst.msk [vmem:[%s361 + $0x3c] sm:$0xf] %vm6037, %v6189
      %v6194 = vmul.f32 %v5917, %v6009
      %v6195 = vmul.f32 %v5920, %v6009
      %v6196 = vadd.f32 %v6194, %v6017
      %v6197 = vadd.f32 %v6195, %v6017
      %v6198 = vld [vmem:[%s355 + $0x40] sm:$0xf]
      %v6199 = vld [vmem:[%s355 + $0x44] sm:$0xf]
      %v6200 = vunpack.c.l.bf16 %v6198
      %v6201 = vunpack.c.l.bf16 %v6199
      %v6202 = vadd.f32 %v6196, %v6200
      %v6203 = vadd.f32 %v6197, %v6201
      %v6204 = vmax.f32 %v6202, 0.0
      %v6205 = vmax.f32 %v6203, 0.0
      %v6206 = vpack.c.bf16 %v6205, %v6204
      %v6208 = vunpack.c.l.b16 %v6206
      %v6209 = vunpack.c.h.b16 %v6206
      %v6210 = vpack.c.b16 %v6208, %v6208
      %v6211 = vpack.c.b16 %v6209, %v6209
      %6214 = vst.msk [vmem:[%s361 + $0x40] sm:$0xf] %vm6037, %v6210
      %6215 = vst.msk [vmem:[%s361 + $0x44] sm:$0xf] %vm6037, %v6211
      %v6216 = vmul.f32 %v5927, %v6009
      %v6217 = vmul.f32 %v5932, %v6009
      %v6218 = vadd.f32 %v6216, %v6017
      %v6219 = vadd.f32 %v6217, %v6017
      %v6220 = vld [vmem:[%s355 + $0x48] sm:$0xf]
      %v6221 = vld [vmem:[%s355 + $0x4c] sm:$0xf]
      %v6222 = vunpack.c.l.bf16 %v6220
      %v6223 = vunpack.c.l.bf16 %v6221
      %v6224 = vadd.f32 %v6218, %v6222
      %v6225 = vadd.f32 %v6219, %v6223
      %v6226 = vmax.f32 %v6224, 0.0
      %v6227 = vmax.f32 %v6225, 0.0
      %v6228 = vpack.c.bf16 %v6227, %v6226
      %v6230 = vunpack.c.l.b16 %v6228
      %v6231 = vunpack.c.h.b16 %v6228
      %v6232 = vpack.c.b16 %v6230, %v6230
      %v6233 = vpack.c.b16 %v6231, %v6231
      %6236 = vst.msk [vmem:[%s361 + $0x48] sm:$0xf] %vm6037, %v6232
      %6237 = vst.msk [vmem:[%s361 + $0x4c] sm:$0xf] %vm6037, %v6233
      %v6238 = vmul.f32 %v5939, %v6009
      %v6239 = vmul.f32 %v5942, %v6009
      %v6240 = vadd.f32 %v6238, %v6017
      %v6241 = vadd.f32 %v6239, %v6017
      %v6242 = vld [vmem:[%s355 + $0x50] sm:$0xf]
      %v6243 = vld [vmem:[%s355 + $0x54] sm:$0xf]
      %v6244 = vunpack.c.l.bf16 %v6242
      %v6245 = vunpack.c.l.bf16 %v6243
      %v6246 = vadd.f32 %v6240, %v6244
      %v6247 = vadd.f32 %v6241, %v6245
      %v6248 = vmax.f32 %v6246, 0.0
      %v6249 = vmax.f32 %v6247, 0.0
      %v6250 = vpack.c.bf16 %v6249, %v6248
      %v6252 = vunpack.c.l.b16 %v6250
      %v6253 = vunpack.c.h.b16 %v6250
      %v6254 = vpack.c.b16 %v6252, %v6252
      %v6255 = vpack.c.b16 %v6253, %v6253
      %6258 = vst.msk [vmem:[%s361 + $0x50] sm:$0xf] %vm6037, %v6254
      %6259 = vst.msk [vmem:[%s361 + $0x54] sm:$0xf] %vm6037, %v6255
      %v6260 = vmul.f32 %v5949, %v6009
      %v6261 = vmul.f32 %v5954, %v6009
      %v6262 = vadd.f32 %v6260, %v6017
      %v6263 = vadd.f32 %v6261, %v6017
      %v6264 = vld [vmem:[%s355 + $0x58] sm:$0xf]
      %v6265 = vld [vmem:[%s355 + $0x5c] sm:$0xf]
      %v6266 = vunpack.c.l.bf16 %v6264
      %v6267 = vunpack.c.l.bf16 %v6265
      %v6268 = vadd.f32 %v6262, %v6266
      %v6269 = vadd.f32 %v6263, %v6267
      %v6270 = vmax.f32 %v6268, 0.0
      %v6271 = vmax.f32 %v6269, 0.0
      %v6272 = vpack.c.bf16 %v6271, %v6270
      %v6274 = vunpack.c.l.b16 %v6272
      %v6275 = vunpack.c.h.b16 %v6272
      %v6276 = vpack.c.b16 %v6274, %v6274
      %v6277 = vpack.c.b16 %v6275, %v6275
      %6280 = vst.msk [vmem:[%s361 + $0x58] sm:$0xf] %vm6037, %v6276
      %6281 = vst.msk [vmem:[%s361 + $0x5c] sm:$0xf] %vm6037, %v6277
      %v6282 = vmul.f32 %v5961, %v6009
      %v6283 = vmul.f32 %v5964, %v6009
      %v6284 = vadd.f32 %v6282, %v6017
      %v6285 = vadd.f32 %v6283, %v6017
      %v6286 = vld [vmem:[%s355 + $0x60] sm:$0xf]
      %v6287 = vld [vmem:[%s355 + $0x64] sm:$0xf]
      %v6288 = vunpack.c.l.bf16 %v6286
      %v6289 = vunpack.c.l.bf16 %v6287
      %v6290 = vadd.f32 %v6284, %v6288
      %v6291 = vadd.f32 %v6285, %v6289
      %v6292 = vmax.f32 %v6290, 0.0
      %v6293 = vmax.f32 %v6291, 0.0
      %v6294 = vpack.c.bf16 %v6293, %v6292
      %v6296 = vunpack.c.l.b16 %v6294
      %v6297 = vunpack.c.h.b16 %v6294
      %v6298 = vpack.c.b16 %v6296, %v6296
      %v6299 = vpack.c.b16 %v6297, %v6297
      %6302 = vst.msk [vmem:[%s361 + $0x60] sm:$0xf] %vm6037, %v6298
      %6303 = vst.msk [vmem:[%s361 + $0x64] sm:$0xf] %vm6037, %v6299
      %v6304 = vmul.f32 %v5971, %v6009
      %v6305 = vmul.f32 %v5976, %v6009
      %v6306 = vadd.f32 %v6304, %v6017
      %v6307 = vadd.f32 %v6305, %v6017
      %v6308 = vld [vmem:[%s355 + $0x68] sm:$0xf]
      %v6309 = vld [vmem:[%s355 + $0x6c] sm:$0xf]
      %v6310 = vunpack.c.l.bf16 %v6308
      %v6311 = vunpack.c.l.bf16 %v6309
      %v6312 = vadd.f32 %v6306, %v6310
      %v6313 = vadd.f32 %v6307, %v6311
      %v6314 = vmax.f32 %v6312, 0.0
      %v6315 = vmax.f32 %v6313, 0.0
      %v6316 = vpack.c.bf16 %v6315, %v6314
      %v6318 = vunpack.c.l.b16 %v6316
      %v6319 = vunpack.c.h.b16 %v6316
      %v6320 = vpack.c.b16 %v6318, %v6318
      %v6321 = vpack.c.b16 %v6319, %v6319
      %6324 = vst.msk [vmem:[%s361 + $0x68] sm:$0xf] %vm6037, %v6320
      %6325 = vst.msk [vmem:[%s361 + $0x6c] sm:$0xf] %vm6037, %v6321
      %v6326 = vmul.f32 %v5983, %v6009
      %v6327 = vmul.f32 %v5986, %v6009
      %v6328 = vadd.f32 %v6326, %v6017
      %v6329 = vadd.f32 %v6327, %v6017
      %v6330 = vld [vmem:[%s355 + $0x70] sm:$0xf]
      %v6331 = vld [vmem:[%s355 + $0x74] sm:$0xf]
      %v6332 = vunpack.c.l.bf16 %v6330
      %v6333 = vunpack.c.l.bf16 %v6331
      %v6334 = vadd.f32 %v6328, %v6332
      %v6335 = vadd.f32 %v6329, %v6333
      %v6336 = vmax.f32 %v6334, 0.0
      %v6337 = vmax.f32 %v6335, 0.0
      %v6338 = vpack.c.bf16 %v6337, %v6336
      %v6340 = vunpack.c.l.b16 %v6338
      %v6341 = vunpack.c.h.b16 %v6338
      %v6342 = vpack.c.b16 %v6340, %v6340
      %v6343 = vpack.c.b16 %v6341, %v6341
      %6346 = vst.msk [vmem:[%s361 + $0x70] sm:$0xf] %vm6037, %v6342
      %6347 = vst.msk [vmem:[%s361 + $0x74] sm:$0xf] %vm6037, %v6343
      %v6348 = vmul.f32 %v5993, %v6009
      %v6349 = vmul.f32 %v5998, %v6009
      %v6350 = vadd.f32 %v6348, %v6017
      %v6351 = vadd.f32 %v6349, %v6017
      %v6352 = vld [vmem:[%s355 + $0x78] sm:$0xf]
      %v6353 = vld [vmem:[%s355 + $0x7c] sm:$0xf]
      %v6354 = vunpack.c.l.bf16 %v6352
      %v6355 = vunpack.c.l.bf16 %v6353
      %v6356 = vadd.f32 %v6350, %v6354
      %v6357 = vadd.f32 %v6351, %v6355
      %v6358 = vmax.f32 %v6356, 0.0
      %v6359 = vmax.f32 %v6357, 0.0
      %v6360 = vpack.c.bf16 %v6359, %v6358
      %v6362 = vunpack.c.l.b16 %v6360
      %v6363 = vunpack.c.h.b16 %v6360
      %v6364 = vpack.c.b16 %v6362, %v6362
      %v6365 = vpack.c.b16 %v6363, %v6363
      %6368 = vst.msk [vmem:[%s361 + $0x78] sm:$0xf] %vm6037, %v6364
      %6369 = vst.msk [vmem:[%s361 + $0x7c] sm:$0xf] %vm6037, %v6365
      %s6370 = smul.u32 32, %s21
      %p6371 = scmp.lt.s32.totalorder %s6370, 63
      %s6372 = scalar_select %p6371, %s6370, 63
      %s6373 = smul.addr %s6372, 4
      %s6374 = scalar_lea.vmem %s10, %s6373
      // Predicated region
      $region61: #{bottleneck_forward.1} parent=59 // pred_check
        %p6375 = pneg %p254
      $region62: #{bottleneck_forward.1} parent=59 // pred_check_branch
        %6377 = sbr.rel (%p6375) target = $region64
      $region63: #{bottleneck_forward.1} parent=59 // pred_region
        %s6378 = smul.u32 32, %s21
      $region64: #{bottleneck_forward.1} parent=59 // pred_fallthru
        _
    $region60: #{bottleneck_forward.1} parent=5 // pred_fallthru
      _
    %p6379 = scmp.le.s32.totalorder 2, %s16
    // Predicated region
    $region65: #{bottleneck_forward.1} parent=5 // pred_check
      %p6380 = pneg %p6379
    $region66: #{bottleneck_forward.1} parent=5 // pred_check_branch
      %6382 = sbr.rel (%p6380) target = $region68
    $region67: #{bottleneck_forward.1} parent=5 // pred_region
      %s6383 = ssub.s32 %s16, 2
      // Predicated region
      $region69: #{bottleneck_forward.1} parent=67 // pred_check
        %p6384 = pneg %p260
      $region70: #{bottleneck_forward.1} parent=67 // pred_check_branch
        %6386 = sbr.rel (%p6384) target = $region72
      $region71: #{bottleneck_forward.1} parent=67 // pred_region
        %s6387 = smul.u32 32, %s22
        %p6388 = scmp.lt.s32.totalorder %s6387, 63
        %s6389 = scalar_select %p6388, %s6387, 63
        %s6390 = smul.addr %s6389, 4
        %s6391 = scalar_lea.vmem %s10, %s6390
      $region72: #{bottleneck_forward.1} parent=67 // pred_fallthru
        _
    $region68: #{bottleneck_forward.1} parent=5 // pred_fallthru
      _
  $region6: #{bottleneck_forward.1} parent=0 // loop_footer
    %s20 = sadd.s32 1, %s16
  $region7: #{bottleneck_forward.1} parent=0 // loop_footer_branch
    %15 = sbr.rel target = $region3
  $region8: #{bottleneck_forward.1} parent=0 // loop_exit
    _

</llo_original>
